<compile_context>
chip_gen: v6e
topology: v6e:2x2x1
jax: 0.10.0
libtpu: 0.0.40
codegen_flags: <defaults>
</compile_context>

<pallas_src>
import jax
import jax.numpy as jnp
from jax.experimental import pallas as pl
from jax.experimental.pallas import tpu as pltpu

LANE = 128


def _round_up(v, m):
    return ((v + m - 1) // m) * m


def _prefer_im2col_slab():
    """v5e: keep the single big-K im2col matmul (MXU-bound).  Else: shifted."""
    try:
        kind = jax.devices()[0].device_kind.lower()
    except Exception:
        return False
    return ("v5e" in kind) or ("v5 lite" in kind) or ("v5lite" in kind)


# --------------------------------------------------------------------------
# In-kernel helpers
# --------------------------------------------------------------------------
def _fill_reflect_pad(pad_ref, img, H, W):
    """Write `img` (H, W, Cw) into pad_ref[:H+2, :W+2, :Cw] with reflect pad=1.

    Lanes >= Cw of pad_ref are assumed to already hold zeros (memset at kernel
    entry), so padded channels contribute exactly zero to the matmuls.
    """
    Cw = img.shape[-1]
    # interior
    pad_ref[1:H + 1, 1:W + 1, :Cw] = img
    # top / bottom reflected rows (mirror, excluding the edge row itself)
    pad_ref[0:1, 1:W + 1, :Cw] = img[1:2]
    pad_ref[H + 1:H + 2, 1:W + 1, :Cw] = img[H - 2:H - 1]
    # left / right reflected columns; read from already-padded rows so the
    # four corners come out doubly reflected, matching torch.
    pad_ref[:, 0:1, :] = pad_ref[:, 2:3, :]
    pad_ref[:, W + 1:W + 2, :] = pad_ref[:, W - 1:W, :]


def _conv3x3_shifted(pad_ref, w_ref, H, W, Cp):
    """9 shifted-view matmuls, f32 accumulation (v6e/v7x path, no im2col slab)."""
    acc = None
    for k in range(9):
        dy, dx = divmod(k, 3)
        lhs = pad_ref[dy:dy + H, dx:dx + W, :].reshape(H * W, Cp)      # bf16
        d = jnp.dot(lhs, w_ref[k], preferred_element_type=jnp.float32)
        acc = d if acc is None else acc + d
    return acc                                                         # (H*W, Cp) f32


def _conv3x3_slab(pad_ref, w_ref, col_ref, H, W, Cp):
    """Single big-K im2col matmul (v5e path: MXU is the binding unit)."""
    for k in range(9):
        dy, dx = divmod(k, 3)
        col_ref[:, k * Cp:(k + 1) * Cp] = (
            pad_ref[dy:dy + H, dx:dx + W, :].reshape(H * W, Cp))
    return jnp.dot(col_ref[...], w_ref[...].reshape(9 * Cp, Cp),
                   preferred_element_type=jnp.float32)


# --------------------------------------------------------------------------
# Fused kernel: pad -> conv -> BN -> ReLU -> pad -> conv -> BN -> +x
# --------------------------------------------------------------------------
def _make_kernel(H, W, C, Cp, use_slab):
    def kernel(x_ref, w1_ref, s1_ref, b1_ref, w2_ref, s2_ref, b2_ref,
               out_ref, pad_ref, *maybe_col):
        col_ref = maybe_col[0] if use_slab else None

        def conv(w_ref):
            if use_slab:
                return _conv3x3_slab(pad_ref, w_ref, col_ref, H, W, Cp)
            return _conv3x3_shifted(pad_ref, w_ref, H, W, Cp)

        # Zero the pad scratch so lanes >= C (and alignment columns) are inert.
        # Cheap (one bf16 tile write) and must run every step: with "parallel"
        # grid sharding each core has its own scratch instance.
        pad_ref[...] = jnp.zeros_like(pad_ref)

        # ---- stage 1: ReflectionPad -> Conv3x3 -> BN -> ReLU
        _fill_reflect_pad(pad_ref, x_ref[0].astype(jnp.bfloat16), H, W)
        acc1 = conv(w1_ref)                                    # (H*W, Cp) f32
        h = jnp.maximum(acc1 * s1_ref[...] + b1_ref[...], 0.0)

        # ---- stage 2: ReflectionPad -> Conv3x3 -> BN  (scratch reused)
        _fill_reflect_pad(pad_ref, h.astype(jnp.bfloat16).reshape(H, W, Cp), H, W)
        acc2 = conv(w2_ref)
        y = (acc2 * s2_ref[...] + b2_ref[...])[:, :C].reshape(H, W, C)

        # ---- residual add: re-read x here (short live range), native-C store
        out_ref[0] = x_ref[0] + y

    return kernel


# --------------------------------------------------------------------------
# Wrapper
# --------------------------------------------------------------------------
def residual_block_forward(x_nchw, params):
    x = jnp.transpose(x_nchw, (0, 2, 3, 1)).astype(jnp.float32)  # NCHW -> NHWC
    N, H, W, C = x.shape
    assert H >= 2 and W >= 2, "ReflectionPad2d(1) needs H >= 2 and W >= 2"

    Cp = _round_up(C, LANE)              # lane-dense channels *inside* the kernel
    Wp = _round_up(W + 2, 8)             # sublane-aligned padded-scratch width
    use_slab = _prefer_im2col_slab()

    def prep(w9, scale, shift):
        # Weights / BN vectors are tiny; pad them (not the activations) to Cp.
        w = jnp.pad(w9, ((0, 0), (0, Cp - C), (0, Cp - C))).astype(jnp.bfloat16)
        scale = jnp.pad(scale, ((0, 0), (0, Cp - C)))
        shift = jnp.pad(shift, ((0, 0), (0, Cp - C)))
        return w, scale, shift

    w1, s1, b1 = prep(params["w1"], params["scale1"], params["shift1"])
    w2, s2, b2 = prep(params["w2"], params["scale2"], params["shift2"])

    img_spec = pl.BlockSpec((1, H, W, C), lambda n: (n, 0, 0, 0))   # native C
    w_spec = pl.BlockSpec((9, Cp, Cp), lambda n: (0, 0, 0))
    vec_spec = pl.BlockSpec((1, Cp), lambda n: (0, 0))

    scratch = [pltpu.VMEM((H + 2, Wp, Cp), jnp.bfloat16)]           # padded tile
    if use_slab:
        scratch.append(pltpu.VMEM((H * W, 9 * Cp), jnp.bfloat16))   # v5e im2col

    out = pl.pallas_call(
        _make_kernel(H, W, C, Cp, use_slab),
        out_shape=jax.ShapeDtypeStruct((N, H, W, C), jnp.float32),
        grid_spec=pltpu.PrefetchScalarGridSpec(
            num_scalar_prefetch=0,
            grid=(N,),
            in_specs=[img_spec, w_spec, vec_spec, vec_spec,
                      w_spec, vec_spec, vec_spec],
            out_specs=img_spec,
            scratch_shapes=scratch),
        compiler_params=pltpu.CompilerParams(
            dimension_semantics=("parallel",)),
    )(x, w1, s1, b1, w2, s2, b2)

    return jnp.transpose(out, (0, 3, 1, 2))                         # NHWC -> NCHW


# --------------------------------------------------------------------------
# Deterministic parameter init (Conv2d bias + BN gamma/beta/mean/var folded)
# --------------------------------------------------------------------------
def init_params(key, C, eps=1e-5):
    def one_branch(k):
        kw, kb, kg, kbeta, km, kv = jax.random.split(k, 6)
        w_hwio = jax.random.normal(kw, (3, 3, C, C), jnp.float32) / jnp.sqrt(9.0 * C)
        conv_b = 0.05 * jax.random.normal(kb, (C,), jnp.float32)
        gamma = 1.0 + 0.1 * jax.random.normal(kg, (C,), jnp.float32)
        beta = 0.1 * jax.random.normal(kbeta, (C,), jnp.float32)
        run_mean = 0.1 * jax.random.normal(km, (C,), jnp.float32)
        run_var = jax.random.uniform(kv, (C,), jnp.float32, minval=0.5, maxval=1.5)
        scale = gamma / jnp.sqrt(run_var + eps)
        shift = beta + (conv_b - run_mean) * scale
        return w_hwio.reshape(9, C, C), scale.reshape(1, C), shift.reshape(1, C)

    k1, k2 = jax.random.split(key)
    w1, s1, b1 = one_branch(k1)
    w2, s2, b2 = one_branch(k2)
    return {"w1": w1, "scale1": s1, "shift1": b1,
            "w2": w2, "scale2": s2, "shift2": b2}


# --------------------------------------------------------------------------
# Pure-JAX reference (for correctness check)
# --------------------------------------------------------------------------
def residual_block_reference(x_nchw, params):
    x = jnp.transpose(x_nchw, (0, 2, 3, 1)).astype(jnp.float32)
    C = x.shape[-1]

    def conv_bn(h, w9, scale, shift):
        hp = jnp.pad(h, ((0, 0), (1, 1), (1, 1), (0, 0)), mode="reflect")
        y = jax.lax.conv_general_dilated(
            hp, w9.reshape(3, 3, C, C), window_strides=(1, 1), padding="VALID",
            dimension_numbers=("NHWC", "HWIO", "NHWC"))
        return y * scale.reshape(1, 1, 1, C) + shift.reshape(1, 1, 1, C)

    h = jnp.maximum(conv_bn(x, params["w1"], params["scale1"], params["shift1"]), 0.0)
    y = conv_bn(h, params["w2"], params["scale2"], params["shift2"])
    return jnp.transpose(x + y, (0, 3, 1, 2))


if __name__ == "__main__":
    key = jax.random.PRNGKey(0)
    kx, kp = jax.random.split(key)
    N, C, H, W = 2, 4, 16, 16                     # PyTorch NCHW input shape
    x = jax.random.normal(kx, (N, C, H, W), jnp.float32)
    params = init_params(kp, C)

    out = jax.jit(residual_block_forward)(x, params)
    out = jax.block_until_ready(out)

    ref = residual_block_reference(x, params)
    assert out.shape == (N, C, H, W)
    if not jnp.allclose(out, ref, atol=2e-2, rtol=2e-2):
        raise AssertionError(
            f"mismatch vs reference, max abs err = {jnp.max(jnp.abs(out - ref))}")
    print("KERNEL_OK")
</pallas_src>

<mosaic_0001>
module attributes {stable_mosaic.version = 11 : i64} {
  func.func @kernel(%arg0: i32, %arg1: memref<1x16x16x4xf32, #tpu.memory_space<vmem>>, %arg2: memref<9x128x128xbf16, #tpu.memory_space<vmem>>, %arg3: memref<1x128xf32, #tpu.memory_space<vmem>>, %arg4: memref<1x128xf32, #tpu.memory_space<vmem>>, %arg5: memref<9x128x128xbf16, #tpu.memory_space<vmem>>, %arg6: memref<1x128xf32, #tpu.memory_space<vmem>>, %arg7: memref<1x128xf32, #tpu.memory_space<vmem>>, %arg8: memref<1x16x16x4xf32, #tpu.memory_space<vmem>>, %arg9: memref<18x24x128xbf16, #tpu.memory_space<vmem>>) attributes {dimension_semantics = [#tpu.dimension_semantics<parallel>], iteration_bounds = array<i64: 2>, scalar_prefetch = 0 : i64, scratch_operands = 1 : i64, tpu.core_type = #tpu.core_type<tc>, window_params = [{transform_indices = @transform_0, window_bounds = array<i64: 1, 16, 16, 4>}, {pipeline_mode = #tpu.pipeline_mode<synchronous>, transform_indices = @transform_1, window_bounds = array<i64: 9, 128, 128>}, {pipeline_mode = #tpu.pipeline_mode<synchronous>, transform_indices = @transform_2, window_bounds = array<i64: 1, 128>}, {pipeline_mode = #tpu.pipeline_mode<synchronous>, transform_indices = @transform_3, window_bounds = array<i64: 1, 128>}, {pipeline_mode = #tpu.pipeline_mode<synchronous>, transform_indices = @transform_4, window_bounds = array<i64: 9, 128, 128>}, {pipeline_mode = #tpu.pipeline_mode<synchronous>, transform_indices = @transform_5, window_bounds = array<i64: 1, 128>}, {pipeline_mode = #tpu.pipeline_mode<synchronous>, transform_indices = @transform_6, window_bounds = array<i64: 1, 128>}, {transform_indices = @transform_7, window_bounds = array<i64: 1, 16, 16, 4>}]} {
    %cst = arith.constant 0.000000e+00 : bf16
    %0 = vector.broadcast %cst : bf16 to vector<18x24x128xbf16>
    %c0 = arith.constant 0 : index
    %c0_0 = arith.constant 0 : index
    %c0_1 = arith.constant 0 : index
    %1 = vector.load %arg9[%c0, %c0_0, %c0_1] : memref<18x24x128xbf16, #tpu.memory_space<vmem>>, vector<18x24x128xbf16>
    tpu.vector_store %arg9[%c0, %c0_0, %c0_1], %0 {strides = array<i32>} : memref<18x24x128xbf16, #tpu.memory_space<vmem>>, vector<18x24x128xbf16>,
    %c0_2 = arith.constant 0 : index
    %c0_3 = arith.constant 0 : index
    %c0_4 = arith.constant 0 : index
    %c0_5 = arith.constant 0 : index
    %2 = vector.load %arg1[%c0_2, %c0_3, %c0_4, %c0_5] : memref<1x16x16x4xf32, #tpu.memory_space<vmem>>, vector<1x16x16x4xf32>
    %3 = vector.shape_cast %2 : vector<1x16x16x4xf32> to vector<16x16x4xf32>
    %4 = arith.truncf %3 : vector<16x16x4xf32> to vector<16x16x4xbf16>
    %c1 = arith.constant 1 : index
    %c1_6 = arith.constant 1 : index
    %c0_7 = arith.constant 0 : index
    %5 = vector.load %arg9[%c1, %c1_6, %c0_7] : memref<18x24x128xbf16, #tpu.memory_space<vmem>>, vector<16x16x4xbf16>
    tpu.vector_store %arg9[%c1, %c1_6, %c0_7], %4 {strides = array<i32>} : memref<18x24x128xbf16, #tpu.memory_space<vmem>>, vector<16x16x4xbf16>,
    %6 = vector.extract_strided_slice %4 {offsets = [1, 0, 0], sizes = [1, 16, 4], strides = [1, 1, 1]} : vector<16x16x4xbf16> to vector<1x16x4xbf16>
    %c0_8 = arith.constant 0 : index
    %c1_9 = arith.constant 1 : index
    %c0_10 = arith.constant 0 : index
    %7 = vector.load %arg9[%c0_8, %c1_9, %c0_10] : memref<18x24x128xbf16, #tpu.memory_space<vmem>>, vector<1x16x4xbf16>
    tpu.vector_store %arg9[%c0_8, %c1_9, %c0_10], %6 {strides = array<i32>} : memref<18x24x128xbf16, #tpu.memory_space<vmem>>, vector<1x16x4xbf16>,
    %8 = vector.extract_strided_slice %4 {offsets = [14, 0, 0], sizes = [1, 16, 4], strides = [1, 1, 1]} : vector<16x16x4xbf16> to vector<1x16x4xbf16>
    %c17 = arith.constant 17 : index
    %c1_11 = arith.constant 1 : index
    %c0_12 = arith.constant 0 : index
    %9 = vector.load %arg9[%c17, %c1_11, %c0_12] : memref<18x24x128xbf16, #tpu.memory_space<vmem>>, vector<1x16x4xbf16>
    tpu.vector_store %arg9[%c17, %c1_11, %c0_12], %8 {strides = array<i32>} : memref<18x24x128xbf16, #tpu.memory_space<vmem>>, vector<1x16x4xbf16>,
    %c0_13 = arith.constant 0 : index
    %c2 = arith.constant 2 : index
    %c0_14 = arith.constant 0 : index
    %10 = vector.load %arg9[%c0_13, %c2, %c0_14] : memref<18x24x128xbf16, #tpu.memory_space<vmem>>, vector<18x1x128xbf16>
    %c0_15 = arith.constant 0 : index
    %c0_16 = arith.constant 0 : index
    %c0_17 = arith.constant 0 : index
    %11 = vector.load %arg9[%c0_15, %c0_16, %c0_17] : memref<18x24x128xbf16, #tpu.memory_space<vmem>>, vector<18x1x128xbf16>
    tpu.vector_store %arg9[%c0_15, %c0_16, %c0_17], %10 {strides = array<i32>} : memref<18x24x128xbf16, #tpu.memory_space<vmem>>, vector<18x1x128xbf16>,
    %c0_18 = arith.constant 0 : index
    %c15 = arith.constant 15 : index
    %c0_19 = arith.constant 0 : index
    %12 = vector.load %arg9[%c0_18, %c15, %c0_19] : memref<18x24x128xbf16, #tpu.memory_space<vmem>>, vector<18x1x128xbf16>
    %c0_20 = arith.constant 0 : index
    %c17_21 = arith.constant 17 : index
    %c0_22 = arith.constant 0 : index
    %13 = vector.load %arg9[%c0_20, %c17_21, %c0_22] : memref<18x24x128xbf16, #tpu.memory_space<vmem>>, vector<18x1x128xbf16>
    tpu.vector_store %arg9[%c0_20, %c17_21, %c0_22], %12 {strides = array<i32>} : memref<18x24x128xbf16, #tpu.memory_space<vmem>>, vector<18x1x128xbf16>,
    %c0_23 = arith.constant 0 : index
    %c0_24 = arith.constant 0 : index
    %c0_25 = arith.constant 0 : index
    %14 = vector.load %arg9[%c0_23, %c0_24, %c0_25] : memref<18x24x128xbf16, #tpu.memory_space<vmem>>, vector<16x16x128xbf16>
    %15 = vector.shape_cast %14 : vector<16x16x128xbf16> to vector<256x128xbf16>
    %c0_26 = arith.constant 0 : index
    %c0_27 = arith.constant 0 : index
    %c0_28 = arith.constant 0 : index
    %16 = vector.load %arg2[%c0_26, %c0_27, %c0_28] : memref<9x128x128xbf16, #tpu.memory_space<vmem>>, vector<1x128x128xbf16>
    %17 = vector.shape_cast %16 : vector<1x128x128xbf16> to vector<128x128xbf16>
    %cst_29 = arith.constant dense<0.000000e+00> : vector<256x128xf32>
    %18 = tpu.matmul %15, %17, %cst_29 {dimension_numbers = #tpu.dot_dimension_numbers<[1], [0], [0], [1], [0, 0, 1, 1], [], []>} : vector<256x128xbf16>, vector<128x128xbf16>, vector<256x128xf32> -> vector<256x128xf32>
    %c0_30 = arith.constant 0 : index
    %c1_31 = arith.constant 1 : index
    %c0_32 = arith.constant 0 : index
    %19 = vector.load %arg9[%c0_30, %c1_31, %c0_32] : memref<18x24x128xbf16, #tpu.memory_space<vmem>>, vector<16x16x128xbf16>
    %20 = vector.shape_cast %19 : vector<16x16x128xbf16> to vector<256x128xbf16>
    %c1_33 = arith.constant 1 : index
    %c0_34 = arith.constant 0 : index
    %c0_35 = arith.constant 0 : index
    %21 = vector.load %arg2[%c1_33, %c0_34, %c0_35] : memref<9x128x128xbf16, #tpu.memory_space<vmem>>, vector<1x128x128xbf16>
    %22 = vector.shape_cast %21 : vector<1x128x128xbf16> to vector<128x128xbf16>
    %cst_36 = arith.constant dense<0.000000e+00> : vector<256x128xf32>
    %23 = tpu.matmul %20, %22, %cst_36 {dimension_numbers = #tpu.dot_dimension_numbers<[1], [0], [0], [1], [0, 0, 1, 1], [], []>} : vector<256x128xbf16>, vector<128x128xbf16>, vector<256x128xf32> -> vector<256x128xf32>
    %24 = arith.addf %18, %23 : vector<256x128xf32>
    %c0_37 = arith.constant 0 : index
    %c2_38 = arith.constant 2 : index
    %c0_39 = arith.constant 0 : index
    %25 = vector.load %arg9[%c0_37, %c2_38, %c0_39] : memref<18x24x128xbf16, #tpu.memory_space<vmem>>, vector<16x16x128xbf16>
    %26 = vector.shape_cast %25 : vector<16x16x128xbf16> to vector<256x128xbf16>
    %c2_40 = arith.constant 2 : index
    %c0_41 = arith.constant 0 : index
    %c0_42 = arith.constant 0 : index
    %27 = vector.load %arg2[%c2_40, %c0_41, %c0_42] : memref<9x128x128xbf16, #tpu.memory_space<vmem>>, vector<1x128x128xbf16>
    %28 = vector.shape_cast %27 : vector<1x128x128xbf16> to vector<128x128xbf16>
    %cst_43 = arith.constant dense<0.000000e+00> : vector<256x128xf32>
    %29 = tpu.matmul %26, %28, %cst_43 {dimension_numbers = #tpu.dot_dimension_numbers<[1], [0], [0], [1], [0, 0, 1, 1], [], []>} : vector<256x128xbf16>, vector<128x128xbf16>, vector<256x128xf32> -> vector<256x128xf32>
    %30 = arith.addf %24, %29 : vector<256x128xf32>
    %c1_44 = arith.constant 1 : index
    %c0_45 = arith.constant 0 : index
    %c0_46 = arith.constant 0 : index
    %31 = vector.load %arg9[%c1_44, %c0_45, %c0_46] : memref<18x24x128xbf16, #tpu.memory_space<vmem>>, vector<16x16x128xbf16>
    %32 = vector.shape_cast %31 : vector<16x16x128xbf16> to vector<256x128xbf16>
    %c3 = arith.constant 3 : index
    %c0_47 = arith.constant 0 : index
    %c0_48 = arith.constant 0 : index
    %33 = vector.load %arg2[%c3, %c0_47, %c0_48] : memref<9x128x128xbf16, #tpu.memory_space<vmem>>, vector<1x128x128xbf16>
    %34 = vector.shape_cast %33 : vector<1x128x128xbf16> to vector<128x128xbf16>
    %cst_49 = arith.constant dense<0.000000e+00> : vector<256x128xf32>
    %35 = tpu.matmul %32, %34, %cst_49 {dimension_numbers = #tpu.dot_dimension_numbers<[1], [0], [0], [1], [0, 0, 1, 1], [], []>} : vector<256x128xbf16>, vector<128x128xbf16>, vector<256x128xf32> -> vector<256x128xf32>
    %36 = arith.addf %30, %35 : vector<256x128xf32>
    %c1_50 = arith.constant 1 : index
    %c1_51 = arith.constant 1 : index
    %c0_52 = arith.constant 0 : index
    %37 = vector.load %arg9[%c1_50, %c1_51, %c0_52] : memref<18x24x128xbf16, #tpu.memory_space<vmem>>, vector<16x16x128xbf16>
    %38 = vector.shape_cast %37 : vector<16x16x128xbf16> to vector<256x128xbf16>
    %c4 = arith.constant 4 : index
    %c0_53 = arith.constant 0 : index
    %c0_54 = arith.constant 0 : index
    %39 = vector.load %arg2[%c4, %c0_53, %c0_54] : memref<9x128x128xbf16, #tpu.memory_space<vmem>>, vector<1x128x128xbf16>
    %40 = vector.shape_cast %39 : vector<1x128x128xbf16> to vector<128x128xbf16>
    %cst_55 = arith.constant dense<0.000000e+00> : vector<256x128xf32>
    %41 = tpu.matmul %38, %40, %cst_55 {dimension_numbers = #tpu.dot_dimension_numbers<[1], [0], [0], [1], [0, 0, 1, 1], [], []>} : vector<256x128xbf16>, vector<128x128xbf16>, vector<256x128xf32> -> vector<256x128xf32>
    %42 = arith.addf %36, %41 : vector<256x128xf32>
    %c1_56 = arith.constant 1 : index
    %c2_57 = arith.constant 2 : index
    %c0_58 = arith.constant 0 : index
    %43 = vector.load %arg9[%c1_56, %c2_57, %c0_58] : memref<18x24x128xbf16, #tpu.memory_space<vmem>>, vector<16x16x128xbf16>
    %44 = vector.shape_cast %43 : vector<16x16x128xbf16> to vector<256x128xbf16>
    %c5 = arith.constant 5 : index
    %c0_59 = arith.constant 0 : index
    %c0_60 = arith.constant 0 : index
    %45 = vector.load %arg2[%c5, %c0_59, %c0_60] : memref<9x128x128xbf16, #tpu.memory_space<vmem>>, vector<1x128x128xbf16>
    %46 = vector.shape_cast %45 : vector<1x128x128xbf16> to vector<128x128xbf16>
    %cst_61 = arith.constant dense<0.000000e+00> : vector<256x128xf32>
    %47 = tpu.matmul %44, %46, %cst_61 {dimension_numbers = #tpu.dot_dimension_numbers<[1], [0], [0], [1], [0, 0, 1, 1], [], []>} : vector<256x128xbf16>, vector<128x128xbf16>, vector<256x128xf32> -> vector<256x128xf32>
    %48 = arith.addf %42, %47 : vector<256x128xf32>
    %c2_62 = arith.constant 2 : index
    %c0_63 = arith.constant 0 : index
    %c0_64 = arith.constant 0 : index
    %49 = vector.load %arg9[%c2_62, %c0_63, %c0_64] : memref<18x24x128xbf16, #tpu.memory_space<vmem>>, vector<16x16x128xbf16>
    %50 = vector.shape_cast %49 : vector<16x16x128xbf16> to vector<256x128xbf16>
    %c6 = arith.constant 6 : index
    %c0_65 = arith.constant 0 : index
    %c0_66 = arith.constant 0 : index
    %51 = vector.load %arg2[%c6, %c0_65, %c0_66] : memref<9x128x128xbf16, #tpu.memory_space<vmem>>, vector<1x128x128xbf16>
    %52 = vector.shape_cast %51 : vector<1x128x128xbf16> to vector<128x128xbf16>
    %cst_67 = arith.constant dense<0.000000e+00> : vector<256x128xf32>
    %53 = tpu.matmul %50, %52, %cst_67 {dimension_numbers = #tpu.dot_dimension_numbers<[1], [0], [0], [1], [0, 0, 1, 1], [], []>} : vector<256x128xbf16>, vector<128x128xbf16>, vector<256x128xf32> -> vector<256x128xf32>
    %54 = arith.addf %48, %53 : vector<256x128xf32>
    %c2_68 = arith.constant 2 : index
    %c1_69 = arith.constant 1 : index
    %c0_70 = arith.constant 0 : index
    %55 = vector.load %arg9[%c2_68, %c1_69, %c0_70] : memref<18x24x128xbf16, #tpu.memory_space<vmem>>, vector<16x16x128xbf16>
    %56 = vector.shape_cast %55 : vector<16x16x128xbf16> to vector<256x128xbf16>
    %c7 = arith.constant 7 : index
    %c0_71 = arith.constant 0 : index
    %c0_72 = arith.constant 0 : index
    %57 = vector.load %arg2[%c7, %c0_71, %c0_72] : memref<9x128x128xbf16, #tpu.memory_space<vmem>>, vector<1x128x128xbf16>
    %58 = vector.shape_cast %57 : vector<1x128x128xbf16> to vector<128x128xbf16>
    %cst_73 = arith.constant dense<0.000000e+00> : vector<256x128xf32>
    %59 = tpu.matmul %56, %58, %cst_73 {dimension_numbers = #tpu.dot_dimension_numbers<[1], [0], [0], [1], [0, 0, 1, 1], [], []>} : vector<256x128xbf16>, vector<128x128xbf16>, vector<256x128xf32> -> vector<256x128xf32>
    %60 = arith.addf %54, %59 : vector<256x128xf32>
    %c2_74 = arith.constant 2 : index
    %c2_75 = arith.constant 2 : index
    %c0_76 = arith.constant 0 : index
    %61 = vector.load %arg9[%c2_74, %c2_75, %c0_76] : memref<18x24x128xbf16, #tpu.memory_space<vmem>>, vector<16x16x128xbf16>
    %62 = vector.shape_cast %61 : vector<16x16x128xbf16> to vector<256x128xbf16>
    %c8 = arith.constant 8 : index
    %c0_77 = arith.constant 0 : index
    %c0_78 = arith.constant 0 : index
    %63 = vector.load %arg2[%c8, %c0_77, %c0_78] : memref<9x128x128xbf16, #tpu.memory_space<vmem>>, vector<1x128x128xbf16>
    %64 = vector.shape_cast %63 : vector<1x128x128xbf16> to vector<128x128xbf16>
    %cst_79 = arith.constant dense<0.000000e+00> : vector<256x128xf32>
    %65 = tpu.matmul %62, %64, %cst_79 {dimension_numbers = #tpu.dot_dimension_numbers<[1], [0], [0], [1], [0, 0, 1, 1], [], []>} : vector<256x128xbf16>, vector<128x128xbf16>, vector<256x128xf32> -> vector<256x128xf32>
    %66 = arith.addf %60, %65 : vector<256x128xf32>
    %c0_80 = arith.constant 0 : index
    %c0_81 = arith.constant 0 : index
    %67 = vector.load %arg3[%c0_80, %c0_81] : memref<1x128xf32, #tpu.memory_space<vmem>>, vector<1x128xf32>
    %68 = vector.broadcast %67 : vector<1x128xf32> to vector<256x128xf32>
    %69 = arith.mulf %66, %68 : vector<256x128xf32>
    %c0_82 = arith.constant 0 : index
    %c0_83 = arith.constant 0 : index
    %70 = vector.load %arg4[%c0_82, %c0_83] : memref<1x128xf32, #tpu.memory_space<vmem>>, vector<1x128xf32>
    %71 = vector.broadcast %70 : vector<1x128xf32> to vector<256x128xf32>
    %72 = arith.addf %69, %71 : vector<256x128xf32>
    %cst_84 = arith.constant 0.000000e+00 : f32
    %73 = vector.broadcast %cst_84 : f32 to vector<256x128xf32>
    %74 = arith.maximumf %72, %73 : vector<256x128xf32>
    %75 = arith.truncf %74 : vector<256x128xf32> to vector<256x128xbf16>
    %76 = vector.shape_cast %75 : vector<256x128xbf16> to vector<16x16x128xbf16>
    %c1_85 = arith.constant 1 : index
    %c1_86 = arith.constant 1 : index
    %c0_87 = arith.constant 0 : index
    %77 = vector.load %arg9[%c1_85, %c1_86, %c0_87] : memref<18x24x128xbf16, #tpu.memory_space<vmem>>, vector<16x16x128xbf16>
    tpu.vector_store %arg9[%c1_85, %c1_86, %c0_87], %76 {strides = array<i32>} : memref<18x24x128xbf16, #tpu.memory_space<vmem>>, vector<16x16x128xbf16>,
    %78 = vector.extract_strided_slice %76 {offsets = [1, 0, 0], sizes = [1, 16, 128], strides = [1, 1, 1]} : vector<16x16x128xbf16> to vector<1x16x128xbf16>
    %c0_88 = arith.constant 0 : index
    %c1_89 = arith.constant 1 : index
    %c0_90 = arith.constant 0 : index
    %79 = vector.load %arg9[%c0_88, %c1_89, %c0_90] : memref<18x24x128xbf16, #tpu.memory_space<vmem>>, vector<1x16x128xbf16>
    tpu.vector_store %arg9[%c0_88, %c1_89, %c0_90], %78 {strides = array<i32>} : memref<18x24x128xbf16, #tpu.memory_space<vmem>>, vector<1x16x128xbf16>,
    %80 = vector.extract_strided_slice %76 {offsets = [14, 0, 0], sizes = [1, 16, 128], strides = [1, 1, 1]} : vector<16x16x128xbf16> to vector<1x16x128xbf16>
    %c17_91 = arith.constant 17 : index
    %c1_92 = arith.constant 1 : index
    %c0_93 = arith.constant 0 : index
    %81 = vector.load %arg9[%c17_91, %c1_92, %c0_93] : memref<18x24x128xbf16, #tpu.memory_space<vmem>>, vector<1x16x128xbf16>
    tpu.vector_store %arg9[%c17_91, %c1_92, %c0_93], %80 {strides = array<i32>} : memref<18x24x128xbf16, #tpu.memory_space<vmem>>, vector<1x16x128xbf16>,
    %c0_94 = arith.constant 0 : index
    %c2_95 = arith.constant 2 : index
    %c0_96 = arith.constant 0 : index
    %82 = vector.load %arg9[%c0_94, %c2_95, %c0_96] : memref<18x24x128xbf16, #tpu.memory_space<vmem>>, vector<18x1x128xbf16>
    %c0_97 = arith.constant 0 : index
    %c0_98 = arith.constant 0 : index
    %c0_99 = arith.constant 0 : index
    %83 = vector.load %arg9[%c0_97, %c0_98, %c0_99] : memref<18x24x128xbf16, #tpu.memory_space<vmem>>, vector<18x1x128xbf16>
    tpu.vector_store %arg9[%c0_97, %c0_98, %c0_99], %82 {strides = array<i32>} : memref<18x24x128xbf16, #tpu.memory_space<vmem>>, vector<18x1x128xbf16>,
    %c0_100 = arith.constant 0 : index
    %c15_101 = arith.constant 15 : index
    %c0_102 = arith.constant 0 : index
    %84 = vector.load %arg9[%c0_100, %c15_101, %c0_102] : memref<18x24x128xbf16, #tpu.memory_space<vmem>>, vector<18x1x128xbf16>
    %c0_103 = arith.constant 0 : index
    %c17_104 = arith.constant 17 : index
    %c0_105 = arith.constant 0 : index
    %85 = vector.load %arg9[%c0_103, %c17_104, %c0_105] : memref<18x24x128xbf16, #tpu.memory_space<vmem>>, vector<18x1x128xbf16>
    tpu.vector_store %arg9[%c0_103, %c17_104, %c0_105], %84 {strides = array<i32>} : memref<18x24x128xbf16, #tpu.memory_space<vmem>>, vector<18x1x128xbf16>,
    %c0_106 = arith.constant 0 : index
    %c0_107 = arith.constant 0 : index
    %c0_108 = arith.constant 0 : index
    %86 = vector.load %arg9[%c0_106, %c0_107, %c0_108] : memref<18x24x128xbf16, #tpu.memory_space<vmem>>, vector<16x16x128xbf16>
    %87 = vector.shape_cast %86 : vector<16x16x128xbf16> to vector<256x128xbf16>
    %c0_109 = arith.constant 0 : index
    %c0_110 = arith.constant 0 : index
    %c0_111 = arith.constant 0 : index
    %88 = vector.load %arg5[%c0_109, %c0_110, %c0_111] : memref<9x128x128xbf16, #tpu.memory_space<vmem>>, vector<1x128x128xbf16>
    %89 = vector.shape_cast %88 : vector<1x128x128xbf16> to vector<128x128xbf16>
    %cst_112 = arith.constant dense<0.000000e+00> : vector<256x128xf32>
    %90 = tpu.matmul %87, %89, %cst_112 {dimension_numbers = #tpu.dot_dimension_numbers<[1], [0], [0], [1], [0, 0, 1, 1], [], []>} : vector<256x128xbf16>, vector<128x128xbf16>, vector<256x128xf32> -> vector<256x128xf32>
    %c0_113 = arith.constant 0 : index
    %c1_114 = arith.constant 1 : index
    %c0_115 = arith.constant 0 : index
    %91 = vector.load %arg9[%c0_113, %c1_114, %c0_115] : memref<18x24x128xbf16, #tpu.memory_space<vmem>>, vector<16x16x128xbf16>
    %92 = vector.shape_cast %91 : vector<16x16x128xbf16> to vector<256x128xbf16>
    %c1_116 = arith.constant 1 : index
    %c0_117 = arith.constant 0 : index
    %c0_118 = arith.constant 0 : index
    %93 = vector.load %arg5[%c1_116, %c0_117, %c0_118] : memref<9x128x128xbf16, #tpu.memory_space<vmem>>, vector<1x128x128xbf16>
    %94 = vector.shape_cast %93 : vector<1x128x128xbf16> to vector<128x128xbf16>
    %cst_119 = arith.constant dense<0.000000e+00> : vector<256x128xf32>
    %95 = tpu.matmul %92, %94, %cst_119 {dimension_numbers = #tpu.dot_dimension_numbers<[1], [0], [0], [1], [0, 0, 1, 1], [], []>} : vector<256x128xbf16>, vector<128x128xbf16>, vector<256x128xf32> -> vector<256x128xf32>
    %96 = arith.addf %90, %95 : vector<256x128xf32>
    %c0_120 = arith.constant 0 : index
    %c2_121 = arith.constant 2 : index
    %c0_122 = arith.constant 0 : index
    %97 = vector.load %arg9[%c0_120, %c2_121, %c0_122] : memref<18x24x128xbf16, #tpu.memory_space<vmem>>, vector<16x16x128xbf16>
    %98 = vector.shape_cast %97 : vector<16x16x128xbf16> to vector<256x128xbf16>
    %c2_123 = arith.constant 2 : index
    %c0_124 = arith.constant 0 : index
    %c0_125 = arith.constant 0 : index
    %99 = vector.load %arg5[%c2_123, %c0_124, %c0_125] : memref<9x128x128xbf16, #tpu.memory_space<vmem>>, vector<1x128x128xbf16>
    %100 = vector.shape_cast %99 : vector<1x128x128xbf16> to vector<128x128xbf16>
    %cst_126 = arith.constant dense<0.000000e+00> : vector<256x128xf32>
    %101 = tpu.matmul %98, %100, %cst_126 {dimension_numbers = #tpu.dot_dimension_numbers<[1], [0], [0], [1], [0, 0, 1, 1], [], []>} : vector<256x128xbf16>, vector<128x128xbf16>, vector<256x128xf32> -> vector<256x128xf32>
    %102 = arith.addf %96, %101 : vector<256x128xf32>
    %c1_127 = arith.constant 1 : index
    %c0_128 = arith.constant 0 : index
    %c0_129 = arith.constant 0 : index
    %103 = vector.load %arg9[%c1_127, %c0_128, %c0_129] : memref<18x24x128xbf16, #tpu.memory_space<vmem>>, vector<16x16x128xbf16>
    %104 = vector.shape_cast %103 : vector<16x16x128xbf16> to vector<256x128xbf16>
    %c3_130 = arith.constant 3 : index
    %c0_131 = arith.constant 0 : index
    %c0_132 = arith.constant 0 : index
    %105 = vector.load %arg5[%c3_130, %c0_131, %c0_132] : memref<9x128x128xbf16, #tpu.memory_space<vmem>>, vector<1x128x128xbf16>
    %106 = vector.shape_cast %105 : vector<1x128x128xbf16> to vector<128x128xbf16>
    %cst_133 = arith.constant dense<0.000000e+00> : vector<256x128xf32>
    %107 = tpu.matmul %104, %106, %cst_133 {dimension_numbers = #tpu.dot_dimension_numbers<[1], [0], [0], [1], [0, 0, 1, 1], [], []>} : vector<256x128xbf16>, vector<128x128xbf16>, vector<256x128xf32> -> vector<256x128xf32>
    %108 = arith.addf %102, %107 : vector<256x128xf32>
    %c1_134 = arith.constant 1 : index
    %c1_135 = arith.constant 1 : index
    %c0_136 = arith.constant 0 : index
    %109 = vector.load %arg9[%c1_134, %c1_135, %c0_136] : memref<18x24x128xbf16, #tpu.memory_space<vmem>>, vector<16x16x128xbf16>
    %110 = vector.shape_cast %109 : vector<16x16x128xbf16> to vector<256x128xbf16>
    %c4_137 = arith.constant 4 : index
    %c0_138 = arith.constant 0 : index
    %c0_139 = arith.constant 0 : index
    %111 = vector.load %arg5[%c4_137, %c0_138, %c0_139] : memref<9x128x128xbf16, #tpu.memory_space<vmem>>, vector<1x128x128xbf16>
    %112 = vector.shape_cast %111 : vector<1x128x128xbf16> to vector<128x128xbf16>
    %cst_140 = arith.constant dense<0.000000e+00> : vector<256x128xf32>
    %113 = tpu.matmul %110, %112, %cst_140 {dimension_numbers = #tpu.dot_dimension_numbers<[1], [0], [0], [1], [0, 0, 1, 1], [], []>} : vector<256x128xbf16>, vector<128x128xbf16>, vector<256x128xf32> -> vector<256x128xf32>
    %114 = arith.addf %108, %113 : vector<256x128xf32>
    %c1_141 = arith.constant 1 : index
    %c2_142 = arith.constant 2 : index
    %c0_143 = arith.constant 0 : index
    %115 = vector.load %arg9[%c1_141, %c2_142, %c0_143] : memref<18x24x128xbf16, #tpu.memory_space<vmem>>, vector<16x16x128xbf16>
    %116 = vector.shape_cast %115 : vector<16x16x128xbf16> to vector<256x128xbf16>
    %c5_144 = arith.constant 5 : index
    %c0_145 = arith.constant 0 : index
    %c0_146 = arith.constant 0 : index
    %117 = vector.load %arg5[%c5_144, %c0_145, %c0_146] : memref<9x128x128xbf16, #tpu.memory_space<vmem>>, vector<1x128x128xbf16>
    %118 = vector.shape_cast %117 : vector<1x128x128xbf16> to vector<128x128xbf16>
    %cst_147 = arith.constant dense<0.000000e+00> : vector<256x128xf32>
    %119 = tpu.matmul %116, %118, %cst_147 {dimension_numbers = #tpu.dot_dimension_numbers<[1], [0], [0], [1], [0, 0, 1, 1], [], []>} : vector<256x128xbf16>, vector<128x128xbf16>, vector<256x128xf32> -> vector<256x128xf32>
    %120 = arith.addf %114, %119 : vector<256x128xf32>
    %c2_148 = arith.constant 2 : index
    %c0_149 = arith.constant 0 : index
    %c0_150 = arith.constant 0 : index
    %121 = vector.load %arg9[%c2_148, %c0_149, %c0_150] : memref<18x24x128xbf16, #tpu.memory_space<vmem>>, vector<16x16x128xbf16>
    %122 = vector.shape_cast %121 : vector<16x16x128xbf16> to vector<256x128xbf16>
    %c6_151 = arith.constant 6 : index
    %c0_152 = arith.constant 0 : index
    %c0_153 = arith.constant 0 : index
    %123 = vector.load %arg5[%c6_151, %c0_152, %c0_153] : memref<9x128x128xbf16, #tpu.memory_space<vmem>>, vector<1x128x128xbf16>
    %124 = vector.shape_cast %123 : vector<1x128x128xbf16> to vector<128x128xbf16>
    %cst_154 = arith.constant dense<0.000000e+00> : vector<256x128xf32>
    %125 = tpu.matmul %122, %124, %cst_154 {dimension_numbers = #tpu.dot_dimension_numbers<[1], [0], [0], [1], [0, 0, 1, 1], [], []>} : vector<256x128xbf16>, vector<128x128xbf16>, vector<256x128xf32> -> vector<256x128xf32>
    %126 = arith.addf %120, %125 : vector<256x128xf32>
    %c2_155 = arith.constant 2 : index
    %c1_156 = arith.constant 1 : index
    %c0_157 = arith.constant 0 : index
    %127 = vector.load %arg9[%c2_155, %c1_156, %c0_157] : memref<18x24x128xbf16, #tpu.memory_space<vmem>>, vector<16x16x128xbf16>
    %128 = vector.shape_cast %127 : vector<16x16x128xbf16> to vector<256x128xbf16>
    %c7_158 = arith.constant 7 : index
    %c0_159 = arith.constant 0 : index
    %c0_160 = arith.constant 0 : index
    %129 = vector.load %arg5[%c7_158, %c0_159, %c0_160] : memref<9x128x128xbf16, #tpu.memory_space<vmem>>, vector<1x128x128xbf16>
    %130 = vector.shape_cast %129 : vector<1x128x128xbf16> to vector<128x128xbf16>
    %cst_161 = arith.constant dense<0.000000e+00> : vector<256x128xf32>
    %131 = tpu.matmul %128, %130, %cst_161 {dimension_numbers = #tpu.dot_dimension_numbers<[1], [0], [0], [1], [0, 0, 1, 1], [], []>} : vector<256x128xbf16>, vector<128x128xbf16>, vector<256x128xf32> -> vector<256x128xf32>
    %132 = arith.addf %126, %131 : vector<256x128xf32>
    %c2_162 = arith.constant 2 : index
    %c2_163 = arith.constant 2 : index
    %c0_164 = arith.constant 0 : index
    %133 = vector.load %arg9[%c2_162, %c2_163, %c0_164] : memref<18x24x128xbf16, #tpu.memory_space<vmem>>, vector<16x16x128xbf16>
    %134 = vector.shape_cast %133 : vector<16x16x128xbf16> to vector<256x128xbf16>
    %c8_165 = arith.constant 8 : index
    %c0_166 = arith.constant 0 : index
    %c0_167 = arith.constant 0 : index
    %135 = vector.load %arg5[%c8_165, %c0_166, %c0_167] : memref<9x128x128xbf16, #tpu.memory_space<vmem>>, vector<1x128x128xbf16>
    %136 = vector.shape_cast %135 : vector<1x128x128xbf16> to vector<128x128xbf16>
    %cst_168 = arith.constant dense<0.000000e+00> : vector<256x128xf32>
    %137 = tpu.matmul %134, %136, %cst_168 {dimension_numbers = #tpu.dot_dimension_numbers<[1], [0], [0], [1], [0, 0, 1, 1], [], []>} : vector<256x128xbf16>, vector<128x128xbf16>, vector<256x128xf32> -> vector<256x128xf32>
    %138 = arith.addf %132, %137 : vector<256x128xf32>
    %c0_169 = arith.constant 0 : index
    %c0_170 = arith.constant 0 : index
    %139 = vector.load %arg6[%c0_169, %c0_170] : memref<1x128xf32, #tpu.memory_space<vmem>>, vector<1x128xf32>
    %140 = vector.broadcast %139 : vector<1x128xf32> to vector<256x128xf32>
    %141 = arith.mulf %138, %140 : vector<256x128xf32>
    %c0_171 = arith.constant 0 : index
    %c0_172 = arith.constant 0 : index
    %142 = vector.load %arg7[%c0_171, %c0_172] : memref<1x128xf32, #tpu.memory_space<vmem>>, vector<1x128xf32>
    %143 = vector.broadcast %142 : vector<1x128xf32> to vector<256x128xf32>
    %144 = arith.addf %141, %143 : vector<256x128xf32>
    %145 = vector.extract_strided_slice %144 {offsets = [0, 0], sizes = [256, 4], strides = [1, 1]} : vector<256x128xf32> to vector<256x4xf32>
    %146 = vector.shape_cast %145 : vector<256x4xf32> to vector<16x16x4xf32>
    %c0_173 = arith.constant 0 : index
    %c0_174 = arith.constant 0 : index
    %c0_175 = arith.constant 0 : index
    %c0_176 = arith.constant 0 : index
    %147 = vector.load %arg1[%c0_173, %c0_174, %c0_175, %c0_176] : memref<1x16x16x4xf32, #tpu.memory_space<vmem>>, vector<1x16x16x4xf32>
    %148 = vector.shape_cast %147 : vector<1x16x16x4xf32> to vector<16x16x4xf32>
    %149 = arith.addf %148, %146 : vector<16x16x4xf32>
    %c0_177 = arith.constant 0 : index
    %c0_178 = arith.constant 0 : index
    %c0_179 = arith.constant 0 : index
    %c0_180 = arith.constant 0 : index
    %150 = vector.load %arg8[%c0_177, %c0_178, %c0_179, %c0_180] : memref<1x16x16x4xf32, #tpu.memory_space<vmem>>, vector<1x16x16x4xf32>
    %151 = vector.shape_cast %150 : vector<1x16x16x4xf32> to vector<16x16x4xf32>
    %152 = vector.shape_cast %149 : vector<16x16x4xf32> to vector<1x16x16x4xf32>
    tpu.vector_store %arg8[%c0_177, %c0_178, %c0_179, %c0_180], %152 {strides = array<i32>} : memref<1x16x16x4xf32, #tpu.memory_space<vmem>>, vector<1x16x16x4xf32>,
    return
  }
  func.func @transform_0(%arg0: i32) -> (i32, i32, i32, i32) {
    %c0_i32 = arith.constant 0 : i32
    %c0_i32_0 = arith.constant 0 : i32
    %c0_i32_1 = arith.constant 0 : i32
    %c0_i32_2 = arith.constant 0 : i32
    return %arg0, %c0_i32, %c0_i32_0, %c0_i32_1 : i32, i32, i32, i32
  }
  func.func @transform_1(%arg0: i32) -> (i32, i32, i32) {
    %c0_i32 = arith.constant 0 : i32
    %c0_i32_0 = arith.constant 0 : i32
    %c0_i32_1 = arith.constant 0 : i32
    %c0_i32_2 = arith.constant 0 : i32
    return %c0_i32, %c0_i32_0, %c0_i32_1 : i32, i32, i32
  }
  func.func @transform_2(%arg0: i32) -> (i32, i32) {
    %c0_i32 = arith.constant 0 : i32
    %c0_i32_0 = arith.constant 0 : i32
    %c0_i32_1 = arith.constant 0 : i32
    return %c0_i32, %c0_i32_0 : i32, i32
  }
  func.func @transform_3(%arg0: i32) -> (i32, i32) {
    %c0_i32 = arith.constant 0 : i32
    %c0_i32_0 = arith.constant 0 : i32
    %c0_i32_1 = arith.constant 0 : i32
    return %c0_i32, %c0_i32_0 : i32, i32
  }
  func.func @transform_4(%arg0: i32) -> (i32, i32, i32) {
    %c0_i32 = arith.constant 0 : i32
    %c0_i32_0 = arith.constant 0 : i32
    %c0_i32_1 = arith.constant 0 : i32
    %c0_i32_2 = arith.constant 0 : i32
    return %c0_i32, %c0_i32_0, %c0_i32_1 : i32, i32, i32
  }
  func.func @transform_5(%arg0: i32) -> (i32, i32) {
    %c0_i32 = arith.constant 0 : i32
    %c0_i32_0 = arith.constant 0 : i32
    %c0_i32_1 = arith.constant 0 : i32
    return %c0_i32, %c0_i32_0 : i32, i32
  }
  func.func @transform_6(%arg0: i32) -> (i32, i32) {
    %c0_i32 = arith.constant 0 : i32
    %c0_i32_0 = arith.constant 0 : i32
    %c0_i32_1 = arith.constant 0 : i32
    return %c0_i32, %c0_i32_0 : i32, i32
  }
  func.func @transform_7(%arg0: i32) -> (i32, i32, i32, i32) {
    %c0_i32 = arith.constant 0 : i32
    %c0_i32_0 = arith.constant 0 : i32
    %c0_i32_1 = arith.constant 0 : i32
    %c0_i32_2 = arith.constant 0 : i32
    return %arg0, %c0_i32, %c0_i32_0, %c0_i32_1 : i32, i32, i32, i32
  }
}

</mosaic_0001>

<llo_original>
// kernel: residual_block_forward.1
$region0: #{residual_block_forward.1}
  #allocation0 [shape = 'u32[]', space=smem, size = 0x4, offset = 0x4, fixed_abs, tag = 'smem constant byte address 0x4 - core index']
  #allocation1 [shape = 'u32[144,128]{1,0:T(1,128)}', space=vmem, size = 0x12000, scoped, tag = 'internal scratch']
  #allocation2 [shape = 'bf16[18,24,128]{2,1,0:T(8,128)(2,1)}', space=vmem, size = 0x1b000, scoped, tag = 'scratch operand']
  %s0 = inlined_call_operand.vmem [shape: f32[2,16,16,4], index: 0, kind: input, shape index: {}]
  %s1 = inlined_call_operand.vmem [shape: bf16[9,128,128], index: 1, kind: input, shape index: {}]
  %s2 = inlined_call_operand.vmem [shape: f32[1,128], index: 2, kind: input, shape index: {}]
  %s3 = inlined_call_operand.vmem [shape: f32[1,128], index: 3, kind: input, shape index: {}]
  %s4 = inlined_call_operand.vmem [shape: bf16[9,128,128], index: 4, kind: input, shape index: {}]
  %s5 = inlined_call_operand.vmem [shape: f32[1,128], index: 5, kind: input, shape index: {}]
  %s6 = inlined_call_operand.vmem [shape: f32[1,128], index: 6, kind: input, shape index: {}]
  %s7 = inlined_call_operand.vmem [shape: f32[2,16,16,4], index: 7, kind: output, shape index: {}]
  %s8 = sld [smem:[#allocation0]]
  $region61: #{residual_block_forward.1} parent=0
    _
  %s10 = ssub.s32 1, %s8
  %s11 = scalar_select 0, %s10, %s8
  loop: start=0, step=1, limit=4
  $region2: #{residual_block_forward.1} parent=0 // loop_pre_header
    _
  $region3: #{residual_block_forward.1} parent=0 // loop_header
    %s13 = sphi 0, %s17
    %p14 = scmp.ge.s32.totalorder %s13, 4
    %s23 = sphi 0, %s25
    %s26 = sphi 0, %s23
    %s27 = sphi 0, %s26
    %s43 = sphi 0, %s27
    %s47 = sphi 0, %s47
    %s49 = sphi 0, %s47
    %s50 = sphi 0, %s49
    %s64 = sphi 0, %s50
    %s68 = sphi 0, %s68
    %s70 = sphi 0, %s68
    %s71 = sphi 0, %s70
    %s85 = sphi 0, %s71
    %s89 = sphi 0, %s89
    %s91 = sphi 0, %s89
    %s92 = sphi 0, %s91
    %s106 = sphi 0, %s92
    %s110 = sphi 0, %s110
    %s112 = sphi 0, %s110
    %s113 = sphi 0, %s112
    %s127 = sphi 0, %s113
    %s131 = sphi 0, %s131
    %s133 = sphi 0, %s131
    %s134 = sphi 0, %s133
    %s148 = sphi 0, %s134
    %s152 = sphi 0, %s152
    %s154 = sphi 0, %s152
    %s155 = sphi 0, %s154
    %s169 = sphi 0, %s155
    %s175 = sphi 0, %s177
    %s178 = sphi 0, %s175
    %s179 = sphi 0, %s178
    %s195 = sphi 0, %s179
  $region4: #{residual_block_forward.1} parent=0 // loop_header_branch
    %16 = sbr.rel (%p14) target = $region8
  $region5: #{residual_block_forward.1} parent=0 // loop_body
    %s18 = ssub.s32 %s13, 1
    %s19 = ssub.s32 %s13, 2
    %s20 = sadd.s32 %s13, 1
    %s21 = ssub.s32 %s13, %s20
    %p22 = scmp.eq.s32.totalorder %s21, 0
    %s24 = sadd.s32 %s23, 1
    %s25 = scalar_select %p22, %s23, %s24
    %p28 = pneg %p22
    %p29 = scmp.eq.s32.totalorder %s13, 1
    %p30 = por %p28, %p29
    %p31 = scmp.ne.s32.totalorder %s23, %s26
    %p32 = scmp.eq.s32.totalorder %s13, 0
    %p33 = por %p31, %p32
    %p34 = scmp.ne.s32.totalorder %s23, %s26
    %p35 = scmp.eq.s32.totalorder %s18, 1
    %p36 = por %p34, %p35
    %p37 = scmp.ne.s32.totalorder %s26, %s27
    %p38 = scmp.eq.s32.totalorder %s18, 0
    %p39 = por %p37, %p38
    %p40 = scmp.ne.s32.totalorder %s26, %s27
    %p41 = scmp.eq.s32.totalorder %s19, 1
    %p42 = por %p40, %p41
    %p44 = scmp.ne.s32.totalorder %s27, %s43
    %p45 = scmp.eq.s32.totalorder %s19, 0
    %p46 = por %p44, %p45
    %s48 = sadd.s32 %s47, 1
    %p51 = scmp.eq.s32.totalorder %s13, 1
    %p52 = scmp.ne.s32.totalorder %s47, %s49
    %p53 = scmp.eq.s32.totalorder %s13, 0
    %p54 = por %p52, %p53
    %p55 = scmp.ne.s32.totalorder %s47, %s49
    %p56 = scmp.eq.s32.totalorder %s18, 1
    %p57 = por %p55, %p56
    %p58 = scmp.ne.s32.totalorder %s49, %s50
    %p59 = scmp.eq.s32.totalorder %s18, 0
    %p60 = por %p58, %p59
    %p61 = scmp.ne.s32.totalorder %s49, %s50
    %p62 = scmp.eq.s32.totalorder %s19, 1
    %p63 = por %p61, %p62
    %p65 = scmp.ne.s32.totalorder %s50, %s64
    %p66 = scmp.eq.s32.totalorder %s19, 0
    %p67 = por %p65, %p66
    %s69 = sadd.s32 %s68, 1
    %p72 = scmp.eq.s32.totalorder %s13, 1
    %p73 = scmp.ne.s32.totalorder %s68, %s70
    %p74 = scmp.eq.s32.totalorder %s13, 0
    %p75 = por %p73, %p74
    %p76 = scmp.ne.s32.totalorder %s68, %s70
    %p77 = scmp.eq.s32.totalorder %s18, 1
    %p78 = por %p76, %p77
    %p79 = scmp.ne.s32.totalorder %s70, %s71
    %p80 = scmp.eq.s32.totalorder %s18, 0
    %p81 = por %p79, %p80
    %p82 = scmp.ne.s32.totalorder %s70, %s71
    %p83 = scmp.eq.s32.totalorder %s19, 1
    %p84 = por %p82, %p83
    %p86 = scmp.ne.s32.totalorder %s71, %s85
    %p87 = scmp.eq.s32.totalorder %s19, 0
    %p88 = por %p86, %p87
    %s90 = sadd.s32 %s89, 1
    %p93 = scmp.eq.s32.totalorder %s13, 1
    %p94 = scmp.ne.s32.totalorder %s89, %s91
    %p95 = scmp.eq.s32.totalorder %s13, 0
    %p96 = por %p94, %p95
    %p97 = scmp.ne.s32.totalorder %s89, %s91
    %p98 = scmp.eq.s32.totalorder %s18, 1
    %p99 = por %p97, %p98
    %p100 = scmp.ne.s32.totalorder %s91, %s92
    %p101 = scmp.eq.s32.totalorder %s18, 0
    %p102 = por %p100, %p101
    %p103 = scmp.ne.s32.totalorder %s91, %s92
    %p104 = scmp.eq.s32.totalorder %s19, 1
    %p105 = por %p103, %p104
    %p107 = scmp.ne.s32.totalorder %s92, %s106
    %p108 = scmp.eq.s32.totalorder %s19, 0
    %p109 = por %p107, %p108
    %s111 = sadd.s32 %s110, 1
    %p114 = scmp.eq.s32.totalorder %s13, 1
    %p115 = scmp.ne.s32.totalorder %s110, %s112
    %p116 = scmp.eq.s32.totalorder %s13, 0
    %p117 = por %p115, %p116
    %p118 = scmp.ne.s32.totalorder %s110, %s112
    %p119 = scmp.eq.s32.totalorder %s18, 1
    %p120 = por %p118, %p119
    %p121 = scmp.ne.s32.totalorder %s112, %s113
    %p122 = scmp.eq.s32.totalorder %s18, 0
    %p123 = por %p121, %p122
    %p124 = scmp.ne.s32.totalorder %s112, %s113
    %p125 = scmp.eq.s32.totalorder %s19, 1
    %p126 = por %p124, %p125
    %p128 = scmp.ne.s32.totalorder %s113, %s127
    %p129 = scmp.eq.s32.totalorder %s19, 0
    %p130 = por %p128, %p129
    %s132 = sadd.s32 %s131, 1
    %p135 = scmp.eq.s32.totalorder %s13, 1
    %p136 = scmp.ne.s32.totalorder %s131, %s133
    %p137 = scmp.eq.s32.totalorder %s13, 0
    %p138 = por %p136, %p137
    %p139 = scmp.ne.s32.totalorder %s131, %s133
    %p140 = scmp.eq.s32.totalorder %s18, 1
    %p141 = por %p139, %p140
    %p142 = scmp.ne.s32.totalorder %s133, %s134
    %p143 = scmp.eq.s32.totalorder %s18, 0
    %p144 = por %p142, %p143
    %p145 = scmp.ne.s32.totalorder %s133, %s134
    %p146 = scmp.eq.s32.totalorder %s19, 1
    %p147 = por %p145, %p146
    %p149 = scmp.ne.s32.totalorder %s134, %s148
    %p150 = scmp.eq.s32.totalorder %s19, 0
    %p151 = por %p149, %p150
    %s153 = sadd.s32 %s152, 1
    %p156 = scmp.eq.s32.totalorder %s13, 1
    %p157 = scmp.ne.s32.totalorder %s152, %s154
    %p158 = scmp.eq.s32.totalorder %s13, 0
    %p159 = por %p157, %p158
    %p160 = scmp.ne.s32.totalorder %s152, %s154
    %p161 = scmp.eq.s32.totalorder %s18, 1
    %p162 = por %p160, %p161
    %p163 = scmp.ne.s32.totalorder %s154, %s155
    %p164 = scmp.eq.s32.totalorder %s18, 0
    %p165 = por %p163, %p164
    %p166 = scmp.ne.s32.totalorder %s154, %s155
    %p167 = scmp.eq.s32.totalorder %s19, 1
    %p168 = por %p166, %p167
    %p170 = scmp.ne.s32.totalorder %s155, %s169
    %p171 = scmp.eq.s32.totalorder %s19, 0
    %p172 = por %p170, %p171
    %s173 = ssub.s32 %s13, %s20
    %p174 = scmp.eq.s32.totalorder %s173, 0
    %s176 = sadd.s32 %s175, 1
    %s177 = scalar_select %p174, %s175, %s176
    %p180 = pneg %p174
    %p181 = scmp.eq.s32.totalorder %s13, 1
    %p182 = por %p180, %p181
    %p183 = scmp.ne.s32.totalorder %s175, %s178
    %p184 = scmp.eq.s32.totalorder %s13, 0
    %p185 = por %p183, %p184
    %p186 = scmp.ne.s32.totalorder %s175, %s178
    %p187 = scmp.eq.s32.totalorder %s18, 1
    %p188 = por %p186, %p187
    %p189 = scmp.ne.s32.totalorder %s178, %s179
    %p190 = scmp.eq.s32.totalorder %s18, 0
    %p191 = por %p189, %p190
    %p192 = scmp.ne.s32.totalorder %s178, %s179
    %p193 = scmp.eq.s32.totalorder %s19, 1
    %p194 = por %p192, %p193
    %p196 = scmp.ne.s32.totalorder %s179, %s195
    %p197 = scmp.eq.s32.totalorder %s19, 0
    %p198 = por %p196, %p197
    %p199 = scmp.le.s32.totalorder 1, %s13
    %p200 = scmp.lt.s32.totalorder %s13, 3
    %p201 = pnand %p199, %p200
    %p202 = pneg %p201
    // Predicated region
    $region9: #{residual_block_forward.1} parent=5 // pred_check
      _
    $region10: #{residual_block_forward.1} parent=5 // pred_check_branch
      %204 = sbr.rel (%p201) target = $region12
    $region11: #{residual_block_forward.1} parent=5 // pred_region
      %s205 = ssub.s32 %s13, 1
      // Predicated region
      $region13: #{residual_block_forward.1} parent=11 // pred_check
        %p206 = pneg %p60
      $region14: #{residual_block_forward.1} parent=11 // pred_check_branch
        %208 = sbr.rel (%p206) target = $region16
      $region15: #{residual_block_forward.1} parent=11 // pred_region
        _
      $region16: #{residual_block_forward.1} parent=11 // pred_fallthru
        _
      // Predicated region
      $region17: #{residual_block_forward.1} parent=11 // pred_check
        %p209 = pneg %p81
      $region18: #{residual_block_forward.1} parent=11 // pred_check_branch
        %211 = sbr.rel (%p209) target = $region20
      $region19: #{residual_block_forward.1} parent=11 // pred_region
        _
      $region20: #{residual_block_forward.1} parent=11 // pred_fallthru
        _
      // Predicated region
      $region21: #{residual_block_forward.1} parent=11 // pred_check
        %p212 = pneg %p102
      $region22: #{residual_block_forward.1} parent=11 // pred_check_branch
        %214 = sbr.rel (%p212) target = $region24
      $region23: #{residual_block_forward.1} parent=11 // pred_region
        _
      $region24: #{residual_block_forward.1} parent=11 // pred_fallthru
        _
      // Predicated region
      $region25: #{residual_block_forward.1} parent=11 // pred_check
        %p215 = pneg %p123
      $region26: #{residual_block_forward.1} parent=11 // pred_check_branch
        %217 = sbr.rel (%p215) target = $region28
      $region27: #{residual_block_forward.1} parent=11 // pred_region
        _
      $region28: #{residual_block_forward.1} parent=11 // pred_fallthru
        _
      // Predicated region
      $region29: #{residual_block_forward.1} parent=11 // pred_check
        %p218 = pneg %p144
      $region30: #{residual_block_forward.1} parent=11 // pred_check_branch
        %220 = sbr.rel (%p218) target = $region32
      $region31: #{residual_block_forward.1} parent=11 // pred_region
        _
      $region32: #{residual_block_forward.1} parent=11 // pred_fallthru
        _
      // Predicated region
      $region33: #{residual_block_forward.1} parent=11 // pred_check
        %p221 = pneg %p165
      $region34: #{residual_block_forward.1} parent=11 // pred_check_branch
        %223 = sbr.rel (%p221) target = $region36
      $region35: #{residual_block_forward.1} parent=11 // pred_region
        _
      $region36: #{residual_block_forward.1} parent=11 // pred_fallthru
        _
    $region12: #{residual_block_forward.1} parent=5 // pred_fallthru
      _
    %p224 = scmp.lt.s32.totalorder %s13, 2
    // Predicated region
    $region37: #{residual_block_forward.1} parent=5 // pred_check
      %p225 = pneg %p224
    $region38: #{residual_block_forward.1} parent=5 // pred_check_branch
      %227 = sbr.rel (%p225) target = $region40
    $region39: #{residual_block_forward.1} parent=5 // pred_region
      // Predicated region
      $region41: #{residual_block_forward.1} parent=39 // pred_check
        %p228 = pneg %p33
      $region42: #{residual_block_forward.1} parent=39 // pred_check_branch
        %230 = sbr.rel (%p228) target = $region44
      $region43: #{residual_block_forward.1} parent=39 // pred_region
        %p231 = scmp.lt.s32.totalorder %s13, 1
        %s232 = scalar_select %p231, %s13, 1
        %s233 = smul.addr %s232, 32
        %s234 = smul.addr %s233, 8
        %s235 = scalar_lea.vmem %s0, %s234
      $region44: #{residual_block_forward.1} parent=39 // pred_fallthru
        _
    $region40: #{residual_block_forward.1} parent=5 // pred_fallthru
      _
    %p236 = scmp.le.s32.totalorder 1, %s13
    %p237 = scmp.lt.s32.totalorder %s13, 3
    %p238 = pnand %p236, %p237
    %p239 = pneg %p238
    // Predicated region
    $region45: #{residual_block_forward.1} parent=5 // pred_check
      _
    $region46: #{residual_block_forward.1} parent=5 // pred_check_branch
      %241 = sbr.rel (%p238) target = $region48
    $region47: #{residual_block_forward.1} parent=5 // pred_region
      %s242 = ssub.s32 %s13, 1
      %p243 = scmp.lt.s32.totalorder %s18, 1
      %s244 = scalar_select %p243, %s18, 1
      %s245 = smul.addr %s244, 32
      %s246 = smul.addr %s245, 8
      %s247 = scalar_lea.vmem %s0, %s246
      %p248 = pneg %p39
      %p249 = pneg %p36
      %p250 = pneg %p60
      %p251 = pneg %p57
      %p252 = pneg %p81
      %p253 = pneg %p78
      %p254 = pneg %p102
      %p255 = pneg %p99
      %p256 = pneg %p123
      %p257 = pneg %p120
      %p258 = pneg %p144
      %p259 = pneg %p141
      %p260 = pneg %p165
      %p261 = pneg %p162
      %p262 = pneg %p191
      %p263 = pneg %p188
      %p264 = scmp.lt.s32.totalorder %s18, 1
      %s265 = scalar_select %p264, %s18, 1
      %s266 = smul.addr %s265, 32
      %s267 = smul.addr %s266, 8
      %s268 = scalar_lea.vmem %s7, %s267
      %p269 = scmp.lt.s32.totalorder %s18, 1
      %s270 = scalar_select %p269, %s18, 1
      %s271 = smul.addr %s270, 32
      %s272 = smul.addr %s271, 8
      %s273 = scalar_lea.vmem %s0, %s272
      %p274 = scmp.lt.s32.totalorder %s18, 1
      %s275 = scalar_select %p274, %s18, 1
      %s276 = smul.addr %s275, 32
      %s277 = smul.addr %s276, 8
      %s278 = scalar_lea.vmem %s7, %s277
      %280 = vst [vmem:[#allocation2] sm:$0xf] 0
      %281 = vst [vmem:[#allocation2 + $0x4] sm:$0xf] 0
      %282 = vst [vmem:[#allocation2 + $0x8] sm:$0xf] 0
      %283 = vst [vmem:[#allocation2 + $0xc] sm:$0xf] 0
      %284 = vst [vmem:[#allocation2 + $0x10] sm:$0xf] 0
      %285 = vst [vmem:[#allocation2 + $0x14] sm:$0xf] 0
      %286 = vst [vmem:[#allocation2 + $0x18] sm:$0xf] 0
      %287 = vst [vmem:[#allocation2 + $0x1c] sm:$0xf] 0
      %288 = vst [vmem:[#allocation2 + $0x20] sm:$0xf] 0
      %289 = vst [vmem:[#allocation2 + $0x24] sm:$0xf] 0
      %290 = vst [vmem:[#allocation2 + $0x28] sm:$0xf] 0
      %291 = vst [vmem:[#allocation2 + $0x2c] sm:$0xf] 0
      %292 = vst [vmem:[#allocation2 + $0x30] sm:$0xf] 0
      %293 = vst [vmem:[#allocation2 + $0x34] sm:$0xf] 0
      %294 = vst [vmem:[#allocation2 + $0x38] sm:$0xf] 0
      %295 = vst [vmem:[#allocation2 + $0x3c] sm:$0xf] 0
      %296 = vst [vmem:[#allocation2 + $0x40] sm:$0xf] 0
      %297 = vst [vmem:[#allocation2 + $0x44] sm:$0xf] 0
      %298 = vst [vmem:[#allocation2 + $0x48] sm:$0xf] 0
      %299 = vst [vmem:[#allocation2 + $0x4c] sm:$0xf] 0
      %300 = vst [vmem:[#allocation2 + $0x50] sm:$0xf] 0
      %301 = vst [vmem:[#allocation2 + $0x54] sm:$0xf] 0
      %302 = vst [vmem:[#allocation2 + $0x58] sm:$0xf] 0
      %303 = vst [vmem:[#allocation2 + $0x5c] sm:$0xf] 0
      %304 = vst [vmem:[#allocation2 + $0x60] sm:$0xf] 0
      %305 = vst [vmem:[#allocation2 + $0x64] sm:$0xf] 0
      %306 = vst [vmem:[#allocation2 + $0x68] sm:$0xf] 0
      %307 = vst [vmem:[#allocation2 + $0x6c] sm:$0xf] 0
      %308 = vst [vmem:[#allocation2 + $0x70] sm:$0xf] 0
      %309 = vst [vmem:[#allocation2 + $0x74] sm:$0xf] 0
      %310 = vst [vmem:[#allocation2 + $0x78] sm:$0xf] 0
      %311 = vst [vmem:[#allocation2 + $0x7c] sm:$0xf] 0
      %312 = vst [vmem:[#allocation2 + $0x80] sm:$0xf] 0
      %313 = vst [vmem:[#allocation2 + $0x84] sm:$0xf] 0
      %314 = vst [vmem:[#allocation2 + $0x88] sm:$0xf] 0
      %315 = vst [vmem:[#allocation2 + $0x8c] sm:$0xf] 0
      %316 = vst [vmem:[#allocation2 + $0x90] sm:$0xf] 0
      %317 = vst [vmem:[#allocation2 + $0x94] sm:$0xf] 0
      %318 = vst [vmem:[#allocation2 + $0x98] sm:$0xf] 0
      %319 = vst [vmem:[#allocation2 + $0x9c] sm:$0xf] 0
      %320 = vst [vmem:[#allocation2 + $0xa0] sm:$0xf] 0
      %321 = vst [vmem:[#allocation2 + $0xa4] sm:$0xf] 0
      %322 = vst [vmem:[#allocation2 + $0xa8] sm:$0xf] 0
      %323 = vst [vmem:[#allocation2 + $0xac] sm:$0xf] 0
      %324 = vst [vmem:[#allocation2 + $0xb0] sm:$0xf] 0
      %325 = vst [vmem:[#allocation2 + $0xb4] sm:$0xf] 0
      %326 = vst [vmem:[#allocation2 + $0xb8] sm:$0xf] 0
      %327 = vst [vmem:[#allocation2 + $0xbc] sm:$0xf] 0
      %328 = vst [vmem:[#allocation2 + $0xc0] sm:$0xf] 0
      %329 = vst [vmem:[#allocation2 + $0xc4] sm:$0xf] 0
      %330 = vst [vmem:[#allocation2 + $0xc8] sm:$0xf] 0
      %331 = vst [vmem:[#allocation2 + $0xcc] sm:$0xf] 0
      %332 = vst [vmem:[#allocation2 + $0xd0] sm:$0xf] 0
      %333 = vst [vmem:[#allocation2 + $0xd4] sm:$0xf] 0
      %v334 = vld [vmem:[%s273] sm:$0xff]
      %v335 = vld [vmem:[%s273 + $0x8] sm:$0xff]
      %v336 = vld [vmem:[%s273 + $0x10] sm:$0xff]
      %v337 = vld [vmem:[%s273 + $0x18] sm:$0xff]
      %v338 = vld [vmem:[%s273 + $0x20] sm:$0xff]
      %v339 = vld [vmem:[%s273 + $0x28] sm:$0xff]
      %v340 = vld [vmem:[%s273 + $0x30] sm:$0xff]
      %v341 = vld [vmem:[%s273 + $0x38] sm:$0xff]
      %v342 = vld [vmem:[%s273 + $0x40] sm:$0xff]
      %v343 = vld [vmem:[%s273 + $0x48] sm:$0xff]
      %v344 = vld [vmem:[%s273 + $0x50] sm:$0xff]
      %v345 = vld [vmem:[%s273 + $0x58] sm:$0xff]
      %v346 = vld [vmem:[%s273 + $0x60] sm:$0xff]
      %v347 = vld [vmem:[%s273 + $0x68] sm:$0xff]
      %v348 = vld [vmem:[%s273 + $0x70] sm:$0xff]
      %v349 = vld [vmem:[%s273 + $0x78] sm:$0xff]
      %v350 = vld [vmem:[%s273 + $0x80] sm:$0xff]
      %v351 = vld [vmem:[%s273 + $0x88] sm:$0xff]
      %v352 = vld [vmem:[%s273 + $0x90] sm:$0xff]
      %v353 = vld [vmem:[%s273 + $0x98] sm:$0xff]
      %v354 = vld [vmem:[%s273 + $0xa0] sm:$0xff]
      %v355 = vld [vmem:[%s273 + $0xa8] sm:$0xff]
      %v356 = vld [vmem:[%s273 + $0xb0] sm:$0xff]
      %v357 = vld [vmem:[%s273 + $0xb8] sm:$0xff]
      %v358 = vld [vmem:[%s273 + $0xc0] sm:$0xff]
      %v359 = vld [vmem:[%s273 + $0xc8] sm:$0xff]
      %v360 = vld [vmem:[%s273 + $0xd0] sm:$0xff]
      %v361 = vld [vmem:[%s273 + $0xd8] sm:$0xff]
      %v362 = vld [vmem:[%s273 + $0xe0] sm:$0xff]
      %v363 = vld [vmem:[%s273 + $0xe8] sm:$0xff]
      %v364 = vld [vmem:[%s273 + $0xf0] sm:$0xff]
      %v365 = vld [vmem:[%s273 + $0xf8] sm:$0xff]
      %v366 = vpack.c.bf16 %v335, %v334
      %v367 = vpack.c.bf16 %v337, %v336
      %v368 = vpack.c.bf16 %v339, %v338
      %v369 = vpack.c.bf16 %v341, %v340
      %v370 = vpack.c.bf16 %v343, %v342
      %v371 = vpack.c.bf16 %v345, %v344
      %v372 = vpack.c.bf16 %v347, %v346
      %v373 = vpack.c.bf16 %v349, %v348
      %v374 = vpack.c.bf16 %v351, %v350
      %v375 = vpack.c.bf16 %v353, %v352
      %v376 = vpack.c.bf16 %v355, %v354
      %v377 = vpack.c.bf16 %v357, %v356
      %v378 = vpack.c.bf16 %v359, %v358
      %v379 = vpack.c.bf16 %v361, %v360
      %v380 = vpack.c.bf16 %v363, %v362
      %v381 = vpack.c.bf16 %v365, %v364
      %v398 = vunpack.c.l.b16 %v366
      %v399 = vunpack.c.h.b16 %v366
      %v400 = vunpack.c.l.b16 %v367
      %v401 = vunpack.c.h.b16 %v367
      %v402 = vunpack.c.l.b16 %v368
      %v403 = vunpack.c.h.b16 %v368
      %v404 = vunpack.c.l.b16 %v369
      %v405 = vunpack.c.h.b16 %v369
      %v406 = vunpack.c.l.b16 %v370
      %v407 = vunpack.c.h.b16 %v370
      %v408 = vunpack.c.l.b16 %v371
      %v409 = vunpack.c.h.b16 %v371
      %v410 = vunpack.c.l.b16 %v372
      %v411 = vunpack.c.h.b16 %v372
      %v412 = vunpack.c.l.b16 %v373
      %v413 = vunpack.c.h.b16 %v373
      %v414 = vunpack.c.l.b16 %v374
      %v415 = vunpack.c.h.b16 %v374
      %v416 = vunpack.c.l.b16 %v375
      %v417 = vunpack.c.h.b16 %v375
      %v418 = vunpack.c.l.b16 %v376
      %v419 = vunpack.c.h.b16 %v376
      %v420 = vunpack.c.l.b16 %v377
      %v421 = vunpack.c.h.b16 %v377
      %v422 = vunpack.c.l.b16 %v378
      %v423 = vunpack.c.h.b16 %v378
      %v424 = vunpack.c.l.b16 %v379
      %v425 = vunpack.c.h.b16 %v379
      %v426 = vunpack.c.l.b16 %v380
      %v427 = vunpack.c.h.b16 %v380
      %v428 = vunpack.c.l.b16 %v381
      %v429 = vunpack.c.h.b16 %v381
      %v430 = vpack.c.b16 %v398, %v398
      %v431 = vpack.c.b16 %v399, %v399
      %v432 = vpack.c.b16 %v400, %v400
      %v433 = vpack.c.b16 %v401, %v401
      %v434 = vpack.c.b16 %v402, %v402
      %v435 = vpack.c.b16 %v403, %v403
      %v436 = vpack.c.b16 %v404, %v404
      %v437 = vpack.c.b16 %v405, %v405
      %v438 = vpack.c.b16 %v406, %v406
      %v439 = vpack.c.b16 %v407, %v407
      %v440 = vpack.c.b16 %v408, %v408
      %v441 = vpack.c.b16 %v409, %v409
      %v442 = vpack.c.b16 %v410, %v410
      %v443 = vpack.c.b16 %v411, %v411
      %v444 = vpack.c.b16 %v412, %v412
      %v445 = vpack.c.b16 %v413, %v413
      %v446 = vpack.c.b16 %v414, %v414
      %v447 = vpack.c.b16 %v415, %v415
      %v448 = vpack.c.b16 %v416, %v416
      %v449 = vpack.c.b16 %v417, %v417
      %v450 = vpack.c.b16 %v418, %v418
      %v451 = vpack.c.b16 %v419, %v419
      %v452 = vpack.c.b16 %v420, %v420
      %v453 = vpack.c.b16 %v421, %v421
      %v454 = vpack.c.b16 %v422, %v422
      %v455 = vpack.c.b16 %v423, %v423
      %v456 = vpack.c.b16 %v424, %v424
      %v457 = vpack.c.b16 %v425, %v425
      %v458 = vpack.c.b16 %v426, %v426
      %v459 = vpack.c.b16 %v427, %v427
      %v460 = vpack.c.b16 %v428, %v428
      %v461 = vpack.c.b16 %v429, %v429
      %vm462 = vsmask.f32 256
      %vm463 = vsmask.f32 4368
      %vm464 = vmor %vm462, %vm463
      %v466 = vshrl.u32 %v430, 16
      %v468 = vrot.slane %v466, 7
      %v469 = vshll.u32 %v430, 16
      %v471 = vor.u32 %v468, %v469
      %v472 = vrot.slane %v468, 4
      %v474 = vshrl.u32 %v431, 16
      %v476 = vrot.slane %v474, 7
      %v477 = vshll.u32 %v431, 16
      %v479 = vor.u32 %v476, %v477
      %v480 = vsel %vm464, %v472, %v479
      %v481 = vrot.slane %v476, 4
      %v483 = vshrl.u32 %v432, 16
      %v485 = vrot.slane %v483, 7
      %v486 = vshll.u32 %v432, 16
      %v488 = vor.u32 %v485, %v486
      %v489 = vrot.slane %v485, 4
      %v491 = vshrl.u32 %v433, 16
      %v493 = vrot.slane %v491, 7
      %v494 = vshll.u32 %v433, 16
      %v496 = vor.u32 %v493, %v494
      %v497 = vsel %vm464, %v489, %v496
      %v498 = vrot.slane %v493, 4
      %v500 = vshrl.u32 %v434, 16
      %v502 = vrot.slane %v500, 7
      %v503 = vshll.u32 %v434, 16
      %v505 = vor.u32 %v502, %v503
      %v506 = vrot.slane %v502, 4
      %v508 = vshrl.u32 %v435, 16
      %v510 = vrot.slane %v508, 7
      %v511 = vshll.u32 %v435, 16
      %v513 = vor.u32 %v510, %v511
      %v514 = vsel %vm464, %v506, %v513
      %v515 = vrot.slane %v510, 4
      %v517 = vshrl.u32 %v436, 16
      %v519 = vrot.slane %v517, 7
      %v520 = vshll.u32 %v436, 16
      %v522 = vor.u32 %v519, %v520
      %v523 = vrot.slane %v519, 4
      %v525 = vshrl.u32 %v437, 16
      %v527 = vrot.slane %v525, 7
      %v528 = vshll.u32 %v437, 16
      %v530 = vor.u32 %v527, %v528
      %v531 = vsel %vm464, %v523, %v530
      %v532 = vrot.slane %v527, 4
      %v534 = vshrl.u32 %v438, 16
      %v536 = vrot.slane %v534, 7
      %v537 = vshll.u32 %v438, 16
      %v539 = vor.u32 %v536, %v537
      %v540 = vrot.slane %v536, 4
      %v542 = vshrl.u32 %v439, 16
      %v544 = vrot.slane %v542, 7
      %v545 = vshll.u32 %v439, 16
      %v547 = vor.u32 %v544, %v545
      %v548 = vsel %vm464, %v540, %v547
      %v549 = vrot.slane %v544, 4
      %v551 = vshrl.u32 %v440, 16
      %v553 = vrot.slane %v551, 7
      %v554 = vshll.u32 %v440, 16
      %v556 = vor.u32 %v553, %v554
      %v557 = vrot.slane %v553, 4
      %v559 = vshrl.u32 %v441, 16
      %v561 = vrot.slane %v559, 7
      %v562 = vshll.u32 %v441, 16
      %v564 = vor.u32 %v561, %v562
      %v565 = vsel %vm464, %v557, %v564
      %v566 = vrot.slane %v561, 4
      %v568 = vshrl.u32 %v442, 16
      %v570 = vrot.slane %v568, 7
      %v571 = vshll.u32 %v442, 16
      %v573 = vor.u32 %v570, %v571
      %v574 = vrot.slane %v570, 4
      %v576 = vshrl.u32 %v443, 16
      %v578 = vrot.slane %v576, 7
      %v579 = vshll.u32 %v443, 16
      %v581 = vor.u32 %v578, %v579
      %v582 = vsel %vm464, %v574, %v581
      %v583 = vrot.slane %v578, 4
      %v585 = vshrl.u32 %v444, 16
      %v587 = vrot.slane %v585, 7
      %v588 = vshll.u32 %v444, 16
      %v590 = vor.u32 %v587, %v588
      %v591 = vrot.slane %v587, 4
      %v593 = vshrl.u32 %v445, 16
      %v595 = vrot.slane %v593, 7
      %v596 = vshll.u32 %v445, 16
      %v598 = vor.u32 %v595, %v596
      %v599 = vsel %vm464, %v591, %v598
      %v600 = vrot.slane %v595, 4
      %v602 = vshrl.u32 %v446, 16
      %v604 = vrot.slane %v602, 7
      %v605 = vshll.u32 %v446, 16
      %v607 = vor.u32 %v604, %v605
      %v608 = vrot.slane %v604, 4
      %v610 = vshrl.u32 %v447, 16
      %v612 = vrot.slane %v610, 7
      %v613 = vshll.u32 %v447, 16
      %v615 = vor.u32 %v612, %v613
      %v616 = vsel %vm464, %v608, %v615
      %v617 = vrot.slane %v612, 4
      %v619 = vshrl.u32 %v448, 16
      %v621 = vrot.slane %v619, 7
      %v622 = vshll.u32 %v448, 16
      %v624 = vor.u32 %v621, %v622
      %v625 = vrot.slane %v621, 4
      %v627 = vshrl.u32 %v449, 16
      %v629 = vrot.slane %v627, 7
      %v630 = vshll.u32 %v449, 16
      %v632 = vor.u32 %v629, %v630
      %v633 = vsel %vm464, %v625, %v632
      %v634 = vrot.slane %v629, 4
      %v636 = vshrl.u32 %v450, 16
      %v638 = vrot.slane %v636, 7
      %v639 = vshll.u32 %v450, 16
      %v641 = vor.u32 %v638, %v639
      %v642 = vrot.slane %v638, 4
      %v644 = vshrl.u32 %v451, 16
      %v646 = vrot.slane %v644, 7
      %v647 = vshll.u32 %v451, 16
      %v649 = vor.u32 %v646, %v647
      %v650 = vsel %vm464, %v642, %v649
      %v651 = vrot.slane %v646, 4
      %v653 = vshrl.u32 %v452, 16
      %v655 = vrot.slane %v653, 7
      %v656 = vshll.u32 %v452, 16
      %v658 = vor.u32 %v655, %v656
      %v659 = vrot.slane %v655, 4
      %v661 = vshrl.u32 %v453, 16
      %v663 = vrot.slane %v661, 7
      %v664 = vshll.u32 %v453, 16
      %v666 = vor.u32 %v663, %v664
      %v667 = vsel %vm464, %v659, %v666
      %v668 = vrot.slane %v663, 4
      %v670 = vshrl.u32 %v454, 16
      %v672 = vrot.slane %v670, 7
      %v673 = vshll.u32 %v454, 16
      %v675 = vor.u32 %v672, %v673
      %v676 = vrot.slane %v672, 4
      %v678 = vshrl.u32 %v455, 16
      %v680 = vrot.slane %v678, 7
      %v681 = vshll.u32 %v455, 16
      %v683 = vor.u32 %v680, %v681
      %v684 = vsel %vm464, %v676, %v683
      %v685 = vrot.slane %v680, 4
      %v687 = vshrl.u32 %v456, 16
      %v689 = vrot.slane %v687, 7
      %v690 = vshll.u32 %v456, 16
      %v692 = vor.u32 %v689, %v690
      %v693 = vrot.slane %v689, 4
      %v695 = vshrl.u32 %v457, 16
      %v697 = vrot.slane %v695, 7
      %v698 = vshll.u32 %v457, 16
      %v700 = vor.u32 %v697, %v698
      %v701 = vsel %vm464, %v693, %v700
      %v702 = vrot.slane %v697, 4
      %v704 = vshrl.u32 %v458, 16
      %v706 = vrot.slane %v704, 7
      %v707 = vshll.u32 %v458, 16
      %v709 = vor.u32 %v706, %v707
      %v710 = vrot.slane %v706, 4
      %v712 = vshrl.u32 %v459, 16
      %v714 = vrot.slane %v712, 7
      %v715 = vshll.u32 %v459, 16
      %v717 = vor.u32 %v714, %v715
      %v718 = vsel %vm464, %v710, %v717
      %v719 = vrot.slane %v714, 4
      %v721 = vshrl.u32 %v460, 16
      %v723 = vrot.slane %v721, 7
      %v724 = vshll.u32 %v460, 16
      %v726 = vor.u32 %v723, %v724
      %v727 = vrot.slane %v723, 4
      %v729 = vshrl.u32 %v461, 16
      %v731 = vrot.slane %v729, 7
      %v732 = vshll.u32 %v461, 16
      %v734 = vor.u32 %v731, %v732
      %v735 = vsel %vm464, %v727, %v734
      %v736 = vrot.slane %v731, 4
      %s785 = scalar_lea.vmem [#allocation2], 12
      %vm786 = vcmask 27648
      %vm787 = vsmask.f32 7938
      %vm788 = vmand %vm786, %vm787
      %v789 = vld [vmem:[%s785] sm:$0xf]
      %v790 = vsel %vm788, %v471, %v789
      %791 = vst [vmem:[%s785] sm:$0xf] %v790
      %vm792 = vcmask 27648
      %793 = vst.msk [vmem:[%s785 + $0x4] sm:$0xf] %vm792, %v480
      %vm794 = vcmask 24576
      %vm795 = vmand %vm794, %vm462
      %v796 = vld [vmem:[%s785 + $0x8] sm:$0x1]
      %v797 = vsel %vm795, %v481, %v796
      %798 = vst [vmem:[%s785 + $0x8] sm:$0x1] %v797
      %v799 = vld [vmem:[%s785 + $0xc] sm:$0xf]
      %v800 = vsel %vm788, %v488, %v799
      %801 = vst [vmem:[%s785 + $0xc] sm:$0xf] %v800
      %802 = vst.msk [vmem:[%s785 + $0x10] sm:$0xf] %vm792, %v497
      %v803 = vld [vmem:[%s785 + $0x14] sm:$0x1]
      %v804 = vsel %vm795, %v498, %v803
      %805 = vst [vmem:[%s785 + $0x14] sm:$0x1] %v804
      %v806 = vld [vmem:[%s785 + $0x18] sm:$0xf]
      %v807 = vsel %vm788, %v505, %v806
      %808 = vst [vmem:[%s785 + $0x18] sm:$0xf] %v807
      %809 = vst.msk [vmem:[%s785 + $0x1c] sm:$0xf] %vm792, %v514
      %v810 = vld [vmem:[%s785 + $0x20] sm:$0x1]
      %v811 = vsel %vm795, %v515, %v810
      %812 = vst [vmem:[%s785 + $0x20] sm:$0x1] %v811
      %v813 = vld [vmem:[%s785 + $0x24] sm:$0xf]
      %v814 = vsel %vm788, %v522, %v813
      %815 = vst [vmem:[%s785 + $0x24] sm:$0xf] %v814
      %816 = vst.msk [vmem:[%s785 + $0x28] sm:$0xf] %vm792, %v531
      %v817 = vld [vmem:[%s785 + $0x2c] sm:$0x1]
      %v818 = vsel %vm795, %v532, %v817
      %819 = vst [vmem:[%s785 + $0x2c] sm:$0x1] %v818
      %v820 = vld [vmem:[%s785 + $0x30] sm:$0xf]
      %v821 = vsel %vm788, %v539, %v820
      %822 = vst [vmem:[%s785 + $0x30] sm:$0xf] %v821
      %823 = vst.msk [vmem:[%s785 + $0x34] sm:$0xf] %vm792, %v548
      %v824 = vld [vmem:[%s785 + $0x38] sm:$0x1]
      %v825 = vsel %vm795, %v549, %v824
      %826 = vst [vmem:[%s785 + $0x38] sm:$0x1] %v825
      %v827 = vld [vmem:[%s785 + $0x3c] sm:$0xf]
      %v828 = vsel %vm788, %v556, %v827
      %829 = vst [vmem:[%s785 + $0x3c] sm:$0xf] %v828
      %830 = vst.msk [vmem:[%s785 + $0x40] sm:$0xf] %vm792, %v565
      %v831 = vld [vmem:[%s785 + $0x44] sm:$0x1]
      %v832 = vsel %vm795, %v566, %v831
      %833 = vst [vmem:[%s785 + $0x44] sm:$0x1] %v832
      %v834 = vld [vmem:[%s785 + $0x48] sm:$0xf]
      %v835 = vsel %vm788, %v573, %v834
      %836 = vst [vmem:[%s785 + $0x48] sm:$0xf] %v835
      %837 = vst.msk [vmem:[%s785 + $0x4c] sm:$0xf] %vm792, %v582
      %v838 = vld [vmem:[%s785 + $0x50] sm:$0x1]
      %v839 = vsel %vm795, %v583, %v838
      %840 = vst [vmem:[%s785 + $0x50] sm:$0x1] %v839
      %v841 = vld [vmem:[%s785 + $0x54] sm:$0xf]
      %v842 = vsel %vm788, %v590, %v841
      %843 = vst [vmem:[%s785 + $0x54] sm:$0xf] %v842
      %844 = vst.msk [vmem:[%s785 + $0x58] sm:$0xf] %vm792, %v599
      %v845 = vld [vmem:[%s785 + $0x5c] sm:$0x1]
      %v846 = vsel %vm795, %v600, %v845
      %847 = vst [vmem:[%s785 + $0x5c] sm:$0x1] %v846
      %v848 = vld [vmem:[%s785 + $0x60] sm:$0xf]
      %v849 = vsel %vm788, %v607, %v848
      %850 = vst [vmem:[%s785 + $0x60] sm:$0xf] %v849
      %851 = vst.msk [vmem:[%s785 + $0x64] sm:$0xf] %vm792, %v616
      %v852 = vld [vmem:[%s785 + $0x68] sm:$0x1]
      %v853 = vsel %vm795, %v617, %v852
      %854 = vst [vmem:[%s785 + $0x68] sm:$0x1] %v853
      %v855 = vld [vmem:[%s785 + $0x6c] sm:$0xf]
      %v856 = vsel %vm788, %v624, %v855
      %857 = vst [vmem:[%s785 + $0x6c] sm:$0xf] %v856
      %858 = vst.msk [vmem:[%s785 + $0x70] sm:$0xf] %vm792, %v633
      %v859 = vld [vmem:[%s785 + $0x74] sm:$0x1]
      %v860 = vsel %vm795, %v634, %v859
      %861 = vst [vmem:[%s785 + $0x74] sm:$0x1] %v860
      %v862 = vld [vmem:[%s785 + $0x78] sm:$0xf]
      %v863 = vsel %vm788, %v641, %v862
      %864 = vst [vmem:[%s785 + $0x78] sm:$0xf] %v863
      %865 = vst.msk [vmem:[%s785 + $0x7c] sm:$0xf] %vm792, %v650
      %v866 = vld [vmem:[%s785 + $0x80] sm:$0x1]
      %v867 = vsel %vm795, %v651, %v866
      %868 = vst [vmem:[%s785 + $0x80] sm:$0x1] %v867
      %v869 = vld [vmem:[%s785 + $0x84] sm:$0xf]
      %v870 = vsel %vm788, %v658, %v869
      %871 = vst [vmem:[%s785 + $0x84] sm:$0xf] %v870
      %872 = vst.msk [vmem:[%s785 + $0x88] sm:$0xf] %vm792, %v667
      %v873 = vld [vmem:[%s785 + $0x8c] sm:$0x1]
      %v874 = vsel %vm795, %v668, %v873
      %875 = vst [vmem:[%s785 + $0x8c] sm:$0x1] %v874
      %v876 = vld [vmem:[%s785 + $0x90] sm:$0xf]
      %v877 = vsel %vm788, %v675, %v876
      %878 = vst [vmem:[%s785 + $0x90] sm:$0xf] %v877
      %879 = vst.msk [vmem:[%s785 + $0x94] sm:$0xf] %vm792, %v684
      %v880 = vld [vmem:[%s785 + $0x98] sm:$0x1]
      %v881 = vsel %vm795, %v685, %v880
      %882 = vst [vmem:[%s785 + $0x98] sm:$0x1] %v881
      %v883 = vld [vmem:[%s785 + $0x9c] sm:$0xf]
      %v884 = vsel %vm788, %v692, %v883
      %885 = vst [vmem:[%s785 + $0x9c] sm:$0xf] %v884
      %886 = vst.msk [vmem:[%s785 + $0xa0] sm:$0xf] %vm792, %v701
      %v887 = vld [vmem:[%s785 + $0xa4] sm:$0x1]
      %v888 = vsel %vm795, %v702, %v887
      %889 = vst [vmem:[%s785 + $0xa4] sm:$0x1] %v888
      %v890 = vld [vmem:[%s785 + $0xa8] sm:$0xf]
      %v891 = vsel %vm788, %v709, %v890
      %892 = vst [vmem:[%s785 + $0xa8] sm:$0xf] %v891
      %893 = vst.msk [vmem:[%s785 + $0xac] sm:$0xf] %vm792, %v718
      %v894 = vld [vmem:[%s785 + $0xb0] sm:$0x1]
      %v895 = vsel %vm795, %v719, %v894
      %896 = vst [vmem:[%s785 + $0xb0] sm:$0x1] %v895
      %v897 = vld [vmem:[%s785 + $0xb4] sm:$0xf]
      %v898 = vsel %vm788, %v726, %v897
      %899 = vst [vmem:[%s785 + $0xb4] sm:$0xf] %v898
      %900 = vst.msk [vmem:[%s785 + $0xb8] sm:$0xf] %vm792, %v735
      %v901 = vld [vmem:[%s785 + $0xbc] sm:$0x1]
      %v902 = vsel %vm795, %v736, %v901
      %903 = vst [vmem:[%s785 + $0xbc] sm:$0x1] %v902
      %v904 = vld [vmem:[#allocation2] sm:$0xf]
      %v905 = vsel %vm788, %v488, %v904
      %906 = vst [vmem:[#allocation2] sm:$0xf] %v905
      %907 = vst.msk [vmem:[#allocation2 + $0x4] sm:$0xf] %vm792, %v497
      %v908 = vld [vmem:[#allocation2 + $0x8] sm:$0x1]
      %v909 = vsel %vm795, %v498, %v908
      %910 = vst [vmem:[#allocation2 + $0x8] sm:$0x1] %v909
      %s911 = scalar_lea.vmem [#allocation2], 204
      %v912 = vld [vmem:[%s911] sm:$0xf]
      %v913 = vsel %vm788, %v709, %v912
      %914 = vst [vmem:[%s911] sm:$0xf] %v913
      %915 = vst.msk [vmem:[%s911 + $0x4] sm:$0xf] %vm792, %v718
      %v916 = vld [vmem:[%s911 + $0x8] sm:$0x1]
      %v917 = vsel %vm795, %v719, %v916
      %918 = vst [vmem:[%s911 + $0x8] sm:$0x1] %v917
      %v919 = vld [vmem:[#allocation2] sm:$0x2]
      %v920 = vld [vmem:[#allocation2 + $0xc] sm:$0x2]
      %v921 = vld [vmem:[#allocation2 + $0x18] sm:$0x2]
      %v922 = vld [vmem:[#allocation2 + $0x24] sm:$0x2]
      %v923 = vld [vmem:[#allocation2 + $0x30] sm:$0x2]
      %v924 = vld [vmem:[#allocation2 + $0x3c] sm:$0x2]
      %v925 = vld [vmem:[#allocation2 + $0x48] sm:$0x2]
      %v926 = vld [vmem:[#allocation2 + $0x54] sm:$0x2]
      %v927 = vld [vmem:[#allocation2 + $0x60] sm:$0x2]
      %v928 = vld [vmem:[#allocation2 + $0x6c] sm:$0x2]
      %v929 = vld [vmem:[#allocation2 + $0x78] sm:$0x2]
      %v930 = vld [vmem:[#allocation2 + $0x84] sm:$0x2]
      %v931 = vld [vmem:[#allocation2 + $0x90] sm:$0x2]
      %v932 = vld [vmem:[#allocation2 + $0x9c] sm:$0x2]
      %v933 = vld [vmem:[#allocation2 + $0xa8] sm:$0x2]
      %v934 = vld [vmem:[#allocation2 + $0xb4] sm:$0x2]
      %v935 = vld [vmem:[#allocation2 + $0xc0] sm:$0x2]
      %v936 = vld [vmem:[#allocation2 + $0xcc] sm:$0x2]
      %v955 = vrot.slane %v919, 5
      %v956 = vrot.slane %v955, 4
      %v957 = vrot.slane %v920, 5
      %v958 = vrot.slane %v957, 4
      %v959 = vrot.slane %v921, 5
      %v960 = vrot.slane %v959, 4
      %v961 = vrot.slane %v922, 5
      %v962 = vrot.slane %v961, 4
      %v963 = vrot.slane %v923, 5
      %v964 = vrot.slane %v963, 4
      %v965 = vrot.slane %v924, 5
      %v966 = vrot.slane %v965, 4
      %v967 = vrot.slane %v925, 5
      %v968 = vrot.slane %v967, 4
      %v969 = vrot.slane %v926, 5
      %v970 = vrot.slane %v969, 4
      %v971 = vrot.slane %v927, 5
      %v972 = vrot.slane %v971, 4
      %v973 = vrot.slane %v928, 5
      %v974 = vrot.slane %v973, 4
      %v975 = vrot.slane %v929, 5
      %v976 = vrot.slane %v975, 4
      %v977 = vrot.slane %v930, 5
      %v978 = vrot.slane %v977, 4
      %v979 = vrot.slane %v931, 5
      %v980 = vrot.slane %v979, 4
      %v981 = vrot.slane %v932, 5
      %v982 = vrot.slane %v981, 4
      %v983 = vrot.slane %v933, 5
      %v984 = vrot.slane %v983, 4
      %v985 = vrot.slane %v934, 5
      %v986 = vrot.slane %v985, 4
      %v987 = vrot.slane %v935, 5
      %v988 = vrot.slane %v987, 4
      %v989 = vrot.slane %v936, 5
      %v990 = vrot.slane %v989, 4
      %vm1009 = vcmask 1040384
      %vm1010 = vmand %vm1009, %vm462
      %v1011 = vld [vmem:[#allocation2] sm:$0x1]
      %v1012 = vsel %vm1010, %v956, %v1011
      %1013 = vst [vmem:[#allocation2] sm:$0x1] %v1012
      %v1014 = vld [vmem:[#allocation2 + $0xc] sm:$0x1]
      %v1015 = vsel %vm1010, %v958, %v1014
      %1016 = vst [vmem:[#allocation2 + $0xc] sm:$0x1] %v1015
      %v1017 = vld [vmem:[#allocation2 + $0x18] sm:$0x1]
      %v1018 = vsel %vm1010, %v960, %v1017
      %1019 = vst [vmem:[#allocation2 + $0x18] sm:$0x1] %v1018
      %v1020 = vld [vmem:[#allocation2 + $0x24] sm:$0x1]
      %v1021 = vsel %vm1010, %v962, %v1020
      %1022 = vst [vmem:[#allocation2 + $0x24] sm:$0x1] %v1021
      %v1023 = vld [vmem:[#allocation2 + $0x30] sm:$0x1]
      %v1024 = vsel %vm1010, %v964, %v1023
      %1025 = vst [vmem:[#allocation2 + $0x30] sm:$0x1] %v1024
      %v1026 = vld [vmem:[#allocation2 + $0x3c] sm:$0x1]
      %v1027 = vsel %vm1010, %v966, %v1026
      %1028 = vst [vmem:[#allocation2 + $0x3c] sm:$0x1] %v1027
      %v1029 = vld [vmem:[#allocation2 + $0x48] sm:$0x1]
      %v1030 = vsel %vm1010, %v968, %v1029
      %1031 = vst [vmem:[#allocation2 + $0x48] sm:$0x1] %v1030
      %v1032 = vld [vmem:[#allocation2 + $0x54] sm:$0x1]
      %v1033 = vsel %vm1010, %v970, %v1032
      %1034 = vst [vmem:[#allocation2 + $0x54] sm:$0x1] %v1033
      %v1035 = vld [vmem:[#allocation2 + $0x60] sm:$0x1]
      %v1036 = vsel %vm1010, %v972, %v1035
      %1037 = vst [vmem:[#allocation2 + $0x60] sm:$0x1] %v1036
      %v1038 = vld [vmem:[#allocation2 + $0x6c] sm:$0x1]
      %v1039 = vsel %vm1010, %v974, %v1038
      %1040 = vst [vmem:[#allocation2 + $0x6c] sm:$0x1] %v1039
      %v1041 = vld [vmem:[#allocation2 + $0x78] sm:$0x1]
      %v1042 = vsel %vm1010, %v976, %v1041
      %1043 = vst [vmem:[#allocation2 + $0x78] sm:$0x1] %v1042
      %v1044 = vld [vmem:[#allocation2 + $0x84] sm:$0x1]
      %v1045 = vsel %vm1010, %v978, %v1044
      %1046 = vst [vmem:[#allocation2 + $0x84] sm:$0x1] %v1045
      %v1047 = vld [vmem:[#allocation2 + $0x90] sm:$0x1]
      %v1048 = vsel %vm1010, %v980, %v1047
      %1049 = vst [vmem:[#allocation2 + $0x90] sm:$0x1] %v1048
      %v1050 = vld [vmem:[#allocation2 + $0x9c] sm:$0x1]
      %v1051 = vsel %vm1010, %v982, %v1050
      %1052 = vst [vmem:[#allocation2 + $0x9c] sm:$0x1] %v1051
      %v1053 = vld [vmem:[#allocation2 + $0xa8] sm:$0x1]
      %v1054 = vsel %vm1010, %v984, %v1053
      %1055 = vst [vmem:[#allocation2 + $0xa8] sm:$0x1] %v1054
      %v1056 = vld [vmem:[#allocation2 + $0xb4] sm:$0x1]
      %v1057 = vsel %vm1010, %v986, %v1056
      %1058 = vst [vmem:[#allocation2 + $0xb4] sm:$0x1] %v1057
      %v1059 = vld [vmem:[#allocation2 + $0xc0] sm:$0x1]
      %v1060 = vsel %vm1010, %v988, %v1059
      %1061 = vst [vmem:[#allocation2 + $0xc0] sm:$0x1] %v1060
      %v1062 = vld [vmem:[#allocation2 + $0xcc] sm:$0x1]
      %v1063 = vsel %vm1010, %v990, %v1062
      %1064 = vst [vmem:[#allocation2 + $0xcc] sm:$0x1] %v1063
      %v1065 = vld [vmem:[#allocation2 + $0x4] sm:$0x8]
      %v1066 = vld [vmem:[#allocation2 + $0x10] sm:$0x8]
      %v1067 = vld [vmem:[#allocation2 + $0x1c] sm:$0x8]
      %v1068 = vld [vmem:[#allocation2 + $0x28] sm:$0x8]
      %v1069 = vld [vmem:[#allocation2 + $0x34] sm:$0x8]
      %v1070 = vld [vmem:[#allocation2 + $0x40] sm:$0x8]
      %v1071 = vld [vmem:[#allocation2 + $0x4c] sm:$0x8]
      %v1072 = vld [vmem:[#allocation2 + $0x58] sm:$0x8]
      %v1073 = vld [vmem:[#allocation2 + $0x64] sm:$0x8]
      %v1074 = vld [vmem:[#allocation2 + $0x70] sm:$0x8]
      %v1075 = vld [vmem:[#allocation2 + $0x7c] sm:$0x8]
      %v1076 = vld [vmem:[#allocation2 + $0x88] sm:$0x8]
      %v1077 = vld [vmem:[#allocation2 + $0x94] sm:$0x8]
      %v1078 = vld [vmem:[#allocation2 + $0xa0] sm:$0x8]
      %v1079 = vld [vmem:[#allocation2 + $0xac] sm:$0x8]
      %v1080 = vld [vmem:[#allocation2 + $0xb8] sm:$0x8]
      %v1081 = vld [vmem:[#allocation2 + $0xc4] sm:$0x8]
      %v1082 = vld [vmem:[#allocation2 + $0xd0] sm:$0x8]
      %v1101 = vrot.slane %v1065, 7
      %v1102 = vrot.slane %v1101, 4
      %v1103 = vrot.slane %v1066, 7
      %v1104 = vrot.slane %v1103, 4
      %v1105 = vrot.slane %v1067, 7
      %v1106 = vrot.slane %v1105, 4
      %v1107 = vrot.slane %v1068, 7
      %v1108 = vrot.slane %v1107, 4
      %v1109 = vrot.slane %v1069, 7
      %v1110 = vrot.slane %v1109, 4
      %v1111 = vrot.slane %v1070, 7
      %v1112 = vrot.slane %v1111, 4
      %v1113 = vrot.slane %v1071, 7
      %v1114 = vrot.slane %v1113, 4
      %v1115 = vrot.slane %v1072, 7
      %v1116 = vrot.slane %v1115, 4
      %v1117 = vrot.slane %v1073, 7
      %v1118 = vrot.slane %v1117, 4
      %v1119 = vrot.slane %v1074, 7
      %v1120 = vrot.slane %v1119, 4
      %v1121 = vrot.slane %v1075, 7
      %v1122 = vrot.slane %v1121, 4
      %v1123 = vrot.slane %v1076, 7
      %v1124 = vrot.slane %v1123, 4
      %v1125 = vrot.slane %v1077, 7
      %v1126 = vrot.slane %v1125, 4
      %v1127 = vrot.slane %v1078, 7
      %v1128 = vrot.slane %v1127, 4
      %v1129 = vrot.slane %v1079, 7
      %v1130 = vrot.slane %v1129, 4
      %v1131 = vrot.slane %v1080, 7
      %v1132 = vrot.slane %v1131, 4
      %v1133 = vrot.slane %v1081, 7
      %v1134 = vrot.slane %v1133, 4
      %v1135 = vrot.slane %v1082, 7
      %v1136 = vrot.slane %v1135, 4
      %vm1155 = vmand %vm1009, %vm787
      %v1156 = vld [vmem:[#allocation2 + $0x8] sm:$0x1]
      %v1157 = vsel %vm1155, %v1102, %v1156
      %1158 = vst [vmem:[#allocation2 + $0x8] sm:$0x1] %v1157
      %v1159 = vld [vmem:[#allocation2 + $0x14] sm:$0x1]
      %v1160 = vsel %vm1155, %v1104, %v1159
      %1161 = vst [vmem:[#allocation2 + $0x14] sm:$0x1] %v1160
      %v1162 = vld [vmem:[#allocation2 + $0x20] sm:$0x1]
      %v1163 = vsel %vm1155, %v1106, %v1162
      %1164 = vst [vmem:[#allocation2 + $0x20] sm:$0x1] %v1163
      %v1165 = vld [vmem:[#allocation2 + $0x2c] sm:$0x1]
      %v1166 = vsel %vm1155, %v1108, %v1165
      %1167 = vst [vmem:[#allocation2 + $0x2c] sm:$0x1] %v1166
      %v1168 = vld [vmem:[#allocation2 + $0x38] sm:$0x1]
      %v1169 = vsel %vm1155, %v1110, %v1168
      %1170 = vst [vmem:[#allocation2 + $0x38] sm:$0x1] %v1169
      %v1171 = vld [vmem:[#allocation2 + $0x44] sm:$0x1]
      %v1172 = vsel %vm1155, %v1112, %v1171
      %1173 = vst [vmem:[#allocation2 + $0x44] sm:$0x1] %v1172
      %v1174 = vld [vmem:[#allocation2 + $0x50] sm:$0x1]
      %v1175 = vsel %vm1155, %v1114, %v1174
      %1176 = vst [vmem:[#allocation2 + $0x50] sm:$0x1] %v1175
      %v1177 = vld [vmem:[#allocation2 + $0x5c] sm:$0x1]
      %v1178 = vsel %vm1155, %v1116, %v1177
      %1179 = vst [vmem:[#allocation2 + $0x5c] sm:$0x1] %v1178
      %v1180 = vld [vmem:[#allocation2 + $0x68] sm:$0x1]
      %v1181 = vsel %vm1155, %v1118, %v1180
      %1182 = vst [vmem:[#allocation2 + $0x68] sm:$0x1] %v1181
      %v1183 = vld [vmem:[#allocation2 + $0x74] sm:$0x1]
      %v1184 = vsel %vm1155, %v1120, %v1183
      %1185 = vst [vmem:[#allocation2 + $0x74] sm:$0x1] %v1184
      %v1186 = vld [vmem:[#allocation2 + $0x80] sm:$0x1]
      %v1187 = vsel %vm1155, %v1122, %v1186
      %1188 = vst [vmem:[#allocation2 + $0x80] sm:$0x1] %v1187
      %v1189 = vld [vmem:[#allocation2 + $0x8c] sm:$0x1]
      %v1190 = vsel %vm1155, %v1124, %v1189
      %1191 = vst [vmem:[#allocation2 + $0x8c] sm:$0x1] %v1190
      %v1192 = vld [vmem:[#allocation2 + $0x98] sm:$0x1]
      %v1193 = vsel %vm1155, %v1126, %v1192
      %1194 = vst [vmem:[#allocation2 + $0x98] sm:$0x1] %v1193
      %v1195 = vld [vmem:[#allocation2 + $0xa4] sm:$0x1]
      %v1196 = vsel %vm1155, %v1128, %v1195
      %1197 = vst [vmem:[#allocation2 + $0xa4] sm:$0x1] %v1196
      %v1198 = vld [vmem:[#allocation2 + $0xb0] sm:$0x1]
      %v1199 = vsel %vm1155, %v1130, %v1198
      %1200 = vst [vmem:[#allocation2 + $0xb0] sm:$0x1] %v1199
      %v1201 = vld [vmem:[#allocation2 + $0xbc] sm:$0x1]
      %v1202 = vsel %vm1155, %v1132, %v1201
      %1203 = vst [vmem:[#allocation2 + $0xbc] sm:$0x1] %v1202
      %v1204 = vld [vmem:[#allocation2 + $0xc8] sm:$0x1]
      %v1205 = vsel %vm1155, %v1134, %v1204
      %1206 = vst [vmem:[#allocation2 + $0xc8] sm:$0x1] %v1205
      %v1207 = vld [vmem:[#allocation2 + $0xd4] sm:$0x1]
      %v1208 = vsel %vm1155, %v1136, %v1207
      %1209 = vst [vmem:[#allocation2 + $0xd4] sm:$0x1] %v1208
      %v1210 = vld [vmem:[#allocation2] sm:$0xf]
      %v1211 = vld [vmem:[#allocation2 + $0x4] sm:$0xf]
      %v1212 = vld [vmem:[#allocation2 + $0xc] sm:$0xf]
      %v1213 = vld [vmem:[#allocation2 + $0x10] sm:$0xf]
      %v1214 = vld [vmem:[#allocation2 + $0x18] sm:$0xf]
      %v1215 = vld [vmem:[#allocation2 + $0x1c] sm:$0xf]
      %v1216 = vld [vmem:[#allocation2 + $0x24] sm:$0xf]
      %v1217 = vld [vmem:[#allocation2 + $0x28] sm:$0xf]
      %v1218 = vld [vmem:[#allocation2 + $0x30] sm:$0xf]
      %v1219 = vld [vmem:[#allocation2 + $0x34] sm:$0xf]
      %v1220 = vld [vmem:[#allocation2 + $0x3c] sm:$0xf]
      %v1221 = vld [vmem:[#allocation2 + $0x40] sm:$0xf]
      %v1222 = vld [vmem:[#allocation2 + $0x48] sm:$0xf]
      %v1223 = vld [vmem:[#allocation2 + $0x4c] sm:$0xf]
      %v1224 = vld [vmem:[#allocation2 + $0x54] sm:$0xf]
      %v1225 = vld [vmem:[#allocation2 + $0x58] sm:$0xf]
      %v1226 = vld [vmem:[#allocation2 + $0x60] sm:$0xf]
      %v1227 = vld [vmem:[#allocation2 + $0x64] sm:$0xf]
      %v1228 = vld [vmem:[#allocation2 + $0x6c] sm:$0xf]
      %v1229 = vld [vmem:[#allocation2 + $0x70] sm:$0xf]
      %v1230 = vld [vmem:[#allocation2 + $0x78] sm:$0xf]
      %v1231 = vld [vmem:[#allocation2 + $0x7c] sm:$0xf]
      %v1232 = vld [vmem:[#allocation2 + $0x84] sm:$0xf]
      %v1233 = vld [vmem:[#allocation2 + $0x88] sm:$0xf]
      %v1234 = vld [vmem:[#allocation2 + $0x90] sm:$0xf]
      %v1235 = vld [vmem:[#allocation2 + $0x94] sm:$0xf]
      %v1236 = vld [vmem:[#allocation2 + $0x9c] sm:$0xf]
      %v1237 = vld [vmem:[#allocation2 + $0xa0] sm:$0xf]
      %v1238 = vld [vmem:[#allocation2 + $0xa8] sm:$0xf]
      %v1239 = vld [vmem:[#allocation2 + $0xac] sm:$0xf]
      %v1240 = vld [vmem:[#allocation2 + $0xb4] sm:$0xf]
      %v1241 = vld [vmem:[#allocation2 + $0xb8] sm:$0xf]
      %v1242 = vld [vmem:[%s1] sm:$0xf]
      %v1243 = vld [vmem:[%s1 + $0x4] sm:$0xf]
      %v1244 = vld [vmem:[%s1 + $0x8] sm:$0xf]
      %v1245 = vld [vmem:[%s1 + $0xc] sm:$0xf]
      %v1246 = vld [vmem:[%s1 + $0x10] sm:$0xf]
      %v1247 = vld [vmem:[%s1 + $0x14] sm:$0xf]
      %v1248 = vld [vmem:[%s1 + $0x18] sm:$0xf]
      %v1249 = vld [vmem:[%s1 + $0x1c] sm:$0xf]
      %v1250 = vld [vmem:[%s1 + $0x20] sm:$0xf]
      %v1251 = vld [vmem:[%s1 + $0x24] sm:$0xf]
      %v1252 = vld [vmem:[%s1 + $0x28] sm:$0xf]
      %v1253 = vld [vmem:[%s1 + $0x2c] sm:$0xf]
      %v1254 = vld [vmem:[%s1 + $0x30] sm:$0xf]
      %v1255 = vld [vmem:[%s1 + $0x34] sm:$0xf]
      %v1256 = vld [vmem:[%s1 + $0x38] sm:$0xf]
      %v1257 = vld [vmem:[%s1 + $0x3c] sm:$0xf]
      %v1258 = vld [vmem:[#allocation2 + $0x8] sm:$0x1]
      %v1259 = vld [vmem:[#allocation2 + $0x14] sm:$0x1]
      %v1260 = vld [vmem:[#allocation2 + $0x20] sm:$0x1]
      %v1261 = vld [vmem:[#allocation2 + $0x2c] sm:$0x1]
      %v1262 = vld [vmem:[#allocation2 + $0x38] sm:$0x1]
      %v1263 = vld [vmem:[#allocation2 + $0x44] sm:$0x1]
      %v1264 = vld [vmem:[#allocation2 + $0x50] sm:$0x1]
      %v1265 = vld [vmem:[#allocation2 + $0x5c] sm:$0x1]
      %v1266 = vld [vmem:[#allocation2 + $0x68] sm:$0x1]
      %v1267 = vld [vmem:[#allocation2 + $0x74] sm:$0x1]
      %v1268 = vld [vmem:[#allocation2 + $0x80] sm:$0x1]
      %v1269 = vld [vmem:[#allocation2 + $0x8c] sm:$0x1]
      %v1270 = vld [vmem:[#allocation2 + $0x98] sm:$0x1]
      %v1271 = vld [vmem:[#allocation2 + $0xa4] sm:$0x1]
      %v1272 = vld [vmem:[#allocation2 + $0xb0] sm:$0x1]
      %v1273 = vld [vmem:[#allocation2 + $0xbc] sm:$0x1]
      %vm1274 = vsmask.f32 3328
      %vm1275 = vsmask.f32 7440
      %vm1276 = vmor %vm1274, %vm1275
      %v1278 = vshrl.u32 %v1210, 16
      %v1280 = vrot.slane %v1278, 4
      %v1281 = vshll.u32 %v1210, 16
      %v1283 = vrot.slane %v1281, 5
      %v1284 = vor.u32 %v1280, %v1283
      %v1285 = vrot.slane %v1284, 4
      %v1287 = vshll.u32 %v1211, 16
      %v1289 = vrot.slane %v1287, 5
      %v1290 = vsel %vm1276, %v1285, %v1289
      %v1291 = vshrl.u32 %v1211, 16
      %v1293 = vrot.slane %v1291, 4
      %v1294 = vor.u32 %v1293, %v1289
      %v1295 = vrot.slane %v1294, 4
      %v1297 = vshll.u32 %v1258, 16
      %v1299 = vrot.slane %v1297, 5
      %v1300 = vsel %vm1276, %v1295, %v1299
      %v1302 = vshrl.u32 %v1212, 16
      %v1304 = vrot.slane %v1302, 4
      %v1305 = vshll.u32 %v1212, 16
      %v1307 = vrot.slane %v1305, 5
      %v1308 = vor.u32 %v1304, %v1307
      %v1309 = vrot.slane %v1308, 4
      %v1311 = vshll.u32 %v1213, 16
      %v1313 = vrot.slane %v1311, 5
      %v1314 = vsel %vm1276, %v1309, %v1313
      %v1315 = vshrl.u32 %v1213, 16
      %v1317 = vrot.slane %v1315, 4
      %v1318 = vor.u32 %v1317, %v1313
      %v1319 = vrot.slane %v1318, 4
      %v1321 = vshll.u32 %v1259, 16
      %v1323 = vrot.slane %v1321, 5
      %v1324 = vsel %vm1276, %v1319, %v1323
      %v1326 = vshrl.u32 %v1214, 16
      %v1328 = vrot.slane %v1326, 4
      %v1329 = vshll.u32 %v1214, 16
      %v1331 = vrot.slane %v1329, 5
      %v1332 = vor.u32 %v1328, %v1331
      %v1333 = vrot.slane %v1332, 4
      %v1335 = vshll.u32 %v1215, 16
      %v1337 = vrot.slane %v1335, 5
      %v1338 = vsel %vm1276, %v1333, %v1337
      %v1339 = vshrl.u32 %v1215, 16
      %v1341 = vrot.slane %v1339, 4
      %v1342 = vor.u32 %v1341, %v1337
      %v1343 = vrot.slane %v1342, 4
      %v1345 = vshll.u32 %v1260, 16
      %v1347 = vrot.slane %v1345, 5
      %v1348 = vsel %vm1276, %v1343, %v1347
      %v1350 = vshrl.u32 %v1216, 16
      %v1352 = vrot.slane %v1350, 4
      %v1353 = vshll.u32 %v1216, 16
      %v1355 = vrot.slane %v1353, 5
      %v1356 = vor.u32 %v1352, %v1355
      %v1357 = vrot.slane %v1356, 4
      %v1359 = vshll.u32 %v1217, 16
      %v1361 = vrot.slane %v1359, 5
      %v1362 = vsel %vm1276, %v1357, %v1361
      %v1363 = vshrl.u32 %v1217, 16
      %v1365 = vrot.slane %v1363, 4
      %v1366 = vor.u32 %v1365, %v1361
      %v1367 = vrot.slane %v1366, 4
      %v1369 = vshll.u32 %v1261, 16
      %v1371 = vrot.slane %v1369, 5
      %v1372 = vsel %vm1276, %v1367, %v1371
      %v1374 = vshrl.u32 %v1218, 16
      %v1376 = vrot.slane %v1374, 4
      %v1377 = vshll.u32 %v1218, 16
      %v1379 = vrot.slane %v1377, 5
      %v1380 = vor.u32 %v1376, %v1379
      %v1381 = vrot.slane %v1380, 4
      %v1383 = vshll.u32 %v1219, 16
      %v1385 = vrot.slane %v1383, 5
      %v1386 = vsel %vm1276, %v1381, %v1385
      %v1387 = vshrl.u32 %v1219, 16
      %v1389 = vrot.slane %v1387, 4
      %v1390 = vor.u32 %v1389, %v1385
      %v1391 = vrot.slane %v1390, 4
      %v1393 = vshll.u32 %v1262, 16
      %v1395 = vrot.slane %v1393, 5
      %v1396 = vsel %vm1276, %v1391, %v1395
      %v1398 = vshrl.u32 %v1220, 16
      %v1400 = vrot.slane %v1398, 4
      %v1401 = vshll.u32 %v1220, 16
      %v1403 = vrot.slane %v1401, 5
      %v1404 = vor.u32 %v1400, %v1403
      %v1405 = vrot.slane %v1404, 4
      %v1407 = vshll.u32 %v1221, 16
      %v1409 = vrot.slane %v1407, 5
      %v1410 = vsel %vm1276, %v1405, %v1409
      %v1411 = vshrl.u32 %v1221, 16
      %v1413 = vrot.slane %v1411, 4
      %v1414 = vor.u32 %v1413, %v1409
      %v1415 = vrot.slane %v1414, 4
      %v1417 = vshll.u32 %v1263, 16
      %v1419 = vrot.slane %v1417, 5
      %v1420 = vsel %vm1276, %v1415, %v1419
      %v1422 = vshrl.u32 %v1222, 16
      %v1424 = vrot.slane %v1422, 4
      %v1425 = vshll.u32 %v1222, 16
      %v1427 = vrot.slane %v1425, 5
      %v1428 = vor.u32 %v1424, %v1427
      %v1429 = vrot.slane %v1428, 4
      %v1431 = vshll.u32 %v1223, 16
      %v1433 = vrot.slane %v1431, 5
      %v1434 = vsel %vm1276, %v1429, %v1433
      %v1435 = vshrl.u32 %v1223, 16
      %v1437 = vrot.slane %v1435, 4
      %v1438 = vor.u32 %v1437, %v1433
      %v1439 = vrot.slane %v1438, 4
      %v1441 = vshll.u32 %v1264, 16
      %v1443 = vrot.slane %v1441, 5
      %v1444 = vsel %vm1276, %v1439, %v1443
      %v1446 = vshrl.u32 %v1224, 16
      %v1448 = vrot.slane %v1446, 4
      %v1449 = vshll.u32 %v1224, 16
      %v1451 = vrot.slane %v1449, 5
      %v1452 = vor.u32 %v1448, %v1451
      %v1453 = vrot.slane %v1452, 4
      %v1455 = vshll.u32 %v1225, 16
      %v1457 = vrot.slane %v1455, 5
      %v1458 = vsel %vm1276, %v1453, %v1457
      %v1459 = vshrl.u32 %v1225, 16
      %v1461 = vrot.slane %v1459, 4
      %v1462 = vor.u32 %v1461, %v1457
      %v1463 = vrot.slane %v1462, 4
      %v1465 = vshll.u32 %v1265, 16
      %v1467 = vrot.slane %v1465, 5
      %v1468 = vsel %vm1276, %v1463, %v1467
      %v1470 = vshrl.u32 %v1226, 16
      %v1472 = vrot.slane %v1470, 4
      %v1473 = vshll.u32 %v1226, 16
      %v1475 = vrot.slane %v1473, 5
      %v1476 = vor.u32 %v1472, %v1475
      %v1477 = vrot.slane %v1476, 4
      %v1479 = vshll.u32 %v1227, 16
      %v1481 = vrot.slane %v1479, 5
      %v1482 = vsel %vm1276, %v1477, %v1481
      %v1483 = vshrl.u32 %v1227, 16
      %v1485 = vrot.slane %v1483, 4
      %v1486 = vor.u32 %v1485, %v1481
      %v1487 = vrot.slane %v1486, 4
      %v1489 = vshll.u32 %v1266, 16
      %v1491 = vrot.slane %v1489, 5
      %v1492 = vsel %vm1276, %v1487, %v1491
      %v1494 = vshrl.u32 %v1228, 16
      %v1496 = vrot.slane %v1494, 4
      %v1497 = vshll.u32 %v1228, 16
      %v1499 = vrot.slane %v1497, 5
      %v1500 = vor.u32 %v1496, %v1499
      %v1501 = vrot.slane %v1500, 4
      %v1503 = vshll.u32 %v1229, 16
      %v1505 = vrot.slane %v1503, 5
      %v1506 = vsel %vm1276, %v1501, %v1505
      %v1507 = vshrl.u32 %v1229, 16
      %v1509 = vrot.slane %v1507, 4
      %v1510 = vor.u32 %v1509, %v1505
      %v1511 = vrot.slane %v1510, 4
      %v1513 = vshll.u32 %v1267, 16
      %v1515 = vrot.slane %v1513, 5
      %v1516 = vsel %vm1276, %v1511, %v1515
      %v1518 = vshrl.u32 %v1230, 16
      %v1520 = vrot.slane %v1518, 4
      %v1521 = vshll.u32 %v1230, 16
      %v1523 = vrot.slane %v1521, 5
      %v1524 = vor.u32 %v1520, %v1523
      %v1525 = vrot.slane %v1524, 4
      %v1527 = vshll.u32 %v1231, 16
      %v1529 = vrot.slane %v1527, 5
      %v1530 = vsel %vm1276, %v1525, %v1529
      %v1531 = vshrl.u32 %v1231, 16
      %v1533 = vrot.slane %v1531, 4
      %v1534 = vor.u32 %v1533, %v1529
      %v1535 = vrot.slane %v1534, 4
      %v1537 = vshll.u32 %v1268, 16
      %v1539 = vrot.slane %v1537, 5
      %v1540 = vsel %vm1276, %v1535, %v1539
      %v1542 = vshrl.u32 %v1232, 16
      %v1544 = vrot.slane %v1542, 4
      %v1545 = vshll.u32 %v1232, 16
      %v1547 = vrot.slane %v1545, 5
      %v1548 = vor.u32 %v1544, %v1547
      %v1549 = vrot.slane %v1548, 4
      %v1551 = vshll.u32 %v1233, 16
      %v1553 = vrot.slane %v1551, 5
      %v1554 = vsel %vm1276, %v1549, %v1553
      %v1555 = vshrl.u32 %v1233, 16
      %v1557 = vrot.slane %v1555, 4
      %v1558 = vor.u32 %v1557, %v1553
      %v1559 = vrot.slane %v1558, 4
      %v1561 = vshll.u32 %v1269, 16
      %v1563 = vrot.slane %v1561, 5
      %v1564 = vsel %vm1276, %v1559, %v1563
      %v1566 = vshrl.u32 %v1234, 16
      %v1568 = vrot.slane %v1566, 4
      %v1569 = vshll.u32 %v1234, 16
      %v1571 = vrot.slane %v1569, 5
      %v1572 = vor.u32 %v1568, %v1571
      %v1573 = vrot.slane %v1572, 4
      %v1575 = vshll.u32 %v1235, 16
      %v1577 = vrot.slane %v1575, 5
      %v1578 = vsel %vm1276, %v1573, %v1577
      %v1579 = vshrl.u32 %v1235, 16
      %v1581 = vrot.slane %v1579, 4
      %v1582 = vor.u32 %v1581, %v1577
      %v1583 = vrot.slane %v1582, 4
      %v1585 = vshll.u32 %v1270, 16
      %v1587 = vrot.slane %v1585, 5
      %v1588 = vsel %vm1276, %v1583, %v1587
      %v1590 = vshrl.u32 %v1236, 16
      %v1592 = vrot.slane %v1590, 4
      %v1593 = vshll.u32 %v1236, 16
      %v1595 = vrot.slane %v1593, 5
      %v1596 = vor.u32 %v1592, %v1595
      %v1597 = vrot.slane %v1596, 4
      %v1599 = vshll.u32 %v1237, 16
      %v1601 = vrot.slane %v1599, 5
      %v1602 = vsel %vm1276, %v1597, %v1601
      %v1603 = vshrl.u32 %v1237, 16
      %v1605 = vrot.slane %v1603, 4
      %v1606 = vor.u32 %v1605, %v1601
      %v1607 = vrot.slane %v1606, 4
      %v1609 = vshll.u32 %v1271, 16
      %v1611 = vrot.slane %v1609, 5
      %v1612 = vsel %vm1276, %v1607, %v1611
      %v1614 = vshrl.u32 %v1238, 16
      %v1616 = vrot.slane %v1614, 4
      %v1617 = vshll.u32 %v1238, 16
      %v1619 = vrot.slane %v1617, 5
      %v1620 = vor.u32 %v1616, %v1619
      %v1621 = vrot.slane %v1620, 4
      %v1623 = vshll.u32 %v1239, 16
      %v1625 = vrot.slane %v1623, 5
      %v1626 = vsel %vm1276, %v1621, %v1625
      %v1627 = vshrl.u32 %v1239, 16
      %v1629 = vrot.slane %v1627, 4
      %v1630 = vor.u32 %v1629, %v1625
      %v1631 = vrot.slane %v1630, 4
      %v1633 = vshll.u32 %v1272, 16
      %v1635 = vrot.slane %v1633, 5
      %v1636 = vsel %vm1276, %v1631, %v1635
      %v1638 = vshrl.u32 %v1240, 16
      %v1640 = vrot.slane %v1638, 4
      %v1641 = vshll.u32 %v1240, 16
      %v1643 = vrot.slane %v1641, 5
      %v1644 = vor.u32 %v1640, %v1643
      %v1645 = vrot.slane %v1644, 4
      %v1647 = vshll.u32 %v1241, 16
      %v1649 = vrot.slane %v1647, 5
      %v1650 = vsel %vm1276, %v1645, %v1649
      %v1651 = vshrl.u32 %v1241, 16
      %v1653 = vrot.slane %v1651, 4
      %v1654 = vor.u32 %v1653, %v1649
      %v1655 = vrot.slane %v1654, 4
      %v1657 = vshll.u32 %v1273, 16
      %v1659 = vrot.slane %v1657, 5
      %v1660 = vsel %vm1276, %v1655, %v1659
      %s1661 = scalar_lea.vmem %s1, 64
      %v1662 = vld [vmem:[%s1661] sm:$0xf]
      %v1663 = vld [vmem:[%s1661 + $0x4] sm:$0xf]
      %v1664 = vld [vmem:[%s1661 + $0x8] sm:$0xf]
      %v1665 = vld [vmem:[%s1661 + $0xc] sm:$0xf]
      %v1666 = vld [vmem:[%s1661 + $0x10] sm:$0xf]
      %v1667 = vld [vmem:[%s1661 + $0x14] sm:$0xf]
      %v1668 = vld [vmem:[%s1661 + $0x18] sm:$0xf]
      %v1669 = vld [vmem:[%s1661 + $0x1c] sm:$0xf]
      %v1670 = vld [vmem:[%s1661 + $0x20] sm:$0xf]
      %v1671 = vld [vmem:[%s1661 + $0x24] sm:$0xf]
      %v1672 = vld [vmem:[%s1661 + $0x28] sm:$0xf]
      %v1673 = vld [vmem:[%s1661 + $0x2c] sm:$0xf]
      %v1674 = vld [vmem:[%s1661 + $0x30] sm:$0xf]
      %v1675 = vld [vmem:[%s1661 + $0x34] sm:$0xf]
      %v1676 = vld [vmem:[%s1661 + $0x38] sm:$0xf]
      %v1677 = vld [vmem:[%s1661 + $0x3c] sm:$0xf]
      %v1678 = vunpack.c.l.b16 %v1290
      %v1679 = vunpack.c.l.b16 %v1300
      %v1680 = vunpack.c.l.b16 %v1314
      %v1681 = vunpack.c.l.b16 %v1324
      %v1682 = vunpack.c.l.b16 %v1338
      %v1683 = vunpack.c.l.b16 %v1348
      %v1684 = vunpack.c.l.b16 %v1362
      %v1685 = vunpack.c.l.b16 %v1372
      %v1686 = vunpack.c.l.b16 %v1386
      %v1687 = vunpack.c.l.b16 %v1396
      %v1688 = vunpack.c.l.b16 %v1410
      %v1689 = vunpack.c.l.b16 %v1420
      %v1690 = vunpack.c.l.b16 %v1434
      %v1691 = vunpack.c.l.b16 %v1444
      %v1692 = vunpack.c.l.b16 %v1458
      %v1693 = vunpack.c.l.b16 %v1468
      %v1694 = vunpack.c.l.b16 %v1482
      %v1695 = vunpack.c.l.b16 %v1492
      %v1696 = vunpack.c.l.b16 %v1506
      %v1697 = vunpack.c.l.b16 %v1516
      %v1698 = vunpack.c.l.b16 %v1530
      %v1699 = vunpack.c.l.b16 %v1540
      %v1700 = vunpack.c.l.b16 %v1554
      %v1701 = vunpack.c.l.b16 %v1564
      %v1702 = vunpack.c.l.b16 %v1578
      %v1703 = vunpack.c.l.b16 %v1588
      %v1704 = vunpack.c.l.b16 %v1602
      %v1705 = vunpack.c.l.b16 %v1612
      %v1706 = vunpack.c.l.b16 %v1626
      %v1707 = vunpack.c.l.b16 %v1636
      %v1708 = vunpack.c.l.b16 %v1650
      %v1709 = vunpack.c.l.b16 %v1660
      %v1710 = vpack.c.b16 %v1679, %v1678
      %v1711 = vpack.c.b16 %v1681, %v1680
      %v1712 = vpack.c.b16 %v1683, %v1682
      %v1713 = vpack.c.b16 %v1685, %v1684
      %v1714 = vpack.c.b16 %v1687, %v1686
      %v1715 = vpack.c.b16 %v1689, %v1688
      %v1716 = vpack.c.b16 %v1691, %v1690
      %v1717 = vpack.c.b16 %v1693, %v1692
      %v1718 = vpack.c.b16 %v1695, %v1694
      %v1719 = vpack.c.b16 %v1697, %v1696
      %v1720 = vpack.c.b16 %v1699, %v1698
      %v1721 = vpack.c.b16 %v1701, %v1700
      %v1722 = vpack.c.b16 %v1703, %v1702
      %v1723 = vpack.c.b16 %v1705, %v1704
      %v1724 = vpack.c.b16 %v1707, %v1706
      %v1725 = vpack.c.b16 %v1709, %v1708
      %v1758 = vunpack.c.l.b16 %v1662
      %v1759 = vunpack.c.l.b16 %v1663
      %v1760 = vunpack.c.l.b16 %v1664
      %v1761 = vunpack.c.l.b16 %v1665
      %v1762 = vunpack.c.l.b16 %v1666
      %v1763 = vunpack.c.l.b16 %v1667
      %v1764 = vunpack.c.l.b16 %v1668
      %v1765 = vunpack.c.l.b16 %v1669
      %v1766 = vunpack.c.l.b16 %v1670
      %v1767 = vunpack.c.l.b16 %v1671
      %v1768 = vunpack.c.l.b16 %v1672
      %v1769 = vunpack.c.l.b16 %v1673
      %v1770 = vunpack.c.l.b16 %v1674
      %v1771 = vunpack.c.l.b16 %v1675
      %v1772 = vunpack.c.l.b16 %v1676
      %v1773 = vunpack.c.l.b16 %v1677
      %v1774 = vpack.c.b16 %v1759, %v1758
      %v1775 = vpack.c.b16 %v1761, %v1760
      %v1776 = vpack.c.b16 %v1763, %v1762
      %v1777 = vpack.c.b16 %v1765, %v1764
      %v1778 = vpack.c.b16 %v1767, %v1766
      %v1779 = vpack.c.b16 %v1769, %v1768
      %v1780 = vpack.c.b16 %v1771, %v1770
      %v1781 = vpack.c.b16 %v1773, %v1772
      %1790 = vmatprep.subr.bf16.mxu0 0
      %1791 = vmatpush1.bf16.msra.mxu0 %v1781
      %1792 = vmatprep.subr.bf16.mxu0 0
      %1793 = vmatpush1.bf16.msra.mxu0 %v1780
      %1794 = vmatprep.subr.bf16.mxu0 0
      %1795 = vmatpush1.bf16.msra.mxu0 %v1779
      %1796 = vmatprep.subr.bf16.mxu0 0
      %1797 = vmatpush1.bf16.msra.mxu0 %v1778
      %1798 = vmatprep.subr.bf16.mxu0 0
      %1799 = vmatpush1.bf16.msra.mxu0 %v1777
      %1800 = vmatprep.subr.bf16.mxu0 0
      %1801 = vmatpush1.bf16.msra.mxu0 %v1776
      %1802 = vmatprep.subr.bf16.mxu0 0
      %1803 = vmatpush1.bf16.msra.mxu0 %v1775
      %1804 = vmatprep.subr.bf16.mxu0 0
      %1805 = vmatpush1.bf16.msra.mxu0 %v1774
      %1806 = vmatprep.subr.bf16.mxu0 0
      %1807 = vmatpush2.bf16.msra.mxu0 0
      %1808 = vmatprep.subr.bf16.mxu0 0
      %1809 = vmatpush2.bf16.msra.mxu0 0
      %1810 = vmatprep.subr.bf16.mxu0 0
      %1811 = vmatpush2.bf16.msra.mxu0 0
      %1812 = vmatprep.subr.bf16.mxu0 0
      %1813 = vmatpush2.bf16.msra.mxu0 0
      %1814 = vmatprep.subr.bf16.mxu0 0
      %1815 = vmatpush2.bf16.msra.mxu0 0
      %1816 = vmatprep.subr.bf16.mxu0 0
      %1817 = vmatpush2.bf16.msra.mxu0 0
      %1818 = vmatprep.subr.bf16.mxu0 0
      %1819 = vmatpush2.bf16.msra.mxu0 0
      %1820 = vmatprep.subr.bf16.mxu0 0
      %1821 = vmatpush2.bf16.msra.mxu0 0
      %1822 = vmatprep.mubr.bf16.mxu0 0
      %1823 = vmatmul.mubr.bf16.gmra.mxu0 %v1710
      %v1824 = vpop.f32.mrf.mxu0
      %v1825 = vadd.f32 0.0, %v1824
      %v1826 = vpop.f32.mrf.mxu0
      %v1827 = vpop.f32.mrf.mxu0
      %v1828 = vadd.f32 0.0, %v1827
      %v1829 = vpop.f32.mrf.mxu0
      %1830 = vmatprep.mubr.bf16.mxu0 0
      %1831 = vmatmul.mubr.bf16.gmra.mxu0 %v1711
      %v1832 = vpop.f32.mrf.mxu0
      %v1833 = vadd.f32 0.0, %v1832
      %v1834 = vpop.f32.mrf.mxu0
      %v1835 = vpop.f32.mrf.mxu0
      %v1836 = vadd.f32 0.0, %v1835
      %v1837 = vpop.f32.mrf.mxu0
      %1838 = vmatprep.mubr.bf16.mxu0 0
      %1839 = vmatmul.mubr.bf16.gmra.mxu0 %v1712
      %v1840 = vpop.f32.mrf.mxu0
      %v1841 = vadd.f32 0.0, %v1840
      %v1842 = vpop.f32.mrf.mxu0
      %v1843 = vpop.f32.mrf.mxu0
      %v1844 = vadd.f32 0.0, %v1843
      %v1845 = vpop.f32.mrf.mxu0
      %1846 = vmatprep.mubr.bf16.mxu0 0
      %1847 = vmatmul.mubr.bf16.gmra.mxu0 %v1713
      %v1848 = vpop.f32.mrf.mxu0
      %v1849 = vadd.f32 0.0, %v1848
      %v1850 = vpop.f32.mrf.mxu0
      %v1851 = vpop.f32.mrf.mxu0
      %v1852 = vadd.f32 0.0, %v1851
      %v1853 = vpop.f32.mrf.mxu0
      %1854 = vmatprep.mubr.bf16.mxu0 0
      %1855 = vmatmul.mubr.bf16.gmra.mxu0 %v1714
      %v1856 = vpop.f32.mrf.mxu0
      %v1857 = vadd.f32 0.0, %v1856
      %v1858 = vpop.f32.mrf.mxu0
      %v1859 = vpop.f32.mrf.mxu0
      %v1860 = vadd.f32 0.0, %v1859
      %v1861 = vpop.f32.mrf.mxu0
      %1862 = vmatprep.mubr.bf16.mxu0 0
      %1863 = vmatmul.mubr.bf16.gmra.mxu0 %v1715
      %v1864 = vpop.f32.mrf.mxu0
      %v1865 = vadd.f32 0.0, %v1864
      %v1866 = vpop.f32.mrf.mxu0
      %v1867 = vpop.f32.mrf.mxu0
      %v1868 = vadd.f32 0.0, %v1867
      %v1869 = vpop.f32.mrf.mxu0
      %1870 = vmatprep.mubr.bf16.mxu0 0
      %1871 = vmatmul.mubr.bf16.gmra.mxu0 %v1716
      %v1872 = vpop.f32.mrf.mxu0
      %v1873 = vadd.f32 0.0, %v1872
      %v1874 = vpop.f32.mrf.mxu0
      %v1875 = vpop.f32.mrf.mxu0
      %v1876 = vadd.f32 0.0, %v1875
      %v1877 = vpop.f32.mrf.mxu0
      %1878 = vmatprep.mubr.bf16.mxu0 0
      %1879 = vmatmul.mubr.bf16.gmra.mxu0 %v1717
      %v1880 = vpop.f32.mrf.mxu0
      %v1881 = vadd.f32 0.0, %v1880
      %v1882 = vpop.f32.mrf.mxu0
      %v1883 = vpop.f32.mrf.mxu0
      %v1884 = vadd.f32 0.0, %v1883
      %v1885 = vpop.f32.mrf.mxu0
      %1886 = vmatprep.mubr.bf16.mxu0 0
      %1887 = vmatmul.mubr.bf16.gmra.mxu0 %v1718
      %v1888 = vpop.f32.mrf.mxu0
      %v1889 = vadd.f32 0.0, %v1888
      %v1890 = vpop.f32.mrf.mxu0
      %v1891 = vpop.f32.mrf.mxu0
      %v1892 = vadd.f32 0.0, %v1891
      %v1893 = vpop.f32.mrf.mxu0
      %1894 = vmatprep.mubr.bf16.mxu0 0
      %1895 = vmatmul.mubr.bf16.gmra.mxu0 %v1719
      %v1896 = vpop.f32.mrf.mxu0
      %v1897 = vadd.f32 0.0, %v1896
      %v1898 = vpop.f32.mrf.mxu0
      %v1899 = vpop.f32.mrf.mxu0
      %v1900 = vadd.f32 0.0, %v1899
      %v1901 = vpop.f32.mrf.mxu0
      %1902 = vmatprep.mubr.bf16.mxu0 0
      %1903 = vmatmul.mubr.bf16.gmra.mxu0 %v1720
      %v1904 = vpop.f32.mrf.mxu0
      %v1905 = vadd.f32 0.0, %v1904
      %v1906 = vpop.f32.mrf.mxu0
      %v1907 = vpop.f32.mrf.mxu0
      %v1908 = vadd.f32 0.0, %v1907
      %v1909 = vpop.f32.mrf.mxu0
      %1910 = vmatprep.mubr.bf16.mxu0 0
      %1911 = vmatmul.mubr.bf16.gmra.mxu0 %v1721
      %v1912 = vpop.f32.mrf.mxu0
      %v1913 = vadd.f32 0.0, %v1912
      %v1914 = vpop.f32.mrf.mxu0
      %v1915 = vpop.f32.mrf.mxu0
      %v1916 = vadd.f32 0.0, %v1915
      %v1917 = vpop.f32.mrf.mxu0
      %1918 = vmatprep.mubr.bf16.mxu0 0
      %1919 = vmatmul.mubr.bf16.gmra.mxu0 %v1722
      %v1920 = vpop.f32.mrf.mxu0
      %v1921 = vadd.f32 0.0, %v1920
      %v1922 = vpop.f32.mrf.mxu0
      %v1923 = vpop.f32.mrf.mxu0
      %v1924 = vadd.f32 0.0, %v1923
      %v1925 = vpop.f32.mrf.mxu0
      %1926 = vmatprep.mubr.bf16.mxu0 0
      %1927 = vmatmul.mubr.bf16.gmra.mxu0 %v1723
      %v1928 = vpop.f32.mrf.mxu0
      %v1929 = vadd.f32 0.0, %v1928
      %v1930 = vpop.f32.mrf.mxu0
      %v1931 = vpop.f32.mrf.mxu0
      %v1932 = vadd.f32 0.0, %v1931
      %v1933 = vpop.f32.mrf.mxu0
      %1934 = vmatprep.mubr.bf16.mxu0 0
      %1935 = vmatmul.mubr.bf16.gmra.mxu0 %v1724
      %v1936 = vpop.f32.mrf.mxu0
      %v1937 = vadd.f32 0.0, %v1936
      %v1938 = vpop.f32.mrf.mxu0
      %v1939 = vpop.f32.mrf.mxu0
      %v1940 = vadd.f32 0.0, %v1939
      %v1941 = vpop.f32.mrf.mxu0
      %1942 = vmatprep.mubr.bf16.mxu0 0
      %1943 = vmatmul.mubr.bf16.gmra.mxu0 %v1725
      %v1944 = vpop.f32.mrf.mxu0
      %v1945 = vadd.f32 0.0, %v1944
      %v1946 = vpop.f32.mrf.mxu0
      %v1947 = vpop.f32.mrf.mxu0
      %v1948 = vadd.f32 0.0, %v1947
      %v1949 = vpop.f32.mrf.mxu0
      %1950 = vdwg.mxu0
      %v1983 = vunpack.c.l.b16 %v1210
      %v1984 = vunpack.c.l.b16 %v1211
      %v1985 = vunpack.c.l.b16 %v1212
      %v1986 = vunpack.c.l.b16 %v1213
      %v1987 = vunpack.c.l.b16 %v1214
      %v1988 = vunpack.c.l.b16 %v1215
      %v1989 = vunpack.c.l.b16 %v1216
      %v1990 = vunpack.c.l.b16 %v1217
      %v1991 = vunpack.c.l.b16 %v1218
      %v1992 = vunpack.c.l.b16 %v1219
      %v1993 = vunpack.c.l.b16 %v1220
      %v1994 = vunpack.c.l.b16 %v1221
      %v1995 = vunpack.c.l.b16 %v1222
      %v1996 = vunpack.c.l.b16 %v1223
      %v1997 = vunpack.c.l.b16 %v1224
      %v1998 = vunpack.c.l.b16 %v1225
      %v1999 = vunpack.c.l.b16 %v1226
      %v2000 = vunpack.c.l.b16 %v1227
      %v2001 = vunpack.c.l.b16 %v1228
      %v2002 = vunpack.c.l.b16 %v1229
      %v2003 = vunpack.c.l.b16 %v1230
      %v2004 = vunpack.c.l.b16 %v1231
      %v2005 = vunpack.c.l.b16 %v1232
      %v2006 = vunpack.c.l.b16 %v1233
      %v2007 = vunpack.c.l.b16 %v1234
      %v2008 = vunpack.c.l.b16 %v1235
      %v2009 = vunpack.c.l.b16 %v1236
      %v2010 = vunpack.c.l.b16 %v1237
      %v2011 = vunpack.c.l.b16 %v1238
      %v2012 = vunpack.c.l.b16 %v1239
      %v2013 = vunpack.c.l.b16 %v1240
      %v2014 = vunpack.c.l.b16 %v1241
      %v2015 = vpack.c.b16 %v1984, %v1983
      %v2016 = vpack.c.b16 %v1986, %v1985
      %v2017 = vpack.c.b16 %v1988, %v1987
      %v2018 = vpack.c.b16 %v1990, %v1989
      %v2019 = vpack.c.b16 %v1992, %v1991
      %v2020 = vpack.c.b16 %v1994, %v1993
      %v2021 = vpack.c.b16 %v1996, %v1995
      %v2022 = vpack.c.b16 %v1998, %v1997
      %v2023 = vpack.c.b16 %v2000, %v1999
      %v2024 = vpack.c.b16 %v2002, %v2001
      %v2025 = vpack.c.b16 %v2004, %v2003
      %v2026 = vpack.c.b16 %v2006, %v2005
      %v2027 = vpack.c.b16 %v2008, %v2007
      %v2028 = vpack.c.b16 %v2010, %v2009
      %v2029 = vpack.c.b16 %v2012, %v2011
      %v2030 = vpack.c.b16 %v2014, %v2013
      %v2063 = vunpack.c.l.b16 %v1242
      %v2064 = vunpack.c.l.b16 %v1243
      %v2065 = vunpack.c.l.b16 %v1244
      %v2066 = vunpack.c.l.b16 %v1245
      %v2067 = vunpack.c.l.b16 %v1246
      %v2068 = vunpack.c.l.b16 %v1247
      %v2069 = vunpack.c.l.b16 %v1248
      %v2070 = vunpack.c.l.b16 %v1249
      %v2071 = vunpack.c.l.b16 %v1250
      %v2072 = vunpack.c.l.b16 %v1251
      %v2073 = vunpack.c.l.b16 %v1252
      %v2074 = vunpack.c.l.b16 %v1253
      %v2075 = vunpack.c.l.b16 %v1254
      %v2076 = vunpack.c.l.b16 %v1255
      %v2077 = vunpack.c.l.b16 %v1256
      %v2078 = vunpack.c.l.b16 %v1257
      %v2079 = vpack.c.b16 %v2064, %v2063
      %v2080 = vpack.c.b16 %v2066, %v2065
      %v2081 = vpack.c.b16 %v2068, %v2067
      %v2082 = vpack.c.b16 %v2070, %v2069
      %v2083 = vpack.c.b16 %v2072, %v2071
      %v2084 = vpack.c.b16 %v2074, %v2073
      %v2085 = vpack.c.b16 %v2076, %v2075
      %v2086 = vpack.c.b16 %v2078, %v2077
      %2095 = vmatprep.subr.bf16.mxu0 0
      %2096 = vmatpush1.bf16.msra.mxu0 %v2086
      %2097 = vmatprep.subr.bf16.mxu0 0
      %2098 = vmatpush1.bf16.msra.mxu0 %v2085
      %2099 = vmatprep.subr.bf16.mxu0 0
      %2100 = vmatpush1.bf16.msra.mxu0 %v2084
      %2101 = vmatprep.subr.bf16.mxu0 0
      %2102 = vmatpush1.bf16.msra.mxu0 %v2083
      %2103 = vmatprep.subr.bf16.mxu0 0
      %2104 = vmatpush1.bf16.msra.mxu0 %v2082
      %2105 = vmatprep.subr.bf16.mxu0 0
      %2106 = vmatpush1.bf16.msra.mxu0 %v2081
      %2107 = vmatprep.subr.bf16.mxu0 0
      %2108 = vmatpush1.bf16.msra.mxu0 %v2080
      %2109 = vmatprep.subr.bf16.mxu0 0
      %2110 = vmatpush1.bf16.msra.mxu0 %v2079
      %2111 = vmatprep.subr.bf16.mxu0 0
      %2112 = vmatpush2.bf16.msra.mxu0 0
      %2113 = vmatprep.subr.bf16.mxu0 0
      %2114 = vmatpush2.bf16.msra.mxu0 0
      %2115 = vmatprep.subr.bf16.mxu0 0
      %2116 = vmatpush2.bf16.msra.mxu0 0
      %2117 = vmatprep.subr.bf16.mxu0 0
      %2118 = vmatpush2.bf16.msra.mxu0 0
      %2119 = vmatprep.subr.bf16.mxu0 0
      %2120 = vmatpush2.bf16.msra.mxu0 0
      %2121 = vmatprep.subr.bf16.mxu0 0
      %2122 = vmatpush2.bf16.msra.mxu0 0
      %2123 = vmatprep.subr.bf16.mxu0 0
      %2124 = vmatpush2.bf16.msra.mxu0 0
      %2125 = vmatprep.subr.bf16.mxu0 0
      %2126 = vmatpush2.bf16.msra.mxu0 0
      %2127 = vmatprep.mubr.bf16.mxu0 0
      %2128 = vmatmul.mubr.bf16.gmra.mxu0 %v2015
      %v2129 = vpop.f32.mrf.mxu0
      %v2130 = vadd.f32 %v1825, %v2129
      %v2131 = vpop.f32.mrf.mxu0
      %v2132 = vpop.f32.mrf.mxu0
      %v2133 = vadd.f32 %v1828, %v2132
      %v2134 = vpop.f32.mrf.mxu0
      %2135 = vmatprep.mubr.bf16.mxu0 0
      %2136 = vmatmul.mubr.bf16.gmra.mxu0 %v2016
      %v2137 = vpop.f32.mrf.mxu0
      %v2138 = vadd.f32 %v1833, %v2137
      %v2139 = vpop.f32.mrf.mxu0
      %v2140 = vpop.f32.mrf.mxu0
      %v2141 = vadd.f32 %v1836, %v2140
      %v2142 = vpop.f32.mrf.mxu0
      %2143 = vmatprep.mubr.bf16.mxu0 0
      %2144 = vmatmul.mubr.bf16.gmra.mxu0 %v2017
      %v2145 = vpop.f32.mrf.mxu0
      %v2146 = vadd.f32 %v1841, %v2145
      %v2147 = vpop.f32.mrf.mxu0
      %v2148 = vpop.f32.mrf.mxu0
      %v2149 = vadd.f32 %v1844, %v2148
      %v2150 = vpop.f32.mrf.mxu0
      %2151 = vmatprep.mubr.bf16.mxu0 0
      %2152 = vmatmul.mubr.bf16.gmra.mxu0 %v2018
      %v2153 = vpop.f32.mrf.mxu0
      %v2154 = vadd.f32 %v1849, %v2153
      %v2155 = vpop.f32.mrf.mxu0
      %v2156 = vpop.f32.mrf.mxu0
      %v2157 = vadd.f32 %v1852, %v2156
      %v2158 = vpop.f32.mrf.mxu0
      %2159 = vmatprep.mubr.bf16.mxu0 0
      %2160 = vmatmul.mubr.bf16.gmra.mxu0 %v2019
      %v2161 = vpop.f32.mrf.mxu0
      %v2162 = vadd.f32 %v1857, %v2161
      %v2163 = vpop.f32.mrf.mxu0
      %v2164 = vpop.f32.mrf.mxu0
      %v2165 = vadd.f32 %v1860, %v2164
      %v2166 = vpop.f32.mrf.mxu0
      %2167 = vmatprep.mubr.bf16.mxu0 0
      %2168 = vmatmul.mubr.bf16.gmra.mxu0 %v2020
      %v2169 = vpop.f32.mrf.mxu0
      %v2170 = vadd.f32 %v1865, %v2169
      %v2171 = vpop.f32.mrf.mxu0
      %v2172 = vpop.f32.mrf.mxu0
      %v2173 = vadd.f32 %v1868, %v2172
      %v2174 = vpop.f32.mrf.mxu0
      %2175 = vmatprep.mubr.bf16.mxu0 0
      %2176 = vmatmul.mubr.bf16.gmra.mxu0 %v2021
      %v2177 = vpop.f32.mrf.mxu0
      %v2178 = vadd.f32 %v1873, %v2177
      %v2179 = vpop.f32.mrf.mxu0
      %v2180 = vpop.f32.mrf.mxu0
      %v2181 = vadd.f32 %v1876, %v2180
      %v2182 = vpop.f32.mrf.mxu0
      %2183 = vmatprep.mubr.bf16.mxu0 0
      %2184 = vmatmul.mubr.bf16.gmra.mxu0 %v2022
      %v2185 = vpop.f32.mrf.mxu0
      %v2186 = vadd.f32 %v1881, %v2185
      %v2187 = vpop.f32.mrf.mxu0
      %v2188 = vpop.f32.mrf.mxu0
      %v2189 = vadd.f32 %v1884, %v2188
      %v2190 = vpop.f32.mrf.mxu0
      %2191 = vmatprep.mubr.bf16.mxu0 0
      %2192 = vmatmul.mubr.bf16.gmra.mxu0 %v2023
      %v2193 = vpop.f32.mrf.mxu0
      %v2194 = vadd.f32 %v1889, %v2193
      %v2195 = vpop.f32.mrf.mxu0
      %v2196 = vpop.f32.mrf.mxu0
      %v2197 = vadd.f32 %v1892, %v2196
      %v2198 = vpop.f32.mrf.mxu0
      %2199 = vmatprep.mubr.bf16.mxu0 0
      %2200 = vmatmul.mubr.bf16.gmra.mxu0 %v2024
      %v2201 = vpop.f32.mrf.mxu0
      %v2202 = vadd.f32 %v1897, %v2201
      %v2203 = vpop.f32.mrf.mxu0
      %v2204 = vpop.f32.mrf.mxu0
      %v2205 = vadd.f32 %v1900, %v2204
      %v2206 = vpop.f32.mrf.mxu0
      %2207 = vmatprep.mubr.bf16.mxu0 0
      %2208 = vmatmul.mubr.bf16.gmra.mxu0 %v2025
      %v2209 = vpop.f32.mrf.mxu0
      %v2210 = vadd.f32 %v1905, %v2209
      %v2211 = vpop.f32.mrf.mxu0
      %v2212 = vpop.f32.mrf.mxu0
      %v2213 = vadd.f32 %v1908, %v2212
      %v2214 = vpop.f32.mrf.mxu0
      %2215 = vmatprep.mubr.bf16.mxu0 0
      %2216 = vmatmul.mubr.bf16.gmra.mxu0 %v2026
      %v2217 = vpop.f32.mrf.mxu0
      %v2218 = vadd.f32 %v1913, %v2217
      %v2219 = vpop.f32.mrf.mxu0
      %v2220 = vpop.f32.mrf.mxu0
      %v2221 = vadd.f32 %v1916, %v2220
      %v2222 = vpop.f32.mrf.mxu0
      %2223 = vmatprep.mubr.bf16.mxu0 0
      %2224 = vmatmul.mubr.bf16.gmra.mxu0 %v2027
      %v2225 = vpop.f32.mrf.mxu0
      %v2226 = vadd.f32 %v1921, %v2225
      %v2227 = vpop.f32.mrf.mxu0
      %v2228 = vpop.f32.mrf.mxu0
      %v2229 = vadd.f32 %v1924, %v2228
      %v2230 = vpop.f32.mrf.mxu0
      %2231 = vmatprep.mubr.bf16.mxu0 0
      %2232 = vmatmul.mubr.bf16.gmra.mxu0 %v2028
      %v2233 = vpop.f32.mrf.mxu0
      %v2234 = vadd.f32 %v1929, %v2233
      %v2235 = vpop.f32.mrf.mxu0
      %v2236 = vpop.f32.mrf.mxu0
      %v2237 = vadd.f32 %v1932, %v2236
      %v2238 = vpop.f32.mrf.mxu0
      %2239 = vmatprep.mubr.bf16.mxu0 0
      %2240 = vmatmul.mubr.bf16.gmra.mxu0 %v2029
      %v2241 = vpop.f32.mrf.mxu0
      %v2242 = vadd.f32 %v1937, %v2241
      %v2243 = vpop.f32.mrf.mxu0
      %v2244 = vpop.f32.mrf.mxu0
      %v2245 = vadd.f32 %v1940, %v2244
      %v2246 = vpop.f32.mrf.mxu0
      %2247 = vmatprep.mubr.bf16.mxu0 0
      %2248 = vmatmul.mubr.bf16.gmra.mxu0 %v2030
      %v2249 = vpop.f32.mrf.mxu0
      %v2250 = vadd.f32 %v1945, %v2249
      %v2251 = vpop.f32.mrf.mxu0
      %v2252 = vpop.f32.mrf.mxu0
      %v2253 = vadd.f32 %v1948, %v2252
      %v2254 = vpop.f32.mrf.mxu0
      %2255 = vdwg.mxu0
      %v2256 = vld [vmem:[#allocation2] sm:$0xe]
      %v2257 = vld [vmem:[#allocation2 + $0xc] sm:$0xe]
      %v2258 = vld [vmem:[#allocation2 + $0x18] sm:$0xe]
      %v2259 = vld [vmem:[#allocation2 + $0x24] sm:$0xe]
      %v2260 = vld [vmem:[#allocation2 + $0x30] sm:$0xe]
      %v2261 = vld [vmem:[#allocation2 + $0x3c] sm:$0xe]
      %v2262 = vld [vmem:[#allocation2 + $0x48] sm:$0xe]
      %v2263 = vld [vmem:[#allocation2 + $0x54] sm:$0xe]
      %v2264 = vld [vmem:[#allocation2 + $0x60] sm:$0xe]
      %v2265 = vld [vmem:[#allocation2 + $0x6c] sm:$0xe]
      %v2266 = vld [vmem:[#allocation2 + $0x78] sm:$0xe]
      %v2267 = vld [vmem:[#allocation2 + $0x84] sm:$0xe]
      %v2268 = vld [vmem:[#allocation2 + $0x90] sm:$0xe]
      %v2269 = vld [vmem:[#allocation2 + $0x9c] sm:$0xe]
      %v2270 = vld [vmem:[#allocation2 + $0xa8] sm:$0xe]
      %v2271 = vld [vmem:[#allocation2 + $0xb4] sm:$0xe]
      %vm2304 = vcmask 1042432
      %vm2305 = vcmask 1046532
      %vm2306 = vmor %vm2304, %vm2305
      %v2307 = vrot.slane %v2256, 5
      %v2308 = vrot.slane %v2307, 4
      %v2309 = vrot.slane %v1211, 5
      %v2310 = vsel %vm2306, %v2308, %v2309
      %v2311 = vrot.slane %v2309, 4
      %v2312 = vrot.slane %v1258, 5
      %v2313 = vsel %vm2306, %v2311, %v2312
      %v2314 = vrot.slane %v2257, 5
      %v2315 = vrot.slane %v2314, 4
      %v2316 = vrot.slane %v1213, 5
      %v2317 = vsel %vm2306, %v2315, %v2316
      %v2318 = vrot.slane %v2316, 4
      %v2319 = vrot.slane %v1259, 5
      %v2320 = vsel %vm2306, %v2318, %v2319
      %v2321 = vrot.slane %v2258, 5
      %v2322 = vrot.slane %v2321, 4
      %v2323 = vrot.slane %v1215, 5
      %v2324 = vsel %vm2306, %v2322, %v2323
      %v2325 = vrot.slane %v2323, 4
      %v2326 = vrot.slane %v1260, 5
      %v2327 = vsel %vm2306, %v2325, %v2326
      %v2328 = vrot.slane %v2259, 5
      %v2329 = vrot.slane %v2328, 4
      %v2330 = vrot.slane %v1217, 5
      %v2331 = vsel %vm2306, %v2329, %v2330
      %v2332 = vrot.slane %v2330, 4
      %v2333 = vrot.slane %v1261, 5
      %v2334 = vsel %vm2306, %v2332, %v2333
      %v2335 = vrot.slane %v2260, 5
      %v2336 = vrot.slane %v2335, 4
      %v2337 = vrot.slane %v1219, 5
      %v2338 = vsel %vm2306, %v2336, %v2337
      %v2339 = vrot.slane %v2337, 4
      %v2340 = vrot.slane %v1262, 5
      %v2341 = vsel %vm2306, %v2339, %v2340
      %v2342 = vrot.slane %v2261, 5
      %v2343 = vrot.slane %v2342, 4
      %v2344 = vrot.slane %v1221, 5
      %v2345 = vsel %vm2306, %v2343, %v2344
      %v2346 = vrot.slane %v2344, 4
      %v2347 = vrot.slane %v1263, 5
      %v2348 = vsel %vm2306, %v2346, %v2347
      %v2349 = vrot.slane %v2262, 5
      %v2350 = vrot.slane %v2349, 4
      %v2351 = vrot.slane %v1223, 5
      %v2352 = vsel %vm2306, %v2350, %v2351
      %v2353 = vrot.slane %v2351, 4
      %v2354 = vrot.slane %v1264, 5
      %v2355 = vsel %vm2306, %v2353, %v2354
      %v2356 = vrot.slane %v2263, 5
      %v2357 = vrot.slane %v2356, 4
      %v2358 = vrot.slane %v1225, 5
      %v2359 = vsel %vm2306, %v2357, %v2358
      %v2360 = vrot.slane %v2358, 4
      %v2361 = vrot.slane %v1265, 5
      %v2362 = vsel %vm2306, %v2360, %v2361
      %v2363 = vrot.slane %v2264, 5
      %v2364 = vrot.slane %v2363, 4
      %v2365 = vrot.slane %v1227, 5
      %v2366 = vsel %vm2306, %v2364, %v2365
      %v2367 = vrot.slane %v2365, 4
      %v2368 = vrot.slane %v1266, 5
      %v2369 = vsel %vm2306, %v2367, %v2368
      %v2370 = vrot.slane %v2265, 5
      %v2371 = vrot.slane %v2370, 4
      %v2372 = vrot.slane %v1229, 5
      %v2373 = vsel %vm2306, %v2371, %v2372
      %v2374 = vrot.slane %v2372, 4
      %v2375 = vrot.slane %v1267, 5
      %v2376 = vsel %vm2306, %v2374, %v2375
      %v2377 = vrot.slane %v2266, 5
      %v2378 = vrot.slane %v2377, 4
      %v2379 = vrot.slane %v1231, 5
      %v2380 = vsel %vm2306, %v2378, %v2379
      %v2381 = vrot.slane %v2379, 4
      %v2382 = vrot.slane %v1268, 5
      %v2383 = vsel %vm2306, %v2381, %v2382
      %v2384 = vrot.slane %v2267, 5
      %v2385 = vrot.slane %v2384, 4
      %v2386 = vrot.slane %v1233, 5
      %v2387 = vsel %vm2306, %v2385, %v2386
      %v2388 = vrot.slane %v2386, 4
      %v2389 = vrot.slane %v1269, 5
      %v2390 = vsel %vm2306, %v2388, %v2389
      %v2391 = vrot.slane %v2268, 5
      %v2392 = vrot.slane %v2391, 4
      %v2393 = vrot.slane %v1235, 5
      %v2394 = vsel %vm2306, %v2392, %v2393
      %v2395 = vrot.slane %v2393, 4
      %v2396 = vrot.slane %v1270, 5
      %v2397 = vsel %vm2306, %v2395, %v2396
      %v2398 = vrot.slane %v2269, 5
      %v2399 = vrot.slane %v2398, 4
      %v2400 = vrot.slane %v1237, 5
      %v2401 = vsel %vm2306, %v2399, %v2400
      %v2402 = vrot.slane %v2400, 4
      %v2403 = vrot.slane %v1271, 5
      %v2404 = vsel %vm2306, %v2402, %v2403
      %v2405 = vrot.slane %v2270, 5
      %v2406 = vrot.slane %v2405, 4
      %v2407 = vrot.slane %v1239, 5
      %v2408 = vsel %vm2306, %v2406, %v2407
      %v2409 = vrot.slane %v2407, 4
      %v2410 = vrot.slane %v1272, 5
      %v2411 = vsel %vm2306, %v2409, %v2410
      %v2412 = vrot.slane %v2271, 5
      %v2413 = vrot.slane %v2412, 4
      %v2414 = vrot.slane %v1241, 5
      %v2415 = vsel %vm2306, %v2413, %v2414
      %v2416 = vrot.slane %v2414, 4
      %v2417 = vrot.slane %v1273, 5
      %v2418 = vsel %vm2306, %v2416, %v2417
      %s2419 = scalar_lea.vmem %s1, 128
      %v2420 = vld [vmem:[%s2419] sm:$0xf]
      %v2421 = vld [vmem:[%s2419 + $0x4] sm:$0xf]
      %v2422 = vld [vmem:[%s2419 + $0x8] sm:$0xf]
      %v2423 = vld [vmem:[%s2419 + $0xc] sm:$0xf]
      %v2424 = vld [vmem:[%s2419 + $0x10] sm:$0xf]
      %v2425 = vld [vmem:[%s2419 + $0x14] sm:$0xf]
      %v2426 = vld [vmem:[%s2419 + $0x18] sm:$0xf]
      %v2427 = vld [vmem:[%s2419 + $0x1c] sm:$0xf]
      %v2428 = vld [vmem:[%s2419 + $0x20] sm:$0xf]
      %v2429 = vld [vmem:[%s2419 + $0x24] sm:$0xf]
      %v2430 = vld [vmem:[%s2419 + $0x28] sm:$0xf]
      %v2431 = vld [vmem:[%s2419 + $0x2c] sm:$0xf]
      %v2432 = vld [vmem:[%s2419 + $0x30] sm:$0xf]
      %v2433 = vld [vmem:[%s2419 + $0x34] sm:$0xf]
      %v2434 = vld [vmem:[%s2419 + $0x38] sm:$0xf]
      %v2435 = vld [vmem:[%s2419 + $0x3c] sm:$0xf]
      %v2436 = vunpack.c.l.b16 %v2310
      %v2437 = vunpack.c.l.b16 %v2313
      %v2438 = vunpack.c.l.b16 %v2317
      %v2439 = vunpack.c.l.b16 %v2320
      %v2440 = vunpack.c.l.b16 %v2324
      %v2441 = vunpack.c.l.b16 %v2327
      %v2442 = vunpack.c.l.b16 %v2331
      %v2443 = vunpack.c.l.b16 %v2334
      %v2444 = vunpack.c.l.b16 %v2338
      %v2445 = vunpack.c.l.b16 %v2341
      %v2446 = vunpack.c.l.b16 %v2345
      %v2447 = vunpack.c.l.b16 %v2348
      %v2448 = vunpack.c.l.b16 %v2352
      %v2449 = vunpack.c.l.b16 %v2355
      %v2450 = vunpack.c.l.b16 %v2359
      %v2451 = vunpack.c.l.b16 %v2362
      %v2452 = vunpack.c.l.b16 %v2366
      %v2453 = vunpack.c.l.b16 %v2369
      %v2454 = vunpack.c.l.b16 %v2373
      %v2455 = vunpack.c.l.b16 %v2376
      %v2456 = vunpack.c.l.b16 %v2380
      %v2457 = vunpack.c.l.b16 %v2383
      %v2458 = vunpack.c.l.b16 %v2387
      %v2459 = vunpack.c.l.b16 %v2390
      %v2460 = vunpack.c.l.b16 %v2394
      %v2461 = vunpack.c.l.b16 %v2397
      %v2462 = vunpack.c.l.b16 %v2401
      %v2463 = vunpack.c.l.b16 %v2404
      %v2464 = vunpack.c.l.b16 %v2408
      %v2465 = vunpack.c.l.b16 %v2411
      %v2466 = vunpack.c.l.b16 %v2415
      %v2467 = vunpack.c.l.b16 %v2418
      %v2468 = vpack.c.b16 %v2437, %v2436
      %v2469 = vpack.c.b16 %v2439, %v2438
      %v2470 = vpack.c.b16 %v2441, %v2440
      %v2471 = vpack.c.b16 %v2443, %v2442
      %v2472 = vpack.c.b16 %v2445, %v2444
      %v2473 = vpack.c.b16 %v2447, %v2446
      %v2474 = vpack.c.b16 %v2449, %v2448
      %v2475 = vpack.c.b16 %v2451, %v2450
      %v2476 = vpack.c.b16 %v2453, %v2452
      %v2477 = vpack.c.b16 %v2455, %v2454
      %v2478 = vpack.c.b16 %v2457, %v2456
      %v2479 = vpack.c.b16 %v2459, %v2458
      %v2480 = vpack.c.b16 %v2461, %v2460
      %v2481 = vpack.c.b16 %v2463, %v2462
      %v2482 = vpack.c.b16 %v2465, %v2464
      %v2483 = vpack.c.b16 %v2467, %v2466
      %v2516 = vunpack.c.l.b16 %v2420
      %v2517 = vunpack.c.l.b16 %v2421
      %v2518 = vunpack.c.l.b16 %v2422
      %v2519 = vunpack.c.l.b16 %v2423
      %v2520 = vunpack.c.l.b16 %v2424
      %v2521 = vunpack.c.l.b16 %v2425
      %v2522 = vunpack.c.l.b16 %v2426
      %v2523 = vunpack.c.l.b16 %v2427
      %v2524 = vunpack.c.l.b16 %v2428
      %v2525 = vunpack.c.l.b16 %v2429
      %v2526 = vunpack.c.l.b16 %v2430
      %v2527 = vunpack.c.l.b16 %v2431
      %v2528 = vunpack.c.l.b16 %v2432
      %v2529 = vunpack.c.l.b16 %v2433
      %v2530 = vunpack.c.l.b16 %v2434
      %v2531 = vunpack.c.l.b16 %v2435
      %v2532 = vpack.c.b16 %v2517, %v2516
      %v2533 = vpack.c.b16 %v2519, %v2518
      %v2534 = vpack.c.b16 %v2521, %v2520
      %v2535 = vpack.c.b16 %v2523, %v2522
      %v2536 = vpack.c.b16 %v2525, %v2524
      %v2537 = vpack.c.b16 %v2527, %v2526
      %v2538 = vpack.c.b16 %v2529, %v2528
      %v2539 = vpack.c.b16 %v2531, %v2530
      %2548 = vmatprep.subr.bf16.mxu0 0
      %2549 = vmatpush1.bf16.msra.mxu0 %v2539
      %2550 = vmatprep.subr.bf16.mxu0 0
      %2551 = vmatpush1.bf16.msra.mxu0 %v2538
      %2552 = vmatprep.subr.bf16.mxu0 0
      %2553 = vmatpush1.bf16.msra.mxu0 %v2537
      %2554 = vmatprep.subr.bf16.mxu0 0
      %2555 = vmatpush1.bf16.msra.mxu0 %v2536
      %2556 = vmatprep.subr.bf16.mxu0 0
      %2557 = vmatpush1.bf16.msra.mxu0 %v2535
      %2558 = vmatprep.subr.bf16.mxu0 0
      %2559 = vmatpush1.bf16.msra.mxu0 %v2534
      %2560 = vmatprep.subr.bf16.mxu0 0
      %2561 = vmatpush1.bf16.msra.mxu0 %v2533
      %2562 = vmatprep.subr.bf16.mxu0 0
      %2563 = vmatpush1.bf16.msra.mxu0 %v2532
      %2564 = vmatprep.subr.bf16.mxu0 0
      %2565 = vmatpush2.bf16.msra.mxu0 0
      %2566 = vmatprep.subr.bf16.mxu0 0
      %2567 = vmatpush2.bf16.msra.mxu0 0
      %2568 = vmatprep.subr.bf16.mxu0 0
      %2569 = vmatpush2.bf16.msra.mxu0 0
      %2570 = vmatprep.subr.bf16.mxu0 0
      %2571 = vmatpush2.bf16.msra.mxu0 0
      %2572 = vmatprep.subr.bf16.mxu0 0
      %2573 = vmatpush2.bf16.msra.mxu0 0
      %2574 = vmatprep.subr.bf16.mxu0 0
      %2575 = vmatpush2.bf16.msra.mxu0 0
      %2576 = vmatprep.subr.bf16.mxu0 0
      %2577 = vmatpush2.bf16.msra.mxu0 0
      %2578 = vmatprep.subr.bf16.mxu0 0
      %2579 = vmatpush2.bf16.msra.mxu0 0
      %2580 = vmatprep.mubr.bf16.mxu0 0
      %2581 = vmatmul.mubr.bf16.gmra.mxu0 %v2468
      %v2582 = vpop.f32.mrf.mxu0
      %v2583 = vadd.f32 0.0, %v2582
      %v2584 = vpop.f32.mrf.mxu0
      %v2585 = vpop.f32.mrf.mxu0
      %v2586 = vadd.f32 0.0, %v2585
      %v2587 = vpop.f32.mrf.mxu0
      %2588 = vmatprep.mubr.bf16.mxu0 0
      %2589 = vmatmul.mubr.bf16.gmra.mxu0 %v2469
      %v2590 = vpop.f32.mrf.mxu0
      %v2591 = vadd.f32 0.0, %v2590
      %v2592 = vpop.f32.mrf.mxu0
      %v2593 = vpop.f32.mrf.mxu0
      %v2594 = vadd.f32 0.0, %v2593
      %v2595 = vpop.f32.mrf.mxu0
      %2596 = vmatprep.mubr.bf16.mxu0 0
      %2597 = vmatmul.mubr.bf16.gmra.mxu0 %v2470
      %v2598 = vpop.f32.mrf.mxu0
      %v2599 = vadd.f32 0.0, %v2598
      %v2600 = vpop.f32.mrf.mxu0
      %v2601 = vpop.f32.mrf.mxu0
      %v2602 = vadd.f32 0.0, %v2601
      %v2603 = vpop.f32.mrf.mxu0
      %2604 = vmatprep.mubr.bf16.mxu0 0
      %2605 = vmatmul.mubr.bf16.gmra.mxu0 %v2471
      %v2606 = vpop.f32.mrf.mxu0
      %v2607 = vadd.f32 0.0, %v2606
      %v2608 = vpop.f32.mrf.mxu0
      %v2609 = vpop.f32.mrf.mxu0
      %v2610 = vadd.f32 0.0, %v2609
      %v2611 = vpop.f32.mrf.mxu0
      %2612 = vmatprep.mubr.bf16.mxu0 0
      %2613 = vmatmul.mubr.bf16.gmra.mxu0 %v2472
      %v2614 = vpop.f32.mrf.mxu0
      %v2615 = vadd.f32 0.0, %v2614
      %v2616 = vpop.f32.mrf.mxu0
      %v2617 = vpop.f32.mrf.mxu0
      %v2618 = vadd.f32 0.0, %v2617
      %v2619 = vpop.f32.mrf.mxu0
      %2620 = vmatprep.mubr.bf16.mxu0 0
      %2621 = vmatmul.mubr.bf16.gmra.mxu0 %v2473
      %v2622 = vpop.f32.mrf.mxu0
      %v2623 = vadd.f32 0.0, %v2622
      %v2624 = vpop.f32.mrf.mxu0
      %v2625 = vpop.f32.mrf.mxu0
      %v2626 = vadd.f32 0.0, %v2625
      %v2627 = vpop.f32.mrf.mxu0
      %2628 = vmatprep.mubr.bf16.mxu0 0
      %2629 = vmatmul.mubr.bf16.gmra.mxu0 %v2474
      %v2630 = vpop.f32.mrf.mxu0
      %v2631 = vadd.f32 0.0, %v2630
      %v2632 = vpop.f32.mrf.mxu0
      %v2633 = vpop.f32.mrf.mxu0
      %v2634 = vadd.f32 0.0, %v2633
      %v2635 = vpop.f32.mrf.mxu0
      %2636 = vmatprep.mubr.bf16.mxu0 0
      %2637 = vmatmul.mubr.bf16.gmra.mxu0 %v2475
      %v2638 = vpop.f32.mrf.mxu0
      %v2639 = vadd.f32 0.0, %v2638
      %v2640 = vpop.f32.mrf.mxu0
      %v2641 = vpop.f32.mrf.mxu0
      %v2642 = vadd.f32 0.0, %v2641
      %v2643 = vpop.f32.mrf.mxu0
      %2644 = vmatprep.mubr.bf16.mxu0 0
      %2645 = vmatmul.mubr.bf16.gmra.mxu0 %v2476
      %v2646 = vpop.f32.mrf.mxu0
      %v2647 = vadd.f32 0.0, %v2646
      %v2648 = vpop.f32.mrf.mxu0
      %v2649 = vpop.f32.mrf.mxu0
      %v2650 = vadd.f32 0.0, %v2649
      %v2651 = vpop.f32.mrf.mxu0
      %2652 = vmatprep.mubr.bf16.mxu0 0
      %2653 = vmatmul.mubr.bf16.gmra.mxu0 %v2477
      %v2654 = vpop.f32.mrf.mxu0
      %v2655 = vadd.f32 0.0, %v2654
      %v2656 = vpop.f32.mrf.mxu0
      %v2657 = vpop.f32.mrf.mxu0
      %v2658 = vadd.f32 0.0, %v2657
      %v2659 = vpop.f32.mrf.mxu0
      %2660 = vmatprep.mubr.bf16.mxu0 0
      %2661 = vmatmul.mubr.bf16.gmra.mxu0 %v2478
      %v2662 = vpop.f32.mrf.mxu0
      %v2663 = vadd.f32 0.0, %v2662
      %v2664 = vpop.f32.mrf.mxu0
      %v2665 = vpop.f32.mrf.mxu0
      %v2666 = vadd.f32 0.0, %v2665
      %v2667 = vpop.f32.mrf.mxu0
      %2668 = vmatprep.mubr.bf16.mxu0 0
      %2669 = vmatmul.mubr.bf16.gmra.mxu0 %v2479
      %v2670 = vpop.f32.mrf.mxu0
      %v2671 = vadd.f32 0.0, %v2670
      %v2672 = vpop.f32.mrf.mxu0
      %v2673 = vpop.f32.mrf.mxu0
      %v2674 = vadd.f32 0.0, %v2673
      %v2675 = vpop.f32.mrf.mxu0
      %2676 = vmatprep.mubr.bf16.mxu0 0
      %2677 = vmatmul.mubr.bf16.gmra.mxu0 %v2480
      %v2678 = vpop.f32.mrf.mxu0
      %v2679 = vadd.f32 0.0, %v2678
      %v2680 = vpop.f32.mrf.mxu0
      %v2681 = vpop.f32.mrf.mxu0
      %v2682 = vadd.f32 0.0, %v2681
      %v2683 = vpop.f32.mrf.mxu0
      %2684 = vmatprep.mubr.bf16.mxu0 0
      %2685 = vmatmul.mubr.bf16.gmra.mxu0 %v2481
      %v2686 = vpop.f32.mrf.mxu0
      %v2687 = vadd.f32 0.0, %v2686
      %v2688 = vpop.f32.mrf.mxu0
      %v2689 = vpop.f32.mrf.mxu0
      %v2690 = vadd.f32 0.0, %v2689
      %v2691 = vpop.f32.mrf.mxu0
      %2692 = vmatprep.mubr.bf16.mxu0 0
      %2693 = vmatmul.mubr.bf16.gmra.mxu0 %v2482
      %v2694 = vpop.f32.mrf.mxu0
      %v2695 = vadd.f32 0.0, %v2694
      %v2696 = vpop.f32.mrf.mxu0
      %v2697 = vpop.f32.mrf.mxu0
      %v2698 = vadd.f32 0.0, %v2697
      %v2699 = vpop.f32.mrf.mxu0
      %2700 = vmatprep.mubr.bf16.mxu0 0
      %2701 = vmatmul.mubr.bf16.gmra.mxu0 %v2483
      %v2702 = vpop.f32.mrf.mxu0
      %v2703 = vadd.f32 0.0, %v2702
      %v2704 = vpop.f32.mrf.mxu0
      %v2705 = vpop.f32.mrf.mxu0
      %v2706 = vadd.f32 0.0, %v2705
      %v2707 = vpop.f32.mrf.mxu0
      %2708 = vdwg.mxu0
      %v2709 = vadd.f32 %v2130, %v2583
      %v2710 = vadd.f32 %v2133, %v2586
      %v2711 = vadd.f32 %v2138, %v2591
      %v2712 = vadd.f32 %v2141, %v2594
      %v2713 = vadd.f32 %v2146, %v2599
      %v2714 = vadd.f32 %v2149, %v2602
      %v2715 = vadd.f32 %v2154, %v2607
      %v2716 = vadd.f32 %v2157, %v2610
      %v2717 = vadd.f32 %v2162, %v2615
      %v2718 = vadd.f32 %v2165, %v2618
      %v2719 = vadd.f32 %v2170, %v2623
      %v2720 = vadd.f32 %v2173, %v2626
      %v2721 = vadd.f32 %v2178, %v2631
      %v2722 = vadd.f32 %v2181, %v2634
      %v2723 = vadd.f32 %v2186, %v2639
      %v2724 = vadd.f32 %v2189, %v2642
      %v2725 = vadd.f32 %v2194, %v2647
      %v2726 = vadd.f32 %v2197, %v2650
      %v2727 = vadd.f32 %v2202, %v2655
      %v2728 = vadd.f32 %v2205, %v2658
      %v2729 = vadd.f32 %v2210, %v2663
      %v2730 = vadd.f32 %v2213, %v2666
      %v2731 = vadd.f32 %v2218, %v2671
      %v2732 = vadd.f32 %v2221, %v2674
      %v2733 = vadd.f32 %v2226, %v2679
      %v2734 = vadd.f32 %v2229, %v2682
      %v2735 = vadd.f32 %v2234, %v2687
      %v2736 = vadd.f32 %v2237, %v2690
      %v2737 = vadd.f32 %v2242, %v2695
      %v2738 = vadd.f32 %v2245, %v2698
      %v2739 = vadd.f32 %v2250, %v2703
      %v2740 = vadd.f32 %v2253, %v2706
      %v2741 = vld [vmem:[%s785] sm:$0xf]
      %v2742 = vld [vmem:[%s785 + $0x4] sm:$0xf]
      %v2743 = vld [vmem:[%s785 + $0xc] sm:$0xf]
      %v2744 = vld [vmem:[%s785 + $0x10] sm:$0xf]
      %v2745 = vld [vmem:[%s785 + $0x18] sm:$0xf]
      %v2746 = vld [vmem:[%s785 + $0x1c] sm:$0xf]
      %v2747 = vld [vmem:[%s785 + $0x24] sm:$0xf]
      %v2748 = vld [vmem:[%s785 + $0x28] sm:$0xf]
      %v2749 = vld [vmem:[%s785 + $0x30] sm:$0xf]
      %v2750 = vld [vmem:[%s785 + $0x34] sm:$0xf]
      %v2751 = vld [vmem:[%s785 + $0x3c] sm:$0xf]
      %v2752 = vld [vmem:[%s785 + $0x40] sm:$0xf]
      %v2753 = vld [vmem:[%s785 + $0x48] sm:$0xf]
      %v2754 = vld [vmem:[%s785 + $0x4c] sm:$0xf]
      %v2755 = vld [vmem:[%s785 + $0x54] sm:$0xf]
      %v2756 = vld [vmem:[%s785 + $0x58] sm:$0xf]
      %v2757 = vld [vmem:[%s785 + $0x60] sm:$0xf]
      %v2758 = vld [vmem:[%s785 + $0x64] sm:$0xf]
      %v2759 = vld [vmem:[%s785 + $0x6c] sm:$0xf]
      %v2760 = vld [vmem:[%s785 + $0x70] sm:$0xf]
      %v2761 = vld [vmem:[%s785 + $0x78] sm:$0xf]
      %v2762 = vld [vmem:[%s785 + $0x7c] sm:$0xf]
      %v2763 = vld [vmem:[%s785 + $0x84] sm:$0xf]
      %v2764 = vld [vmem:[%s785 + $0x88] sm:$0xf]
      %v2765 = vld [vmem:[%s785 + $0x90] sm:$0xf]
      %v2766 = vld [vmem:[%s785 + $0x94] sm:$0xf]
      %v2767 = vld [vmem:[%s785 + $0x9c] sm:$0xf]
      %v2768 = vld [vmem:[%s785 + $0xa0] sm:$0xf]
      %v2769 = vld [vmem:[%s785 + $0xa8] sm:$0xf]
      %v2770 = vld [vmem:[%s785 + $0xac] sm:$0xf]
      %v2771 = vld [vmem:[%s785 + $0xb4] sm:$0xf]
      %v2772 = vld [vmem:[%s785 + $0xb8] sm:$0xf]
      %s2773 = scalar_lea.vmem %s1, 192
      %v2774 = vld [vmem:[%s2773] sm:$0xf]
      %v2775 = vld [vmem:[%s2773 + $0x4] sm:$0xf]
      %v2776 = vld [vmem:[%s2773 + $0x8] sm:$0xf]
      %v2777 = vld [vmem:[%s2773 + $0xc] sm:$0xf]
      %v2778 = vld [vmem:[%s2773 + $0x10] sm:$0xf]
      %v2779 = vld [vmem:[%s2773 + $0x14] sm:$0xf]
      %v2780 = vld [vmem:[%s2773 + $0x18] sm:$0xf]
      %v2781 = vld [vmem:[%s2773 + $0x1c] sm:$0xf]
      %v2782 = vld [vmem:[%s2773 + $0x20] sm:$0xf]
      %v2783 = vld [vmem:[%s2773 + $0x24] sm:$0xf]
      %v2784 = vld [vmem:[%s2773 + $0x28] sm:$0xf]
      %v2785 = vld [vmem:[%s2773 + $0x2c] sm:$0xf]
      %v2786 = vld [vmem:[%s2773 + $0x30] sm:$0xf]
      %v2787 = vld [vmem:[%s2773 + $0x34] sm:$0xf]
      %v2788 = vld [vmem:[%s2773 + $0x38] sm:$0xf]
      %v2789 = vld [vmem:[%s2773 + $0x3c] sm:$0xf]
      %v2822 = vunpack.c.l.b16 %v2741
      %v2823 = vunpack.c.l.b16 %v2742
      %v2824 = vunpack.c.l.b16 %v2743
      %v2825 = vunpack.c.l.b16 %v2744
      %v2826 = vunpack.c.l.b16 %v2745
      %v2827 = vunpack.c.l.b16 %v2746
      %v2828 = vunpack.c.l.b16 %v2747
      %v2829 = vunpack.c.l.b16 %v2748
      %v2830 = vunpack.c.l.b16 %v2749
      %v2831 = vunpack.c.l.b16 %v2750
      %v2832 = vunpack.c.l.b16 %v2751
      %v2833 = vunpack.c.l.b16 %v2752
      %v2834 = vunpack.c.l.b16 %v2753
      %v2835 = vunpack.c.l.b16 %v2754
      %v2836 = vunpack.c.l.b16 %v2755
      %v2837 = vunpack.c.l.b16 %v2756
      %v2838 = vunpack.c.l.b16 %v2757
      %v2839 = vunpack.c.l.b16 %v2758
      %v2840 = vunpack.c.l.b16 %v2759
      %v2841 = vunpack.c.l.b16 %v2760
      %v2842 = vunpack.c.l.b16 %v2761
      %v2843 = vunpack.c.l.b16 %v2762
      %v2844 = vunpack.c.l.b16 %v2763
      %v2845 = vunpack.c.l.b16 %v2764
      %v2846 = vunpack.c.l.b16 %v2765
      %v2847 = vunpack.c.l.b16 %v2766
      %v2848 = vunpack.c.l.b16 %v2767
      %v2849 = vunpack.c.l.b16 %v2768
      %v2850 = vunpack.c.l.b16 %v2769
      %v2851 = vunpack.c.l.b16 %v2770
      %v2852 = vunpack.c.l.b16 %v2771
      %v2853 = vunpack.c.l.b16 %v2772
      %v2854 = vpack.c.b16 %v2823, %v2822
      %v2855 = vpack.c.b16 %v2825, %v2824
      %v2856 = vpack.c.b16 %v2827, %v2826
      %v2857 = vpack.c.b16 %v2829, %v2828
      %v2858 = vpack.c.b16 %v2831, %v2830
      %v2859 = vpack.c.b16 %v2833, %v2832
      %v2860 = vpack.c.b16 %v2835, %v2834
      %v2861 = vpack.c.b16 %v2837, %v2836
      %v2862 = vpack.c.b16 %v2839, %v2838
      %v2863 = vpack.c.b16 %v2841, %v2840
      %v2864 = vpack.c.b16 %v2843, %v2842
      %v2865 = vpack.c.b16 %v2845, %v2844
      %v2866 = vpack.c.b16 %v2847, %v2846
      %v2867 = vpack.c.b16 %v2849, %v2848
      %v2868 = vpack.c.b16 %v2851, %v2850
      %v2869 = vpack.c.b16 %v2853, %v2852
      %v2902 = vunpack.c.l.b16 %v2774
      %v2903 = vunpack.c.l.b16 %v2775
      %v2904 = vunpack.c.l.b16 %v2776
      %v2905 = vunpack.c.l.b16 %v2777
      %v2906 = vunpack.c.l.b16 %v2778
      %v2907 = vunpack.c.l.b16 %v2779
      %v2908 = vunpack.c.l.b16 %v2780
      %v2909 = vunpack.c.l.b16 %v2781
      %v2910 = vunpack.c.l.b16 %v2782
      %v2911 = vunpack.c.l.b16 %v2783
      %v2912 = vunpack.c.l.b16 %v2784
      %v2913 = vunpack.c.l.b16 %v2785
      %v2914 = vunpack.c.l.b16 %v2786
      %v2915 = vunpack.c.l.b16 %v2787
      %v2916 = vunpack.c.l.b16 %v2788
      %v2917 = vunpack.c.l.b16 %v2789
      %v2918 = vpack.c.b16 %v2903, %v2902
      %v2919 = vpack.c.b16 %v2905, %v2904
      %v2920 = vpack.c.b16 %v2907, %v2906
      %v2921 = vpack.c.b16 %v2909, %v2908
      %v2922 = vpack.c.b16 %v2911, %v2910
      %v2923 = vpack.c.b16 %v2913, %v2912
      %v2924 = vpack.c.b16 %v2915, %v2914
      %v2925 = vpack.c.b16 %v2917, %v2916
      %2934 = vmatprep.subr.bf16.mxu0 0
      %2935 = vmatpush1.bf16.msra.mxu0 %v2925
      %2936 = vmatprep.subr.bf16.mxu0 0
      %2937 = vmatpush1.bf16.msra.mxu0 %v2924
      %2938 = vmatprep.subr.bf16.mxu0 0
      %2939 = vmatpush1.bf16.msra.mxu0 %v2923
      %2940 = vmatprep.subr.bf16.mxu0 0
      %2941 = vmatpush1.bf16.msra.mxu0 %v2922
      %2942 = vmatprep.subr.bf16.mxu0 0
      %2943 = vmatpush1.bf16.msra.mxu0 %v2921
      %2944 = vmatprep.subr.bf16.mxu0 0
      %2945 = vmatpush1.bf16.msra.mxu0 %v2920
      %2946 = vmatprep.subr.bf16.mxu0 0
      %2947 = vmatpush1.bf16.msra.mxu0 %v2919
      %2948 = vmatprep.subr.bf16.mxu0 0
      %2949 = vmatpush1.bf16.msra.mxu0 %v2918
      %2950 = vmatprep.subr.bf16.mxu0 0
      %2951 = vmatpush2.bf16.msra.mxu0 0
      %2952 = vmatprep.subr.bf16.mxu0 0
      %2953 = vmatpush2.bf16.msra.mxu0 0
      %2954 = vmatprep.subr.bf16.mxu0 0
      %2955 = vmatpush2.bf16.msra.mxu0 0
      %2956 = vmatprep.subr.bf16.mxu0 0
      %2957 = vmatpush2.bf16.msra.mxu0 0
      %2958 = vmatprep.subr.bf16.mxu0 0
      %2959 = vmatpush2.bf16.msra.mxu0 0
      %2960 = vmatprep.subr.bf16.mxu0 0
      %2961 = vmatpush2.bf16.msra.mxu0 0
      %2962 = vmatprep.subr.bf16.mxu0 0
      %2963 = vmatpush2.bf16.msra.mxu0 0
      %2964 = vmatprep.subr.bf16.mxu0 0
      %2965 = vmatpush2.bf16.msra.mxu0 0
      %2966 = vmatprep.mubr.bf16.mxu0 0
      %2967 = vmatmul.mubr.bf16.gmra.mxu0 %v2854
      %v2968 = vpop.f32.mrf.mxu0
      %v2969 = vadd.f32 0.0, %v2968
      %v2970 = vpop.f32.mrf.mxu0
      %v2971 = vpop.f32.mrf.mxu0
      %v2972 = vadd.f32 0.0, %v2971
      %v2973 = vpop.f32.mrf.mxu0
      %2974 = vmatprep.mubr.bf16.mxu0 0
      %2975 = vmatmul.mubr.bf16.gmra.mxu0 %v2855
      %v2976 = vpop.f32.mrf.mxu0
      %v2977 = vadd.f32 0.0, %v2976
      %v2978 = vpop.f32.mrf.mxu0
      %v2979 = vpop.f32.mrf.mxu0
      %v2980 = vadd.f32 0.0, %v2979
      %v2981 = vpop.f32.mrf.mxu0
      %2982 = vmatprep.mubr.bf16.mxu0 0
      %2983 = vmatmul.mubr.bf16.gmra.mxu0 %v2856
      %v2984 = vpop.f32.mrf.mxu0
      %v2985 = vadd.f32 0.0, %v2984
      %v2986 = vpop.f32.mrf.mxu0
      %v2987 = vpop.f32.mrf.mxu0
      %v2988 = vadd.f32 0.0, %v2987
      %v2989 = vpop.f32.mrf.mxu0
      %2990 = vmatprep.mubr.bf16.mxu0 0
      %2991 = vmatmul.mubr.bf16.gmra.mxu0 %v2857
      %v2992 = vpop.f32.mrf.mxu0
      %v2993 = vadd.f32 0.0, %v2992
      %v2994 = vpop.f32.mrf.mxu0
      %v2995 = vpop.f32.mrf.mxu0
      %v2996 = vadd.f32 0.0, %v2995
      %v2997 = vpop.f32.mrf.mxu0
      %2998 = vmatprep.mubr.bf16.mxu0 0
      %2999 = vmatmul.mubr.bf16.gmra.mxu0 %v2858
      %v3000 = vpop.f32.mrf.mxu0
      %v3001 = vadd.f32 0.0, %v3000
      %v3002 = vpop.f32.mrf.mxu0
      %v3003 = vpop.f32.mrf.mxu0
      %v3004 = vadd.f32 0.0, %v3003
      %v3005 = vpop.f32.mrf.mxu0
      %3006 = vmatprep.mubr.bf16.mxu0 0
      %3007 = vmatmul.mubr.bf16.gmra.mxu0 %v2859
      %v3008 = vpop.f32.mrf.mxu0
      %v3009 = vadd.f32 0.0, %v3008
      %v3010 = vpop.f32.mrf.mxu0
      %v3011 = vpop.f32.mrf.mxu0
      %v3012 = vadd.f32 0.0, %v3011
      %v3013 = vpop.f32.mrf.mxu0
      %3014 = vmatprep.mubr.bf16.mxu0 0
      %3015 = vmatmul.mubr.bf16.gmra.mxu0 %v2860
      %v3016 = vpop.f32.mrf.mxu0
      %v3017 = vadd.f32 0.0, %v3016
      %v3018 = vpop.f32.mrf.mxu0
      %v3019 = vpop.f32.mrf.mxu0
      %v3020 = vadd.f32 0.0, %v3019
      %v3021 = vpop.f32.mrf.mxu0
      %3022 = vmatprep.mubr.bf16.mxu0 0
      %3023 = vmatmul.mubr.bf16.gmra.mxu0 %v2861
      %v3024 = vpop.f32.mrf.mxu0
      %v3025 = vadd.f32 0.0, %v3024
      %v3026 = vpop.f32.mrf.mxu0
      %v3027 = vpop.f32.mrf.mxu0
      %v3028 = vadd.f32 0.0, %v3027
      %v3029 = vpop.f32.mrf.mxu0
      %3030 = vmatprep.mubr.bf16.mxu0 0
      %3031 = vmatmul.mubr.bf16.gmra.mxu0 %v2862
      %v3032 = vpop.f32.mrf.mxu0
      %v3033 = vadd.f32 0.0, %v3032
      %v3034 = vpop.f32.mrf.mxu0
      %v3035 = vpop.f32.mrf.mxu0
      %v3036 = vadd.f32 0.0, %v3035
      %v3037 = vpop.f32.mrf.mxu0
      %3038 = vmatprep.mubr.bf16.mxu0 0
      %3039 = vmatmul.mubr.bf16.gmra.mxu0 %v2863
      %v3040 = vpop.f32.mrf.mxu0
      %v3041 = vadd.f32 0.0, %v3040
      %v3042 = vpop.f32.mrf.mxu0
      %v3043 = vpop.f32.mrf.mxu0
      %v3044 = vadd.f32 0.0, %v3043
      %v3045 = vpop.f32.mrf.mxu0
      %3046 = vmatprep.mubr.bf16.mxu0 0
      %3047 = vmatmul.mubr.bf16.gmra.mxu0 %v2864
      %v3048 = vpop.f32.mrf.mxu0
      %v3049 = vadd.f32 0.0, %v3048
      %v3050 = vpop.f32.mrf.mxu0
      %v3051 = vpop.f32.mrf.mxu0
      %v3052 = vadd.f32 0.0, %v3051
      %v3053 = vpop.f32.mrf.mxu0
      %3054 = vmatprep.mubr.bf16.mxu0 0
      %3055 = vmatmul.mubr.bf16.gmra.mxu0 %v2865
      %v3056 = vpop.f32.mrf.mxu0
      %v3057 = vadd.f32 0.0, %v3056
      %v3058 = vpop.f32.mrf.mxu0
      %v3059 = vpop.f32.mrf.mxu0
      %v3060 = vadd.f32 0.0, %v3059
      %v3061 = vpop.f32.mrf.mxu0
      %3062 = vmatprep.mubr.bf16.mxu0 0
      %3063 = vmatmul.mubr.bf16.gmra.mxu0 %v2866
      %v3064 = vpop.f32.mrf.mxu0
      %v3065 = vadd.f32 0.0, %v3064
      %v3066 = vpop.f32.mrf.mxu0
      %v3067 = vpop.f32.mrf.mxu0
      %v3068 = vadd.f32 0.0, %v3067
      %v3069 = vpop.f32.mrf.mxu0
      %3070 = vmatprep.mubr.bf16.mxu0 0
      %3071 = vmatmul.mubr.bf16.gmra.mxu0 %v2867
      %v3072 = vpop.f32.mrf.mxu0
      %v3073 = vadd.f32 0.0, %v3072
      %v3074 = vpop.f32.mrf.mxu0
      %v3075 = vpop.f32.mrf.mxu0
      %v3076 = vadd.f32 0.0, %v3075
      %v3077 = vpop.f32.mrf.mxu0
      %3078 = vmatprep.mubr.bf16.mxu0 0
      %3079 = vmatmul.mubr.bf16.gmra.mxu0 %v2868
      %v3080 = vpop.f32.mrf.mxu0
      %v3081 = vadd.f32 0.0, %v3080
      %v3082 = vpop.f32.mrf.mxu0
      %v3083 = vpop.f32.mrf.mxu0
      %v3084 = vadd.f32 0.0, %v3083
      %v3085 = vpop.f32.mrf.mxu0
      %3086 = vmatprep.mubr.bf16.mxu0 0
      %3087 = vmatmul.mubr.bf16.gmra.mxu0 %v2869
      %v3088 = vpop.f32.mrf.mxu0
      %v3089 = vadd.f32 0.0, %v3088
      %v3090 = vpop.f32.mrf.mxu0
      %v3091 = vpop.f32.mrf.mxu0
      %v3092 = vadd.f32 0.0, %v3091
      %v3093 = vpop.f32.mrf.mxu0
      %3094 = vdwg.mxu0
      %v3095 = vadd.f32 %v2709, %v2969
      %v3096 = vadd.f32 %v2710, %v2972
      %v3097 = vadd.f32 %v2711, %v2977
      %v3098 = vadd.f32 %v2712, %v2980
      %v3099 = vadd.f32 %v2713, %v2985
      %v3100 = vadd.f32 %v2714, %v2988
      %v3101 = vadd.f32 %v2715, %v2993
      %v3102 = vadd.f32 %v2716, %v2996
      %v3103 = vadd.f32 %v2717, %v3001
      %v3104 = vadd.f32 %v2718, %v3004
      %v3105 = vadd.f32 %v2719, %v3009
      %v3106 = vadd.f32 %v2720, %v3012
      %v3107 = vadd.f32 %v2721, %v3017
      %v3108 = vadd.f32 %v2722, %v3020
      %v3109 = vadd.f32 %v2723, %v3025
      %v3110 = vadd.f32 %v2724, %v3028
      %v3111 = vadd.f32 %v2725, %v3033
      %v3112 = vadd.f32 %v2726, %v3036
      %v3113 = vadd.f32 %v2727, %v3041
      %v3114 = vadd.f32 %v2728, %v3044
      %v3115 = vadd.f32 %v2729, %v3049
      %v3116 = vadd.f32 %v2730, %v3052
      %v3117 = vadd.f32 %v2731, %v3057
      %v3118 = vadd.f32 %v2732, %v3060
      %v3119 = vadd.f32 %v2733, %v3065
      %v3120 = vadd.f32 %v2734, %v3068
      %v3121 = vadd.f32 %v2735, %v3073
      %v3122 = vadd.f32 %v2736, %v3076
      %v3123 = vadd.f32 %v2737, %v3081
      %v3124 = vadd.f32 %v2738, %v3084
      %v3125 = vadd.f32 %v2739, %v3089
      %v3126 = vadd.f32 %v2740, %v3092
      %v3127 = vld [vmem:[%s785] sm:$0xf]
      %v3128 = vld [vmem:[%s785 + $0x4] sm:$0xf]
      %v3129 = vld [vmem:[%s785 + $0x8] sm:$0x1]
      %v3130 = vld [vmem:[%s785 + $0xc] sm:$0xf]
      %v3131 = vld [vmem:[%s785 + $0x10] sm:$0xf]
      %v3132 = vld [vmem:[%s785 + $0x14] sm:$0x1]
      %v3133 = vld [vmem:[%s785 + $0x18] sm:$0xf]
      %v3134 = vld [vmem:[%s785 + $0x1c] sm:$0xf]
      %v3135 = vld [vmem:[%s785 + $0x20] sm:$0x1]
      %v3136 = vld [vmem:[%s785 + $0x24] sm:$0xf]
      %v3137 = vld [vmem:[%s785 + $0x28] sm:$0xf]
      %v3138 = vld [vmem:[%s785 + $0x2c] sm:$0x1]
      %v3139 = vld [vmem:[%s785 + $0x30] sm:$0xf]
      %v3140 = vld [vmem:[%s785 + $0x34] sm:$0xf]
      %v3141 = vld [vmem:[%s785 + $0x38] sm:$0x1]
      %v3142 = vld [vmem:[%s785 + $0x3c] sm:$0xf]
      %v3143 = vld [vmem:[%s785 + $0x40] sm:$0xf]
      %v3144 = vld [vmem:[%s785 + $0x44] sm:$0x1]
      %v3145 = vld [vmem:[%s785 + $0x48] sm:$0xf]
      %v3146 = vld [vmem:[%s785 + $0x4c] sm:$0xf]
      %v3147 = vld [vmem:[%s785 + $0x50] sm:$0x1]
      %v3148 = vld [vmem:[%s785 + $0x54] sm:$0xf]
      %v3149 = vld [vmem:[%s785 + $0x58] sm:$0xf]
      %v3150 = vld [vmem:[%s785 + $0x5c] sm:$0x1]
      %v3151 = vld [vmem:[%s785 + $0x60] sm:$0xf]
      %v3152 = vld [vmem:[%s785 + $0x64] sm:$0xf]
      %v3153 = vld [vmem:[%s785 + $0x68] sm:$0x1]
      %v3154 = vld [vmem:[%s785 + $0x6c] sm:$0xf]
      %v3155 = vld [vmem:[%s785 + $0x70] sm:$0xf]
      %v3156 = vld [vmem:[%s785 + $0x74] sm:$0x1]
      %v3157 = vld [vmem:[%s785 + $0x78] sm:$0xf]
      %v3158 = vld [vmem:[%s785 + $0x7c] sm:$0xf]
      %v3159 = vld [vmem:[%s785 + $0x80] sm:$0x1]
      %v3160 = vld [vmem:[%s785 + $0x84] sm:$0xf]
      %v3161 = vld [vmem:[%s785 + $0x88] sm:$0xf]
      %v3162 = vld [vmem:[%s785 + $0x8c] sm:$0x1]
      %v3163 = vld [vmem:[%s785 + $0x90] sm:$0xf]
      %v3164 = vld [vmem:[%s785 + $0x94] sm:$0xf]
      %v3165 = vld [vmem:[%s785 + $0x98] sm:$0x1]
      %v3166 = vld [vmem:[%s785 + $0x9c] sm:$0xf]
      %v3167 = vld [vmem:[%s785 + $0xa0] sm:$0xf]
      %v3168 = vld [vmem:[%s785 + $0xa4] sm:$0x1]
      %v3169 = vld [vmem:[%s785 + $0xa8] sm:$0xf]
      %v3170 = vld [vmem:[%s785 + $0xac] sm:$0xf]
      %v3171 = vld [vmem:[%s785 + $0xb0] sm:$0x1]
      %v3172 = vld [vmem:[%s785 + $0xb4] sm:$0xf]
      %v3173 = vld [vmem:[%s785 + $0xb8] sm:$0xf]
      %v3174 = vld [vmem:[%s785 + $0xbc] sm:$0x1]
      %v3176 = vshrl.u32 %v3127, 16
      %v3178 = vrot.slane %v3176, 4
      %v3179 = vshll.u32 %v3127, 16
      %v3181 = vrot.slane %v3179, 5
      %v3182 = vor.u32 %v3178, %v3181
      %v3183 = vrot.slane %v3182, 4
      %v3185 = vshll.u32 %v3128, 16
      %v3187 = vrot.slane %v3185, 5
      %v3188 = vsel %vm1276, %v3183, %v3187
      %v3189 = vshrl.u32 %v3128, 16
      %v3191 = vrot.slane %v3189, 4
      %v3192 = vor.u32 %v3191, %v3187
      %v3193 = vrot.slane %v3192, 4
      %v3195 = vshll.u32 %v3129, 16
      %v3197 = vrot.slane %v3195, 5
      %v3198 = vsel %vm1276, %v3193, %v3197
      %v3200 = vshrl.u32 %v3130, 16
      %v3202 = vrot.slane %v3200, 4
      %v3203 = vshll.u32 %v3130, 16
      %v3205 = vrot.slane %v3203, 5
      %v3206 = vor.u32 %v3202, %v3205
      %v3207 = vrot.slane %v3206, 4
      %v3209 = vshll.u32 %v3131, 16
      %v3211 = vrot.slane %v3209, 5
      %v3212 = vsel %vm1276, %v3207, %v3211
      %v3213 = vshrl.u32 %v3131, 16
      %v3215 = vrot.slane %v3213, 4
      %v3216 = vor.u32 %v3215, %v3211
      %v3217 = vrot.slane %v3216, 4
      %v3219 = vshll.u32 %v3132, 16
      %v3221 = vrot.slane %v3219, 5
      %v3222 = vsel %vm1276, %v3217, %v3221
      %v3224 = vshrl.u32 %v3133, 16
      %v3226 = vrot.slane %v3224, 4
      %v3227 = vshll.u32 %v3133, 16
      %v3229 = vrot.slane %v3227, 5
      %v3230 = vor.u32 %v3226, %v3229
      %v3231 = vrot.slane %v3230, 4
      %v3233 = vshll.u32 %v3134, 16
      %v3235 = vrot.slane %v3233, 5
      %v3236 = vsel %vm1276, %v3231, %v3235
      %v3237 = vshrl.u32 %v3134, 16
      %v3239 = vrot.slane %v3237, 4
      %v3240 = vor.u32 %v3239, %v3235
      %v3241 = vrot.slane %v3240, 4
      %v3243 = vshll.u32 %v3135, 16
      %v3245 = vrot.slane %v3243, 5
      %v3246 = vsel %vm1276, %v3241, %v3245
      %v3248 = vshrl.u32 %v3136, 16
      %v3250 = vrot.slane %v3248, 4
      %v3251 = vshll.u32 %v3136, 16
      %v3253 = vrot.slane %v3251, 5
      %v3254 = vor.u32 %v3250, %v3253
      %v3255 = vrot.slane %v3254, 4
      %v3257 = vshll.u32 %v3137, 16
      %v3259 = vrot.slane %v3257, 5
      %v3260 = vsel %vm1276, %v3255, %v3259
      %v3261 = vshrl.u32 %v3137, 16
      %v3263 = vrot.slane %v3261, 4
      %v3264 = vor.u32 %v3263, %v3259
      %v3265 = vrot.slane %v3264, 4
      %v3267 = vshll.u32 %v3138, 16
      %v3269 = vrot.slane %v3267, 5
      %v3270 = vsel %vm1276, %v3265, %v3269
      %v3272 = vshrl.u32 %v3139, 16
      %v3274 = vrot.slane %v3272, 4
      %v3275 = vshll.u32 %v3139, 16
      %v3277 = vrot.slane %v3275, 5
      %v3278 = vor.u32 %v3274, %v3277
      %v3279 = vrot.slane %v3278, 4
      %v3281 = vshll.u32 %v3140, 16
      %v3283 = vrot.slane %v3281, 5
      %v3284 = vsel %vm1276, %v3279, %v3283
      %v3285 = vshrl.u32 %v3140, 16
      %v3287 = vrot.slane %v3285, 4
      %v3288 = vor.u32 %v3287, %v3283
      %v3289 = vrot.slane %v3288, 4
      %v3291 = vshll.u32 %v3141, 16
      %v3293 = vrot.slane %v3291, 5
      %v3294 = vsel %vm1276, %v3289, %v3293
      %v3296 = vshrl.u32 %v3142, 16
      %v3298 = vrot.slane %v3296, 4
      %v3299 = vshll.u32 %v3142, 16
      %v3301 = vrot.slane %v3299, 5
      %v3302 = vor.u32 %v3298, %v3301
      %v3303 = vrot.slane %v3302, 4
      %v3305 = vshll.u32 %v3143, 16
      %v3307 = vrot.slane %v3305, 5
      %v3308 = vsel %vm1276, %v3303, %v3307
      %v3309 = vshrl.u32 %v3143, 16
      %v3311 = vrot.slane %v3309, 4
      %v3312 = vor.u32 %v3311, %v3307
      %v3313 = vrot.slane %v3312, 4
      %v3315 = vshll.u32 %v3144, 16
      %v3317 = vrot.slane %v3315, 5
      %v3318 = vsel %vm1276, %v3313, %v3317
      %v3320 = vshrl.u32 %v3145, 16
      %v3322 = vrot.slane %v3320, 4
      %v3323 = vshll.u32 %v3145, 16
      %v3325 = vrot.slane %v3323, 5
      %v3326 = vor.u32 %v3322, %v3325
      %v3327 = vrot.slane %v3326, 4
      %v3329 = vshll.u32 %v3146, 16
      %v3331 = vrot.slane %v3329, 5
      %v3332 = vsel %vm1276, %v3327, %v3331
      %v3333 = vshrl.u32 %v3146, 16
      %v3335 = vrot.slane %v3333, 4
      %v3336 = vor.u32 %v3335, %v3331
      %v3337 = vrot.slane %v3336, 4
      %v3339 = vshll.u32 %v3147, 16
      %v3341 = vrot.slane %v3339, 5
      %v3342 = vsel %vm1276, %v3337, %v3341
      %v3344 = vshrl.u32 %v3148, 16
      %v3346 = vrot.slane %v3344, 4
      %v3347 = vshll.u32 %v3148, 16
      %v3349 = vrot.slane %v3347, 5
      %v3350 = vor.u32 %v3346, %v3349
      %v3351 = vrot.slane %v3350, 4
      %v3353 = vshll.u32 %v3149, 16
      %v3355 = vrot.slane %v3353, 5
      %v3356 = vsel %vm1276, %v3351, %v3355
      %v3357 = vshrl.u32 %v3149, 16
      %v3359 = vrot.slane %v3357, 4
      %v3360 = vor.u32 %v3359, %v3355
      %v3361 = vrot.slane %v3360, 4
      %v3363 = vshll.u32 %v3150, 16
      %v3365 = vrot.slane %v3363, 5
      %v3366 = vsel %vm1276, %v3361, %v3365
      %v3368 = vshrl.u32 %v3151, 16
      %v3370 = vrot.slane %v3368, 4
      %v3371 = vshll.u32 %v3151, 16
      %v3373 = vrot.slane %v3371, 5
      %v3374 = vor.u32 %v3370, %v3373
      %v3375 = vrot.slane %v3374, 4
      %v3377 = vshll.u32 %v3152, 16
      %v3379 = vrot.slane %v3377, 5
      %v3380 = vsel %vm1276, %v3375, %v3379
      %v3381 = vshrl.u32 %v3152, 16
      %v3383 = vrot.slane %v3381, 4
      %v3384 = vor.u32 %v3383, %v3379
      %v3385 = vrot.slane %v3384, 4
      %v3387 = vshll.u32 %v3153, 16
      %v3389 = vrot.slane %v3387, 5
      %v3390 = vsel %vm1276, %v3385, %v3389
      %v3392 = vshrl.u32 %v3154, 16
      %v3394 = vrot.slane %v3392, 4
      %v3395 = vshll.u32 %v3154, 16
      %v3397 = vrot.slane %v3395, 5
      %v3398 = vor.u32 %v3394, %v3397
      %v3399 = vrot.slane %v3398, 4
      %v3401 = vshll.u32 %v3155, 16
      %v3403 = vrot.slane %v3401, 5
      %v3404 = vsel %vm1276, %v3399, %v3403
      %v3405 = vshrl.u32 %v3155, 16
      %v3407 = vrot.slane %v3405, 4
      %v3408 = vor.u32 %v3407, %v3403
      %v3409 = vrot.slane %v3408, 4
      %v3411 = vshll.u32 %v3156, 16
      %v3413 = vrot.slane %v3411, 5
      %v3414 = vsel %vm1276, %v3409, %v3413
      %v3416 = vshrl.u32 %v3157, 16
      %v3418 = vrot.slane %v3416, 4
      %v3419 = vshll.u32 %v3157, 16
      %v3421 = vrot.slane %v3419, 5
      %v3422 = vor.u32 %v3418, %v3421
      %v3423 = vrot.slane %v3422, 4
      %v3425 = vshll.u32 %v3158, 16
      %v3427 = vrot.slane %v3425, 5
      %v3428 = vsel %vm1276, %v3423, %v3427
      %v3429 = vshrl.u32 %v3158, 16
      %v3431 = vrot.slane %v3429, 4
      %v3432 = vor.u32 %v3431, %v3427
      %v3433 = vrot.slane %v3432, 4
      %v3435 = vshll.u32 %v3159, 16
      %v3437 = vrot.slane %v3435, 5
      %v3438 = vsel %vm1276, %v3433, %v3437
      %v3440 = vshrl.u32 %v3160, 16
      %v3442 = vrot.slane %v3440, 4
      %v3443 = vshll.u32 %v3160, 16
      %v3445 = vrot.slane %v3443, 5
      %v3446 = vor.u32 %v3442, %v3445
      %v3447 = vrot.slane %v3446, 4
      %v3449 = vshll.u32 %v3161, 16
      %v3451 = vrot.slane %v3449, 5
      %v3452 = vsel %vm1276, %v3447, %v3451
      %v3453 = vshrl.u32 %v3161, 16
      %v3455 = vrot.slane %v3453, 4
      %v3456 = vor.u32 %v3455, %v3451
      %v3457 = vrot.slane %v3456, 4
      %v3459 = vshll.u32 %v3162, 16
      %v3461 = vrot.slane %v3459, 5
      %v3462 = vsel %vm1276, %v3457, %v3461
      %v3464 = vshrl.u32 %v3163, 16
      %v3466 = vrot.slane %v3464, 4
      %v3467 = vshll.u32 %v3163, 16
      %v3469 = vrot.slane %v3467, 5
      %v3470 = vor.u32 %v3466, %v3469
      %v3471 = vrot.slane %v3470, 4
      %v3473 = vshll.u32 %v3164, 16
      %v3475 = vrot.slane %v3473, 5
      %v3476 = vsel %vm1276, %v3471, %v3475
      %v3477 = vshrl.u32 %v3164, 16
      %v3479 = vrot.slane %v3477, 4
      %v3480 = vor.u32 %v3479, %v3475
      %v3481 = vrot.slane %v3480, 4
      %v3483 = vshll.u32 %v3165, 16
      %v3485 = vrot.slane %v3483, 5
      %v3486 = vsel %vm1276, %v3481, %v3485
      %v3488 = vshrl.u32 %v3166, 16
      %v3490 = vrot.slane %v3488, 4
      %v3491 = vshll.u32 %v3166, 16
      %v3493 = vrot.slane %v3491, 5
      %v3494 = vor.u32 %v3490, %v3493
      %v3495 = vrot.slane %v3494, 4
      %v3497 = vshll.u32 %v3167, 16
      %v3499 = vrot.slane %v3497, 5
      %v3500 = vsel %vm1276, %v3495, %v3499
      %v3501 = vshrl.u32 %v3167, 16
      %v3503 = vrot.slane %v3501, 4
      %v3504 = vor.u32 %v3503, %v3499
      %v3505 = vrot.slane %v3504, 4
      %v3507 = vshll.u32 %v3168, 16
      %v3509 = vrot.slane %v3507, 5
      %v3510 = vsel %vm1276, %v3505, %v3509
      %v3512 = vshrl.u32 %v3169, 16
      %v3514 = vrot.slane %v3512, 4
      %v3515 = vshll.u32 %v3169, 16
      %v3517 = vrot.slane %v3515, 5
      %v3518 = vor.u32 %v3514, %v3517
      %v3519 = vrot.slane %v3518, 4
      %v3521 = vshll.u32 %v3170, 16
      %v3523 = vrot.slane %v3521, 5
      %v3524 = vsel %vm1276, %v3519, %v3523
      %v3525 = vshrl.u32 %v3170, 16
      %v3527 = vrot.slane %v3525, 4
      %v3528 = vor.u32 %v3527, %v3523
      %v3529 = vrot.slane %v3528, 4
      %v3531 = vshll.u32 %v3171, 16
      %v3533 = vrot.slane %v3531, 5
      %v3534 = vsel %vm1276, %v3529, %v3533
      %v3536 = vshrl.u32 %v3172, 16
      %v3538 = vrot.slane %v3536, 4
      %v3539 = vshll.u32 %v3172, 16
      %v3541 = vrot.slane %v3539, 5
      %v3542 = vor.u32 %v3538, %v3541
      %v3543 = vrot.slane %v3542, 4
      %v3545 = vshll.u32 %v3173, 16
      %v3547 = vrot.slane %v3545, 5
      %v3548 = vsel %vm1276, %v3543, %v3547
      %v3549 = vshrl.u32 %v3173, 16
      %v3551 = vrot.slane %v3549, 4
      %v3552 = vor.u32 %v3551, %v3547
      %v3553 = vrot.slane %v3552, 4
      %v3555 = vshll.u32 %v3174, 16
      %v3557 = vrot.slane %v3555, 5
      %v3558 = vsel %vm1276, %v3553, %v3557
      %s3559 = scalar_lea.vmem %s1, 256
      %v3560 = vld [vmem:[%s3559] sm:$0xf]
      %v3561 = vld [vmem:[%s3559 + $0x4] sm:$0xf]
      %v3562 = vld [vmem:[%s3559 + $0x8] sm:$0xf]
      %v3563 = vld [vmem:[%s3559 + $0xc] sm:$0xf]
      %v3564 = vld [vmem:[%s3559 + $0x10] sm:$0xf]
      %v3565 = vld [vmem:[%s3559 + $0x14] sm:$0xf]
      %v3566 = vld [vmem:[%s3559 + $0x18] sm:$0xf]
      %v3567 = vld [vmem:[%s3559 + $0x1c] sm:$0xf]
      %v3568 = vld [vmem:[%s3559 + $0x20] sm:$0xf]
      %v3569 = vld [vmem:[%s3559 + $0x24] sm:$0xf]
      %v3570 = vld [vmem:[%s3559 + $0x28] sm:$0xf]
      %v3571 = vld [vmem:[%s3559 + $0x2c] sm:$0xf]
      %v3572 = vld [vmem:[%s3559 + $0x30] sm:$0xf]
      %v3573 = vld [vmem:[%s3559 + $0x34] sm:$0xf]
      %v3574 = vld [vmem:[%s3559 + $0x38] sm:$0xf]
      %v3575 = vld [vmem:[%s3559 + $0x3c] sm:$0xf]
      %v3576 = vunpack.c.l.b16 %v3188
      %v3577 = vunpack.c.l.b16 %v3198
      %v3578 = vunpack.c.l.b16 %v3212
      %v3579 = vunpack.c.l.b16 %v3222
      %v3580 = vunpack.c.l.b16 %v3236
      %v3581 = vunpack.c.l.b16 %v3246
      %v3582 = vunpack.c.l.b16 %v3260
      %v3583 = vunpack.c.l.b16 %v3270
      %v3584 = vunpack.c.l.b16 %v3284
      %v3585 = vunpack.c.l.b16 %v3294
      %v3586 = vunpack.c.l.b16 %v3308
      %v3587 = vunpack.c.l.b16 %v3318
      %v3588 = vunpack.c.l.b16 %v3332
      %v3589 = vunpack.c.l.b16 %v3342
      %v3590 = vunpack.c.l.b16 %v3356
      %v3591 = vunpack.c.l.b16 %v3366
      %v3592 = vunpack.c.l.b16 %v3380
      %v3593 = vunpack.c.l.b16 %v3390
      %v3594 = vunpack.c.l.b16 %v3404
      %v3595 = vunpack.c.l.b16 %v3414
      %v3596 = vunpack.c.l.b16 %v3428
      %v3597 = vunpack.c.l.b16 %v3438
      %v3598 = vunpack.c.l.b16 %v3452
      %v3599 = vunpack.c.l.b16 %v3462
      %v3600 = vunpack.c.l.b16 %v3476
      %v3601 = vunpack.c.l.b16 %v3486
      %v3602 = vunpack.c.l.b16 %v3500
      %v3603 = vunpack.c.l.b16 %v3510
      %v3604 = vunpack.c.l.b16 %v3524
      %v3605 = vunpack.c.l.b16 %v3534
      %v3606 = vunpack.c.l.b16 %v3548
      %v3607 = vunpack.c.l.b16 %v3558
      %v3608 = vpack.c.b16 %v3577, %v3576
      %v3609 = vpack.c.b16 %v3579, %v3578
      %v3610 = vpack.c.b16 %v3581, %v3580
      %v3611 = vpack.c.b16 %v3583, %v3582
      %v3612 = vpack.c.b16 %v3585, %v3584
      %v3613 = vpack.c.b16 %v3587, %v3586
      %v3614 = vpack.c.b16 %v3589, %v3588
      %v3615 = vpack.c.b16 %v3591, %v3590
      %v3616 = vpack.c.b16 %v3593, %v3592
      %v3617 = vpack.c.b16 %v3595, %v3594
      %v3618 = vpack.c.b16 %v3597, %v3596
      %v3619 = vpack.c.b16 %v3599, %v3598
      %v3620 = vpack.c.b16 %v3601, %v3600
      %v3621 = vpack.c.b16 %v3603, %v3602
      %v3622 = vpack.c.b16 %v3605, %v3604
      %v3623 = vpack.c.b16 %v3607, %v3606
      %v3656 = vunpack.c.l.b16 %v3560
      %v3657 = vunpack.c.l.b16 %v3561
      %v3658 = vunpack.c.l.b16 %v3562
      %v3659 = vunpack.c.l.b16 %v3563
      %v3660 = vunpack.c.l.b16 %v3564
      %v3661 = vunpack.c.l.b16 %v3565
      %v3662 = vunpack.c.l.b16 %v3566
      %v3663 = vunpack.c.l.b16 %v3567
      %v3664 = vunpack.c.l.b16 %v3568
      %v3665 = vunpack.c.l.b16 %v3569
      %v3666 = vunpack.c.l.b16 %v3570
      %v3667 = vunpack.c.l.b16 %v3571
      %v3668 = vunpack.c.l.b16 %v3572
      %v3669 = vunpack.c.l.b16 %v3573
      %v3670 = vunpack.c.l.b16 %v3574
      %v3671 = vunpack.c.l.b16 %v3575
      %v3672 = vpack.c.b16 %v3657, %v3656
      %v3673 = vpack.c.b16 %v3659, %v3658
      %v3674 = vpack.c.b16 %v3661, %v3660
      %v3675 = vpack.c.b16 %v3663, %v3662
      %v3676 = vpack.c.b16 %v3665, %v3664
      %v3677 = vpack.c.b16 %v3667, %v3666
      %v3678 = vpack.c.b16 %v3669, %v3668
      %v3679 = vpack.c.b16 %v3671, %v3670
      %3688 = vmatprep.subr.bf16.mxu0 0
      %3689 = vmatpush1.bf16.msra.mxu0 %v3679
      %3690 = vmatprep.subr.bf16.mxu0 0
      %3691 = vmatpush1.bf16.msra.mxu0 %v3678
      %3692 = vmatprep.subr.bf16.mxu0 0
      %3693 = vmatpush1.bf16.msra.mxu0 %v3677
      %3694 = vmatprep.subr.bf16.mxu0 0
      %3695 = vmatpush1.bf16.msra.mxu0 %v3676
      %3696 = vmatprep.subr.bf16.mxu0 0
      %3697 = vmatpush1.bf16.msra.mxu0 %v3675
      %3698 = vmatprep.subr.bf16.mxu0 0
      %3699 = vmatpush1.bf16.msra.mxu0 %v3674
      %3700 = vmatprep.subr.bf16.mxu0 0
      %3701 = vmatpush1.bf16.msra.mxu0 %v3673
      %3702 = vmatprep.subr.bf16.mxu0 0
      %3703 = vmatpush1.bf16.msra.mxu0 %v3672
      %3704 = vmatprep.subr.bf16.mxu0 0
      %3705 = vmatpush2.bf16.msra.mxu0 0
      %3706 = vmatprep.subr.bf16.mxu0 0
      %3707 = vmatpush2.bf16.msra.mxu0 0
      %3708 = vmatprep.subr.bf16.mxu0 0
      %3709 = vmatpush2.bf16.msra.mxu0 0
      %3710 = vmatprep.subr.bf16.mxu0 0
      %3711 = vmatpush2.bf16.msra.mxu0 0
      %3712 = vmatprep.subr.bf16.mxu0 0
      %3713 = vmatpush2.bf16.msra.mxu0 0
      %3714 = vmatprep.subr.bf16.mxu0 0
      %3715 = vmatpush2.bf16.msra.mxu0 0
      %3716 = vmatprep.subr.bf16.mxu0 0
      %3717 = vmatpush2.bf16.msra.mxu0 0
      %3718 = vmatprep.subr.bf16.mxu0 0
      %3719 = vmatpush2.bf16.msra.mxu0 0
      %3720 = vmatprep.mubr.bf16.mxu0 0
      %3721 = vmatmul.mubr.bf16.gmra.mxu0 %v3608
      %v3722 = vpop.f32.mrf.mxu0
      %v3723 = vadd.f32 0.0, %v3722
      %v3724 = vpop.f32.mrf.mxu0
      %v3725 = vpop.f32.mrf.mxu0
      %v3726 = vadd.f32 0.0, %v3725
      %v3727 = vpop.f32.mrf.mxu0
      %3728 = vmatprep.mubr.bf16.mxu0 0
      %3729 = vmatmul.mubr.bf16.gmra.mxu0 %v3609
      %v3730 = vpop.f32.mrf.mxu0
      %v3731 = vadd.f32 0.0, %v3730
      %v3732 = vpop.f32.mrf.mxu0
      %v3733 = vpop.f32.mrf.mxu0
      %v3734 = vadd.f32 0.0, %v3733
      %v3735 = vpop.f32.mrf.mxu0
      %3736 = vmatprep.mubr.bf16.mxu0 0
      %3737 = vmatmul.mubr.bf16.gmra.mxu0 %v3610
      %v3738 = vpop.f32.mrf.mxu0
      %v3739 = vadd.f32 0.0, %v3738
      %v3740 = vpop.f32.mrf.mxu0
      %v3741 = vpop.f32.mrf.mxu0
      %v3742 = vadd.f32 0.0, %v3741
      %v3743 = vpop.f32.mrf.mxu0
      %3744 = vmatprep.mubr.bf16.mxu0 0
      %3745 = vmatmul.mubr.bf16.gmra.mxu0 %v3611
      %v3746 = vpop.f32.mrf.mxu0
      %v3747 = vadd.f32 0.0, %v3746
      %v3748 = vpop.f32.mrf.mxu0
      %v3749 = vpop.f32.mrf.mxu0
      %v3750 = vadd.f32 0.0, %v3749
      %v3751 = vpop.f32.mrf.mxu0
      %3752 = vmatprep.mubr.bf16.mxu0 0
      %3753 = vmatmul.mubr.bf16.gmra.mxu0 %v3612
      %v3754 = vpop.f32.mrf.mxu0
      %v3755 = vadd.f32 0.0, %v3754
      %v3756 = vpop.f32.mrf.mxu0
      %v3757 = vpop.f32.mrf.mxu0
      %v3758 = vadd.f32 0.0, %v3757
      %v3759 = vpop.f32.mrf.mxu0
      %3760 = vmatprep.mubr.bf16.mxu0 0
      %3761 = vmatmul.mubr.bf16.gmra.mxu0 %v3613
      %v3762 = vpop.f32.mrf.mxu0
      %v3763 = vadd.f32 0.0, %v3762
      %v3764 = vpop.f32.mrf.mxu0
      %v3765 = vpop.f32.mrf.mxu0
      %v3766 = vadd.f32 0.0, %v3765
      %v3767 = vpop.f32.mrf.mxu0
      %3768 = vmatprep.mubr.bf16.mxu0 0
      %3769 = vmatmul.mubr.bf16.gmra.mxu0 %v3614
      %v3770 = vpop.f32.mrf.mxu0
      %v3771 = vadd.f32 0.0, %v3770
      %v3772 = vpop.f32.mrf.mxu0
      %v3773 = vpop.f32.mrf.mxu0
      %v3774 = vadd.f32 0.0, %v3773
      %v3775 = vpop.f32.mrf.mxu0
      %3776 = vmatprep.mubr.bf16.mxu0 0
      %3777 = vmatmul.mubr.bf16.gmra.mxu0 %v3615
      %v3778 = vpop.f32.mrf.mxu0
      %v3779 = vadd.f32 0.0, %v3778
      %v3780 = vpop.f32.mrf.mxu0
      %v3781 = vpop.f32.mrf.mxu0
      %v3782 = vadd.f32 0.0, %v3781
      %v3783 = vpop.f32.mrf.mxu0
      %3784 = vmatprep.mubr.bf16.mxu0 0
      %3785 = vmatmul.mubr.bf16.gmra.mxu0 %v3616
      %v3786 = vpop.f32.mrf.mxu0
      %v3787 = vadd.f32 0.0, %v3786
      %v3788 = vpop.f32.mrf.mxu0
      %v3789 = vpop.f32.mrf.mxu0
      %v3790 = vadd.f32 0.0, %v3789
      %v3791 = vpop.f32.mrf.mxu0
      %3792 = vmatprep.mubr.bf16.mxu0 0
      %3793 = vmatmul.mubr.bf16.gmra.mxu0 %v3617
      %v3794 = vpop.f32.mrf.mxu0
      %v3795 = vadd.f32 0.0, %v3794
      %v3796 = vpop.f32.mrf.mxu0
      %v3797 = vpop.f32.mrf.mxu0
      %v3798 = vadd.f32 0.0, %v3797
      %v3799 = vpop.f32.mrf.mxu0
      %3800 = vmatprep.mubr.bf16.mxu0 0
      %3801 = vmatmul.mubr.bf16.gmra.mxu0 %v3618
      %v3802 = vpop.f32.mrf.mxu0
      %v3803 = vadd.f32 0.0, %v3802
      %v3804 = vpop.f32.mrf.mxu0
      %v3805 = vpop.f32.mrf.mxu0
      %v3806 = vadd.f32 0.0, %v3805
      %v3807 = vpop.f32.mrf.mxu0
      %3808 = vmatprep.mubr.bf16.mxu0 0
      %3809 = vmatmul.mubr.bf16.gmra.mxu0 %v3619
      %v3810 = vpop.f32.mrf.mxu0
      %v3811 = vadd.f32 0.0, %v3810
      %v3812 = vpop.f32.mrf.mxu0
      %v3813 = vpop.f32.mrf.mxu0
      %v3814 = vadd.f32 0.0, %v3813
      %v3815 = vpop.f32.mrf.mxu0
      %3816 = vmatprep.mubr.bf16.mxu0 0
      %3817 = vmatmul.mubr.bf16.gmra.mxu0 %v3620
      %v3818 = vpop.f32.mrf.mxu0
      %v3819 = vadd.f32 0.0, %v3818
      %v3820 = vpop.f32.mrf.mxu0
      %v3821 = vpop.f32.mrf.mxu0
      %v3822 = vadd.f32 0.0, %v3821
      %v3823 = vpop.f32.mrf.mxu0
      %3824 = vmatprep.mubr.bf16.mxu0 0
      %3825 = vmatmul.mubr.bf16.gmra.mxu0 %v3621
      %v3826 = vpop.f32.mrf.mxu0
      %v3827 = vadd.f32 0.0, %v3826
      %v3828 = vpop.f32.mrf.mxu0
      %v3829 = vpop.f32.mrf.mxu0
      %v3830 = vadd.f32 0.0, %v3829
      %v3831 = vpop.f32.mrf.mxu0
      %3832 = vmatprep.mubr.bf16.mxu0 0
      %3833 = vmatmul.mubr.bf16.gmra.mxu0 %v3622
      %v3834 = vpop.f32.mrf.mxu0
      %v3835 = vadd.f32 0.0, %v3834
      %v3836 = vpop.f32.mrf.mxu0
      %v3837 = vpop.f32.mrf.mxu0
      %v3838 = vadd.f32 0.0, %v3837
      %v3839 = vpop.f32.mrf.mxu0
      %3840 = vmatprep.mubr.bf16.mxu0 0
      %3841 = vmatmul.mubr.bf16.gmra.mxu0 %v3623
      %v3842 = vpop.f32.mrf.mxu0
      %v3843 = vadd.f32 0.0, %v3842
      %v3844 = vpop.f32.mrf.mxu0
      %v3845 = vpop.f32.mrf.mxu0
      %v3846 = vadd.f32 0.0, %v3845
      %v3847 = vpop.f32.mrf.mxu0
      %3848 = vdwg.mxu0
      %v3849 = vadd.f32 %v3095, %v3723
      %v3850 = vadd.f32 %v3096, %v3726
      %v3851 = vadd.f32 %v3097, %v3731
      %v3852 = vadd.f32 %v3098, %v3734
      %v3853 = vadd.f32 %v3099, %v3739
      %v3854 = vadd.f32 %v3100, %v3742
      %v3855 = vadd.f32 %v3101, %v3747
      %v3856 = vadd.f32 %v3102, %v3750
      %v3857 = vadd.f32 %v3103, %v3755
      %v3858 = vadd.f32 %v3104, %v3758
      %v3859 = vadd.f32 %v3105, %v3763
      %v3860 = vadd.f32 %v3106, %v3766
      %v3861 = vadd.f32 %v3107, %v3771
      %v3862 = vadd.f32 %v3108, %v3774
      %v3863 = vadd.f32 %v3109, %v3779
      %v3864 = vadd.f32 %v3110, %v3782
      %v3865 = vadd.f32 %v3111, %v3787
      %v3866 = vadd.f32 %v3112, %v3790
      %v3867 = vadd.f32 %v3113, %v3795
      %v3868 = vadd.f32 %v3114, %v3798
      %v3869 = vadd.f32 %v3115, %v3803
      %v3870 = vadd.f32 %v3116, %v3806
      %v3871 = vadd.f32 %v3117, %v3811
      %v3872 = vadd.f32 %v3118, %v3814
      %v3873 = vadd.f32 %v3119, %v3819
      %v3874 = vadd.f32 %v3120, %v3822
      %v3875 = vadd.f32 %v3121, %v3827
      %v3876 = vadd.f32 %v3122, %v3830
      %v3877 = vadd.f32 %v3123, %v3835
      %v3878 = vadd.f32 %v3124, %v3838
      %v3879 = vadd.f32 %v3125, %v3843
      %v3880 = vadd.f32 %v3126, %v3846
      %v3881 = vld [vmem:[%s785] sm:$0xe]
      %v3882 = vld [vmem:[%s785 + $0xc] sm:$0xe]
      %v3883 = vld [vmem:[%s785 + $0x18] sm:$0xe]
      %v3884 = vld [vmem:[%s785 + $0x24] sm:$0xe]
      %v3885 = vld [vmem:[%s785 + $0x30] sm:$0xe]
      %v3886 = vld [vmem:[%s785 + $0x3c] sm:$0xe]
      %v3887 = vld [vmem:[%s785 + $0x48] sm:$0xe]
      %v3888 = vld [vmem:[%s785 + $0x54] sm:$0xe]
      %v3889 = vld [vmem:[%s785 + $0x60] sm:$0xe]
      %v3890 = vld [vmem:[%s785 + $0x6c] sm:$0xe]
      %v3891 = vld [vmem:[%s785 + $0x78] sm:$0xe]
      %v3892 = vld [vmem:[%s785 + $0x84] sm:$0xe]
      %v3893 = vld [vmem:[%s785 + $0x90] sm:$0xe]
      %v3894 = vld [vmem:[%s785 + $0x9c] sm:$0xe]
      %v3895 = vld [vmem:[%s785 + $0xa8] sm:$0xe]
      %v3896 = vld [vmem:[%s785 + $0xb4] sm:$0xe]
      %v3945 = vrot.slane %v3881, 5
      %v3946 = vrot.slane %v3945, 4
      %v3947 = vrot.slane %v3128, 5
      %v3948 = vsel %vm2306, %v3946, %v3947
      %v3949 = vrot.slane %v3947, 4
      %v3950 = vrot.slane %v3129, 5
      %v3951 = vsel %vm2306, %v3949, %v3950
      %v3952 = vrot.slane %v3882, 5
      %v3953 = vrot.slane %v3952, 4
      %v3954 = vrot.slane %v3131, 5
      %v3955 = vsel %vm2306, %v3953, %v3954
      %v3956 = vrot.slane %v3954, 4
      %v3957 = vrot.slane %v3132, 5
      %v3958 = vsel %vm2306, %v3956, %v3957
      %v3959 = vrot.slane %v3883, 5
      %v3960 = vrot.slane %v3959, 4
      %v3961 = vrot.slane %v3134, 5
      %v3962 = vsel %vm2306, %v3960, %v3961
      %v3963 = vrot.slane %v3961, 4
      %v3964 = vrot.slane %v3135, 5
      %v3965 = vsel %vm2306, %v3963, %v3964
      %v3966 = vrot.slane %v3884, 5
      %v3967 = vrot.slane %v3966, 4
      %v3968 = vrot.slane %v3137, 5
      %v3969 = vsel %vm2306, %v3967, %v3968
      %v3970 = vrot.slane %v3968, 4
      %v3971 = vrot.slane %v3138, 5
      %v3972 = vsel %vm2306, %v3970, %v3971
      %v3973 = vrot.slane %v3885, 5
      %v3974 = vrot.slane %v3973, 4
      %v3975 = vrot.slane %v3140, 5
      %v3976 = vsel %vm2306, %v3974, %v3975
      %v3977 = vrot.slane %v3975, 4
      %v3978 = vrot.slane %v3141, 5
      %v3979 = vsel %vm2306, %v3977, %v3978
      %v3980 = vrot.slane %v3886, 5
      %v3981 = vrot.slane %v3980, 4
      %v3982 = vrot.slane %v3143, 5
      %v3983 = vsel %vm2306, %v3981, %v3982
      %v3984 = vrot.slane %v3982, 4
      %v3985 = vrot.slane %v3144, 5
      %v3986 = vsel %vm2306, %v3984, %v3985
      %v3987 = vrot.slane %v3887, 5
      %v3988 = vrot.slane %v3987, 4
      %v3989 = vrot.slane %v3146, 5
      %v3990 = vsel %vm2306, %v3988, %v3989
      %v3991 = vrot.slane %v3989, 4
      %v3992 = vrot.slane %v3147, 5
      %v3993 = vsel %vm2306, %v3991, %v3992
      %v3994 = vrot.slane %v3888, 5
      %v3995 = vrot.slane %v3994, 4
      %v3996 = vrot.slane %v3149, 5
      %v3997 = vsel %vm2306, %v3995, %v3996
      %v3998 = vrot.slane %v3996, 4
      %v3999 = vrot.slane %v3150, 5
      %v4000 = vsel %vm2306, %v3998, %v3999
      %v4001 = vrot.slane %v3889, 5
      %v4002 = vrot.slane %v4001, 4
      %v4003 = vrot.slane %v3152, 5
      %v4004 = vsel %vm2306, %v4002, %v4003
      %v4005 = vrot.slane %v4003, 4
      %v4006 = vrot.slane %v3153, 5
      %v4007 = vsel %vm2306, %v4005, %v4006
      %v4008 = vrot.slane %v3890, 5
      %v4009 = vrot.slane %v4008, 4
      %v4010 = vrot.slane %v3155, 5
      %v4011 = vsel %vm2306, %v4009, %v4010
      %v4012 = vrot.slane %v4010, 4
      %v4013 = vrot.slane %v3156, 5
      %v4014 = vsel %vm2306, %v4012, %v4013
      %v4015 = vrot.slane %v3891, 5
      %v4016 = vrot.slane %v4015, 4
      %v4017 = vrot.slane %v3158, 5
      %v4018 = vsel %vm2306, %v4016, %v4017
      %v4019 = vrot.slane %v4017, 4
      %v4020 = vrot.slane %v3159, 5
      %v4021 = vsel %vm2306, %v4019, %v4020
      %v4022 = vrot.slane %v3892, 5
      %v4023 = vrot.slane %v4022, 4
      %v4024 = vrot.slane %v3161, 5
      %v4025 = vsel %vm2306, %v4023, %v4024
      %v4026 = vrot.slane %v4024, 4
      %v4027 = vrot.slane %v3162, 5
      %v4028 = vsel %vm2306, %v4026, %v4027
      %v4029 = vrot.slane %v3893, 5
      %v4030 = vrot.slane %v4029, 4
      %v4031 = vrot.slane %v3164, 5
      %v4032 = vsel %vm2306, %v4030, %v4031
      %v4033 = vrot.slane %v4031, 4
      %v4034 = vrot.slane %v3165, 5
      %v4035 = vsel %vm2306, %v4033, %v4034
      %v4036 = vrot.slane %v3894, 5
      %v4037 = vrot.slane %v4036, 4
      %v4038 = vrot.slane %v3167, 5
      %v4039 = vsel %vm2306, %v4037, %v4038
      %v4040 = vrot.slane %v4038, 4
      %v4041 = vrot.slane %v3168, 5
      %v4042 = vsel %vm2306, %v4040, %v4041
      %v4043 = vrot.slane %v3895, 5
      %v4044 = vrot.slane %v4043, 4
      %v4045 = vrot.slane %v3170, 5
      %v4046 = vsel %vm2306, %v4044, %v4045
      %v4047 = vrot.slane %v4045, 4
      %v4048 = vrot.slane %v3171, 5
      %v4049 = vsel %vm2306, %v4047, %v4048
      %v4050 = vrot.slane %v3896, 5
      %v4051 = vrot.slane %v4050, 4
      %v4052 = vrot.slane %v3173, 5
      %v4053 = vsel %vm2306, %v4051, %v4052
      %v4054 = vrot.slane %v4052, 4
      %v4055 = vrot.slane %v3174, 5
      %v4056 = vsel %vm2306, %v4054, %v4055
      %s4057 = scalar_lea.vmem %s1, 320
      %v4058 = vld [vmem:[%s4057] sm:$0xf]
      %v4059 = vld [vmem:[%s4057 + $0x4] sm:$0xf]
      %v4060 = vld [vmem:[%s4057 + $0x8] sm:$0xf]
      %v4061 = vld [vmem:[%s4057 + $0xc] sm:$0xf]
      %v4062 = vld [vmem:[%s4057 + $0x10] sm:$0xf]
      %v4063 = vld [vmem:[%s4057 + $0x14] sm:$0xf]
      %v4064 = vld [vmem:[%s4057 + $0x18] sm:$0xf]
      %v4065 = vld [vmem:[%s4057 + $0x1c] sm:$0xf]
      %v4066 = vld [vmem:[%s4057 + $0x20] sm:$0xf]
      %v4067 = vld [vmem:[%s4057 + $0x24] sm:$0xf]
      %v4068 = vld [vmem:[%s4057 + $0x28] sm:$0xf]
      %v4069 = vld [vmem:[%s4057 + $0x2c] sm:$0xf]
      %v4070 = vld [vmem:[%s4057 + $0x30] sm:$0xf]
      %v4071 = vld [vmem:[%s4057 + $0x34] sm:$0xf]
      %v4072 = vld [vmem:[%s4057 + $0x38] sm:$0xf]
      %v4073 = vld [vmem:[%s4057 + $0x3c] sm:$0xf]
      %v4074 = vunpack.c.l.b16 %v3948
      %v4075 = vunpack.c.l.b16 %v3951
      %v4076 = vunpack.c.l.b16 %v3955
      %v4077 = vunpack.c.l.b16 %v3958
      %v4078 = vunpack.c.l.b16 %v3962
      %v4079 = vunpack.c.l.b16 %v3965
      %v4080 = vunpack.c.l.b16 %v3969
      %v4081 = vunpack.c.l.b16 %v3972
      %v4082 = vunpack.c.l.b16 %v3976
      %v4083 = vunpack.c.l.b16 %v3979
      %v4084 = vunpack.c.l.b16 %v3983
      %v4085 = vunpack.c.l.b16 %v3986
      %v4086 = vunpack.c.l.b16 %v3990
      %v4087 = vunpack.c.l.b16 %v3993
      %v4088 = vunpack.c.l.b16 %v3997
      %v4089 = vunpack.c.l.b16 %v4000
      %v4090 = vunpack.c.l.b16 %v4004
      %v4091 = vunpack.c.l.b16 %v4007
      %v4092 = vunpack.c.l.b16 %v4011
      %v4093 = vunpack.c.l.b16 %v4014
      %v4094 = vunpack.c.l.b16 %v4018
      %v4095 = vunpack.c.l.b16 %v4021
      %v4096 = vunpack.c.l.b16 %v4025
      %v4097 = vunpack.c.l.b16 %v4028
      %v4098 = vunpack.c.l.b16 %v4032
      %v4099 = vunpack.c.l.b16 %v4035
      %v4100 = vunpack.c.l.b16 %v4039
      %v4101 = vunpack.c.l.b16 %v4042
      %v4102 = vunpack.c.l.b16 %v4046
      %v4103 = vunpack.c.l.b16 %v4049
      %v4104 = vunpack.c.l.b16 %v4053
      %v4105 = vunpack.c.l.b16 %v4056
      %v4106 = vpack.c.b16 %v4075, %v4074
      %v4107 = vpack.c.b16 %v4077, %v4076
      %v4108 = vpack.c.b16 %v4079, %v4078
      %v4109 = vpack.c.b16 %v4081, %v4080
      %v4110 = vpack.c.b16 %v4083, %v4082
      %v4111 = vpack.c.b16 %v4085, %v4084
      %v4112 = vpack.c.b16 %v4087, %v4086
      %v4113 = vpack.c.b16 %v4089, %v4088
      %v4114 = vpack.c.b16 %v4091, %v4090
      %v4115 = vpack.c.b16 %v4093, %v4092
      %v4116 = vpack.c.b16 %v4095, %v4094
      %v4117 = vpack.c.b16 %v4097, %v4096
      %v4118 = vpack.c.b16 %v4099, %v4098
      %v4119 = vpack.c.b16 %v4101, %v4100
      %v4120 = vpack.c.b16 %v4103, %v4102
      %v4121 = vpack.c.b16 %v4105, %v4104
      %v4154 = vunpack.c.l.b16 %v4058
      %v4155 = vunpack.c.l.b16 %v4059
      %v4156 = vunpack.c.l.b16 %v4060
      %v4157 = vunpack.c.l.b16 %v4061
      %v4158 = vunpack.c.l.b16 %v4062
      %v4159 = vunpack.c.l.b16 %v4063
      %v4160 = vunpack.c.l.b16 %v4064
      %v4161 = vunpack.c.l.b16 %v4065
      %v4162 = vunpack.c.l.b16 %v4066
      %v4163 = vunpack.c.l.b16 %v4067
      %v4164 = vunpack.c.l.b16 %v4068
      %v4165 = vunpack.c.l.b16 %v4069
      %v4166 = vunpack.c.l.b16 %v4070
      %v4167 = vunpack.c.l.b16 %v4071
      %v4168 = vunpack.c.l.b16 %v4072
      %v4169 = vunpack.c.l.b16 %v4073
      %v4170 = vpack.c.b16 %v4155, %v4154
      %v4171 = vpack.c.b16 %v4157, %v4156
      %v4172 = vpack.c.b16 %v4159, %v4158
      %v4173 = vpack.c.b16 %v4161, %v4160
      %v4174 = vpack.c.b16 %v4163, %v4162
      %v4175 = vpack.c.b16 %v4165, %v4164
      %v4176 = vpack.c.b16 %v4167, %v4166
      %v4177 = vpack.c.b16 %v4169, %v4168
      %4186 = vmatprep.subr.bf16.mxu0 0
      %4187 = vmatpush1.bf16.msra.mxu0 %v4177
      %4188 = vmatprep.subr.bf16.mxu0 0
      %4189 = vmatpush1.bf16.msra.mxu0 %v4176
      %4190 = vmatprep.subr.bf16.mxu0 0
      %4191 = vmatpush1.bf16.msra.mxu0 %v4175
      %4192 = vmatprep.subr.bf16.mxu0 0
      %4193 = vmatpush1.bf16.msra.mxu0 %v4174
      %4194 = vmatprep.subr.bf16.mxu0 0
      %4195 = vmatpush1.bf16.msra.mxu0 %v4173
      %4196 = vmatprep.subr.bf16.mxu0 0
      %4197 = vmatpush1.bf16.msra.mxu0 %v4172
      %4198 = vmatprep.subr.bf16.mxu0 0
      %4199 = vmatpush1.bf16.msra.mxu0 %v4171
      %4200 = vmatprep.subr.bf16.mxu0 0
      %4201 = vmatpush1.bf16.msra.mxu0 %v4170
      %4202 = vmatprep.subr.bf16.mxu0 0
      %4203 = vmatpush2.bf16.msra.mxu0 0
      %4204 = vmatprep.subr.bf16.mxu0 0
      %4205 = vmatpush2.bf16.msra.mxu0 0
      %4206 = vmatprep.subr.bf16.mxu0 0
      %4207 = vmatpush2.bf16.msra.mxu0 0
      %4208 = vmatprep.subr.bf16.mxu0 0
      %4209 = vmatpush2.bf16.msra.mxu0 0
      %4210 = vmatprep.subr.bf16.mxu0 0
      %4211 = vmatpush2.bf16.msra.mxu0 0
      %4212 = vmatprep.subr.bf16.mxu0 0
      %4213 = vmatpush2.bf16.msra.mxu0 0
      %4214 = vmatprep.subr.bf16.mxu0 0
      %4215 = vmatpush2.bf16.msra.mxu0 0
      %4216 = vmatprep.subr.bf16.mxu0 0
      %4217 = vmatpush2.bf16.msra.mxu0 0
      %4218 = vmatprep.mubr.bf16.mxu0 0
      %4219 = vmatmul.mubr.bf16.gmra.mxu0 %v4106
      %v4220 = vpop.f32.mrf.mxu0
      %v4221 = vadd.f32 0.0, %v4220
      %v4222 = vpop.f32.mrf.mxu0
      %v4223 = vpop.f32.mrf.mxu0
      %v4224 = vadd.f32 0.0, %v4223
      %v4225 = vpop.f32.mrf.mxu0
      %4226 = vmatprep.mubr.bf16.mxu0 0
      %4227 = vmatmul.mubr.bf16.gmra.mxu0 %v4107
      %v4228 = vpop.f32.mrf.mxu0
      %v4229 = vadd.f32 0.0, %v4228
      %v4230 = vpop.f32.mrf.mxu0
      %v4231 = vpop.f32.mrf.mxu0
      %v4232 = vadd.f32 0.0, %v4231
      %v4233 = vpop.f32.mrf.mxu0
      %4234 = vmatprep.mubr.bf16.mxu0 0
      %4235 = vmatmul.mubr.bf16.gmra.mxu0 %v4108
      %v4236 = vpop.f32.mrf.mxu0
      %v4237 = vadd.f32 0.0, %v4236
      %v4238 = vpop.f32.mrf.mxu0
      %v4239 = vpop.f32.mrf.mxu0
      %v4240 = vadd.f32 0.0, %v4239
      %v4241 = vpop.f32.mrf.mxu0
      %4242 = vmatprep.mubr.bf16.mxu0 0
      %4243 = vmatmul.mubr.bf16.gmra.mxu0 %v4109
      %v4244 = vpop.f32.mrf.mxu0
      %v4245 = vadd.f32 0.0, %v4244
      %v4246 = vpop.f32.mrf.mxu0
      %v4247 = vpop.f32.mrf.mxu0
      %v4248 = vadd.f32 0.0, %v4247
      %v4249 = vpop.f32.mrf.mxu0
      %4250 = vmatprep.mubr.bf16.mxu0 0
      %4251 = vmatmul.mubr.bf16.gmra.mxu0 %v4110
      %v4252 = vpop.f32.mrf.mxu0
      %v4253 = vadd.f32 0.0, %v4252
      %v4254 = vpop.f32.mrf.mxu0
      %v4255 = vpop.f32.mrf.mxu0
      %v4256 = vadd.f32 0.0, %v4255
      %v4257 = vpop.f32.mrf.mxu0
      %4258 = vmatprep.mubr.bf16.mxu0 0
      %4259 = vmatmul.mubr.bf16.gmra.mxu0 %v4111
      %v4260 = vpop.f32.mrf.mxu0
      %v4261 = vadd.f32 0.0, %v4260
      %v4262 = vpop.f32.mrf.mxu0
      %v4263 = vpop.f32.mrf.mxu0
      %v4264 = vadd.f32 0.0, %v4263
      %v4265 = vpop.f32.mrf.mxu0
      %4266 = vmatprep.mubr.bf16.mxu0 0
      %4267 = vmatmul.mubr.bf16.gmra.mxu0 %v4112
      %v4268 = vpop.f32.mrf.mxu0
      %v4269 = vadd.f32 0.0, %v4268
      %v4270 = vpop.f32.mrf.mxu0
      %v4271 = vpop.f32.mrf.mxu0
      %v4272 = vadd.f32 0.0, %v4271
      %v4273 = vpop.f32.mrf.mxu0
      %4274 = vmatprep.mubr.bf16.mxu0 0
      %4275 = vmatmul.mubr.bf16.gmra.mxu0 %v4113
      %v4276 = vpop.f32.mrf.mxu0
      %v4277 = vadd.f32 0.0, %v4276
      %v4278 = vpop.f32.mrf.mxu0
      %v4279 = vpop.f32.mrf.mxu0
      %v4280 = vadd.f32 0.0, %v4279
      %v4281 = vpop.f32.mrf.mxu0
      %4282 = vmatprep.mubr.bf16.mxu0 0
      %4283 = vmatmul.mubr.bf16.gmra.mxu0 %v4114
      %v4284 = vpop.f32.mrf.mxu0
      %v4285 = vadd.f32 0.0, %v4284
      %v4286 = vpop.f32.mrf.mxu0
      %v4287 = vpop.f32.mrf.mxu0
      %v4288 = vadd.f32 0.0, %v4287
      %v4289 = vpop.f32.mrf.mxu0
      %4290 = vmatprep.mubr.bf16.mxu0 0
      %4291 = vmatmul.mubr.bf16.gmra.mxu0 %v4115
      %v4292 = vpop.f32.mrf.mxu0
      %v4293 = vadd.f32 0.0, %v4292
      %v4294 = vpop.f32.mrf.mxu0
      %v4295 = vpop.f32.mrf.mxu0
      %v4296 = vadd.f32 0.0, %v4295
      %v4297 = vpop.f32.mrf.mxu0
      %4298 = vmatprep.mubr.bf16.mxu0 0
      %4299 = vmatmul.mubr.bf16.gmra.mxu0 %v4116
      %v4300 = vpop.f32.mrf.mxu0
      %v4301 = vadd.f32 0.0, %v4300
      %v4302 = vpop.f32.mrf.mxu0
      %v4303 = vpop.f32.mrf.mxu0
      %v4304 = vadd.f32 0.0, %v4303
      %v4305 = vpop.f32.mrf.mxu0
      %4306 = vmatprep.mubr.bf16.mxu0 0
      %4307 = vmatmul.mubr.bf16.gmra.mxu0 %v4117
      %v4308 = vpop.f32.mrf.mxu0
      %v4309 = vadd.f32 0.0, %v4308
      %v4310 = vpop.f32.mrf.mxu0
      %v4311 = vpop.f32.mrf.mxu0
      %v4312 = vadd.f32 0.0, %v4311
      %v4313 = vpop.f32.mrf.mxu0
      %4314 = vmatprep.mubr.bf16.mxu0 0
      %4315 = vmatmul.mubr.bf16.gmra.mxu0 %v4118
      %v4316 = vpop.f32.mrf.mxu0
      %v4317 = vadd.f32 0.0, %v4316
      %v4318 = vpop.f32.mrf.mxu0
      %v4319 = vpop.f32.mrf.mxu0
      %v4320 = vadd.f32 0.0, %v4319
      %v4321 = vpop.f32.mrf.mxu0
      %4322 = vmatprep.mubr.bf16.mxu0 0
      %4323 = vmatmul.mubr.bf16.gmra.mxu0 %v4119
      %v4324 = vpop.f32.mrf.mxu0
      %v4325 = vadd.f32 0.0, %v4324
      %v4326 = vpop.f32.mrf.mxu0
      %v4327 = vpop.f32.mrf.mxu0
      %v4328 = vadd.f32 0.0, %v4327
      %v4329 = vpop.f32.mrf.mxu0
      %4330 = vmatprep.mubr.bf16.mxu0 0
      %4331 = vmatmul.mubr.bf16.gmra.mxu0 %v4120
      %v4332 = vpop.f32.mrf.mxu0
      %v4333 = vadd.f32 0.0, %v4332
      %v4334 = vpop.f32.mrf.mxu0
      %v4335 = vpop.f32.mrf.mxu0
      %v4336 = vadd.f32 0.0, %v4335
      %v4337 = vpop.f32.mrf.mxu0
      %4338 = vmatprep.mubr.bf16.mxu0 0
      %4339 = vmatmul.mubr.bf16.gmra.mxu0 %v4121
      %v4340 = vpop.f32.mrf.mxu0
      %v4341 = vadd.f32 0.0, %v4340
      %v4342 = vpop.f32.mrf.mxu0
      %v4343 = vpop.f32.mrf.mxu0
      %v4344 = vadd.f32 0.0, %v4343
      %v4345 = vpop.f32.mrf.mxu0
      %4346 = vdwg.mxu0
      %v4347 = vadd.f32 %v3849, %v4221
      %v4348 = vadd.f32 %v3850, %v4224
      %v4349 = vadd.f32 %v3851, %v4229
      %v4350 = vadd.f32 %v3852, %v4232
      %v4351 = vadd.f32 %v3853, %v4237
      %v4352 = vadd.f32 %v3854, %v4240
      %v4353 = vadd.f32 %v3855, %v4245
      %v4354 = vadd.f32 %v3856, %v4248
      %v4355 = vadd.f32 %v3857, %v4253
      %v4356 = vadd.f32 %v3858, %v4256
      %v4357 = vadd.f32 %v3859, %v4261
      %v4358 = vadd.f32 %v3860, %v4264
      %v4359 = vadd.f32 %v3861, %v4269
      %v4360 = vadd.f32 %v3862, %v4272
      %v4361 = vadd.f32 %v3863, %v4277
      %v4362 = vadd.f32 %v3864, %v4280
      %v4363 = vadd.f32 %v3865, %v4285
      %v4364 = vadd.f32 %v3866, %v4288
      %v4365 = vadd.f32 %v3867, %v4293
      %v4366 = vadd.f32 %v3868, %v4296
      %v4367 = vadd.f32 %v3869, %v4301
      %v4368 = vadd.f32 %v3870, %v4304
      %v4369 = vadd.f32 %v3871, %v4309
      %v4370 = vadd.f32 %v3872, %v4312
      %v4371 = vadd.f32 %v3873, %v4317
      %v4372 = vadd.f32 %v3874, %v4320
      %v4373 = vadd.f32 %v3875, %v4325
      %v4374 = vadd.f32 %v3876, %v4328
      %v4375 = vadd.f32 %v3877, %v4333
      %v4376 = vadd.f32 %v3878, %v4336
      %v4377 = vadd.f32 %v3879, %v4341
      %v4378 = vadd.f32 %v3880, %v4344
      %s4379 = scalar_lea.vmem [#allocation2], 24
      %v4380 = vld [vmem:[%s4379] sm:$0xf]
      %v4381 = vld [vmem:[%s4379 + $0x4] sm:$0xf]
      %v4382 = vld [vmem:[%s4379 + $0xc] sm:$0xf]
      %v4383 = vld [vmem:[%s4379 + $0x10] sm:$0xf]
      %v4384 = vld [vmem:[%s4379 + $0x18] sm:$0xf]
      %v4385 = vld [vmem:[%s4379 + $0x1c] sm:$0xf]
      %v4386 = vld [vmem:[%s4379 + $0x24] sm:$0xf]
      %v4387 = vld [vmem:[%s4379 + $0x28] sm:$0xf]
      %v4388 = vld [vmem:[%s4379 + $0x30] sm:$0xf]
      %v4389 = vld [vmem:[%s4379 + $0x34] sm:$0xf]
      %v4390 = vld [vmem:[%s4379 + $0x3c] sm:$0xf]
      %v4391 = vld [vmem:[%s4379 + $0x40] sm:$0xf]
      %v4392 = vld [vmem:[%s4379 + $0x48] sm:$0xf]
      %v4393 = vld [vmem:[%s4379 + $0x4c] sm:$0xf]
      %v4394 = vld [vmem:[%s4379 + $0x54] sm:$0xf]
      %v4395 = vld [vmem:[%s4379 + $0x58] sm:$0xf]
      %v4396 = vld [vmem:[%s4379 + $0x60] sm:$0xf]
      %v4397 = vld [vmem:[%s4379 + $0x64] sm:$0xf]
      %v4398 = vld [vmem:[%s4379 + $0x6c] sm:$0xf]
      %v4399 = vld [vmem:[%s4379 + $0x70] sm:$0xf]
      %v4400 = vld [vmem:[%s4379 + $0x78] sm:$0xf]
      %v4401 = vld [vmem:[%s4379 + $0x7c] sm:$0xf]
      %v4402 = vld [vmem:[%s4379 + $0x84] sm:$0xf]
      %v4403 = vld [vmem:[%s4379 + $0x88] sm:$0xf]
      %v4404 = vld [vmem:[%s4379 + $0x90] sm:$0xf]
      %v4405 = vld [vmem:[%s4379 + $0x94] sm:$0xf]
      %v4406 = vld [vmem:[%s4379 + $0x9c] sm:$0xf]
      %v4407 = vld [vmem:[%s4379 + $0xa0] sm:$0xf]
      %v4408 = vld [vmem:[%s4379 + $0xa8] sm:$0xf]
      %v4409 = vld [vmem:[%s4379 + $0xac] sm:$0xf]
      %v4410 = vld [vmem:[%s4379 + $0xb4] sm:$0xf]
      %v4411 = vld [vmem:[%s4379 + $0xb8] sm:$0xf]
      %s4412 = scalar_lea.vmem %s1, 384
      %v4413 = vld [vmem:[%s4412] sm:$0xf]
      %v4414 = vld [vmem:[%s4412 + $0x4] sm:$0xf]
      %v4415 = vld [vmem:[%s4412 + $0x8] sm:$0xf]
      %v4416 = vld [vmem:[%s4412 + $0xc] sm:$0xf]
      %v4417 = vld [vmem:[%s4412 + $0x10] sm:$0xf]
      %v4418 = vld [vmem:[%s4412 + $0x14] sm:$0xf]
      %v4419 = vld [vmem:[%s4412 + $0x18] sm:$0xf]
      %v4420 = vld [vmem:[%s4412 + $0x1c] sm:$0xf]
      %v4421 = vld [vmem:[%s4412 + $0x20] sm:$0xf]
      %v4422 = vld [vmem:[%s4412 + $0x24] sm:$0xf]
      %v4423 = vld [vmem:[%s4412 + $0x28] sm:$0xf]
      %v4424 = vld [vmem:[%s4412 + $0x2c] sm:$0xf]
      %v4425 = vld [vmem:[%s4412 + $0x30] sm:$0xf]
      %v4426 = vld [vmem:[%s4412 + $0x34] sm:$0xf]
      %v4427 = vld [vmem:[%s4412 + $0x38] sm:$0xf]
      %v4428 = vld [vmem:[%s4412 + $0x3c] sm:$0xf]
      %v4461 = vunpack.c.l.b16 %v4380
      %v4462 = vunpack.c.l.b16 %v4381
      %v4463 = vunpack.c.l.b16 %v4382
      %v4464 = vunpack.c.l.b16 %v4383
      %v4465 = vunpack.c.l.b16 %v4384
      %v4466 = vunpack.c.l.b16 %v4385
      %v4467 = vunpack.c.l.b16 %v4386
      %v4468 = vunpack.c.l.b16 %v4387
      %v4469 = vunpack.c.l.b16 %v4388
      %v4470 = vunpack.c.l.b16 %v4389
      %v4471 = vunpack.c.l.b16 %v4390
      %v4472 = vunpack.c.l.b16 %v4391
      %v4473 = vunpack.c.l.b16 %v4392
      %v4474 = vunpack.c.l.b16 %v4393
      %v4475 = vunpack.c.l.b16 %v4394
      %v4476 = vunpack.c.l.b16 %v4395
      %v4477 = vunpack.c.l.b16 %v4396
      %v4478 = vunpack.c.l.b16 %v4397
      %v4479 = vunpack.c.l.b16 %v4398
      %v4480 = vunpack.c.l.b16 %v4399
      %v4481 = vunpack.c.l.b16 %v4400
      %v4482 = vunpack.c.l.b16 %v4401
      %v4483 = vunpack.c.l.b16 %v4402
      %v4484 = vunpack.c.l.b16 %v4403
      %v4485 = vunpack.c.l.b16 %v4404
      %v4486 = vunpack.c.l.b16 %v4405
      %v4487 = vunpack.c.l.b16 %v4406
      %v4488 = vunpack.c.l.b16 %v4407
      %v4489 = vunpack.c.l.b16 %v4408
      %v4490 = vunpack.c.l.b16 %v4409
      %v4491 = vunpack.c.l.b16 %v4410
      %v4492 = vunpack.c.l.b16 %v4411
      %v4493 = vpack.c.b16 %v4462, %v4461
      %v4494 = vpack.c.b16 %v4464, %v4463
      %v4495 = vpack.c.b16 %v4466, %v4465
      %v4496 = vpack.c.b16 %v4468, %v4467
      %v4497 = vpack.c.b16 %v4470, %v4469
      %v4498 = vpack.c.b16 %v4472, %v4471
      %v4499 = vpack.c.b16 %v4474, %v4473
      %v4500 = vpack.c.b16 %v4476, %v4475
      %v4501 = vpack.c.b16 %v4478, %v4477
      %v4502 = vpack.c.b16 %v4480, %v4479
      %v4503 = vpack.c.b16 %v4482, %v4481
      %v4504 = vpack.c.b16 %v4484, %v4483
      %v4505 = vpack.c.b16 %v4486, %v4485
      %v4506 = vpack.c.b16 %v4488, %v4487
      %v4507 = vpack.c.b16 %v4490, %v4489
      %v4508 = vpack.c.b16 %v4492, %v4491
      %v4541 = vunpack.c.l.b16 %v4413
      %v4542 = vunpack.c.l.b16 %v4414
      %v4543 = vunpack.c.l.b16 %v4415
      %v4544 = vunpack.c.l.b16 %v4416
      %v4545 = vunpack.c.l.b16 %v4417
      %v4546 = vunpack.c.l.b16 %v4418
      %v4547 = vunpack.c.l.b16 %v4419
      %v4548 = vunpack.c.l.b16 %v4420
      %v4549 = vunpack.c.l.b16 %v4421
      %v4550 = vunpack.c.l.b16 %v4422
      %v4551 = vunpack.c.l.b16 %v4423
      %v4552 = vunpack.c.l.b16 %v4424
      %v4553 = vunpack.c.l.b16 %v4425
      %v4554 = vunpack.c.l.b16 %v4426
      %v4555 = vunpack.c.l.b16 %v4427
      %v4556 = vunpack.c.l.b16 %v4428
      %v4557 = vpack.c.b16 %v4542, %v4541
      %v4558 = vpack.c.b16 %v4544, %v4543
      %v4559 = vpack.c.b16 %v4546, %v4545
      %v4560 = vpack.c.b16 %v4548, %v4547
      %v4561 = vpack.c.b16 %v4550, %v4549
      %v4562 = vpack.c.b16 %v4552, %v4551
      %v4563 = vpack.c.b16 %v4554, %v4553
      %v4564 = vpack.c.b16 %v4556, %v4555
      %4573 = vmatprep.subr.bf16.mxu0 0
      %4574 = vmatpush1.bf16.msra.mxu0 %v4564
      %4575 = vmatprep.subr.bf16.mxu0 0
      %4576 = vmatpush1.bf16.msra.mxu0 %v4563
      %4577 = vmatprep.subr.bf16.mxu0 0
      %4578 = vmatpush1.bf16.msra.mxu0 %v4562
      %4579 = vmatprep.subr.bf16.mxu0 0
      %4580 = vmatpush1.bf16.msra.mxu0 %v4561
      %4581 = vmatprep.subr.bf16.mxu0 0
      %4582 = vmatpush1.bf16.msra.mxu0 %v4560
      %4583 = vmatprep.subr.bf16.mxu0 0
      %4584 = vmatpush1.bf16.msra.mxu0 %v4559
      %4585 = vmatprep.subr.bf16.mxu0 0
      %4586 = vmatpush1.bf16.msra.mxu0 %v4558
      %4587 = vmatprep.subr.bf16.mxu0 0
      %4588 = vmatpush1.bf16.msra.mxu0 %v4557
      %4589 = vmatprep.subr.bf16.mxu0 0
      %4590 = vmatpush2.bf16.msra.mxu0 0
      %4591 = vmatprep.subr.bf16.mxu0 0
      %4592 = vmatpush2.bf16.msra.mxu0 0
      %4593 = vmatprep.subr.bf16.mxu0 0
      %4594 = vmatpush2.bf16.msra.mxu0 0
      %4595 = vmatprep.subr.bf16.mxu0 0
      %4596 = vmatpush2.bf16.msra.mxu0 0
      %4597 = vmatprep.subr.bf16.mxu0 0
      %4598 = vmatpush2.bf16.msra.mxu0 0
      %4599 = vmatprep.subr.bf16.mxu0 0
      %4600 = vmatpush2.bf16.msra.mxu0 0
      %4601 = vmatprep.subr.bf16.mxu0 0
      %4602 = vmatpush2.bf16.msra.mxu0 0
      %4603 = vmatprep.subr.bf16.mxu0 0
      %4604 = vmatpush2.bf16.msra.mxu0 0
      %4605 = vmatprep.mubr.bf16.mxu0 0
      %4606 = vmatmul.mubr.bf16.gmra.mxu0 %v4493
      %v4607 = vpop.f32.mrf.mxu0
      %v4608 = vadd.f32 0.0, %v4607
      %v4609 = vpop.f32.mrf.mxu0
      %v4610 = vpop.f32.mrf.mxu0
      %v4611 = vadd.f32 0.0, %v4610
      %v4612 = vpop.f32.mrf.mxu0
      %4613 = vmatprep.mubr.bf16.mxu0 0
      %4614 = vmatmul.mubr.bf16.gmra.mxu0 %v4494
      %v4615 = vpop.f32.mrf.mxu0
      %v4616 = vadd.f32 0.0, %v4615
      %v4617 = vpop.f32.mrf.mxu0
      %v4618 = vpop.f32.mrf.mxu0
      %v4619 = vadd.f32 0.0, %v4618
      %v4620 = vpop.f32.mrf.mxu0
      %4621 = vmatprep.mubr.bf16.mxu0 0
      %4622 = vmatmul.mubr.bf16.gmra.mxu0 %v4495
      %v4623 = vpop.f32.mrf.mxu0
      %v4624 = vadd.f32 0.0, %v4623
      %v4625 = vpop.f32.mrf.mxu0
      %v4626 = vpop.f32.mrf.mxu0
      %v4627 = vadd.f32 0.0, %v4626
      %v4628 = vpop.f32.mrf.mxu0
      %4629 = vmatprep.mubr.bf16.mxu0 0
      %4630 = vmatmul.mubr.bf16.gmra.mxu0 %v4496
      %v4631 = vpop.f32.mrf.mxu0
      %v4632 = vadd.f32 0.0, %v4631
      %v4633 = vpop.f32.mrf.mxu0
      %v4634 = vpop.f32.mrf.mxu0
      %v4635 = vadd.f32 0.0, %v4634
      %v4636 = vpop.f32.mrf.mxu0
      %4637 = vmatprep.mubr.bf16.mxu0 0
      %4638 = vmatmul.mubr.bf16.gmra.mxu0 %v4497
      %v4639 = vpop.f32.mrf.mxu0
      %v4640 = vadd.f32 0.0, %v4639
      %v4641 = vpop.f32.mrf.mxu0
      %v4642 = vpop.f32.mrf.mxu0
      %v4643 = vadd.f32 0.0, %v4642
      %v4644 = vpop.f32.mrf.mxu0
      %4645 = vmatprep.mubr.bf16.mxu0 0
      %4646 = vmatmul.mubr.bf16.gmra.mxu0 %v4498
      %v4647 = vpop.f32.mrf.mxu0
      %v4648 = vadd.f32 0.0, %v4647
      %v4649 = vpop.f32.mrf.mxu0
      %v4650 = vpop.f32.mrf.mxu0
      %v4651 = vadd.f32 0.0, %v4650
      %v4652 = vpop.f32.mrf.mxu0
      %4653 = vmatprep.mubr.bf16.mxu0 0
      %4654 = vmatmul.mubr.bf16.gmra.mxu0 %v4499
      %v4655 = vpop.f32.mrf.mxu0
      %v4656 = vadd.f32 0.0, %v4655
      %v4657 = vpop.f32.mrf.mxu0
      %v4658 = vpop.f32.mrf.mxu0
      %v4659 = vadd.f32 0.0, %v4658
      %v4660 = vpop.f32.mrf.mxu0
      %4661 = vmatprep.mubr.bf16.mxu0 0
      %4662 = vmatmul.mubr.bf16.gmra.mxu0 %v4500
      %v4663 = vpop.f32.mrf.mxu0
      %v4664 = vadd.f32 0.0, %v4663
      %v4665 = vpop.f32.mrf.mxu0
      %v4666 = vpop.f32.mrf.mxu0
      %v4667 = vadd.f32 0.0, %v4666
      %v4668 = vpop.f32.mrf.mxu0
      %4669 = vmatprep.mubr.bf16.mxu0 0
      %4670 = vmatmul.mubr.bf16.gmra.mxu0 %v4501
      %v4671 = vpop.f32.mrf.mxu0
      %v4672 = vadd.f32 0.0, %v4671
      %v4673 = vpop.f32.mrf.mxu0
      %v4674 = vpop.f32.mrf.mxu0
      %v4675 = vadd.f32 0.0, %v4674
      %v4676 = vpop.f32.mrf.mxu0
      %4677 = vmatprep.mubr.bf16.mxu0 0
      %4678 = vmatmul.mubr.bf16.gmra.mxu0 %v4502
      %v4679 = vpop.f32.mrf.mxu0
      %v4680 = vadd.f32 0.0, %v4679
      %v4681 = vpop.f32.mrf.mxu0
      %v4682 = vpop.f32.mrf.mxu0
      %v4683 = vadd.f32 0.0, %v4682
      %v4684 = vpop.f32.mrf.mxu0
      %4685 = vmatprep.mubr.bf16.mxu0 0
      %4686 = vmatmul.mubr.bf16.gmra.mxu0 %v4503
      %v4687 = vpop.f32.mrf.mxu0
      %v4688 = vadd.f32 0.0, %v4687
      %v4689 = vpop.f32.mrf.mxu0
      %v4690 = vpop.f32.mrf.mxu0
      %v4691 = vadd.f32 0.0, %v4690
      %v4692 = vpop.f32.mrf.mxu0
      %4693 = vmatprep.mubr.bf16.mxu0 0
      %4694 = vmatmul.mubr.bf16.gmra.mxu0 %v4504
      %v4695 = vpop.f32.mrf.mxu0
      %v4696 = vadd.f32 0.0, %v4695
      %v4697 = vpop.f32.mrf.mxu0
      %v4698 = vpop.f32.mrf.mxu0
      %v4699 = vadd.f32 0.0, %v4698
      %v4700 = vpop.f32.mrf.mxu0
      %4701 = vmatprep.mubr.bf16.mxu0 0
      %4702 = vmatmul.mubr.bf16.gmra.mxu0 %v4505
      %v4703 = vpop.f32.mrf.mxu0
      %v4704 = vadd.f32 0.0, %v4703
      %v4705 = vpop.f32.mrf.mxu0
      %v4706 = vpop.f32.mrf.mxu0
      %v4707 = vadd.f32 0.0, %v4706
      %v4708 = vpop.f32.mrf.mxu0
      %4709 = vmatprep.mubr.bf16.mxu0 0
      %4710 = vmatmul.mubr.bf16.gmra.mxu0 %v4506
      %v4711 = vpop.f32.mrf.mxu0
      %v4712 = vadd.f32 0.0, %v4711
      %v4713 = vpop.f32.mrf.mxu0
      %v4714 = vpop.f32.mrf.mxu0
      %v4715 = vadd.f32 0.0, %v4714
      %v4716 = vpop.f32.mrf.mxu0
      %4717 = vmatprep.mubr.bf16.mxu0 0
      %4718 = vmatmul.mubr.bf16.gmra.mxu0 %v4507
      %v4719 = vpop.f32.mrf.mxu0
      %v4720 = vadd.f32 0.0, %v4719
      %v4721 = vpop.f32.mrf.mxu0
      %v4722 = vpop.f32.mrf.mxu0
      %v4723 = vadd.f32 0.0, %v4722
      %v4724 = vpop.f32.mrf.mxu0
      %4725 = vmatprep.mubr.bf16.mxu0 0
      %4726 = vmatmul.mubr.bf16.gmra.mxu0 %v4508
      %v4727 = vpop.f32.mrf.mxu0
      %v4728 = vadd.f32 0.0, %v4727
      %v4729 = vpop.f32.mrf.mxu0
      %v4730 = vpop.f32.mrf.mxu0
      %v4731 = vadd.f32 0.0, %v4730
      %v4732 = vpop.f32.mrf.mxu0
      %4733 = vdwg.mxu0
      %v4734 = vadd.f32 %v4347, %v4608
      %v4735 = vadd.f32 %v4348, %v4611
      %v4736 = vadd.f32 %v4349, %v4616
      %v4737 = vadd.f32 %v4350, %v4619
      %v4738 = vadd.f32 %v4351, %v4624
      %v4739 = vadd.f32 %v4352, %v4627
      %v4740 = vadd.f32 %v4353, %v4632
      %v4741 = vadd.f32 %v4354, %v4635
      %v4742 = vadd.f32 %v4355, %v4640
      %v4743 = vadd.f32 %v4356, %v4643
      %v4744 = vadd.f32 %v4357, %v4648
      %v4745 = vadd.f32 %v4358, %v4651
      %v4746 = vadd.f32 %v4359, %v4656
      %v4747 = vadd.f32 %v4360, %v4659
      %v4748 = vadd.f32 %v4361, %v4664
      %v4749 = vadd.f32 %v4362, %v4667
      %v4750 = vadd.f32 %v4363, %v4672
      %v4751 = vadd.f32 %v4364, %v4675
      %v4752 = vadd.f32 %v4365, %v4680
      %v4753 = vadd.f32 %v4366, %v4683
      %v4754 = vadd.f32 %v4367, %v4688
      %v4755 = vadd.f32 %v4368, %v4691
      %v4756 = vadd.f32 %v4369, %v4696
      %v4757 = vadd.f32 %v4370, %v4699
      %v4758 = vadd.f32 %v4371, %v4704
      %v4759 = vadd.f32 %v4372, %v4707
      %v4760 = vadd.f32 %v4373, %v4712
      %v4761 = vadd.f32 %v4374, %v4715
      %v4762 = vadd.f32 %v4375, %v4720
      %v4763 = vadd.f32 %v4376, %v4723
      %v4764 = vadd.f32 %v4377, %v4728
      %v4765 = vadd.f32 %v4378, %v4731
      %v4766 = vld [vmem:[%s4379] sm:$0xf]
      %v4767 = vld [vmem:[%s4379 + $0x4] sm:$0xf]
      %v4768 = vld [vmem:[%s4379 + $0x8] sm:$0x1]
      %v4769 = vld [vmem:[%s4379 + $0xc] sm:$0xf]
      %v4770 = vld [vmem:[%s4379 + $0x10] sm:$0xf]
      %v4771 = vld [vmem:[%s4379 + $0x14] sm:$0x1]
      %v4772 = vld [vmem:[%s4379 + $0x18] sm:$0xf]
      %v4773 = vld [vmem:[%s4379 + $0x1c] sm:$0xf]
      %v4774 = vld [vmem:[%s4379 + $0x20] sm:$0x1]
      %v4775 = vld [vmem:[%s4379 + $0x24] sm:$0xf]
      %v4776 = vld [vmem:[%s4379 + $0x28] sm:$0xf]
      %v4777 = vld [vmem:[%s4379 + $0x2c] sm:$0x1]
      %v4778 = vld [vmem:[%s4379 + $0x30] sm:$0xf]
      %v4779 = vld [vmem:[%s4379 + $0x34] sm:$0xf]
      %v4780 = vld [vmem:[%s4379 + $0x38] sm:$0x1]
      %v4781 = vld [vmem:[%s4379 + $0x3c] sm:$0xf]
      %v4782 = vld [vmem:[%s4379 + $0x40] sm:$0xf]
      %v4783 = vld [vmem:[%s4379 + $0x44] sm:$0x1]
      %v4784 = vld [vmem:[%s4379 + $0x48] sm:$0xf]
      %v4785 = vld [vmem:[%s4379 + $0x4c] sm:$0xf]
      %v4786 = vld [vmem:[%s4379 + $0x50] sm:$0x1]
      %v4787 = vld [vmem:[%s4379 + $0x54] sm:$0xf]
      %v4788 = vld [vmem:[%s4379 + $0x58] sm:$0xf]
      %v4789 = vld [vmem:[%s4379 + $0x5c] sm:$0x1]
      %v4790 = vld [vmem:[%s4379 + $0x60] sm:$0xf]
      %v4791 = vld [vmem:[%s4379 + $0x64] sm:$0xf]
      %v4792 = vld [vmem:[%s4379 + $0x68] sm:$0x1]
      %v4793 = vld [vmem:[%s4379 + $0x6c] sm:$0xf]
      %v4794 = vld [vmem:[%s4379 + $0x70] sm:$0xf]
      %v4795 = vld [vmem:[%s4379 + $0x74] sm:$0x1]
      %v4796 = vld [vmem:[%s4379 + $0x78] sm:$0xf]
      %v4797 = vld [vmem:[%s4379 + $0x7c] sm:$0xf]
      %v4798 = vld [vmem:[%s4379 + $0x80] sm:$0x1]
      %v4799 = vld [vmem:[%s4379 + $0x84] sm:$0xf]
      %v4800 = vld [vmem:[%s4379 + $0x88] sm:$0xf]
      %v4801 = vld [vmem:[%s4379 + $0x8c] sm:$0x1]
      %v4802 = vld [vmem:[%s4379 + $0x90] sm:$0xf]
      %v4803 = vld [vmem:[%s4379 + $0x94] sm:$0xf]
      %v4804 = vld [vmem:[%s4379 + $0x98] sm:$0x1]
      %v4805 = vld [vmem:[%s4379 + $0x9c] sm:$0xf]
      %v4806 = vld [vmem:[%s4379 + $0xa0] sm:$0xf]
      %v4807 = vld [vmem:[%s4379 + $0xa4] sm:$0x1]
      %v4808 = vld [vmem:[%s4379 + $0xa8] sm:$0xf]
      %v4809 = vld [vmem:[%s4379 + $0xac] sm:$0xf]
      %v4810 = vld [vmem:[%s4379 + $0xb0] sm:$0x1]
      %v4811 = vld [vmem:[%s4379 + $0xb4] sm:$0xf]
      %v4812 = vld [vmem:[%s4379 + $0xb8] sm:$0xf]
      %v4813 = vld [vmem:[%s4379 + $0xbc] sm:$0x1]
      %v4815 = vshrl.u32 %v4766, 16
      %v4817 = vrot.slane %v4815, 4
      %v4818 = vshll.u32 %v4766, 16
      %v4820 = vrot.slane %v4818, 5
      %v4821 = vor.u32 %v4817, %v4820
      %v4822 = vrot.slane %v4821, 4
      %v4824 = vshll.u32 %v4767, 16
      %v4826 = vrot.slane %v4824, 5
      %v4827 = vsel %vm1276, %v4822, %v4826
      %v4828 = vshrl.u32 %v4767, 16
      %v4830 = vrot.slane %v4828, 4
      %v4831 = vor.u32 %v4830, %v4826
      %v4832 = vrot.slane %v4831, 4
      %v4834 = vshll.u32 %v4768, 16
      %v4836 = vrot.slane %v4834, 5
      %v4837 = vsel %vm1276, %v4832, %v4836
      %v4839 = vshrl.u32 %v4769, 16
      %v4841 = vrot.slane %v4839, 4
      %v4842 = vshll.u32 %v4769, 16
      %v4844 = vrot.slane %v4842, 5
      %v4845 = vor.u32 %v4841, %v4844
      %v4846 = vrot.slane %v4845, 4
      %v4848 = vshll.u32 %v4770, 16
      %v4850 = vrot.slane %v4848, 5
      %v4851 = vsel %vm1276, %v4846, %v4850
      %v4852 = vshrl.u32 %v4770, 16
      %v4854 = vrot.slane %v4852, 4
      %v4855 = vor.u32 %v4854, %v4850
      %v4856 = vrot.slane %v4855, 4
      %v4858 = vshll.u32 %v4771, 16
      %v4860 = vrot.slane %v4858, 5
      %v4861 = vsel %vm1276, %v4856, %v4860
      %v4863 = vshrl.u32 %v4772, 16
      %v4865 = vrot.slane %v4863, 4
      %v4866 = vshll.u32 %v4772, 16
      %v4868 = vrot.slane %v4866, 5
      %v4869 = vor.u32 %v4865, %v4868
      %v4870 = vrot.slane %v4869, 4
      %v4872 = vshll.u32 %v4773, 16
      %v4874 = vrot.slane %v4872, 5
      %v4875 = vsel %vm1276, %v4870, %v4874
      %v4876 = vshrl.u32 %v4773, 16
      %v4878 = vrot.slane %v4876, 4
      %v4879 = vor.u32 %v4878, %v4874
      %v4880 = vrot.slane %v4879, 4
      %v4882 = vshll.u32 %v4774, 16
      %v4884 = vrot.slane %v4882, 5
      %v4885 = vsel %vm1276, %v4880, %v4884
      %v4887 = vshrl.u32 %v4775, 16
      %v4889 = vrot.slane %v4887, 4
      %v4890 = vshll.u32 %v4775, 16
      %v4892 = vrot.slane %v4890, 5
      %v4893 = vor.u32 %v4889, %v4892
      %v4894 = vrot.slane %v4893, 4
      %v4896 = vshll.u32 %v4776, 16
      %v4898 = vrot.slane %v4896, 5
      %v4899 = vsel %vm1276, %v4894, %v4898
      %v4900 = vshrl.u32 %v4776, 16
      %v4902 = vrot.slane %v4900, 4
      %v4903 = vor.u32 %v4902, %v4898
      %v4904 = vrot.slane %v4903, 4
      %v4906 = vshll.u32 %v4777, 16
      %v4908 = vrot.slane %v4906, 5
      %v4909 = vsel %vm1276, %v4904, %v4908
      %v4911 = vshrl.u32 %v4778, 16
      %v4913 = vrot.slane %v4911, 4
      %v4914 = vshll.u32 %v4778, 16
      %v4916 = vrot.slane %v4914, 5
      %v4917 = vor.u32 %v4913, %v4916
      %v4918 = vrot.slane %v4917, 4
      %v4920 = vshll.u32 %v4779, 16
      %v4922 = vrot.slane %v4920, 5
      %v4923 = vsel %vm1276, %v4918, %v4922
      %v4924 = vshrl.u32 %v4779, 16
      %v4926 = vrot.slane %v4924, 4
      %v4927 = vor.u32 %v4926, %v4922
      %v4928 = vrot.slane %v4927, 4
      %v4930 = vshll.u32 %v4780, 16
      %v4932 = vrot.slane %v4930, 5
      %v4933 = vsel %vm1276, %v4928, %v4932
      %v4935 = vshrl.u32 %v4781, 16
      %v4937 = vrot.slane %v4935, 4
      %v4938 = vshll.u32 %v4781, 16
      %v4940 = vrot.slane %v4938, 5
      %v4941 = vor.u32 %v4937, %v4940
      %v4942 = vrot.slane %v4941, 4
      %v4944 = vshll.u32 %v4782, 16
      %v4946 = vrot.slane %v4944, 5
      %v4947 = vsel %vm1276, %v4942, %v4946
      %v4948 = vshrl.u32 %v4782, 16
      %v4950 = vrot.slane %v4948, 4
      %v4951 = vor.u32 %v4950, %v4946
      %v4952 = vrot.slane %v4951, 4
      %v4954 = vshll.u32 %v4783, 16
      %v4956 = vrot.slane %v4954, 5
      %v4957 = vsel %vm1276, %v4952, %v4956
      %v4959 = vshrl.u32 %v4784, 16
      %v4961 = vrot.slane %v4959, 4
      %v4962 = vshll.u32 %v4784, 16
      %v4964 = vrot.slane %v4962, 5
      %v4965 = vor.u32 %v4961, %v4964
      %v4966 = vrot.slane %v4965, 4
      %v4968 = vshll.u32 %v4785, 16
      %v4970 = vrot.slane %v4968, 5
      %v4971 = vsel %vm1276, %v4966, %v4970
      %v4972 = vshrl.u32 %v4785, 16
      %v4974 = vrot.slane %v4972, 4
      %v4975 = vor.u32 %v4974, %v4970
      %v4976 = vrot.slane %v4975, 4
      %v4978 = vshll.u32 %v4786, 16
      %v4980 = vrot.slane %v4978, 5
      %v4981 = vsel %vm1276, %v4976, %v4980
      %v4983 = vshrl.u32 %v4787, 16
      %v4985 = vrot.slane %v4983, 4
      %v4986 = vshll.u32 %v4787, 16
      %v4988 = vrot.slane %v4986, 5
      %v4989 = vor.u32 %v4985, %v4988
      %v4990 = vrot.slane %v4989, 4
      %v4992 = vshll.u32 %v4788, 16
      %v4994 = vrot.slane %v4992, 5
      %v4995 = vsel %vm1276, %v4990, %v4994
      %v4996 = vshrl.u32 %v4788, 16
      %v4998 = vrot.slane %v4996, 4
      %v4999 = vor.u32 %v4998, %v4994
      %v5000 = vrot.slane %v4999, 4
      %v5002 = vshll.u32 %v4789, 16
      %v5004 = vrot.slane %v5002, 5
      %v5005 = vsel %vm1276, %v5000, %v5004
      %v5007 = vshrl.u32 %v4790, 16
      %v5009 = vrot.slane %v5007, 4
      %v5010 = vshll.u32 %v4790, 16
      %v5012 = vrot.slane %v5010, 5
      %v5013 = vor.u32 %v5009, %v5012
      %v5014 = vrot.slane %v5013, 4
      %v5016 = vshll.u32 %v4791, 16
      %v5018 = vrot.slane %v5016, 5
      %v5019 = vsel %vm1276, %v5014, %v5018
      %v5020 = vshrl.u32 %v4791, 16
      %v5022 = vrot.slane %v5020, 4
      %v5023 = vor.u32 %v5022, %v5018
      %v5024 = vrot.slane %v5023, 4
      %v5026 = vshll.u32 %v4792, 16
      %v5028 = vrot.slane %v5026, 5
      %v5029 = vsel %vm1276, %v5024, %v5028
      %v5031 = vshrl.u32 %v4793, 16
      %v5033 = vrot.slane %v5031, 4
      %v5034 = vshll.u32 %v4793, 16
      %v5036 = vrot.slane %v5034, 5
      %v5037 = vor.u32 %v5033, %v5036
      %v5038 = vrot.slane %v5037, 4
      %v5040 = vshll.u32 %v4794, 16
      %v5042 = vrot.slane %v5040, 5
      %v5043 = vsel %vm1276, %v5038, %v5042
      %v5044 = vshrl.u32 %v4794, 16
      %v5046 = vrot.slane %v5044, 4
      %v5047 = vor.u32 %v5046, %v5042
      %v5048 = vrot.slane %v5047, 4
      %v5050 = vshll.u32 %v4795, 16
      %v5052 = vrot.slane %v5050, 5
      %v5053 = vsel %vm1276, %v5048, %v5052
      %v5055 = vshrl.u32 %v4796, 16
      %v5057 = vrot.slane %v5055, 4
      %v5058 = vshll.u32 %v4796, 16
      %v5060 = vrot.slane %v5058, 5
      %v5061 = vor.u32 %v5057, %v5060
      %v5062 = vrot.slane %v5061, 4
      %v5064 = vshll.u32 %v4797, 16
      %v5066 = vrot.slane %v5064, 5
      %v5067 = vsel %vm1276, %v5062, %v5066
      %v5068 = vshrl.u32 %v4797, 16
      %v5070 = vrot.slane %v5068, 4
      %v5071 = vor.u32 %v5070, %v5066
      %v5072 = vrot.slane %v5071, 4
      %v5074 = vshll.u32 %v4798, 16
      %v5076 = vrot.slane %v5074, 5
      %v5077 = vsel %vm1276, %v5072, %v5076
      %v5079 = vshrl.u32 %v4799, 16
      %v5081 = vrot.slane %v5079, 4
      %v5082 = vshll.u32 %v4799, 16
      %v5084 = vrot.slane %v5082, 5
      %v5085 = vor.u32 %v5081, %v5084
      %v5086 = vrot.slane %v5085, 4
      %v5088 = vshll.u32 %v4800, 16
      %v5090 = vrot.slane %v5088, 5
      %v5091 = vsel %vm1276, %v5086, %v5090
      %v5092 = vshrl.u32 %v4800, 16
      %v5094 = vrot.slane %v5092, 4
      %v5095 = vor.u32 %v5094, %v5090
      %v5096 = vrot.slane %v5095, 4
      %v5098 = vshll.u32 %v4801, 16
      %v5100 = vrot.slane %v5098, 5
      %v5101 = vsel %vm1276, %v5096, %v5100
      %v5103 = vshrl.u32 %v4802, 16
      %v5105 = vrot.slane %v5103, 4
      %v5106 = vshll.u32 %v4802, 16
      %v5108 = vrot.slane %v5106, 5
      %v5109 = vor.u32 %v5105, %v5108
      %v5110 = vrot.slane %v5109, 4
      %v5112 = vshll.u32 %v4803, 16
      %v5114 = vrot.slane %v5112, 5
      %v5115 = vsel %vm1276, %v5110, %v5114
      %v5116 = vshrl.u32 %v4803, 16
      %v5118 = vrot.slane %v5116, 4
      %v5119 = vor.u32 %v5118, %v5114
      %v5120 = vrot.slane %v5119, 4
      %v5122 = vshll.u32 %v4804, 16
      %v5124 = vrot.slane %v5122, 5
      %v5125 = vsel %vm1276, %v5120, %v5124
      %v5127 = vshrl.u32 %v4805, 16
      %v5129 = vrot.slane %v5127, 4
      %v5130 = vshll.u32 %v4805, 16
      %v5132 = vrot.slane %v5130, 5
      %v5133 = vor.u32 %v5129, %v5132
      %v5134 = vrot.slane %v5133, 4
      %v5136 = vshll.u32 %v4806, 16
      %v5138 = vrot.slane %v5136, 5
      %v5139 = vsel %vm1276, %v5134, %v5138
      %v5140 = vshrl.u32 %v4806, 16
      %v5142 = vrot.slane %v5140, 4
      %v5143 = vor.u32 %v5142, %v5138
      %v5144 = vrot.slane %v5143, 4
      %v5146 = vshll.u32 %v4807, 16
      %v5148 = vrot.slane %v5146, 5
      %v5149 = vsel %vm1276, %v5144, %v5148
      %v5151 = vshrl.u32 %v4808, 16
      %v5153 = vrot.slane %v5151, 4
      %v5154 = vshll.u32 %v4808, 16
      %v5156 = vrot.slane %v5154, 5
      %v5157 = vor.u32 %v5153, %v5156
      %v5158 = vrot.slane %v5157, 4
      %v5160 = vshll.u32 %v4809, 16
      %v5162 = vrot.slane %v5160, 5
      %v5163 = vsel %vm1276, %v5158, %v5162
      %v5164 = vshrl.u32 %v4809, 16
      %v5166 = vrot.slane %v5164, 4
      %v5167 = vor.u32 %v5166, %v5162
      %v5168 = vrot.slane %v5167, 4
      %v5170 = vshll.u32 %v4810, 16
      %v5172 = vrot.slane %v5170, 5
      %v5173 = vsel %vm1276, %v5168, %v5172
      %v5175 = vshrl.u32 %v4811, 16
      %v5177 = vrot.slane %v5175, 4
      %v5178 = vshll.u32 %v4811, 16
      %v5180 = vrot.slane %v5178, 5
      %v5181 = vor.u32 %v5177, %v5180
      %v5182 = vrot.slane %v5181, 4
      %v5184 = vshll.u32 %v4812, 16
      %v5186 = vrot.slane %v5184, 5
      %v5187 = vsel %vm1276, %v5182, %v5186
      %v5188 = vshrl.u32 %v4812, 16
      %v5190 = vrot.slane %v5188, 4
      %v5191 = vor.u32 %v5190, %v5186
      %v5192 = vrot.slane %v5191, 4
      %v5194 = vshll.u32 %v4813, 16
      %v5196 = vrot.slane %v5194, 5
      %v5197 = vsel %vm1276, %v5192, %v5196
      %s5198 = scalar_lea.vmem %s1, 448
      %v5199 = vld [vmem:[%s5198] sm:$0xf]
      %v5200 = vld [vmem:[%s5198 + $0x4] sm:$0xf]
      %v5201 = vld [vmem:[%s5198 + $0x8] sm:$0xf]
      %v5202 = vld [vmem:[%s5198 + $0xc] sm:$0xf]
      %v5203 = vld [vmem:[%s5198 + $0x10] sm:$0xf]
      %v5204 = vld [vmem:[%s5198 + $0x14] sm:$0xf]
      %v5205 = vld [vmem:[%s5198 + $0x18] sm:$0xf]
      %v5206 = vld [vmem:[%s5198 + $0x1c] sm:$0xf]
      %v5207 = vld [vmem:[%s5198 + $0x20] sm:$0xf]
      %v5208 = vld [vmem:[%s5198 + $0x24] sm:$0xf]
      %v5209 = vld [vmem:[%s5198 + $0x28] sm:$0xf]
      %v5210 = vld [vmem:[%s5198 + $0x2c] sm:$0xf]
      %v5211 = vld [vmem:[%s5198 + $0x30] sm:$0xf]
      %v5212 = vld [vmem:[%s5198 + $0x34] sm:$0xf]
      %v5213 = vld [vmem:[%s5198 + $0x38] sm:$0xf]
      %v5214 = vld [vmem:[%s5198 + $0x3c] sm:$0xf]
      %v5215 = vunpack.c.l.b16 %v4827
      %v5216 = vunpack.c.l.b16 %v4837
      %v5217 = vunpack.c.l.b16 %v4851
      %v5218 = vunpack.c.l.b16 %v4861
      %v5219 = vunpack.c.l.b16 %v4875
      %v5220 = vunpack.c.l.b16 %v4885
      %v5221 = vunpack.c.l.b16 %v4899
      %v5222 = vunpack.c.l.b16 %v4909
      %v5223 = vunpack.c.l.b16 %v4923
      %v5224 = vunpack.c.l.b16 %v4933
      %v5225 = vunpack.c.l.b16 %v4947
      %v5226 = vunpack.c.l.b16 %v4957
      %v5227 = vunpack.c.l.b16 %v4971
      %v5228 = vunpack.c.l.b16 %v4981
      %v5229 = vunpack.c.l.b16 %v4995
      %v5230 = vunpack.c.l.b16 %v5005
      %v5231 = vunpack.c.l.b16 %v5019
      %v5232 = vunpack.c.l.b16 %v5029
      %v5233 = vunpack.c.l.b16 %v5043
      %v5234 = vunpack.c.l.b16 %v5053
      %v5235 = vunpack.c.l.b16 %v5067
      %v5236 = vunpack.c.l.b16 %v5077
      %v5237 = vunpack.c.l.b16 %v5091
      %v5238 = vunpack.c.l.b16 %v5101
      %v5239 = vunpack.c.l.b16 %v5115
      %v5240 = vunpack.c.l.b16 %v5125
      %v5241 = vunpack.c.l.b16 %v5139
      %v5242 = vunpack.c.l.b16 %v5149
      %v5243 = vunpack.c.l.b16 %v5163
      %v5244 = vunpack.c.l.b16 %v5173
      %v5245 = vunpack.c.l.b16 %v5187
      %v5246 = vunpack.c.l.b16 %v5197
      %v5247 = vpack.c.b16 %v5216, %v5215
      %v5248 = vpack.c.b16 %v5218, %v5217
      %v5249 = vpack.c.b16 %v5220, %v5219
      %v5250 = vpack.c.b16 %v5222, %v5221
      %v5251 = vpack.c.b16 %v5224, %v5223
      %v5252 = vpack.c.b16 %v5226, %v5225
      %v5253 = vpack.c.b16 %v5228, %v5227
      %v5254 = vpack.c.b16 %v5230, %v5229
      %v5255 = vpack.c.b16 %v5232, %v5231
      %v5256 = vpack.c.b16 %v5234, %v5233
      %v5257 = vpack.c.b16 %v5236, %v5235
      %v5258 = vpack.c.b16 %v5238, %v5237
      %v5259 = vpack.c.b16 %v5240, %v5239
      %v5260 = vpack.c.b16 %v5242, %v5241
      %v5261 = vpack.c.b16 %v5244, %v5243
      %v5262 = vpack.c.b16 %v5246, %v5245
      %v5295 = vunpack.c.l.b16 %v5199
      %v5296 = vunpack.c.l.b16 %v5200
      %v5297 = vunpack.c.l.b16 %v5201
      %v5298 = vunpack.c.l.b16 %v5202
      %v5299 = vunpack.c.l.b16 %v5203
      %v5300 = vunpack.c.l.b16 %v5204
      %v5301 = vunpack.c.l.b16 %v5205
      %v5302 = vunpack.c.l.b16 %v5206
      %v5303 = vunpack.c.l.b16 %v5207
      %v5304 = vunpack.c.l.b16 %v5208
      %v5305 = vunpack.c.l.b16 %v5209
      %v5306 = vunpack.c.l.b16 %v5210
      %v5307 = vunpack.c.l.b16 %v5211
      %v5308 = vunpack.c.l.b16 %v5212
      %v5309 = vunpack.c.l.b16 %v5213
      %v5310 = vunpack.c.l.b16 %v5214
      %v5311 = vpack.c.b16 %v5296, %v5295
      %v5312 = vpack.c.b16 %v5298, %v5297
      %v5313 = vpack.c.b16 %v5300, %v5299
      %v5314 = vpack.c.b16 %v5302, %v5301
      %v5315 = vpack.c.b16 %v5304, %v5303
      %v5316 = vpack.c.b16 %v5306, %v5305
      %v5317 = vpack.c.b16 %v5308, %v5307
      %v5318 = vpack.c.b16 %v5310, %v5309
      %5327 = vmatprep.subr.bf16.mxu0 0
      %5328 = vmatpush1.bf16.msra.mxu0 %v5318
      %5329 = vmatprep.subr.bf16.mxu0 0
      %5330 = vmatpush1.bf16.msra.mxu0 %v5317
      %5331 = vmatprep.subr.bf16.mxu0 0
      %5332 = vmatpush1.bf16.msra.mxu0 %v5316
      %5333 = vmatprep.subr.bf16.mxu0 0
      %5334 = vmatpush1.bf16.msra.mxu0 %v5315
      %5335 = vmatprep.subr.bf16.mxu0 0
      %5336 = vmatpush1.bf16.msra.mxu0 %v5314
      %5337 = vmatprep.subr.bf16.mxu0 0
      %5338 = vmatpush1.bf16.msra.mxu0 %v5313
      %5339 = vmatprep.subr.bf16.mxu0 0
      %5340 = vmatpush1.bf16.msra.mxu0 %v5312
      %5341 = vmatprep.subr.bf16.mxu0 0
      %5342 = vmatpush1.bf16.msra.mxu0 %v5311
      %5343 = vmatprep.subr.bf16.mxu0 0
      %5344 = vmatpush2.bf16.msra.mxu0 0
      %5345 = vmatprep.subr.bf16.mxu0 0
      %5346 = vmatpush2.bf16.msra.mxu0 0
      %5347 = vmatprep.subr.bf16.mxu0 0
      %5348 = vmatpush2.bf16.msra.mxu0 0
      %5349 = vmatprep.subr.bf16.mxu0 0
      %5350 = vmatpush2.bf16.msra.mxu0 0
      %5351 = vmatprep.subr.bf16.mxu0 0
      %5352 = vmatpush2.bf16.msra.mxu0 0
      %5353 = vmatprep.subr.bf16.mxu0 0
      %5354 = vmatpush2.bf16.msra.mxu0 0
      %5355 = vmatprep.subr.bf16.mxu0 0
      %5356 = vmatpush2.bf16.msra.mxu0 0
      %5357 = vmatprep.subr.bf16.mxu0 0
      %5358 = vmatpush2.bf16.msra.mxu0 0
      %5359 = vmatprep.mubr.bf16.mxu0 0
      %5360 = vmatmul.mubr.bf16.gmra.mxu0 %v5247
      %v5361 = vpop.f32.mrf.mxu0
      %v5362 = vadd.f32 0.0, %v5361
      %v5363 = vpop.f32.mrf.mxu0
      %v5364 = vpop.f32.mrf.mxu0
      %v5365 = vadd.f32 0.0, %v5364
      %v5366 = vpop.f32.mrf.mxu0
      %5367 = vmatprep.mubr.bf16.mxu0 0
      %5368 = vmatmul.mubr.bf16.gmra.mxu0 %v5248
      %v5369 = vpop.f32.mrf.mxu0
      %v5370 = vadd.f32 0.0, %v5369
      %v5371 = vpop.f32.mrf.mxu0
      %v5372 = vpop.f32.mrf.mxu0
      %v5373 = vadd.f32 0.0, %v5372
      %v5374 = vpop.f32.mrf.mxu0
      %5375 = vmatprep.mubr.bf16.mxu0 0
      %5376 = vmatmul.mubr.bf16.gmra.mxu0 %v5249
      %v5377 = vpop.f32.mrf.mxu0
      %v5378 = vadd.f32 0.0, %v5377
      %v5379 = vpop.f32.mrf.mxu0
      %v5380 = vpop.f32.mrf.mxu0
      %v5381 = vadd.f32 0.0, %v5380
      %v5382 = vpop.f32.mrf.mxu0
      %5383 = vmatprep.mubr.bf16.mxu0 0
      %5384 = vmatmul.mubr.bf16.gmra.mxu0 %v5250
      %v5385 = vpop.f32.mrf.mxu0
      %v5386 = vadd.f32 0.0, %v5385
      %v5387 = vpop.f32.mrf.mxu0
      %v5388 = vpop.f32.mrf.mxu0
      %v5389 = vadd.f32 0.0, %v5388
      %v5390 = vpop.f32.mrf.mxu0
      %5391 = vmatprep.mubr.bf16.mxu0 0
      %5392 = vmatmul.mubr.bf16.gmra.mxu0 %v5251
      %v5393 = vpop.f32.mrf.mxu0
      %v5394 = vadd.f32 0.0, %v5393
      %v5395 = vpop.f32.mrf.mxu0
      %v5396 = vpop.f32.mrf.mxu0
      %v5397 = vadd.f32 0.0, %v5396
      %v5398 = vpop.f32.mrf.mxu0
      %5399 = vmatprep.mubr.bf16.mxu0 0
      %5400 = vmatmul.mubr.bf16.gmra.mxu0 %v5252
      %v5401 = vpop.f32.mrf.mxu0
      %v5402 = vadd.f32 0.0, %v5401
      %v5403 = vpop.f32.mrf.mxu0
      %v5404 = vpop.f32.mrf.mxu0
      %v5405 = vadd.f32 0.0, %v5404
      %v5406 = vpop.f32.mrf.mxu0
      %5407 = vmatprep.mubr.bf16.mxu0 0
      %5408 = vmatmul.mubr.bf16.gmra.mxu0 %v5253
      %v5409 = vpop.f32.mrf.mxu0
      %v5410 = vadd.f32 0.0, %v5409
      %v5411 = vpop.f32.mrf.mxu0
      %v5412 = vpop.f32.mrf.mxu0
      %v5413 = vadd.f32 0.0, %v5412
      %v5414 = vpop.f32.mrf.mxu0
      %5415 = vmatprep.mubr.bf16.mxu0 0
      %5416 = vmatmul.mubr.bf16.gmra.mxu0 %v5254
      %v5417 = vpop.f32.mrf.mxu0
      %v5418 = vadd.f32 0.0, %v5417
      %v5419 = vpop.f32.mrf.mxu0
      %v5420 = vpop.f32.mrf.mxu0
      %v5421 = vadd.f32 0.0, %v5420
      %v5422 = vpop.f32.mrf.mxu0
      %5423 = vmatprep.mubr.bf16.mxu0 0
      %5424 = vmatmul.mubr.bf16.gmra.mxu0 %v5255
      %v5425 = vpop.f32.mrf.mxu0
      %v5426 = vadd.f32 0.0, %v5425
      %v5427 = vpop.f32.mrf.mxu0
      %v5428 = vpop.f32.mrf.mxu0
      %v5429 = vadd.f32 0.0, %v5428
      %v5430 = vpop.f32.mrf.mxu0
      %5431 = vmatprep.mubr.bf16.mxu0 0
      %5432 = vmatmul.mubr.bf16.gmra.mxu0 %v5256
      %v5433 = vpop.f32.mrf.mxu0
      %v5434 = vadd.f32 0.0, %v5433
      %v5435 = vpop.f32.mrf.mxu0
      %v5436 = vpop.f32.mrf.mxu0
      %v5437 = vadd.f32 0.0, %v5436
      %v5438 = vpop.f32.mrf.mxu0
      %5439 = vmatprep.mubr.bf16.mxu0 0
      %5440 = vmatmul.mubr.bf16.gmra.mxu0 %v5257
      %v5441 = vpop.f32.mrf.mxu0
      %v5442 = vadd.f32 0.0, %v5441
      %v5443 = vpop.f32.mrf.mxu0
      %v5444 = vpop.f32.mrf.mxu0
      %v5445 = vadd.f32 0.0, %v5444
      %v5446 = vpop.f32.mrf.mxu0
      %5447 = vmatprep.mubr.bf16.mxu0 0
      %5448 = vmatmul.mubr.bf16.gmra.mxu0 %v5258
      %v5449 = vpop.f32.mrf.mxu0
      %v5450 = vadd.f32 0.0, %v5449
      %v5451 = vpop.f32.mrf.mxu0
      %v5452 = vpop.f32.mrf.mxu0
      %v5453 = vadd.f32 0.0, %v5452
      %v5454 = vpop.f32.mrf.mxu0
      %5455 = vmatprep.mubr.bf16.mxu0 0
      %5456 = vmatmul.mubr.bf16.gmra.mxu0 %v5259
      %v5457 = vpop.f32.mrf.mxu0
      %v5458 = vadd.f32 0.0, %v5457
      %v5459 = vpop.f32.mrf.mxu0
      %v5460 = vpop.f32.mrf.mxu0
      %v5461 = vadd.f32 0.0, %v5460
      %v5462 = vpop.f32.mrf.mxu0
      %5463 = vmatprep.mubr.bf16.mxu0 0
      %5464 = vmatmul.mubr.bf16.gmra.mxu0 %v5260
      %v5465 = vpop.f32.mrf.mxu0
      %v5466 = vadd.f32 0.0, %v5465
      %v5467 = vpop.f32.mrf.mxu0
      %v5468 = vpop.f32.mrf.mxu0
      %v5469 = vadd.f32 0.0, %v5468
      %v5470 = vpop.f32.mrf.mxu0
      %5471 = vmatprep.mubr.bf16.mxu0 0
      %5472 = vmatmul.mubr.bf16.gmra.mxu0 %v5261
      %v5473 = vpop.f32.mrf.mxu0
      %v5474 = vadd.f32 0.0, %v5473
      %v5475 = vpop.f32.mrf.mxu0
      %v5476 = vpop.f32.mrf.mxu0
      %v5477 = vadd.f32 0.0, %v5476
      %v5478 = vpop.f32.mrf.mxu0
      %5479 = vmatprep.mubr.bf16.mxu0 0
      %5480 = vmatmul.mubr.bf16.gmra.mxu0 %v5262
      %v5481 = vpop.f32.mrf.mxu0
      %v5482 = vadd.f32 0.0, %v5481
      %v5483 = vpop.f32.mrf.mxu0
      %v5484 = vpop.f32.mrf.mxu0
      %v5485 = vadd.f32 0.0, %v5484
      %v5486 = vpop.f32.mrf.mxu0
      %5487 = vdwg.mxu0
      %v5488 = vadd.f32 %v4734, %v5362
      %v5489 = vadd.f32 %v4735, %v5365
      %v5490 = vadd.f32 %v4736, %v5370
      %v5491 = vadd.f32 %v4737, %v5373
      %v5492 = vadd.f32 %v4738, %v5378
      %v5493 = vadd.f32 %v4739, %v5381
      %v5494 = vadd.f32 %v4740, %v5386
      %v5495 = vadd.f32 %v4741, %v5389
      %v5496 = vadd.f32 %v4742, %v5394
      %v5497 = vadd.f32 %v4743, %v5397
      %v5498 = vadd.f32 %v4744, %v5402
      %v5499 = vadd.f32 %v4745, %v5405
      %v5500 = vadd.f32 %v4746, %v5410
      %v5501 = vadd.f32 %v4747, %v5413
      %v5502 = vadd.f32 %v4748, %v5418
      %v5503 = vadd.f32 %v4749, %v5421
      %v5504 = vadd.f32 %v4750, %v5426
      %v5505 = vadd.f32 %v4751, %v5429
      %v5506 = vadd.f32 %v4752, %v5434
      %v5507 = vadd.f32 %v4753, %v5437
      %v5508 = vadd.f32 %v4754, %v5442
      %v5509 = vadd.f32 %v4755, %v5445
      %v5510 = vadd.f32 %v4756, %v5450
      %v5511 = vadd.f32 %v4757, %v5453
      %v5512 = vadd.f32 %v4758, %v5458
      %v5513 = vadd.f32 %v4759, %v5461
      %v5514 = vadd.f32 %v4760, %v5466
      %v5515 = vadd.f32 %v4761, %v5469
      %v5516 = vadd.f32 %v4762, %v5474
      %v5517 = vadd.f32 %v4763, %v5477
      %v5518 = vadd.f32 %v4764, %v5482
      %v5519 = vadd.f32 %v4765, %v5485
      %v5520 = vld [vmem:[%s4379] sm:$0xe]
      %v5521 = vld [vmem:[%s4379 + $0xc] sm:$0xe]
      %v5522 = vld [vmem:[%s4379 + $0x18] sm:$0xe]
      %v5523 = vld [vmem:[%s4379 + $0x24] sm:$0xe]
      %v5524 = vld [vmem:[%s4379 + $0x30] sm:$0xe]
      %v5525 = vld [vmem:[%s4379 + $0x3c] sm:$0xe]
      %v5526 = vld [vmem:[%s4379 + $0x48] sm:$0xe]
      %v5527 = vld [vmem:[%s4379 + $0x54] sm:$0xe]
      %v5528 = vld [vmem:[%s4379 + $0x60] sm:$0xe]
      %v5529 = vld [vmem:[%s4379 + $0x6c] sm:$0xe]
      %v5530 = vld [vmem:[%s4379 + $0x78] sm:$0xe]
      %v5531 = vld [vmem:[%s4379 + $0x84] sm:$0xe]
      %v5532 = vld [vmem:[%s4379 + $0x90] sm:$0xe]
      %v5533 = vld [vmem:[%s4379 + $0x9c] sm:$0xe]
      %v5534 = vld [vmem:[%s4379 + $0xa8] sm:$0xe]
      %v5535 = vld [vmem:[%s4379 + $0xb4] sm:$0xe]
      %v5584 = vrot.slane %v5520, 5
      %v5585 = vrot.slane %v5584, 4
      %v5586 = vrot.slane %v4767, 5
      %v5587 = vsel %vm2306, %v5585, %v5586
      %v5588 = vrot.slane %v5586, 4
      %v5589 = vrot.slane %v4768, 5
      %v5590 = vsel %vm2306, %v5588, %v5589
      %v5591 = vrot.slane %v5521, 5
      %v5592 = vrot.slane %v5591, 4
      %v5593 = vrot.slane %v4770, 5
      %v5594 = vsel %vm2306, %v5592, %v5593
      %v5595 = vrot.slane %v5593, 4
      %v5596 = vrot.slane %v4771, 5
      %v5597 = vsel %vm2306, %v5595, %v5596
      %v5598 = vrot.slane %v5522, 5
      %v5599 = vrot.slane %v5598, 4
      %v5600 = vrot.slane %v4773, 5
      %v5601 = vsel %vm2306, %v5599, %v5600
      %v5602 = vrot.slane %v5600, 4
      %v5603 = vrot.slane %v4774, 5
      %v5604 = vsel %vm2306, %v5602, %v5603
      %v5605 = vrot.slane %v5523, 5
      %v5606 = vrot.slane %v5605, 4
      %v5607 = vrot.slane %v4776, 5
      %v5608 = vsel %vm2306, %v5606, %v5607
      %v5609 = vrot.slane %v5607, 4
      %v5610 = vrot.slane %v4777, 5
      %v5611 = vsel %vm2306, %v5609, %v5610
      %v5612 = vrot.slane %v5524, 5
      %v5613 = vrot.slane %v5612, 4
      %v5614 = vrot.slane %v4779, 5
      %v5615 = vsel %vm2306, %v5613, %v5614
      %v5616 = vrot.slane %v5614, 4
      %v5617 = vrot.slane %v4780, 5
      %v5618 = vsel %vm2306, %v5616, %v5617
      %v5619 = vrot.slane %v5525, 5
      %v5620 = vrot.slane %v5619, 4
      %v5621 = vrot.slane %v4782, 5
      %v5622 = vsel %vm2306, %v5620, %v5621
      %v5623 = vrot.slane %v5621, 4
      %v5624 = vrot.slane %v4783, 5
      %v5625 = vsel %vm2306, %v5623, %v5624
      %v5626 = vrot.slane %v5526, 5
      %v5627 = vrot.slane %v5626, 4
      %v5628 = vrot.slane %v4785, 5
      %v5629 = vsel %vm2306, %v5627, %v5628
      %v5630 = vrot.slane %v5628, 4
      %v5631 = vrot.slane %v4786, 5
      %v5632 = vsel %vm2306, %v5630, %v5631
      %v5633 = vrot.slane %v5527, 5
      %v5634 = vrot.slane %v5633, 4
      %v5635 = vrot.slane %v4788, 5
      %v5636 = vsel %vm2306, %v5634, %v5635
      %v5637 = vrot.slane %v5635, 4
      %v5638 = vrot.slane %v4789, 5
      %v5639 = vsel %vm2306, %v5637, %v5638
      %v5640 = vrot.slane %v5528, 5
      %v5641 = vrot.slane %v5640, 4
      %v5642 = vrot.slane %v4791, 5
      %v5643 = vsel %vm2306, %v5641, %v5642
      %v5644 = vrot.slane %v5642, 4
      %v5645 = vrot.slane %v4792, 5
      %v5646 = vsel %vm2306, %v5644, %v5645
      %v5647 = vrot.slane %v5529, 5
      %v5648 = vrot.slane %v5647, 4
      %v5649 = vrot.slane %v4794, 5
      %v5650 = vsel %vm2306, %v5648, %v5649
      %v5651 = vrot.slane %v5649, 4
      %v5652 = vrot.slane %v4795, 5
      %v5653 = vsel %vm2306, %v5651, %v5652
      %v5654 = vrot.slane %v5530, 5
      %v5655 = vrot.slane %v5654, 4
      %v5656 = vrot.slane %v4797, 5
      %v5657 = vsel %vm2306, %v5655, %v5656
      %v5658 = vrot.slane %v5656, 4
      %v5659 = vrot.slane %v4798, 5
      %v5660 = vsel %vm2306, %v5658, %v5659
      %v5661 = vrot.slane %v5531, 5
      %v5662 = vrot.slane %v5661, 4
      %v5663 = vrot.slane %v4800, 5
      %v5664 = vsel %vm2306, %v5662, %v5663
      %v5665 = vrot.slane %v5663, 4
      %v5666 = vrot.slane %v4801, 5
      %v5667 = vsel %vm2306, %v5665, %v5666
      %v5668 = vrot.slane %v5532, 5
      %v5669 = vrot.slane %v5668, 4
      %v5670 = vrot.slane %v4803, 5
      %v5671 = vsel %vm2306, %v5669, %v5670
      %v5672 = vrot.slane %v5670, 4
      %v5673 = vrot.slane %v4804, 5
      %v5674 = vsel %vm2306, %v5672, %v5673
      %v5675 = vrot.slane %v5533, 5
      %v5676 = vrot.slane %v5675, 4
      %v5677 = vrot.slane %v4806, 5
      %v5678 = vsel %vm2306, %v5676, %v5677
      %v5679 = vrot.slane %v5677, 4
      %v5680 = vrot.slane %v4807, 5
      %v5681 = vsel %vm2306, %v5679, %v5680
      %v5682 = vrot.slane %v5534, 5
      %v5683 = vrot.slane %v5682, 4
      %v5684 = vrot.slane %v4809, 5
      %v5685 = vsel %vm2306, %v5683, %v5684
      %v5686 = vrot.slane %v5684, 4
      %v5687 = vrot.slane %v4810, 5
      %v5688 = vsel %vm2306, %v5686, %v5687
      %v5689 = vrot.slane %v5535, 5
      %v5690 = vrot.slane %v5689, 4
      %v5691 = vrot.slane %v4812, 5
      %v5692 = vsel %vm2306, %v5690, %v5691
      %v5693 = vrot.slane %v5691, 4
      %v5694 = vrot.slane %v4813, 5
      %v5695 = vsel %vm2306, %v5693, %v5694
      %s5696 = scalar_lea.vmem %s1, 512
      %v5697 = vld [vmem:[%s5696] sm:$0xf]
      %v5698 = vld [vmem:[%s5696 + $0x4] sm:$0xf]
      %v5699 = vld [vmem:[%s5696 + $0x8] sm:$0xf]
      %v5700 = vld [vmem:[%s5696 + $0xc] sm:$0xf]
      %v5701 = vld [vmem:[%s5696 + $0x10] sm:$0xf]
      %v5702 = vld [vmem:[%s5696 + $0x14] sm:$0xf]
      %v5703 = vld [vmem:[%s5696 + $0x18] sm:$0xf]
      %v5704 = vld [vmem:[%s5696 + $0x1c] sm:$0xf]
      %v5705 = vld [vmem:[%s5696 + $0x20] sm:$0xf]
      %v5706 = vld [vmem:[%s5696 + $0x24] sm:$0xf]
      %v5707 = vld [vmem:[%s5696 + $0x28] sm:$0xf]
      %v5708 = vld [vmem:[%s5696 + $0x2c] sm:$0xf]
      %v5709 = vld [vmem:[%s5696 + $0x30] sm:$0xf]
      %v5710 = vld [vmem:[%s5696 + $0x34] sm:$0xf]
      %v5711 = vld [vmem:[%s5696 + $0x38] sm:$0xf]
      %v5712 = vld [vmem:[%s5696 + $0x3c] sm:$0xf]
      %v5713 = vunpack.c.l.b16 %v5587
      %v5714 = vunpack.c.l.b16 %v5590
      %v5715 = vunpack.c.l.b16 %v5594
      %v5716 = vunpack.c.l.b16 %v5597
      %v5717 = vunpack.c.l.b16 %v5601
      %v5718 = vunpack.c.l.b16 %v5604
      %v5719 = vunpack.c.l.b16 %v5608
      %v5720 = vunpack.c.l.b16 %v5611
      %v5721 = vunpack.c.l.b16 %v5615
      %v5722 = vunpack.c.l.b16 %v5618
      %v5723 = vunpack.c.l.b16 %v5622
      %v5724 = vunpack.c.l.b16 %v5625
      %v5725 = vunpack.c.l.b16 %v5629
      %v5726 = vunpack.c.l.b16 %v5632
      %v5727 = vunpack.c.l.b16 %v5636
      %v5728 = vunpack.c.l.b16 %v5639
      %v5729 = vunpack.c.l.b16 %v5643
      %v5730 = vunpack.c.l.b16 %v5646
      %v5731 = vunpack.c.l.b16 %v5650
      %v5732 = vunpack.c.l.b16 %v5653
      %v5733 = vunpack.c.l.b16 %v5657
      %v5734 = vunpack.c.l.b16 %v5660
      %v5735 = vunpack.c.l.b16 %v5664
      %v5736 = vunpack.c.l.b16 %v5667
      %v5737 = vunpack.c.l.b16 %v5671
      %v5738 = vunpack.c.l.b16 %v5674
      %v5739 = vunpack.c.l.b16 %v5678
      %v5740 = vunpack.c.l.b16 %v5681
      %v5741 = vunpack.c.l.b16 %v5685
      %v5742 = vunpack.c.l.b16 %v5688
      %v5743 = vunpack.c.l.b16 %v5692
      %v5744 = vunpack.c.l.b16 %v5695
      %v5745 = vpack.c.b16 %v5714, %v5713
      %v5746 = vpack.c.b16 %v5716, %v5715
      %v5747 = vpack.c.b16 %v5718, %v5717
      %v5748 = vpack.c.b16 %v5720, %v5719
      %v5749 = vpack.c.b16 %v5722, %v5721
      %v5750 = vpack.c.b16 %v5724, %v5723
      %v5751 = vpack.c.b16 %v5726, %v5725
      %v5752 = vpack.c.b16 %v5728, %v5727
      %v5753 = vpack.c.b16 %v5730, %v5729
      %v5754 = vpack.c.b16 %v5732, %v5731
      %v5755 = vpack.c.b16 %v5734, %v5733
      %v5756 = vpack.c.b16 %v5736, %v5735
      %v5757 = vpack.c.b16 %v5738, %v5737
      %v5758 = vpack.c.b16 %v5740, %v5739
      %v5759 = vpack.c.b16 %v5742, %v5741
      %v5760 = vpack.c.b16 %v5744, %v5743
      %v5793 = vunpack.c.l.b16 %v5697
      %v5794 = vunpack.c.l.b16 %v5698
      %v5795 = vunpack.c.l.b16 %v5699
      %v5796 = vunpack.c.l.b16 %v5700
      %v5797 = vunpack.c.l.b16 %v5701
      %v5798 = vunpack.c.l.b16 %v5702
      %v5799 = vunpack.c.l.b16 %v5703
      %v5800 = vunpack.c.l.b16 %v5704
      %v5801 = vunpack.c.l.b16 %v5705
      %v5802 = vunpack.c.l.b16 %v5706
      %v5803 = vunpack.c.l.b16 %v5707
      %v5804 = vunpack.c.l.b16 %v5708
      %v5805 = vunpack.c.l.b16 %v5709
      %v5806 = vunpack.c.l.b16 %v5710
      %v5807 = vunpack.c.l.b16 %v5711
      %v5808 = vunpack.c.l.b16 %v5712
      %v5809 = vpack.c.b16 %v5794, %v5793
      %v5810 = vpack.c.b16 %v5796, %v5795
      %v5811 = vpack.c.b16 %v5798, %v5797
      %v5812 = vpack.c.b16 %v5800, %v5799
      %v5813 = vpack.c.b16 %v5802, %v5801
      %v5814 = vpack.c.b16 %v5804, %v5803
      %v5815 = vpack.c.b16 %v5806, %v5805
      %v5816 = vpack.c.b16 %v5808, %v5807
      %5825 = vmatprep.subr.bf16.mxu0 0
      %5826 = vmatpush1.bf16.msra.mxu0 %v5816
      %5827 = vmatprep.subr.bf16.mxu0 0
      %5828 = vmatpush1.bf16.msra.mxu0 %v5815
      %5829 = vmatprep.subr.bf16.mxu0 0
      %5830 = vmatpush1.bf16.msra.mxu0 %v5814
      %5831 = vmatprep.subr.bf16.mxu0 0
      %5832 = vmatpush1.bf16.msra.mxu0 %v5813
      %5833 = vmatprep.subr.bf16.mxu0 0
      %5834 = vmatpush1.bf16.msra.mxu0 %v5812
      %5835 = vmatprep.subr.bf16.mxu0 0
      %5836 = vmatpush1.bf16.msra.mxu0 %v5811
      %5837 = vmatprep.subr.bf16.mxu0 0
      %5838 = vmatpush1.bf16.msra.mxu0 %v5810
      %5839 = vmatprep.subr.bf16.mxu0 0
      %5840 = vmatpush1.bf16.msra.mxu0 %v5809
      %5841 = vmatprep.subr.bf16.mxu0 0
      %5842 = vmatpush2.bf16.msra.mxu0 0
      %5843 = vmatprep.subr.bf16.mxu0 0
      %5844 = vmatpush2.bf16.msra.mxu0 0
      %5845 = vmatprep.subr.bf16.mxu0 0
      %5846 = vmatpush2.bf16.msra.mxu0 0
      %5847 = vmatprep.subr.bf16.mxu0 0
      %5848 = vmatpush2.bf16.msra.mxu0 0
      %5849 = vmatprep.subr.bf16.mxu0 0
      %5850 = vmatpush2.bf16.msra.mxu0 0
      %5851 = vmatprep.subr.bf16.mxu0 0
      %5852 = vmatpush2.bf16.msra.mxu0 0
      %5853 = vmatprep.subr.bf16.mxu0 0
      %5854 = vmatpush2.bf16.msra.mxu0 0
      %5855 = vmatprep.subr.bf16.mxu0 0
      %5856 = vmatpush2.bf16.msra.mxu0 0
      %5857 = vmatprep.mubr.bf16.mxu0 0
      %5858 = vmatmul.mubr.bf16.gmra.mxu0 %v5745
      %v5859 = vpop.f32.mrf.mxu0
      %v5860 = vadd.f32 0.0, %v5859
      %v5861 = vpop.f32.mrf.mxu0
      %v5862 = vpop.f32.mrf.mxu0
      %v5863 = vadd.f32 0.0, %v5862
      %v5864 = vpop.f32.mrf.mxu0
      %5865 = vmatprep.mubr.bf16.mxu0 0
      %5866 = vmatmul.mubr.bf16.gmra.mxu0 %v5746
      %v5867 = vpop.f32.mrf.mxu0
      %v5868 = vadd.f32 0.0, %v5867
      %v5869 = vpop.f32.mrf.mxu0
      %v5870 = vpop.f32.mrf.mxu0
      %v5871 = vadd.f32 0.0, %v5870
      %v5872 = vpop.f32.mrf.mxu0
      %5873 = vmatprep.mubr.bf16.mxu0 0
      %5874 = vmatmul.mubr.bf16.gmra.mxu0 %v5747
      %v5875 = vpop.f32.mrf.mxu0
      %v5876 = vadd.f32 0.0, %v5875
      %v5877 = vpop.f32.mrf.mxu0
      %v5878 = vpop.f32.mrf.mxu0
      %v5879 = vadd.f32 0.0, %v5878
      %v5880 = vpop.f32.mrf.mxu0
      %5881 = vmatprep.mubr.bf16.mxu0 0
      %5882 = vmatmul.mubr.bf16.gmra.mxu0 %v5748
      %v5883 = vpop.f32.mrf.mxu0
      %v5884 = vadd.f32 0.0, %v5883
      %v5885 = vpop.f32.mrf.mxu0
      %v5886 = vpop.f32.mrf.mxu0
      %v5887 = vadd.f32 0.0, %v5886
      %v5888 = vpop.f32.mrf.mxu0
      %5889 = vmatprep.mubr.bf16.mxu0 0
      %5890 = vmatmul.mubr.bf16.gmra.mxu0 %v5749
      %v5891 = vpop.f32.mrf.mxu0
      %v5892 = vadd.f32 0.0, %v5891
      %v5893 = vpop.f32.mrf.mxu0
      %v5894 = vpop.f32.mrf.mxu0
      %v5895 = vadd.f32 0.0, %v5894
      %v5896 = vpop.f32.mrf.mxu0
      %5897 = vmatprep.mubr.bf16.mxu0 0
      %5898 = vmatmul.mubr.bf16.gmra.mxu0 %v5750
      %v5899 = vpop.f32.mrf.mxu0
      %v5900 = vadd.f32 0.0, %v5899
      %v5901 = vpop.f32.mrf.mxu0
      %v5902 = vpop.f32.mrf.mxu0
      %v5903 = vadd.f32 0.0, %v5902
      %v5904 = vpop.f32.mrf.mxu0
      %5905 = vmatprep.mubr.bf16.mxu0 0
      %5906 = vmatmul.mubr.bf16.gmra.mxu0 %v5751
      %v5907 = vpop.f32.mrf.mxu0
      %v5908 = vadd.f32 0.0, %v5907
      %v5909 = vpop.f32.mrf.mxu0
      %v5910 = vpop.f32.mrf.mxu0
      %v5911 = vadd.f32 0.0, %v5910
      %v5912 = vpop.f32.mrf.mxu0
      %5913 = vmatprep.mubr.bf16.mxu0 0
      %5914 = vmatmul.mubr.bf16.gmra.mxu0 %v5752
      %v5915 = vpop.f32.mrf.mxu0
      %v5916 = vadd.f32 0.0, %v5915
      %v5917 = vpop.f32.mrf.mxu0
      %v5918 = vpop.f32.mrf.mxu0
      %v5919 = vadd.f32 0.0, %v5918
      %v5920 = vpop.f32.mrf.mxu0
      %5921 = vmatprep.mubr.bf16.mxu0 0
      %5922 = vmatmul.mubr.bf16.gmra.mxu0 %v5753
      %v5923 = vpop.f32.mrf.mxu0
      %v5924 = vadd.f32 0.0, %v5923
      %v5925 = vpop.f32.mrf.mxu0
      %v5926 = vpop.f32.mrf.mxu0
      %v5927 = vadd.f32 0.0, %v5926
      %v5928 = vpop.f32.mrf.mxu0
      %5929 = vmatprep.mubr.bf16.mxu0 0
      %5930 = vmatmul.mubr.bf16.gmra.mxu0 %v5754
      %v5931 = vpop.f32.mrf.mxu0
      %v5932 = vadd.f32 0.0, %v5931
      %v5933 = vpop.f32.mrf.mxu0
      %v5934 = vpop.f32.mrf.mxu0
      %v5935 = vadd.f32 0.0, %v5934
      %v5936 = vpop.f32.mrf.mxu0
      %5937 = vmatprep.mubr.bf16.mxu0 0
      %5938 = vmatmul.mubr.bf16.gmra.mxu0 %v5755
      %v5939 = vpop.f32.mrf.mxu0
      %v5940 = vadd.f32 0.0, %v5939
      %v5941 = vpop.f32.mrf.mxu0
      %v5942 = vpop.f32.mrf.mxu0
      %v5943 = vadd.f32 0.0, %v5942
      %v5944 = vpop.f32.mrf.mxu0
      %5945 = vmatprep.mubr.bf16.mxu0 0
      %5946 = vmatmul.mubr.bf16.gmra.mxu0 %v5756
      %v5947 = vpop.f32.mrf.mxu0
      %v5948 = vadd.f32 0.0, %v5947
      %v5949 = vpop.f32.mrf.mxu0
      %v5950 = vpop.f32.mrf.mxu0
      %v5951 = vadd.f32 0.0, %v5950
      %v5952 = vpop.f32.mrf.mxu0
      %5953 = vmatprep.mubr.bf16.mxu0 0
      %5954 = vmatmul.mubr.bf16.gmra.mxu0 %v5757
      %v5955 = vpop.f32.mrf.mxu0
      %v5956 = vadd.f32 0.0, %v5955
      %v5957 = vpop.f32.mrf.mxu0
      %v5958 = vpop.f32.mrf.mxu0
      %v5959 = vadd.f32 0.0, %v5958
      %v5960 = vpop.f32.mrf.mxu0
      %5961 = vmatprep.mubr.bf16.mxu0 0
      %5962 = vmatmul.mubr.bf16.gmra.mxu0 %v5758
      %v5963 = vpop.f32.mrf.mxu0
      %v5964 = vadd.f32 0.0, %v5963
      %v5965 = vpop.f32.mrf.mxu0
      %v5966 = vpop.f32.mrf.mxu0
      %v5967 = vadd.f32 0.0, %v5966
      %v5968 = vpop.f32.mrf.mxu0
      %5969 = vmatprep.mubr.bf16.mxu0 0
      %5970 = vmatmul.mubr.bf16.gmra.mxu0 %v5759
      %v5971 = vpop.f32.mrf.mxu0
      %v5972 = vadd.f32 0.0, %v5971
      %v5973 = vpop.f32.mrf.mxu0
      %v5974 = vpop.f32.mrf.mxu0
      %v5975 = vadd.f32 0.0, %v5974
      %v5976 = vpop.f32.mrf.mxu0
      %5977 = vmatprep.mubr.bf16.mxu0 0
      %5978 = vmatmul.mubr.bf16.gmra.mxu0 %v5760
      %v5979 = vpop.f32.mrf.mxu0
      %v5980 = vadd.f32 0.0, %v5979
      %v5981 = vpop.f32.mrf.mxu0
      %v5982 = vpop.f32.mrf.mxu0
      %v5983 = vadd.f32 0.0, %v5982
      %v5984 = vpop.f32.mrf.mxu0
      %5985 = vdwg.mxu0
      %v5986 = vadd.f32 %v5488, %v5860
      %v5987 = vadd.f32 %v5489, %v5863
      %v5988 = vadd.f32 %v5490, %v5868
      %v5989 = vadd.f32 %v5491, %v5871
      %v5990 = vadd.f32 %v5492, %v5876
      %v5991 = vadd.f32 %v5493, %v5879
      %v5992 = vadd.f32 %v5494, %v5884
      %v5993 = vadd.f32 %v5495, %v5887
      %v5994 = vadd.f32 %v5496, %v5892
      %v5995 = vadd.f32 %v5497, %v5895
      %v5996 = vadd.f32 %v5498, %v5900
      %v5997 = vadd.f32 %v5499, %v5903
      %v5998 = vadd.f32 %v5500, %v5908
      %v5999 = vadd.f32 %v5501, %v5911
      %v6000 = vadd.f32 %v5502, %v5916
      %v6001 = vadd.f32 %v5503, %v5919
      %v6002 = vadd.f32 %v5504, %v5924
      %v6003 = vadd.f32 %v5505, %v5927
      %v6004 = vadd.f32 %v5506, %v5932
      %v6005 = vadd.f32 %v5507, %v5935
      %v6006 = vadd.f32 %v5508, %v5940
      %v6007 = vadd.f32 %v5509, %v5943
      %v6008 = vadd.f32 %v5510, %v5948
      %v6009 = vadd.f32 %v5511, %v5951
      %v6010 = vadd.f32 %v5512, %v5956
      %v6011 = vadd.f32 %v5513, %v5959
      %v6012 = vadd.f32 %v5514, %v5964
      %v6013 = vadd.f32 %v5515, %v5967
      %v6014 = vadd.f32 %v5516, %v5972
      %v6015 = vadd.f32 %v5517, %v5975
      %v6016 = vadd.f32 %v5518, %v5980
      %v6017 = vadd.f32 %v5519, %v5983
      %v6018 = vld [vmem:[%s2] sm:$0x1]
      %v6020 = vlaneseq
      %v6021 = vshrl.u32 %v6020, 7
      %v6022 = vsub.s32 0, %v6021
      %v6023 = vrot.slane %v6018, %v6022
      %v6025 = vmul.f32 %v5986, %v6023
      %v6026 = vmul.f32 %v5987, %v6023
      %v6027 = vmul.f32 %v5988, %v6023
      %v6028 = vmul.f32 %v5989, %v6023
      %v6029 = vmul.f32 %v5990, %v6023
      %v6030 = vmul.f32 %v5991, %v6023
      %v6031 = vmul.f32 %v5992, %v6023
      %v6032 = vmul.f32 %v5993, %v6023
      %v6033 = vmul.f32 %v5994, %v6023
      %v6034 = vmul.f32 %v5995, %v6023
      %v6035 = vmul.f32 %v5996, %v6023
      %v6036 = vmul.f32 %v5997, %v6023
      %v6037 = vmul.f32 %v5998, %v6023
      %v6038 = vmul.f32 %v5999, %v6023
      %v6039 = vmul.f32 %v6000, %v6023
      %v6040 = vmul.f32 %v6001, %v6023
      %v6041 = vmul.f32 %v6002, %v6023
      %v6042 = vmul.f32 %v6003, %v6023
      %v6043 = vmul.f32 %v6004, %v6023
      %v6044 = vmul.f32 %v6005, %v6023
      %v6045 = vmul.f32 %v6006, %v6023
      %v6046 = vmul.f32 %v6007, %v6023
      %v6047 = vmul.f32 %v6008, %v6023
      %v6048 = vmul.f32 %v6009, %v6023
      %v6049 = vmul.f32 %v6010, %v6023
      %v6050 = vmul.f32 %v6011, %v6023
      %v6051 = vmul.f32 %v6012, %v6023
      %v6052 = vmul.f32 %v6013, %v6023
      %v6053 = vmul.f32 %v6014, %v6023
      %v6054 = vmul.f32 %v6015, %v6023
      %v6055 = vmul.f32 %v6016, %v6023
      %v6056 = vmul.f32 %v6017, %v6023
      %v6057 = vld [vmem:[%s3] sm:$0x1]
      %v6059 = vlaneseq
      %v6060 = vshrl.u32 %v6059, 7
      %v6061 = vsub.s32 0, %v6060
      %v6062 = vrot.slane %v6057, %v6061
      %v6064 = vadd.f32 %v6025, %v6062
      %v6065 = vadd.f32 %v6026, %v6062
      %v6066 = vadd.f32 %v6027, %v6062
      %v6067 = vadd.f32 %v6028, %v6062
      %v6068 = vadd.f32 %v6029, %v6062
      %v6069 = vadd.f32 %v6030, %v6062
      %v6070 = vadd.f32 %v6031, %v6062
      %v6071 = vadd.f32 %v6032, %v6062
      %v6072 = vadd.f32 %v6033, %v6062
      %v6073 = vadd.f32 %v6034, %v6062
      %v6074 = vadd.f32 %v6035, %v6062
      %v6075 = vadd.f32 %v6036, %v6062
      %v6076 = vadd.f32 %v6037, %v6062
      %v6077 = vadd.f32 %v6038, %v6062
      %v6078 = vadd.f32 %v6039, %v6062
      %v6079 = vadd.f32 %v6040, %v6062
      %v6080 = vadd.f32 %v6041, %v6062
      %v6081 = vadd.f32 %v6042, %v6062
      %v6082 = vadd.f32 %v6043, %v6062
      %v6083 = vadd.f32 %v6044, %v6062
      %v6084 = vadd.f32 %v6045, %v6062
      %v6085 = vadd.f32 %v6046, %v6062
      %v6086 = vadd.f32 %v6047, %v6062
      %v6087 = vadd.f32 %v6048, %v6062
      %v6088 = vadd.f32 %v6049, %v6062
      %v6089 = vadd.f32 %v6050, %v6062
      %v6090 = vadd.f32 %v6051, %v6062
      %v6091 = vadd.f32 %v6052, %v6062
      %v6092 = vadd.f32 %v6053, %v6062
      %v6093 = vadd.f32 %v6054, %v6062
      %v6094 = vadd.f32 %v6055, %v6062
      %v6095 = vadd.f32 %v6056, %v6062
      %v6096 = vmax.f32 %v6064, 0.0
      %v6097 = vmax.f32 %v6065, 0.0
      %v6098 = vmax.f32 %v6066, 0.0
      %v6099 = vmax.f32 %v6067, 0.0
      %v6100 = vmax.f32 %v6068, 0.0
      %v6101 = vmax.f32 %v6069, 0.0
      %v6102 = vmax.f32 %v6070, 0.0
      %v6103 = vmax.f32 %v6071, 0.0
      %v6104 = vmax.f32 %v6072, 0.0
      %v6105 = vmax.f32 %v6073, 0.0
      %v6106 = vmax.f32 %v6074, 0.0
      %v6107 = vmax.f32 %v6075, 0.0
      %v6108 = vmax.f32 %v6076, 0.0
      %v6109 = vmax.f32 %v6077, 0.0
      %v6110 = vmax.f32 %v6078, 0.0
      %v6111 = vmax.f32 %v6079, 0.0
      %v6112 = vmax.f32 %v6080, 0.0
      %v6113 = vmax.f32 %v6081, 0.0
      %v6114 = vmax.f32 %v6082, 0.0
      %v6115 = vmax.f32 %v6083, 0.0
      %v6116 = vmax.f32 %v6084, 0.0
      %v6117 = vmax.f32 %v6085, 0.0
      %v6118 = vmax.f32 %v6086, 0.0
      %v6119 = vmax.f32 %v6087, 0.0
      %v6120 = vmax.f32 %v6088, 0.0
      %v6121 = vmax.f32 %v6089, 0.0
      %v6122 = vmax.f32 %v6090, 0.0
      %v6123 = vmax.f32 %v6091, 0.0
      %v6124 = vmax.f32 %v6092, 0.0
      %v6125 = vmax.f32 %v6093, 0.0
      %v6126 = vmax.f32 %v6094, 0.0
      %v6127 = vmax.f32 %v6095, 0.0
      %v6128 = vpack.c.bf16 %v6097, %v6096
      %v6129 = vpack.c.bf16 %v6099, %v6098
      %v6130 = vpack.c.bf16 %v6101, %v6100
      %v6131 = vpack.c.bf16 %v6103, %v6102
      %v6132 = vpack.c.bf16 %v6105, %v6104
      %v6133 = vpack.c.bf16 %v6107, %v6106
      %v6134 = vpack.c.bf16 %v6109, %v6108
      %v6135 = vpack.c.bf16 %v6111, %v6110
      %v6136 = vpack.c.bf16 %v6113, %v6112
      %v6137 = vpack.c.bf16 %v6115, %v6114
      %v6138 = vpack.c.bf16 %v6117, %v6116
      %v6139 = vpack.c.bf16 %v6119, %v6118
      %v6140 = vpack.c.bf16 %v6121, %v6120
      %v6141 = vpack.c.bf16 %v6123, %v6122
      %v6142 = vpack.c.bf16 %v6125, %v6124
      %v6143 = vpack.c.bf16 %v6127, %v6126
      %v6160 = vunpack.c.l.b16 %v6128
      %v6161 = vunpack.c.h.b16 %v6128
      %v6162 = vunpack.c.l.b16 %v6129
      %v6163 = vunpack.c.h.b16 %v6129
      %v6164 = vunpack.c.l.b16 %v6130
      %v6165 = vunpack.c.h.b16 %v6130
      %v6166 = vunpack.c.l.b16 %v6131
      %v6167 = vunpack.c.h.b16 %v6131
      %v6168 = vunpack.c.l.b16 %v6132
      %v6169 = vunpack.c.h.b16 %v6132
      %v6170 = vunpack.c.l.b16 %v6133
      %v6171 = vunpack.c.h.b16 %v6133
      %v6172 = vunpack.c.l.b16 %v6134
      %v6173 = vunpack.c.h.b16 %v6134
      %v6174 = vunpack.c.l.b16 %v6135
      %v6175 = vunpack.c.h.b16 %v6135
      %v6176 = vunpack.c.l.b16 %v6136
      %v6177 = vunpack.c.h.b16 %v6136
      %v6178 = vunpack.c.l.b16 %v6137
      %v6179 = vunpack.c.h.b16 %v6137
      %v6180 = vunpack.c.l.b16 %v6138
      %v6181 = vunpack.c.h.b16 %v6138
      %v6182 = vunpack.c.l.b16 %v6139
      %v6183 = vunpack.c.h.b16 %v6139
      %v6184 = vunpack.c.l.b16 %v6140
      %v6185 = vunpack.c.h.b16 %v6140
      %v6186 = vunpack.c.l.b16 %v6141
      %v6187 = vunpack.c.h.b16 %v6141
      %v6188 = vunpack.c.l.b16 %v6142
      %v6189 = vunpack.c.h.b16 %v6142
      %v6190 = vunpack.c.l.b16 %v6143
      %v6191 = vunpack.c.h.b16 %v6143
      %v6192 = vpack.c.b16 %v6160, %v6160
      %v6193 = vpack.c.b16 %v6161, %v6161
      %v6194 = vpack.c.b16 %v6162, %v6162
      %v6195 = vpack.c.b16 %v6163, %v6163
      %v6196 = vpack.c.b16 %v6164, %v6164
      %v6197 = vpack.c.b16 %v6165, %v6165
      %v6198 = vpack.c.b16 %v6166, %v6166
      %v6199 = vpack.c.b16 %v6167, %v6167
      %v6200 = vpack.c.b16 %v6168, %v6168
      %v6201 = vpack.c.b16 %v6169, %v6169
      %v6202 = vpack.c.b16 %v6170, %v6170
      %v6203 = vpack.c.b16 %v6171, %v6171
      %v6204 = vpack.c.b16 %v6172, %v6172
      %v6205 = vpack.c.b16 %v6173, %v6173
      %v6206 = vpack.c.b16 %v6174, %v6174
      %v6207 = vpack.c.b16 %v6175, %v6175
      %v6208 = vpack.c.b16 %v6176, %v6176
      %v6209 = vpack.c.b16 %v6177, %v6177
      %v6210 = vpack.c.b16 %v6178, %v6178
      %v6211 = vpack.c.b16 %v6179, %v6179
      %v6212 = vpack.c.b16 %v6180, %v6180
      %v6213 = vpack.c.b16 %v6181, %v6181
      %v6214 = vpack.c.b16 %v6182, %v6182
      %v6215 = vpack.c.b16 %v6183, %v6183
      %v6216 = vpack.c.b16 %v6184, %v6184
      %v6217 = vpack.c.b16 %v6185, %v6185
      %v6218 = vpack.c.b16 %v6186, %v6186
      %v6219 = vpack.c.b16 %v6187, %v6187
      %v6220 = vpack.c.b16 %v6188, %v6188
      %v6221 = vpack.c.b16 %v6189, %v6189
      %v6222 = vpack.c.b16 %v6190, %v6190
      %v6223 = vpack.c.b16 %v6191, %v6191
      %v6225 = vshrl.u32 %v6192, 16
      %v6227 = vrot.slane %v6225, 7
      %v6228 = vshll.u32 %v6192, 16
      %v6230 = vor.u32 %v6227, %v6228
      %v6231 = vrot.slane %v6227, 4
      %v6233 = vshrl.u32 %v6193, 16
      %v6235 = vrot.slane %v6233, 7
      %v6236 = vshll.u32 %v6193, 16
      %v6238 = vor.u32 %v6235, %v6236
      %v6239 = vsel %vm464, %v6231, %v6238
      %v6240 = vrot.slane %v6235, 4
      %v6242 = vshrl.u32 %v6194, 16
      %v6244 = vrot.slane %v6242, 7
      %v6245 = vshll.u32 %v6194, 16
      %v6247 = vor.u32 %v6244, %v6245
      %v6248 = vrot.slane %v6244, 4
      %v6250 = vshrl.u32 %v6195, 16
      %v6252 = vrot.slane %v6250, 7
      %v6253 = vshll.u32 %v6195, 16
      %v6255 = vor.u32 %v6252, %v6253
      %v6256 = vsel %vm464, %v6248, %v6255
      %v6257 = vrot.slane %v6252, 4
      %v6259 = vshrl.u32 %v6196, 16
      %v6261 = vrot.slane %v6259, 7
      %v6262 = vshll.u32 %v6196, 16
      %v6264 = vor.u32 %v6261, %v6262
      %v6265 = vrot.slane %v6261, 4
      %v6267 = vshrl.u32 %v6197, 16
      %v6269 = vrot.slane %v6267, 7
      %v6270 = vshll.u32 %v6197, 16
      %v6272 = vor.u32 %v6269, %v6270
      %v6273 = vsel %vm464, %v6265, %v6272
      %v6274 = vrot.slane %v6269, 4
      %v6276 = vshrl.u32 %v6198, 16
      %v6278 = vrot.slane %v6276, 7
      %v6279 = vshll.u32 %v6198, 16
      %v6281 = vor.u32 %v6278, %v6279
      %v6282 = vrot.slane %v6278, 4
      %v6284 = vshrl.u32 %v6199, 16
      %v6286 = vrot.slane %v6284, 7
      %v6287 = vshll.u32 %v6199, 16
      %v6289 = vor.u32 %v6286, %v6287
      %v6290 = vsel %vm464, %v6282, %v6289
      %v6291 = vrot.slane %v6286, 4
      %v6293 = vshrl.u32 %v6200, 16
      %v6295 = vrot.slane %v6293, 7
      %v6296 = vshll.u32 %v6200, 16
      %v6298 = vor.u32 %v6295, %v6296
      %v6299 = vrot.slane %v6295, 4
      %v6301 = vshrl.u32 %v6201, 16
      %v6303 = vrot.slane %v6301, 7
      %v6304 = vshll.u32 %v6201, 16
      %v6306 = vor.u32 %v6303, %v6304
      %v6307 = vsel %vm464, %v6299, %v6306
      %v6308 = vrot.slane %v6303, 4
      %v6310 = vshrl.u32 %v6202, 16
      %v6312 = vrot.slane %v6310, 7
      %v6313 = vshll.u32 %v6202, 16
      %v6315 = vor.u32 %v6312, %v6313
      %v6316 = vrot.slane %v6312, 4
      %v6318 = vshrl.u32 %v6203, 16
      %v6320 = vrot.slane %v6318, 7
      %v6321 = vshll.u32 %v6203, 16
      %v6323 = vor.u32 %v6320, %v6321
      %v6324 = vsel %vm464, %v6316, %v6323
      %v6325 = vrot.slane %v6320, 4
      %v6327 = vshrl.u32 %v6204, 16
      %v6329 = vrot.slane %v6327, 7
      %v6330 = vshll.u32 %v6204, 16
      %v6332 = vor.u32 %v6329, %v6330
      %v6333 = vrot.slane %v6329, 4
      %v6335 = vshrl.u32 %v6205, 16
      %v6337 = vrot.slane %v6335, 7
      %v6338 = vshll.u32 %v6205, 16
      %v6340 = vor.u32 %v6337, %v6338
      %v6341 = vsel %vm464, %v6333, %v6340
      %v6342 = vrot.slane %v6337, 4
      %v6344 = vshrl.u32 %v6206, 16
      %v6346 = vrot.slane %v6344, 7
      %v6347 = vshll.u32 %v6206, 16
      %v6349 = vor.u32 %v6346, %v6347
      %v6350 = vrot.slane %v6346, 4
      %v6352 = vshrl.u32 %v6207, 16
      %v6354 = vrot.slane %v6352, 7
      %v6355 = vshll.u32 %v6207, 16
      %v6357 = vor.u32 %v6354, %v6355
      %v6358 = vsel %vm464, %v6350, %v6357
      %v6359 = vrot.slane %v6354, 4
      %v6361 = vshrl.u32 %v6208, 16
      %v6363 = vrot.slane %v6361, 7
      %v6364 = vshll.u32 %v6208, 16
      %v6366 = vor.u32 %v6363, %v6364
      %v6367 = vrot.slane %v6363, 4
      %v6369 = vshrl.u32 %v6209, 16
      %v6371 = vrot.slane %v6369, 7
      %v6372 = vshll.u32 %v6209, 16
      %v6374 = vor.u32 %v6371, %v6372
      %v6375 = vsel %vm464, %v6367, %v6374
      %v6376 = vrot.slane %v6371, 4
      %v6378 = vshrl.u32 %v6210, 16
      %v6380 = vrot.slane %v6378, 7
      %v6381 = vshll.u32 %v6210, 16
      %v6383 = vor.u32 %v6380, %v6381
      %v6384 = vrot.slane %v6380, 4
      %v6386 = vshrl.u32 %v6211, 16
      %v6388 = vrot.slane %v6386, 7
      %v6389 = vshll.u32 %v6211, 16
      %v6391 = vor.u32 %v6388, %v6389
      %v6392 = vsel %vm464, %v6384, %v6391
      %v6393 = vrot.slane %v6388, 4
      %v6395 = vshrl.u32 %v6212, 16
      %v6397 = vrot.slane %v6395, 7
      %v6398 = vshll.u32 %v6212, 16
      %v6400 = vor.u32 %v6397, %v6398
      %v6401 = vrot.slane %v6397, 4
      %v6403 = vshrl.u32 %v6213, 16
      %v6405 = vrot.slane %v6403, 7
      %v6406 = vshll.u32 %v6213, 16
      %v6408 = vor.u32 %v6405, %v6406
      %v6409 = vsel %vm464, %v6401, %v6408
      %v6410 = vrot.slane %v6405, 4
      %v6412 = vshrl.u32 %v6214, 16
      %v6414 = vrot.slane %v6412, 7
      %v6415 = vshll.u32 %v6214, 16
      %v6417 = vor.u32 %v6414, %v6415
      %v6418 = vrot.slane %v6414, 4
      %v6420 = vshrl.u32 %v6215, 16
      %v6422 = vrot.slane %v6420, 7
      %v6423 = vshll.u32 %v6215, 16
      %v6425 = vor.u32 %v6422, %v6423
      %v6426 = vsel %vm464, %v6418, %v6425
      %v6427 = vrot.slane %v6422, 4
      %v6429 = vshrl.u32 %v6216, 16
      %v6431 = vrot.slane %v6429, 7
      %v6432 = vshll.u32 %v6216, 16
      %v6434 = vor.u32 %v6431, %v6432
      %v6435 = vrot.slane %v6431, 4
      %v6437 = vshrl.u32 %v6217, 16
      %v6439 = vrot.slane %v6437, 7
      %v6440 = vshll.u32 %v6217, 16
      %v6442 = vor.u32 %v6439, %v6440
      %v6443 = vsel %vm464, %v6435, %v6442
      %v6444 = vrot.slane %v6439, 4
      %v6446 = vshrl.u32 %v6218, 16
      %v6448 = vrot.slane %v6446, 7
      %v6449 = vshll.u32 %v6218, 16
      %v6451 = vor.u32 %v6448, %v6449
      %v6452 = vrot.slane %v6448, 4
      %v6454 = vshrl.u32 %v6219, 16
      %v6456 = vrot.slane %v6454, 7
      %v6457 = vshll.u32 %v6219, 16
      %v6459 = vor.u32 %v6456, %v6457
      %v6460 = vsel %vm464, %v6452, %v6459
      %v6461 = vrot.slane %v6456, 4
      %v6463 = vshrl.u32 %v6220, 16
      %v6465 = vrot.slane %v6463, 7
      %v6466 = vshll.u32 %v6220, 16
      %v6468 = vor.u32 %v6465, %v6466
      %v6469 = vrot.slane %v6465, 4
      %v6471 = vshrl.u32 %v6221, 16
      %v6473 = vrot.slane %v6471, 7
      %v6474 = vshll.u32 %v6221, 16
      %v6476 = vor.u32 %v6473, %v6474
      %v6477 = vsel %vm464, %v6469, %v6476
      %v6478 = vrot.slane %v6473, 4
      %v6480 = vshrl.u32 %v6222, 16
      %v6482 = vrot.slane %v6480, 7
      %v6483 = vshll.u32 %v6222, 16
      %v6485 = vor.u32 %v6482, %v6483
      %v6486 = vrot.slane %v6482, 4
      %v6488 = vshrl.u32 %v6223, 16
      %v6490 = vrot.slane %v6488, 7
      %v6491 = vshll.u32 %v6223, 16
      %v6493 = vor.u32 %v6490, %v6491
      %v6494 = vsel %vm464, %v6486, %v6493
      %v6495 = vrot.slane %v6490, 4
      %vm6544 = vcmask 1043456
      %vm6545 = vmand %vm6544, %vm787
      %v6546 = vsel %vm6545, %v6230, %v3127
      %6547 = vst [vmem:[%s785] sm:$0xf] %v6546
      %6548 = vst [vmem:[%s785 + $0x4] sm:$0xf] %v6239
      %v6549 = vld [vmem:[%s785 + $0x8] sm:$0x1]
      %v6550 = vsel %vm1010, %v6240, %v6549
      %6551 = vst [vmem:[%s785 + $0x8] sm:$0x1] %v6550
      %v6552 = vld [vmem:[%s785 + $0xc] sm:$0xf]
      %v6553 = vsel %vm6545, %v6247, %v6552
      %6554 = vst [vmem:[%s785 + $0xc] sm:$0xf] %v6553
      %6555 = vst [vmem:[%s785 + $0x10] sm:$0xf] %v6256
      %v6556 = vld [vmem:[%s785 + $0x14] sm:$0x1]
      %v6557 = vsel %vm1010, %v6257, %v6556
      %6558 = vst [vmem:[%s785 + $0x14] sm:$0x1] %v6557
      %v6559 = vld [vmem:[%s785 + $0x18] sm:$0xf]
      %v6560 = vsel %vm6545, %v6264, %v6559
      %6561 = vst [vmem:[%s785 + $0x18] sm:$0xf] %v6560
      %6562 = vst [vmem:[%s785 + $0x1c] sm:$0xf] %v6273
      %v6563 = vld [vmem:[%s785 + $0x20] sm:$0x1]
      %v6564 = vsel %vm1010, %v6274, %v6563
      %6565 = vst [vmem:[%s785 + $0x20] sm:$0x1] %v6564
      %v6566 = vld [vmem:[%s785 + $0x24] sm:$0xf]
      %v6567 = vsel %vm6545, %v6281, %v6566
      %6568 = vst [vmem:[%s785 + $0x24] sm:$0xf] %v6567
      %6569 = vst [vmem:[%s785 + $0x28] sm:$0xf] %v6290
      %v6570 = vld [vmem:[%s785 + $0x2c] sm:$0x1]
      %v6571 = vsel %vm1010, %v6291, %v6570
      %6572 = vst [vmem:[%s785 + $0x2c] sm:$0x1] %v6571
      %v6573 = vld [vmem:[%s785 + $0x30] sm:$0xf]
      %v6574 = vsel %vm6545, %v6298, %v6573
      %6575 = vst [vmem:[%s785 + $0x30] sm:$0xf] %v6574
      %6576 = vst [vmem:[%s785 + $0x34] sm:$0xf] %v6307
      %v6577 = vld [vmem:[%s785 + $0x38] sm:$0x1]
      %v6578 = vsel %vm1010, %v6308, %v6577
      %6579 = vst [vmem:[%s785 + $0x38] sm:$0x1] %v6578
      %v6580 = vld [vmem:[%s785 + $0x3c] sm:$0xf]
      %v6581 = vsel %vm6545, %v6315, %v6580
      %6582 = vst [vmem:[%s785 + $0x3c] sm:$0xf] %v6581
      %6583 = vst [vmem:[%s785 + $0x40] sm:$0xf] %v6324
      %v6584 = vld [vmem:[%s785 + $0x44] sm:$0x1]
      %v6585 = vsel %vm1010, %v6325, %v6584
      %6586 = vst [vmem:[%s785 + $0x44] sm:$0x1] %v6585
      %v6587 = vld [vmem:[%s785 + $0x48] sm:$0xf]
      %v6588 = vsel %vm6545, %v6332, %v6587
      %6589 = vst [vmem:[%s785 + $0x48] sm:$0xf] %v6588
      %6590 = vst [vmem:[%s785 + $0x4c] sm:$0xf] %v6341
      %v6591 = vld [vmem:[%s785 + $0x50] sm:$0x1]
      %v6592 = vsel %vm1010, %v6342, %v6591
      %6593 = vst [vmem:[%s785 + $0x50] sm:$0x1] %v6592
      %v6594 = vld [vmem:[%s785 + $0x54] sm:$0xf]
      %v6595 = vsel %vm6545, %v6349, %v6594
      %6596 = vst [vmem:[%s785 + $0x54] sm:$0xf] %v6595
      %6597 = vst [vmem:[%s785 + $0x58] sm:$0xf] %v6358
      %v6598 = vld [vmem:[%s785 + $0x5c] sm:$0x1]
      %v6599 = vsel %vm1010, %v6359, %v6598
      %6600 = vst [vmem:[%s785 + $0x5c] sm:$0x1] %v6599
      %v6601 = vld [vmem:[%s785 + $0x60] sm:$0xf]
      %v6602 = vsel %vm6545, %v6366, %v6601
      %6603 = vst [vmem:[%s785 + $0x60] sm:$0xf] %v6602
      %6604 = vst [vmem:[%s785 + $0x64] sm:$0xf] %v6375
      %v6605 = vld [vmem:[%s785 + $0x68] sm:$0x1]
      %v6606 = vsel %vm1010, %v6376, %v6605
      %6607 = vst [vmem:[%s785 + $0x68] sm:$0x1] %v6606
      %v6608 = vld [vmem:[%s785 + $0x6c] sm:$0xf]
      %v6609 = vsel %vm6545, %v6383, %v6608
      %6610 = vst [vmem:[%s785 + $0x6c] sm:$0xf] %v6609
      %6611 = vst [vmem:[%s785 + $0x70] sm:$0xf] %v6392
      %v6612 = vld [vmem:[%s785 + $0x74] sm:$0x1]
      %v6613 = vsel %vm1010, %v6393, %v6612
      %6614 = vst [vmem:[%s785 + $0x74] sm:$0x1] %v6613
      %v6615 = vld [vmem:[%s785 + $0x78] sm:$0xf]
      %v6616 = vsel %vm6545, %v6400, %v6615
      %6617 = vst [vmem:[%s785 + $0x78] sm:$0xf] %v6616
      %6618 = vst [vmem:[%s785 + $0x7c] sm:$0xf] %v6409
      %v6619 = vld [vmem:[%s785 + $0x80] sm:$0x1]
      %v6620 = vsel %vm1010, %v6410, %v6619
      %6621 = vst [vmem:[%s785 + $0x80] sm:$0x1] %v6620
      %v6622 = vld [vmem:[%s785 + $0x84] sm:$0xf]
      %v6623 = vsel %vm6545, %v6417, %v6622
      %6624 = vst [vmem:[%s785 + $0x84] sm:$0xf] %v6623
      %6625 = vst [vmem:[%s785 + $0x88] sm:$0xf] %v6426
      %v6626 = vld [vmem:[%s785 + $0x8c] sm:$0x1]
      %v6627 = vsel %vm1010, %v6427, %v6626
      %6628 = vst [vmem:[%s785 + $0x8c] sm:$0x1] %v6627
      %v6629 = vld [vmem:[%s785 + $0x90] sm:$0xf]
      %v6630 = vsel %vm6545, %v6434, %v6629
      %6631 = vst [vmem:[%s785 + $0x90] sm:$0xf] %v6630
      %6632 = vst [vmem:[%s785 + $0x94] sm:$0xf] %v6443
      %v6633 = vld [vmem:[%s785 + $0x98] sm:$0x1]
      %v6634 = vsel %vm1010, %v6444, %v6633
      %6635 = vst [vmem:[%s785 + $0x98] sm:$0x1] %v6634
      %v6636 = vld [vmem:[%s785 + $0x9c] sm:$0xf]
      %v6637 = vsel %vm6545, %v6451, %v6636
      %6638 = vst [vmem:[%s785 + $0x9c] sm:$0xf] %v6637
      %6639 = vst [vmem:[%s785 + $0xa0] sm:$0xf] %v6460
      %v6640 = vld [vmem:[%s785 + $0xa4] sm:$0x1]
      %v6641 = vsel %vm1010, %v6461, %v6640
      %6642 = vst [vmem:[%s785 + $0xa4] sm:$0x1] %v6641
      %v6643 = vld [vmem:[%s785 + $0xa8] sm:$0xf]
      %v6644 = vsel %vm6545, %v6468, %v6643
      %6645 = vst [vmem:[%s785 + $0xa8] sm:$0xf] %v6644
      %6646 = vst [vmem:[%s785 + $0xac] sm:$0xf] %v6477
      %v6647 = vld [vmem:[%s785 + $0xb0] sm:$0x1]
      %v6648 = vsel %vm1010, %v6478, %v6647
      %6649 = vst [vmem:[%s785 + $0xb0] sm:$0x1] %v6648
      %v6650 = vld [vmem:[%s785 + $0xb4] sm:$0xf]
      %v6651 = vsel %vm6545, %v6485, %v6650
      %6652 = vst [vmem:[%s785 + $0xb4] sm:$0xf] %v6651
      %6653 = vst [vmem:[%s785 + $0xb8] sm:$0xf] %v6494
      %v6654 = vld [vmem:[%s785 + $0xbc] sm:$0x1]
      %v6655 = vsel %vm1010, %v6495, %v6654
      %6656 = vst [vmem:[%s785 + $0xbc] sm:$0x1] %v6655
      %v6657 = vld [vmem:[#allocation2] sm:$0xf]
      %v6658 = vsel %vm6545, %v6247, %v6657
      %6659 = vst [vmem:[#allocation2] sm:$0xf] %v6658
      %6660 = vst [vmem:[#allocation2 + $0x4] sm:$0xf] %v6256
      %v6661 = vld [vmem:[#allocation2 + $0x8] sm:$0x1]
      %v6662 = vsel %vm1010, %v6257, %v6661
      %6663 = vst [vmem:[#allocation2 + $0x8] sm:$0x1] %v6662
      %v6664 = vld [vmem:[%s911] sm:$0xf]
      %v6665 = vsel %vm6545, %v6468, %v6664
      %6666 = vst [vmem:[%s911] sm:$0xf] %v6665
      %6667 = vst [vmem:[%s911 + $0x4] sm:$0xf] %v6477
      %v6668 = vld [vmem:[%s911 + $0x8] sm:$0x1]
      %v6669 = vsel %vm1010, %v6478, %v6668
      %6670 = vst [vmem:[%s911 + $0x8] sm:$0x1] %v6669
      %v6671 = vld [vmem:[#allocation2] sm:$0x2]
      %v6672 = vld [vmem:[#allocation2 + $0xc] sm:$0x2]
      %v6673 = vld [vmem:[#allocation2 + $0x18] sm:$0x2]
      %v6674 = vld [vmem:[#allocation2 + $0x24] sm:$0x2]
      %v6675 = vld [vmem:[#allocation2 + $0x30] sm:$0x2]
      %v6676 = vld [vmem:[#allocation2 + $0x3c] sm:$0x2]
      %v6677 = vld [vmem:[#allocation2 + $0x48] sm:$0x2]
      %v6678 = vld [vmem:[#allocation2 + $0x54] sm:$0x2]
      %v6679 = vld [vmem:[#allocation2 + $0x60] sm:$0x2]
      %v6680 = vld [vmem:[#allocation2 + $0x6c] sm:$0x2]
      %v6681 = vld [vmem:[#allocation2 + $0x78] sm:$0x2]
      %v6682 = vld [vmem:[#allocation2 + $0x84] sm:$0x2]
      %v6683 = vld [vmem:[#allocation2 + $0x90] sm:$0x2]
      %v6684 = vld [vmem:[#allocation2 + $0x9c] sm:$0x2]
      %v6685 = vld [vmem:[#allocation2 + $0xa8] sm:$0x2]
      %v6686 = vld [vmem:[#allocation2 + $0xb4] sm:$0x2]
      %v6687 = vld [vmem:[#allocation2 + $0xc0] sm:$0x2]
      %v6688 = vld [vmem:[#allocation2 + $0xcc] sm:$0x2]
      %v6707 = vrot.slane %v6671, 5
      %v6708 = vrot.slane %v6707, 4
      %v6709 = vrot.slane %v6672, 5
      %v6710 = vrot.slane %v6709, 4
      %v6711 = vrot.slane %v6673, 5
      %v6712 = vrot.slane %v6711, 4
      %v6713 = vrot.slane %v6674, 5
      %v6714 = vrot.slane %v6713, 4
      %v6715 = vrot.slane %v6675, 5
      %v6716 = vrot.slane %v6715, 4
      %v6717 = vrot.slane %v6676, 5
      %v6718 = vrot.slane %v6717, 4
      %v6719 = vrot.slane %v6677, 5
      %v6720 = vrot.slane %v6719, 4
      %v6721 = vrot.slane %v6678, 5
      %v6722 = vrot.slane %v6721, 4
      %v6723 = vrot.slane %v6679, 5
      %v6724 = vrot.slane %v6723, 4
      %v6725 = vrot.slane %v6680, 5
      %v6726 = vrot.slane %v6725, 4
      %v6727 = vrot.slane %v6681, 5
      %v6728 = vrot.slane %v6727, 4
      %v6729 = vrot.slane %v6682, 5
      %v6730 = vrot.slane %v6729, 4
      %v6731 = vrot.slane %v6683, 5
      %v6732 = vrot.slane %v6731, 4
      %v6733 = vrot.slane %v6684, 5
      %v6734 = vrot.slane %v6733, 4
      %v6735 = vrot.slane %v6685, 5
      %v6736 = vrot.slane %v6735, 4
      %v6737 = vrot.slane %v6686, 5
      %v6738 = vrot.slane %v6737, 4
      %v6739 = vrot.slane %v6687, 5
      %v6740 = vrot.slane %v6739, 4
      %v6741 = vrot.slane %v6688, 5
      %v6742 = vrot.slane %v6741, 4
      %v6761 = vld [vmem:[#allocation2] sm:$0x1]
      %v6762 = vsel %vm1010, %v6708, %v6761
      %6763 = vst [vmem:[#allocation2] sm:$0x1] %v6762
      %v6764 = vld [vmem:[#allocation2 + $0xc] sm:$0x1]
      %v6765 = vsel %vm1010, %v6710, %v6764
      %6766 = vst [vmem:[#allocation2 + $0xc] sm:$0x1] %v6765
      %v6767 = vld [vmem:[#allocation2 + $0x18] sm:$0x1]
      %v6768 = vsel %vm1010, %v6712, %v6767
      %6769 = vst [vmem:[#allocation2 + $0x18] sm:$0x1] %v6768
      %v6770 = vld [vmem:[#allocation2 + $0x24] sm:$0x1]
      %v6771 = vsel %vm1010, %v6714, %v6770
      %6772 = vst [vmem:[#allocation2 + $0x24] sm:$0x1] %v6771
      %v6773 = vld [vmem:[#allocation2 + $0x30] sm:$0x1]
      %v6774 = vsel %vm1010, %v6716, %v6773
      %6775 = vst [vmem:[#allocation2 + $0x30] sm:$0x1] %v6774
      %v6776 = vld [vmem:[#allocation2 + $0x3c] sm:$0x1]
      %v6777 = vsel %vm1010, %v6718, %v6776
      %6778 = vst [vmem:[#allocation2 + $0x3c] sm:$0x1] %v6777
      %v6779 = vld [vmem:[#allocation2 + $0x48] sm:$0x1]
      %v6780 = vsel %vm1010, %v6720, %v6779
      %6781 = vst [vmem:[#allocation2 + $0x48] sm:$0x1] %v6780
      %v6782 = vld [vmem:[#allocation2 + $0x54] sm:$0x1]
      %v6783 = vsel %vm1010, %v6722, %v6782
      %6784 = vst [vmem:[#allocation2 + $0x54] sm:$0x1] %v6783
      %v6785 = vld [vmem:[#allocation2 + $0x60] sm:$0x1]
      %v6786 = vsel %vm1010, %v6724, %v6785
      %6787 = vst [vmem:[#allocation2 + $0x60] sm:$0x1] %v6786
      %v6788 = vld [vmem:[#allocation2 + $0x6c] sm:$0x1]
      %v6789 = vsel %vm1010, %v6726, %v6788
      %6790 = vst [vmem:[#allocation2 + $0x6c] sm:$0x1] %v6789
      %v6791 = vld [vmem:[#allocation2 + $0x78] sm:$0x1]
      %v6792 = vsel %vm1010, %v6728, %v6791
      %6793 = vst [vmem:[#allocation2 + $0x78] sm:$0x1] %v6792
      %v6794 = vld [vmem:[#allocation2 + $0x84] sm:$0x1]
      %v6795 = vsel %vm1010, %v6730, %v6794
      %6796 = vst [vmem:[#allocation2 + $0x84] sm:$0x1] %v6795
      %v6797 = vld [vmem:[#allocation2 + $0x90] sm:$0x1]
      %v6798 = vsel %vm1010, %v6732, %v6797
      %6799 = vst [vmem:[#allocation2 + $0x90] sm:$0x1] %v6798
      %v6800 = vld [vmem:[#allocation2 + $0x9c] sm:$0x1]
      %v6801 = vsel %vm1010, %v6734, %v6800
      %6802 = vst [vmem:[#allocation2 + $0x9c] sm:$0x1] %v6801
      %v6803 = vld [vmem:[#allocation2 + $0xa8] sm:$0x1]
      %v6804 = vsel %vm1010, %v6736, %v6803
      %6805 = vst [vmem:[#allocation2 + $0xa8] sm:$0x1] %v6804
      %v6806 = vld [vmem:[#allocation2 + $0xb4] sm:$0x1]
      %v6807 = vsel %vm1010, %v6738, %v6806
      %6808 = vst [vmem:[#allocation2 + $0xb4] sm:$0x1] %v6807
      %v6809 = vld [vmem:[#allocation2 + $0xc0] sm:$0x1]
      %v6810 = vsel %vm1010, %v6740, %v6809
      %6811 = vst [vmem:[#allocation2 + $0xc0] sm:$0x1] %v6810
      %v6812 = vld [vmem:[#allocation2 + $0xcc] sm:$0x1]
      %v6813 = vsel %vm1010, %v6742, %v6812
      %6814 = vst [vmem:[#allocation2 + $0xcc] sm:$0x1] %v6813
      %v6815 = vld [vmem:[#allocation2 + $0x4] sm:$0x8]
      %v6816 = vld [vmem:[#allocation2 + $0x10] sm:$0x8]
      %v6817 = vld [vmem:[#allocation2 + $0x1c] sm:$0x8]
      %v6818 = vld [vmem:[#allocation2 + $0x28] sm:$0x8]
      %v6819 = vld [vmem:[#allocation2 + $0x34] sm:$0x8]
      %v6820 = vld [vmem:[#allocation2 + $0x40] sm:$0x8]
      %v6821 = vld [vmem:[#allocation2 + $0x4c] sm:$0x8]
      %v6822 = vld [vmem:[#allocation2 + $0x58] sm:$0x8]
      %v6823 = vld [vmem:[#allocation2 + $0x64] sm:$0x8]
      %v6824 = vld [vmem:[#allocation2 + $0x70] sm:$0x8]
      %v6825 = vld [vmem:[#allocation2 + $0x7c] sm:$0x8]
      %v6826 = vld [vmem:[#allocation2 + $0x88] sm:$0x8]
      %v6827 = vld [vmem:[#allocation2 + $0x94] sm:$0x8]
      %v6828 = vld [vmem:[#allocation2 + $0xa0] sm:$0x8]
      %v6829 = vld [vmem:[#allocation2 + $0xac] sm:$0x8]
      %v6830 = vld [vmem:[#allocation2 + $0xb8] sm:$0x8]
      %v6831 = vld [vmem:[#allocation2 + $0xc4] sm:$0x8]
      %v6832 = vld [vmem:[#allocation2 + $0xd0] sm:$0x8]
      %v6851 = vrot.slane %v6815, 7
      %v6852 = vrot.slane %v6851, 4
      %v6853 = vrot.slane %v6816, 7
      %v6854 = vrot.slane %v6853, 4
      %v6855 = vrot.slane %v6817, 7
      %v6856 = vrot.slane %v6855, 4
      %v6857 = vrot.slane %v6818, 7
      %v6858 = vrot.slane %v6857, 4
      %v6859 = vrot.slane %v6819, 7
      %v6860 = vrot.slane %v6859, 4
      %v6861 = vrot.slane %v6820, 7
      %v6862 = vrot.slane %v6861, 4
      %v6863 = vrot.slane %v6821, 7
      %v6864 = vrot.slane %v6863, 4
      %v6865 = vrot.slane %v6822, 7
      %v6866 = vrot.slane %v6865, 4
      %v6867 = vrot.slane %v6823, 7
      %v6868 = vrot.slane %v6867, 4
      %v6869 = vrot.slane %v6824, 7
      %v6870 = vrot.slane %v6869, 4
      %v6871 = vrot.slane %v6825, 7
      %v6872 = vrot.slane %v6871, 4
      %v6873 = vrot.slane %v6826, 7
      %v6874 = vrot.slane %v6873, 4
      %v6875 = vrot.slane %v6827, 7
      %v6876 = vrot.slane %v6875, 4
      %v6877 = vrot.slane %v6828, 7
      %v6878 = vrot.slane %v6877, 4
      %v6879 = vrot.slane %v6829, 7
      %v6880 = vrot.slane %v6879, 4
      %v6881 = vrot.slane %v6830, 7
      %v6882 = vrot.slane %v6881, 4
      %v6883 = vrot.slane %v6831, 7
      %v6884 = vrot.slane %v6883, 4
      %v6885 = vrot.slane %v6832, 7
      %v6886 = vrot.slane %v6885, 4
      %v6905 = vld [vmem:[#allocation2 + $0x8] sm:$0x1]
      %v6906 = vsel %vm1155, %v6852, %v6905
      %6907 = vst [vmem:[#allocation2 + $0x8] sm:$0x1] %v6906
      %v6908 = vld [vmem:[#allocation2 + $0x14] sm:$0x1]
      %v6909 = vsel %vm1155, %v6854, %v6908
      %6910 = vst [vmem:[#allocation2 + $0x14] sm:$0x1] %v6909
      %v6911 = vld [vmem:[#allocation2 + $0x20] sm:$0x1]
      %v6912 = vsel %vm1155, %v6856, %v6911
      %6913 = vst [vmem:[#allocation2 + $0x20] sm:$0x1] %v6912
      %v6914 = vld [vmem:[#allocation2 + $0x2c] sm:$0x1]
      %v6915 = vsel %vm1155, %v6858, %v6914
      %6916 = vst [vmem:[#allocation2 + $0x2c] sm:$0x1] %v6915
      %v6917 = vld [vmem:[#allocation2 + $0x38] sm:$0x1]
      %v6918 = vsel %vm1155, %v6860, %v6917
      %6919 = vst [vmem:[#allocation2 + $0x38] sm:$0x1] %v6918
      %v6920 = vld [vmem:[#allocation2 + $0x44] sm:$0x1]
      %v6921 = vsel %vm1155, %v6862, %v6920
      %6922 = vst [vmem:[#allocation2 + $0x44] sm:$0x1] %v6921
      %v6923 = vld [vmem:[#allocation2 + $0x50] sm:$0x1]
      %v6924 = vsel %vm1155, %v6864, %v6923
      %6925 = vst [vmem:[#allocation2 + $0x50] sm:$0x1] %v6924
      %v6926 = vld [vmem:[#allocation2 + $0x5c] sm:$0x1]
      %v6927 = vsel %vm1155, %v6866, %v6926
      %6928 = vst [vmem:[#allocation2 + $0x5c] sm:$0x1] %v6927
      %v6929 = vld [vmem:[#allocation2 + $0x68] sm:$0x1]
      %v6930 = vsel %vm1155, %v6868, %v6929
      %6931 = vst [vmem:[#allocation2 + $0x68] sm:$0x1] %v6930
      %v6932 = vld [vmem:[#allocation2 + $0x74] sm:$0x1]
      %v6933 = vsel %vm1155, %v6870, %v6932
      %6934 = vst [vmem:[#allocation2 + $0x74] sm:$0x1] %v6933
      %v6935 = vld [vmem:[#allocation2 + $0x80] sm:$0x1]
      %v6936 = vsel %vm1155, %v6872, %v6935
      %6937 = vst [vmem:[#allocation2 + $0x80] sm:$0x1] %v6936
      %v6938 = vld [vmem:[#allocation2 + $0x8c] sm:$0x1]
      %v6939 = vsel %vm1155, %v6874, %v6938
      %6940 = vst [vmem:[#allocation2 + $0x8c] sm:$0x1] %v6939
      %v6941 = vld [vmem:[#allocation2 + $0x98] sm:$0x1]
      %v6942 = vsel %vm1155, %v6876, %v6941
      %6943 = vst [vmem:[#allocation2 + $0x98] sm:$0x1] %v6942
      %v6944 = vld [vmem:[#allocation2 + $0xa4] sm:$0x1]
      %v6945 = vsel %vm1155, %v6878, %v6944
      %6946 = vst [vmem:[#allocation2 + $0xa4] sm:$0x1] %v6945
      %v6947 = vld [vmem:[#allocation2 + $0xb0] sm:$0x1]
      %v6948 = vsel %vm1155, %v6880, %v6947
      %6949 = vst [vmem:[#allocation2 + $0xb0] sm:$0x1] %v6948
      %v6950 = vld [vmem:[#allocation2 + $0xbc] sm:$0x1]
      %v6951 = vsel %vm1155, %v6882, %v6950
      %6952 = vst [vmem:[#allocation2 + $0xbc] sm:$0x1] %v6951
      %v6953 = vld [vmem:[#allocation2 + $0xc8] sm:$0x1]
      %v6954 = vsel %vm1155, %v6884, %v6953
      %6955 = vst [vmem:[#allocation2 + $0xc8] sm:$0x1] %v6954
      %v6956 = vld [vmem:[#allocation2 + $0xd4] sm:$0x1]
      %v6957 = vsel %vm1155, %v6886, %v6956
      %6958 = vst [vmem:[#allocation2 + $0xd4] sm:$0x1] %v6957
      %v6959 = vld [vmem:[#allocation2] sm:$0xf]
      %v6960 = vld [vmem:[#allocation2 + $0x4] sm:$0xf]
      %v6961 = vld [vmem:[#allocation2 + $0xc] sm:$0xf]
      %v6962 = vld [vmem:[#allocation2 + $0x10] sm:$0xf]
      %v6963 = vld [vmem:[#allocation2 + $0x18] sm:$0xf]
      %v6964 = vld [vmem:[#allocation2 + $0x1c] sm:$0xf]
      %v6965 = vld [vmem:[#allocation2 + $0x24] sm:$0xf]
      %v6966 = vld [vmem:[#allocation2 + $0x28] sm:$0xf]
      %v6967 = vld [vmem:[#allocation2 + $0x30] sm:$0xf]
      %v6968 = vld [vmem:[#allocation2 + $0x34] sm:$0xf]
      %v6969 = vld [vmem:[#allocation2 + $0x3c] sm:$0xf]
      %v6970 = vld [vmem:[#allocation2 + $0x40] sm:$0xf]
      %v6971 = vld [vmem:[#allocation2 + $0x48] sm:$0xf]
      %v6972 = vld [vmem:[#allocation2 + $0x4c] sm:$0xf]
      %v6973 = vld [vmem:[#allocation2 + $0x54] sm:$0xf]
      %v6974 = vld [vmem:[#allocation2 + $0x58] sm:$0xf]
      %v6975 = vld [vmem:[#allocation2 + $0x60] sm:$0xf]
      %v6976 = vld [vmem:[#allocation2 + $0x64] sm:$0xf]
      %v6977 = vld [vmem:[#allocation2 + $0x6c] sm:$0xf]
      %v6978 = vld [vmem:[#allocation2 + $0x70] sm:$0xf]
      %v6979 = vld [vmem:[#allocation2 + $0x78] sm:$0xf]
      %v6980 = vld [vmem:[#allocation2 + $0x7c] sm:$0xf]
      %v6981 = vld [vmem:[#allocation2 + $0x84] sm:$0xf]
      %v6982 = vld [vmem:[#allocation2 + $0x88] sm:$0xf]
      %v6983 = vld [vmem:[#allocation2 + $0x90] sm:$0xf]
      %v6984 = vld [vmem:[#allocation2 + $0x94] sm:$0xf]
      %v6985 = vld [vmem:[#allocation2 + $0x9c] sm:$0xf]
      %v6986 = vld [vmem:[#allocation2 + $0xa0] sm:$0xf]
      %v6987 = vld [vmem:[#allocation2 + $0xa8] sm:$0xf]
      %v6988 = vld [vmem:[#allocation2 + $0xac] sm:$0xf]
      %v6989 = vld [vmem:[#allocation2 + $0xb4] sm:$0xf]
      %v6990 = vld [vmem:[#allocation2 + $0xb8] sm:$0xf]
      %v6991 = vld [vmem:[%s4] sm:$0xf]
      %v6992 = vld [vmem:[%s4 + $0x4] sm:$0xf]
      %v6993 = vld [vmem:[%s4 + $0x8] sm:$0xf]
      %v6994 = vld [vmem:[%s4 + $0xc] sm:$0xf]
      %v6995 = vld [vmem:[%s4 + $0x10] sm:$0xf]
      %v6996 = vld [vmem:[%s4 + $0x14] sm:$0xf]
      %v6997 = vld [vmem:[%s4 + $0x18] sm:$0xf]
      %v6998 = vld [vmem:[%s4 + $0x1c] sm:$0xf]
      %v6999 = vld [vmem:[%s4 + $0x20] sm:$0xf]
      %v7000 = vld [vmem:[%s4 + $0x24] sm:$0xf]
      %v7001 = vld [vmem:[%s4 + $0x28] sm:$0xf]
      %v7002 = vld [vmem:[%s4 + $0x2c] sm:$0xf]
      %v7003 = vld [vmem:[%s4 + $0x30] sm:$0xf]
      %v7004 = vld [vmem:[%s4 + $0x34] sm:$0xf]
      %v7005 = vld [vmem:[%s4 + $0x38] sm:$0xf]
      %v7006 = vld [vmem:[%s4 + $0x3c] sm:$0xf]
      %v7007 = vld [vmem:[#allocation2 + $0x8] sm:$0x1]
      %v7008 = vld [vmem:[#allocation2 + $0x14] sm:$0x1]
      %v7009 = vld [vmem:[#allocation2 + $0x20] sm:$0x1]
      %v7010 = vld [vmem:[#allocation2 + $0x2c] sm:$0x1]
      %v7011 = vld [vmem:[#allocation2 + $0x38] sm:$0x1]
      %v7012 = vld [vmem:[#allocation2 + $0x44] sm:$0x1]
      %v7013 = vld [vmem:[#allocation2 + $0x50] sm:$0x1]
      %v7014 = vld [vmem:[#allocation2 + $0x5c] sm:$0x1]
      %v7015 = vld [vmem:[#allocation2 + $0x68] sm:$0x1]
      %v7016 = vld [vmem:[#allocation2 + $0x74] sm:$0x1]
      %v7017 = vld [vmem:[#allocation2 + $0x80] sm:$0x1]
      %v7018 = vld [vmem:[#allocation2 + $0x8c] sm:$0x1]
      %v7019 = vld [vmem:[#allocation2 + $0x98] sm:$0x1]
      %v7020 = vld [vmem:[#allocation2 + $0xa4] sm:$0x1]
      %v7021 = vld [vmem:[#allocation2 + $0xb0] sm:$0x1]
      %v7022 = vld [vmem:[#allocation2 + $0xbc] sm:$0x1]
      %v7024 = vshrl.u32 %v6959, 16
      %v7026 = vrot.slane %v7024, 4
      %v7027 = vshll.u32 %v6959, 16
      %v7029 = vrot.slane %v7027, 5
      %v7030 = vor.u32 %v7026, %v7029
      %v7031 = vrot.slane %v7030, 4
      %v7033 = vshll.u32 %v6960, 16
      %v7035 = vrot.slane %v7033, 5
      %v7036 = vsel %vm1276, %v7031, %v7035
      %v7037 = vshrl.u32 %v6960, 16
      %v7039 = vrot.slane %v7037, 4
      %v7040 = vor.u32 %v7039, %v7035
      %v7041 = vrot.slane %v7040, 4
      %v7043 = vshll.u32 %v7007, 16
      %v7045 = vrot.slane %v7043, 5
      %v7046 = vsel %vm1276, %v7041, %v7045
      %v7048 = vshrl.u32 %v6961, 16
      %v7050 = vrot.slane %v7048, 4
      %v7051 = vshll.u32 %v6961, 16
      %v7053 = vrot.slane %v7051, 5
      %v7054 = vor.u32 %v7050, %v7053
      %v7055 = vrot.slane %v7054, 4
      %v7057 = vshll.u32 %v6962, 16
      %v7059 = vrot.slane %v7057, 5
      %v7060 = vsel %vm1276, %v7055, %v7059
      %v7061 = vshrl.u32 %v6962, 16
      %v7063 = vrot.slane %v7061, 4
      %v7064 = vor.u32 %v7063, %v7059
      %v7065 = vrot.slane %v7064, 4
      %v7067 = vshll.u32 %v7008, 16
      %v7069 = vrot.slane %v7067, 5
      %v7070 = vsel %vm1276, %v7065, %v7069
      %v7072 = vshrl.u32 %v6963, 16
      %v7074 = vrot.slane %v7072, 4
      %v7075 = vshll.u32 %v6963, 16
      %v7077 = vrot.slane %v7075, 5
      %v7078 = vor.u32 %v7074, %v7077
      %v7079 = vrot.slane %v7078, 4
      %v7081 = vshll.u32 %v6964, 16
      %v7083 = vrot.slane %v7081, 5
      %v7084 = vsel %vm1276, %v7079, %v7083
      %v7085 = vshrl.u32 %v6964, 16
      %v7087 = vrot.slane %v7085, 4
      %v7088 = vor.u32 %v7087, %v7083
      %v7089 = vrot.slane %v7088, 4
      %v7091 = vshll.u32 %v7009, 16
      %v7093 = vrot.slane %v7091, 5
      %v7094 = vsel %vm1276, %v7089, %v7093
      %v7096 = vshrl.u32 %v6965, 16
      %v7098 = vrot.slane %v7096, 4
      %v7099 = vshll.u32 %v6965, 16
      %v7101 = vrot.slane %v7099, 5
      %v7102 = vor.u32 %v7098, %v7101
      %v7103 = vrot.slane %v7102, 4
      %v7105 = vshll.u32 %v6966, 16
      %v7107 = vrot.slane %v7105, 5
      %v7108 = vsel %vm1276, %v7103, %v7107
      %v7109 = vshrl.u32 %v6966, 16
      %v7111 = vrot.slane %v7109, 4
      %v7112 = vor.u32 %v7111, %v7107
      %v7113 = vrot.slane %v7112, 4
      %v7115 = vshll.u32 %v7010, 16
      %v7117 = vrot.slane %v7115, 5
      %v7118 = vsel %vm1276, %v7113, %v7117
      %v7120 = vshrl.u32 %v6967, 16
      %v7122 = vrot.slane %v7120, 4
      %v7123 = vshll.u32 %v6967, 16
      %v7125 = vrot.slane %v7123, 5
      %v7126 = vor.u32 %v7122, %v7125
      %v7127 = vrot.slane %v7126, 4
      %v7129 = vshll.u32 %v6968, 16
      %v7131 = vrot.slane %v7129, 5
      %v7132 = vsel %vm1276, %v7127, %v7131
      %v7133 = vshrl.u32 %v6968, 16
      %v7135 = vrot.slane %v7133, 4
      %v7136 = vor.u32 %v7135, %v7131
      %v7137 = vrot.slane %v7136, 4
      %v7139 = vshll.u32 %v7011, 16
      %v7141 = vrot.slane %v7139, 5
      %v7142 = vsel %vm1276, %v7137, %v7141
      %v7144 = vshrl.u32 %v6969, 16
      %v7146 = vrot.slane %v7144, 4
      %v7147 = vshll.u32 %v6969, 16
      %v7149 = vrot.slane %v7147, 5
      %v7150 = vor.u32 %v7146, %v7149
      %v7151 = vrot.slane %v7150, 4
      %v7153 = vshll.u32 %v6970, 16
      %v7155 = vrot.slane %v7153, 5
      %v7156 = vsel %vm1276, %v7151, %v7155
      %v7157 = vshrl.u32 %v6970, 16
      %v7159 = vrot.slane %v7157, 4
      %v7160 = vor.u32 %v7159, %v7155
      %v7161 = vrot.slane %v7160, 4
      %v7163 = vshll.u32 %v7012, 16
      %v7165 = vrot.slane %v7163, 5
      %v7166 = vsel %vm1276, %v7161, %v7165
      %v7168 = vshrl.u32 %v6971, 16
      %v7170 = vrot.slane %v7168, 4
      %v7171 = vshll.u32 %v6971, 16
      %v7173 = vrot.slane %v7171, 5
      %v7174 = vor.u32 %v7170, %v7173
      %v7175 = vrot.slane %v7174, 4
      %v7177 = vshll.u32 %v6972, 16
      %v7179 = vrot.slane %v7177, 5
      %v7180 = vsel %vm1276, %v7175, %v7179
      %v7181 = vshrl.u32 %v6972, 16
      %v7183 = vrot.slane %v7181, 4
      %v7184 = vor.u32 %v7183, %v7179
      %v7185 = vrot.slane %v7184, 4
      %v7187 = vshll.u32 %v7013, 16
      %v7189 = vrot.slane %v7187, 5
      %v7190 = vsel %vm1276, %v7185, %v7189
      %v7192 = vshrl.u32 %v6973, 16
      %v7194 = vrot.slane %v7192, 4
      %v7195 = vshll.u32 %v6973, 16
      %v7197 = vrot.slane %v7195, 5
      %v7198 = vor.u32 %v7194, %v7197
      %v7199 = vrot.slane %v7198, 4
      %v7201 = vshll.u32 %v6974, 16
      %v7203 = vrot.slane %v7201, 5
      %v7204 = vsel %vm1276, %v7199, %v7203
      %v7205 = vshrl.u32 %v6974, 16
      %v7207 = vrot.slane %v7205, 4
      %v7208 = vor.u32 %v7207, %v7203
      %v7209 = vrot.slane %v7208, 4
      %v7211 = vshll.u32 %v7014, 16
      %v7213 = vrot.slane %v7211, 5
      %v7214 = vsel %vm1276, %v7209, %v7213
      %v7216 = vshrl.u32 %v6975, 16
      %v7218 = vrot.slane %v7216, 4
      %v7219 = vshll.u32 %v6975, 16
      %v7221 = vrot.slane %v7219, 5
      %v7222 = vor.u32 %v7218, %v7221
      %v7223 = vrot.slane %v7222, 4
      %v7225 = vshll.u32 %v6976, 16
      %v7227 = vrot.slane %v7225, 5
      %v7228 = vsel %vm1276, %v7223, %v7227
      %v7229 = vshrl.u32 %v6976, 16
      %v7231 = vrot.slane %v7229, 4
      %v7232 = vor.u32 %v7231, %v7227
      %v7233 = vrot.slane %v7232, 4
      %v7235 = vshll.u32 %v7015, 16
      %v7237 = vrot.slane %v7235, 5
      %v7238 = vsel %vm1276, %v7233, %v7237
      %v7240 = vshrl.u32 %v6977, 16
      %v7242 = vrot.slane %v7240, 4
      %v7243 = vshll.u32 %v6977, 16
      %v7245 = vrot.slane %v7243, 5
      %v7246 = vor.u32 %v7242, %v7245
      %v7247 = vrot.slane %v7246, 4
      %v7249 = vshll.u32 %v6978, 16
      %v7251 = vrot.slane %v7249, 5
      %v7252 = vsel %vm1276, %v7247, %v7251
      %v7253 = vshrl.u32 %v6978, 16
      %v7255 = vrot.slane %v7253, 4
      %v7256 = vor.u32 %v7255, %v7251
      %v7257 = vrot.slane %v7256, 4
      %v7259 = vshll.u32 %v7016, 16
      %v7261 = vrot.slane %v7259, 5
      %v7262 = vsel %vm1276, %v7257, %v7261
      %v7264 = vshrl.u32 %v6979, 16
      %v7266 = vrot.slane %v7264, 4
      %v7267 = vshll.u32 %v6979, 16
      %v7269 = vrot.slane %v7267, 5
      %v7270 = vor.u32 %v7266, %v7269
      %v7271 = vrot.slane %v7270, 4
      %v7273 = vshll.u32 %v6980, 16
      %v7275 = vrot.slane %v7273, 5
      %v7276 = vsel %vm1276, %v7271, %v7275
      %v7277 = vshrl.u32 %v6980, 16
      %v7279 = vrot.slane %v7277, 4
      %v7280 = vor.u32 %v7279, %v7275
      %v7281 = vrot.slane %v7280, 4
      %v7283 = vshll.u32 %v7017, 16
      %v7285 = vrot.slane %v7283, 5
      %v7286 = vsel %vm1276, %v7281, %v7285
      %v7288 = vshrl.u32 %v6981, 16
      %v7290 = vrot.slane %v7288, 4
      %v7291 = vshll.u32 %v6981, 16
      %v7293 = vrot.slane %v7291, 5
      %v7294 = vor.u32 %v7290, %v7293
      %v7295 = vrot.slane %v7294, 4
      %v7297 = vshll.u32 %v6982, 16
      %v7299 = vrot.slane %v7297, 5
      %v7300 = vsel %vm1276, %v7295, %v7299
      %v7301 = vshrl.u32 %v6982, 16
      %v7303 = vrot.slane %v7301, 4
      %v7304 = vor.u32 %v7303, %v7299
      %v7305 = vrot.slane %v7304, 4
      %v7307 = vshll.u32 %v7018, 16
      %v7309 = vrot.slane %v7307, 5
      %v7310 = vsel %vm1276, %v7305, %v7309
      %v7312 = vshrl.u32 %v6983, 16
      %v7314 = vrot.slane %v7312, 4
      %v7315 = vshll.u32 %v6983, 16
      %v7317 = vrot.slane %v7315, 5
      %v7318 = vor.u32 %v7314, %v7317
      %v7319 = vrot.slane %v7318, 4
      %v7321 = vshll.u32 %v6984, 16
      %v7323 = vrot.slane %v7321, 5
      %v7324 = vsel %vm1276, %v7319, %v7323
      %v7325 = vshrl.u32 %v6984, 16
      %v7327 = vrot.slane %v7325, 4
      %v7328 = vor.u32 %v7327, %v7323
      %v7329 = vrot.slane %v7328, 4
      %v7331 = vshll.u32 %v7019, 16
      %v7333 = vrot.slane %v7331, 5
      %v7334 = vsel %vm1276, %v7329, %v7333
      %v7336 = vshrl.u32 %v6985, 16
      %v7338 = vrot.slane %v7336, 4
      %v7339 = vshll.u32 %v6985, 16
      %v7341 = vrot.slane %v7339, 5
      %v7342 = vor.u32 %v7338, %v7341
      %v7343 = vrot.slane %v7342, 4
      %v7345 = vshll.u32 %v6986, 16
      %v7347 = vrot.slane %v7345, 5
      %v7348 = vsel %vm1276, %v7343, %v7347
      %v7349 = vshrl.u32 %v6986, 16
      %v7351 = vrot.slane %v7349, 4
      %v7352 = vor.u32 %v7351, %v7347
      %v7353 = vrot.slane %v7352, 4
      %v7355 = vshll.u32 %v7020, 16
      %v7357 = vrot.slane %v7355, 5
      %v7358 = vsel %vm1276, %v7353, %v7357
      %v7360 = vshrl.u32 %v6987, 16
      %v7362 = vrot.slane %v7360, 4
      %v7363 = vshll.u32 %v6987, 16
      %v7365 = vrot.slane %v7363, 5
      %v7366 = vor.u32 %v7362, %v7365
      %v7367 = vrot.slane %v7366, 4
      %v7369 = vshll.u32 %v6988, 16
      %v7371 = vrot.slane %v7369, 5
      %v7372 = vsel %vm1276, %v7367, %v7371
      %v7373 = vshrl.u32 %v6988, 16
      %v7375 = vrot.slane %v7373, 4
      %v7376 = vor.u32 %v7375, %v7371
      %v7377 = vrot.slane %v7376, 4
      %v7379 = vshll.u32 %v7021, 16
      %v7381 = vrot.slane %v7379, 5
      %v7382 = vsel %vm1276, %v7377, %v7381
      %v7384 = vshrl.u32 %v6989, 16
      %v7386 = vrot.slane %v7384, 4
      %v7387 = vshll.u32 %v6989, 16
      %v7389 = vrot.slane %v7387, 5
      %v7390 = vor.u32 %v7386, %v7389
      %v7391 = vrot.slane %v7390, 4
      %v7393 = vshll.u32 %v6990, 16
      %v7395 = vrot.slane %v7393, 5
      %v7396 = vsel %vm1276, %v7391, %v7395
      %v7397 = vshrl.u32 %v6990, 16
      %v7399 = vrot.slane %v7397, 4
      %v7400 = vor.u32 %v7399, %v7395
      %v7401 = vrot.slane %v7400, 4
      %v7403 = vshll.u32 %v7022, 16
      %v7405 = vrot.slane %v7403, 5
      %v7406 = vsel %vm1276, %v7401, %v7405
      %s7407 = scalar_lea.vmem %s4, 64
      %v7408 = vld [vmem:[%s7407] sm:$0xf]
      %v7409 = vld [vmem:[%s7407 + $0x4] sm:$0xf]
      %v7410 = vld [vmem:[%s7407 + $0x8] sm:$0xf]
      %v7411 = vld [vmem:[%s7407 + $0xc] sm:$0xf]
      %v7412 = vld [vmem:[%s7407 + $0x10] sm:$0xf]
      %v7413 = vld [vmem:[%s7407 + $0x14] sm:$0xf]
      %v7414 = vld [vmem:[%s7407 + $0x18] sm:$0xf]
      %v7415 = vld [vmem:[%s7407 + $0x1c] sm:$0xf]
      %v7416 = vld [vmem:[%s7407 + $0x20] sm:$0xf]
      %v7417 = vld [vmem:[%s7407 + $0x24] sm:$0xf]
      %v7418 = vld [vmem:[%s7407 + $0x28] sm:$0xf]
      %v7419 = vld [vmem:[%s7407 + $0x2c] sm:$0xf]
      %v7420 = vld [vmem:[%s7407 + $0x30] sm:$0xf]
      %v7421 = vld [vmem:[%s7407 + $0x34] sm:$0xf]
      %v7422 = vld [vmem:[%s7407 + $0x38] sm:$0xf]
      %v7423 = vld [vmem:[%s7407 + $0x3c] sm:$0xf]
      %v7424 = vunpack.c.l.b16 %v7036
      %v7425 = vunpack.c.l.b16 %v7046
      %v7426 = vunpack.c.l.b16 %v7060
      %v7427 = vunpack.c.l.b16 %v7070
      %v7428 = vunpack.c.l.b16 %v7084
      %v7429 = vunpack.c.l.b16 %v7094
      %v7430 = vunpack.c.l.b16 %v7108
      %v7431 = vunpack.c.l.b16 %v7118
      %v7432 = vunpack.c.l.b16 %v7132
      %v7433 = vunpack.c.l.b16 %v7142
      %v7434 = vunpack.c.l.b16 %v7156
      %v7435 = vunpack.c.l.b16 %v7166
      %v7436 = vunpack.c.l.b16 %v7180
      %v7437 = vunpack.c.l.b16 %v7190
      %v7438 = vunpack.c.l.b16 %v7204
      %v7439 = vunpack.c.l.b16 %v7214
      %v7440 = vunpack.c.l.b16 %v7228
      %v7441 = vunpack.c.l.b16 %v7238
      %v7442 = vunpack.c.l.b16 %v7252
      %v7443 = vunpack.c.l.b16 %v7262
      %v7444 = vunpack.c.l.b16 %v7276
      %v7445 = vunpack.c.l.b16 %v7286
      %v7446 = vunpack.c.l.b16 %v7300
      %v7447 = vunpack.c.l.b16 %v7310
      %v7448 = vunpack.c.l.b16 %v7324
      %v7449 = vunpack.c.l.b16 %v7334
      %v7450 = vunpack.c.l.b16 %v7348
      %v7451 = vunpack.c.l.b16 %v7358
      %v7452 = vunpack.c.l.b16 %v7372
      %v7453 = vunpack.c.l.b16 %v7382
      %v7454 = vunpack.c.l.b16 %v7396
      %v7455 = vunpack.c.l.b16 %v7406
      %v7456 = vpack.c.b16 %v7425, %v7424
      %v7457 = vpack.c.b16 %v7427, %v7426
      %v7458 = vpack.c.b16 %v7429, %v7428
      %v7459 = vpack.c.b16 %v7431, %v7430
      %v7460 = vpack.c.b16 %v7433, %v7432
      %v7461 = vpack.c.b16 %v7435, %v7434
      %v7462 = vpack.c.b16 %v7437, %v7436
      %v7463 = vpack.c.b16 %v7439, %v7438
      %v7464 = vpack.c.b16 %v7441, %v7440
      %v7465 = vpack.c.b16 %v7443, %v7442
      %v7466 = vpack.c.b16 %v7445, %v7444
      %v7467 = vpack.c.b16 %v7447, %v7446
      %v7468 = vpack.c.b16 %v7449, %v7448
      %v7469 = vpack.c.b16 %v7451, %v7450
      %v7470 = vpack.c.b16 %v7453, %v7452
      %v7471 = vpack.c.b16 %v7455, %v7454
      %v7504 = vunpack.c.l.b16 %v7408
      %v7505 = vunpack.c.l.b16 %v7409
      %v7506 = vunpack.c.l.b16 %v7410
      %v7507 = vunpack.c.l.b16 %v7411
      %v7508 = vunpack.c.l.b16 %v7412
      %v7509 = vunpack.c.l.b16 %v7413
      %v7510 = vunpack.c.l.b16 %v7414
      %v7511 = vunpack.c.l.b16 %v7415
      %v7512 = vunpack.c.l.b16 %v7416
      %v7513 = vunpack.c.l.b16 %v7417
      %v7514 = vunpack.c.l.b16 %v7418
      %v7515 = vunpack.c.l.b16 %v7419
      %v7516 = vunpack.c.l.b16 %v7420
      %v7517 = vunpack.c.l.b16 %v7421
      %v7518 = vunpack.c.l.b16 %v7422
      %v7519 = vunpack.c.l.b16 %v7423
      %v7520 = vpack.c.b16 %v7505, %v7504
      %v7521 = vpack.c.b16 %v7507, %v7506
      %v7522 = vpack.c.b16 %v7509, %v7508
      %v7523 = vpack.c.b16 %v7511, %v7510
      %v7524 = vpack.c.b16 %v7513, %v7512
      %v7525 = vpack.c.b16 %v7515, %v7514
      %v7526 = vpack.c.b16 %v7517, %v7516
      %v7527 = vpack.c.b16 %v7519, %v7518
      %7536 = vmatprep.subr.bf16.mxu0 0
      %7537 = vmatpush1.bf16.msra.mxu0 %v7527
      %7538 = vmatprep.subr.bf16.mxu0 0
      %7539 = vmatpush1.bf16.msra.mxu0 %v7526
      %7540 = vmatprep.subr.bf16.mxu0 0
      %7541 = vmatpush1.bf16.msra.mxu0 %v7525
      %7542 = vmatprep.subr.bf16.mxu0 0
      %7543 = vmatpush1.bf16.msra.mxu0 %v7524
      %7544 = vmatprep.subr.bf16.mxu0 0
      %7545 = vmatpush1.bf16.msra.mxu0 %v7523
      %7546 = vmatprep.subr.bf16.mxu0 0
      %7547 = vmatpush1.bf16.msra.mxu0 %v7522
      %7548 = vmatprep.subr.bf16.mxu0 0
      %7549 = vmatpush1.bf16.msra.mxu0 %v7521
      %7550 = vmatprep.subr.bf16.mxu0 0
      %7551 = vmatpush1.bf16.msra.mxu0 %v7520
      %7552 = vmatprep.subr.bf16.mxu0 0
      %7553 = vmatpush2.bf16.msra.mxu0 0
      %7554 = vmatprep.subr.bf16.mxu0 0
      %7555 = vmatpush2.bf16.msra.mxu0 0
      %7556 = vmatprep.subr.bf16.mxu0 0
      %7557 = vmatpush2.bf16.msra.mxu0 0
      %7558 = vmatprep.subr.bf16.mxu0 0
      %7559 = vmatpush2.bf16.msra.mxu0 0
      %7560 = vmatprep.subr.bf16.mxu0 0
      %7561 = vmatpush2.bf16.msra.mxu0 0
      %7562 = vmatprep.subr.bf16.mxu0 0
      %7563 = vmatpush2.bf16.msra.mxu0 0
      %7564 = vmatprep.subr.bf16.mxu0 0
      %7565 = vmatpush2.bf16.msra.mxu0 0
      %7566 = vmatprep.subr.bf16.mxu0 0
      %7567 = vmatpush2.bf16.msra.mxu0 0
      %7568 = vmatprep.mubr.bf16.mxu0 0
      %7569 = vmatmul.mubr.bf16.gmra.mxu0 %v7456
      %v7570 = vpop.f32.mrf.mxu0
      %v7571 = vadd.f32 0.0, %v7570
      %v7572 = vpop.f32.mrf.mxu0
      %v7573 = vpop.f32.mrf.mxu0
      %v7574 = vadd.f32 0.0, %v7573
      %v7575 = vpop.f32.mrf.mxu0
      %7576 = vmatprep.mubr.bf16.mxu0 0
      %7577 = vmatmul.mubr.bf16.gmra.mxu0 %v7457
      %v7578 = vpop.f32.mrf.mxu0
      %v7579 = vadd.f32 0.0, %v7578
      %v7580 = vpop.f32.mrf.mxu0
      %v7581 = vpop.f32.mrf.mxu0
      %v7582 = vadd.f32 0.0, %v7581
      %v7583 = vpop.f32.mrf.mxu0
      %7584 = vmatprep.mubr.bf16.mxu0 0
      %7585 = vmatmul.mubr.bf16.gmra.mxu0 %v7458
      %v7586 = vpop.f32.mrf.mxu0
      %v7587 = vadd.f32 0.0, %v7586
      %v7588 = vpop.f32.mrf.mxu0
      %v7589 = vpop.f32.mrf.mxu0
      %v7590 = vadd.f32 0.0, %v7589
      %v7591 = vpop.f32.mrf.mxu0
      %7592 = vmatprep.mubr.bf16.mxu0 0
      %7593 = vmatmul.mubr.bf16.gmra.mxu0 %v7459
      %v7594 = vpop.f32.mrf.mxu0
      %v7595 = vadd.f32 0.0, %v7594
      %v7596 = vpop.f32.mrf.mxu0
      %v7597 = vpop.f32.mrf.mxu0
      %v7598 = vadd.f32 0.0, %v7597
      %v7599 = vpop.f32.mrf.mxu0
      %7600 = vmatprep.mubr.bf16.mxu0 0
      %7601 = vmatmul.mubr.bf16.gmra.mxu0 %v7460
      %v7602 = vpop.f32.mrf.mxu0
      %v7603 = vadd.f32 0.0, %v7602
      %v7604 = vpop.f32.mrf.mxu0
      %v7605 = vpop.f32.mrf.mxu0
      %v7606 = vadd.f32 0.0, %v7605
      %v7607 = vpop.f32.mrf.mxu0
      %7608 = vmatprep.mubr.bf16.mxu0 0
      %7609 = vmatmul.mubr.bf16.gmra.mxu0 %v7461
      %v7610 = vpop.f32.mrf.mxu0
      %v7611 = vadd.f32 0.0, %v7610
      %v7612 = vpop.f32.mrf.mxu0
      %v7613 = vpop.f32.mrf.mxu0
      %v7614 = vadd.f32 0.0, %v7613
      %v7615 = vpop.f32.mrf.mxu0
      %7616 = vmatprep.mubr.bf16.mxu0 0
      %7617 = vmatmul.mubr.bf16.gmra.mxu0 %v7462
      %v7618 = vpop.f32.mrf.mxu0
      %v7619 = vadd.f32 0.0, %v7618
      %v7620 = vpop.f32.mrf.mxu0
      %v7621 = vpop.f32.mrf.mxu0
      %v7622 = vadd.f32 0.0, %v7621
      %v7623 = vpop.f32.mrf.mxu0
      %7624 = vmatprep.mubr.bf16.mxu0 0
      %7625 = vmatmul.mubr.bf16.gmra.mxu0 %v7463
      %v7626 = vpop.f32.mrf.mxu0
      %v7627 = vadd.f32 0.0, %v7626
      %v7628 = vpop.f32.mrf.mxu0
      %v7629 = vpop.f32.mrf.mxu0
      %v7630 = vadd.f32 0.0, %v7629
      %v7631 = vpop.f32.mrf.mxu0
      %7632 = vmatprep.mubr.bf16.mxu0 0
      %7633 = vmatmul.mubr.bf16.gmra.mxu0 %v7464
      %v7634 = vpop.f32.mrf.mxu0
      %v7635 = vadd.f32 0.0, %v7634
      %v7636 = vpop.f32.mrf.mxu0
      %v7637 = vpop.f32.mrf.mxu0
      %v7638 = vadd.f32 0.0, %v7637
      %v7639 = vpop.f32.mrf.mxu0
      %7640 = vmatprep.mubr.bf16.mxu0 0
      %7641 = vmatmul.mubr.bf16.gmra.mxu0 %v7465
      %v7642 = vpop.f32.mrf.mxu0
      %v7643 = vadd.f32 0.0, %v7642
      %v7644 = vpop.f32.mrf.mxu0
      %v7645 = vpop.f32.mrf.mxu0
      %v7646 = vadd.f32 0.0, %v7645
      %v7647 = vpop.f32.mrf.mxu0
      %7648 = vmatprep.mubr.bf16.mxu0 0
      %7649 = vmatmul.mubr.bf16.gmra.mxu0 %v7466
      %v7650 = vpop.f32.mrf.mxu0
      %v7651 = vadd.f32 0.0, %v7650
      %v7652 = vpop.f32.mrf.mxu0
      %v7653 = vpop.f32.mrf.mxu0
      %v7654 = vadd.f32 0.0, %v7653
      %v7655 = vpop.f32.mrf.mxu0
      %7656 = vmatprep.mubr.bf16.mxu0 0
      %7657 = vmatmul.mubr.bf16.gmra.mxu0 %v7467
      %v7658 = vpop.f32.mrf.mxu0
      %v7659 = vadd.f32 0.0, %v7658
      %v7660 = vpop.f32.mrf.mxu0
      %v7661 = vpop.f32.mrf.mxu0
      %v7662 = vadd.f32 0.0, %v7661
      %v7663 = vpop.f32.mrf.mxu0
      %7664 = vmatprep.mubr.bf16.mxu0 0
      %7665 = vmatmul.mubr.bf16.gmra.mxu0 %v7468
      %v7666 = vpop.f32.mrf.mxu0
      %v7667 = vadd.f32 0.0, %v7666
      %v7668 = vpop.f32.mrf.mxu0
      %v7669 = vpop.f32.mrf.mxu0
      %v7670 = vadd.f32 0.0, %v7669
      %v7671 = vpop.f32.mrf.mxu0
      %7672 = vmatprep.mubr.bf16.mxu0 0
      %7673 = vmatmul.mubr.bf16.gmra.mxu0 %v7469
      %v7674 = vpop.f32.mrf.mxu0
      %v7675 = vadd.f32 0.0, %v7674
      %v7676 = vpop.f32.mrf.mxu0
      %v7677 = vpop.f32.mrf.mxu0
      %v7678 = vadd.f32 0.0, %v7677
      %v7679 = vpop.f32.mrf.mxu0
      %7680 = vmatprep.mubr.bf16.mxu0 0
      %7681 = vmatmul.mubr.bf16.gmra.mxu0 %v7470
      %v7682 = vpop.f32.mrf.mxu0
      %v7683 = vadd.f32 0.0, %v7682
      %v7684 = vpop.f32.mrf.mxu0
      %v7685 = vpop.f32.mrf.mxu0
      %v7686 = vadd.f32 0.0, %v7685
      %v7687 = vpop.f32.mrf.mxu0
      %7688 = vmatprep.mubr.bf16.mxu0 0
      %7689 = vmatmul.mubr.bf16.gmra.mxu0 %v7471
      %v7690 = vpop.f32.mrf.mxu0
      %v7691 = vadd.f32 0.0, %v7690
      %v7692 = vpop.f32.mrf.mxu0
      %v7693 = vpop.f32.mrf.mxu0
      %v7694 = vadd.f32 0.0, %v7693
      %v7695 = vpop.f32.mrf.mxu0
      %7696 = vdwg.mxu0
      %v7729 = vunpack.c.l.b16 %v6959
      %v7730 = vunpack.c.l.b16 %v6960
      %v7731 = vunpack.c.l.b16 %v6961
      %v7732 = vunpack.c.l.b16 %v6962
      %v7733 = vunpack.c.l.b16 %v6963
      %v7734 = vunpack.c.l.b16 %v6964
      %v7735 = vunpack.c.l.b16 %v6965
      %v7736 = vunpack.c.l.b16 %v6966
      %v7737 = vunpack.c.l.b16 %v6967
      %v7738 = vunpack.c.l.b16 %v6968
      %v7739 = vunpack.c.l.b16 %v6969
      %v7740 = vunpack.c.l.b16 %v6970
      %v7741 = vunpack.c.l.b16 %v6971
      %v7742 = vunpack.c.l.b16 %v6972
      %v7743 = vunpack.c.l.b16 %v6973
      %v7744 = vunpack.c.l.b16 %v6974
      %v7745 = vunpack.c.l.b16 %v6975
      %v7746 = vunpack.c.l.b16 %v6976
      %v7747 = vunpack.c.l.b16 %v6977
      %v7748 = vunpack.c.l.b16 %v6978
      %v7749 = vunpack.c.l.b16 %v6979
      %v7750 = vunpack.c.l.b16 %v6980
      %v7751 = vunpack.c.l.b16 %v6981
      %v7752 = vunpack.c.l.b16 %v6982
      %v7753 = vunpack.c.l.b16 %v6983
      %v7754 = vunpack.c.l.b16 %v6984
      %v7755 = vunpack.c.l.b16 %v6985
      %v7756 = vunpack.c.l.b16 %v6986
      %v7757 = vunpack.c.l.b16 %v6987
      %v7758 = vunpack.c.l.b16 %v6988
      %v7759 = vunpack.c.l.b16 %v6989
      %v7760 = vunpack.c.l.b16 %v6990
      %v7761 = vpack.c.b16 %v7730, %v7729
      %v7762 = vpack.c.b16 %v7732, %v7731
      %v7763 = vpack.c.b16 %v7734, %v7733
      %v7764 = vpack.c.b16 %v7736, %v7735
      %v7765 = vpack.c.b16 %v7738, %v7737
      %v7766 = vpack.c.b16 %v7740, %v7739
      %v7767 = vpack.c.b16 %v7742, %v7741
      %v7768 = vpack.c.b16 %v7744, %v7743
      %v7769 = vpack.c.b16 %v7746, %v7745
      %v7770 = vpack.c.b16 %v7748, %v7747
      %v7771 = vpack.c.b16 %v7750, %v7749
      %v7772 = vpack.c.b16 %v7752, %v7751
      %v7773 = vpack.c.b16 %v7754, %v7753
      %v7774 = vpack.c.b16 %v7756, %v7755
      %v7775 = vpack.c.b16 %v7758, %v7757
      %v7776 = vpack.c.b16 %v7760, %v7759
      %v7809 = vunpack.c.l.b16 %v6991
      %v7810 = vunpack.c.l.b16 %v6992
      %v7811 = vunpack.c.l.b16 %v6993
      %v7812 = vunpack.c.l.b16 %v6994
      %v7813 = vunpack.c.l.b16 %v6995
      %v7814 = vunpack.c.l.b16 %v6996
      %v7815 = vunpack.c.l.b16 %v6997
      %v7816 = vunpack.c.l.b16 %v6998
      %v7817 = vunpack.c.l.b16 %v6999
      %v7818 = vunpack.c.l.b16 %v7000
      %v7819 = vunpack.c.l.b16 %v7001
      %v7820 = vunpack.c.l.b16 %v7002
      %v7821 = vunpack.c.l.b16 %v7003
      %v7822 = vunpack.c.l.b16 %v7004
      %v7823 = vunpack.c.l.b16 %v7005
      %v7824 = vunpack.c.l.b16 %v7006
      %v7825 = vpack.c.b16 %v7810, %v7809
      %v7826 = vpack.c.b16 %v7812, %v7811
      %v7827 = vpack.c.b16 %v7814, %v7813
      %v7828 = vpack.c.b16 %v7816, %v7815
      %v7829 = vpack.c.b16 %v7818, %v7817
      %v7830 = vpack.c.b16 %v7820, %v7819
      %v7831 = vpack.c.b16 %v7822, %v7821
      %v7832 = vpack.c.b16 %v7824, %v7823
      %7841 = vmatprep.subr.bf16.mxu0 0
      %7842 = vmatpush1.bf16.msra.mxu0 %v7832
      %7843 = vmatprep.subr.bf16.mxu0 0
      %7844 = vmatpush1.bf16.msra.mxu0 %v7831
      %7845 = vmatprep.subr.bf16.mxu0 0
      %7846 = vmatpush1.bf16.msra.mxu0 %v7830
      %7847 = vmatprep.subr.bf16.mxu0 0
      %7848 = vmatpush1.bf16.msra.mxu0 %v7829
      %7849 = vmatprep.subr.bf16.mxu0 0
      %7850 = vmatpush1.bf16.msra.mxu0 %v7828
      %7851 = vmatprep.subr.bf16.mxu0 0
      %7852 = vmatpush1.bf16.msra.mxu0 %v7827
      %7853 = vmatprep.subr.bf16.mxu0 0
      %7854 = vmatpush1.bf16.msra.mxu0 %v7826
      %7855 = vmatprep.subr.bf16.mxu0 0
      %7856 = vmatpush1.bf16.msra.mxu0 %v7825
      %7857 = vmatprep.subr.bf16.mxu0 0
      %7858 = vmatpush2.bf16.msra.mxu0 0
      %7859 = vmatprep.subr.bf16.mxu0 0
      %7860 = vmatpush2.bf16.msra.mxu0 0
      %7861 = vmatprep.subr.bf16.mxu0 0
      %7862 = vmatpush2.bf16.msra.mxu0 0
      %7863 = vmatprep.subr.bf16.mxu0 0
      %7864 = vmatpush2.bf16.msra.mxu0 0
      %7865 = vmatprep.subr.bf16.mxu0 0
      %7866 = vmatpush2.bf16.msra.mxu0 0
      %7867 = vmatprep.subr.bf16.mxu0 0
      %7868 = vmatpush2.bf16.msra.mxu0 0
      %7869 = vmatprep.subr.bf16.mxu0 0
      %7870 = vmatpush2.bf16.msra.mxu0 0
      %7871 = vmatprep.subr.bf16.mxu0 0
      %7872 = vmatpush2.bf16.msra.mxu0 0
      %7873 = vmatprep.mubr.bf16.mxu0 0
      %7874 = vmatmul.mubr.bf16.gmra.mxu0 %v7761
      %v7875 = vpop.f32.mrf.mxu0
      %v7876 = vadd.f32 %v7571, %v7875
      %v7877 = vpop.f32.mrf.mxu0
      %v7878 = vpop.f32.mrf.mxu0
      %v7879 = vadd.f32 %v7574, %v7878
      %v7880 = vpop.f32.mrf.mxu0
      %7881 = vmatprep.mubr.bf16.mxu0 0
      %7882 = vmatmul.mubr.bf16.gmra.mxu0 %v7762
      %v7883 = vpop.f32.mrf.mxu0
      %v7884 = vadd.f32 %v7579, %v7883
      %v7885 = vpop.f32.mrf.mxu0
      %v7886 = vpop.f32.mrf.mxu0
      %v7887 = vadd.f32 %v7582, %v7886
      %v7888 = vpop.f32.mrf.mxu0
      %7889 = vmatprep.mubr.bf16.mxu0 0
      %7890 = vmatmul.mubr.bf16.gmra.mxu0 %v7763
      %v7891 = vpop.f32.mrf.mxu0
      %v7892 = vadd.f32 %v7587, %v7891
      %v7893 = vpop.f32.mrf.mxu0
      %v7894 = vpop.f32.mrf.mxu0
      %v7895 = vadd.f32 %v7590, %v7894
      %v7896 = vpop.f32.mrf.mxu0
      %7897 = vmatprep.mubr.bf16.mxu0 0
      %7898 = vmatmul.mubr.bf16.gmra.mxu0 %v7764
      %v7899 = vpop.f32.mrf.mxu0
      %v7900 = vadd.f32 %v7595, %v7899
      %v7901 = vpop.f32.mrf.mxu0
      %v7902 = vpop.f32.mrf.mxu0
      %v7903 = vadd.f32 %v7598, %v7902
      %v7904 = vpop.f32.mrf.mxu0
      %7905 = vmatprep.mubr.bf16.mxu0 0
      %7906 = vmatmul.mubr.bf16.gmra.mxu0 %v7765
      %v7907 = vpop.f32.mrf.mxu0
      %v7908 = vadd.f32 %v7603, %v7907
      %v7909 = vpop.f32.mrf.mxu0
      %v7910 = vpop.f32.mrf.mxu0
      %v7911 = vadd.f32 %v7606, %v7910
      %v7912 = vpop.f32.mrf.mxu0
      %7913 = vmatprep.mubr.bf16.mxu0 0
      %7914 = vmatmul.mubr.bf16.gmra.mxu0 %v7766
      %v7915 = vpop.f32.mrf.mxu0
      %v7916 = vadd.f32 %v7611, %v7915
      %v7917 = vpop.f32.mrf.mxu0
      %v7918 = vpop.f32.mrf.mxu0
      %v7919 = vadd.f32 %v7614, %v7918
      %v7920 = vpop.f32.mrf.mxu0
      %7921 = vmatprep.mubr.bf16.mxu0 0
      %7922 = vmatmul.mubr.bf16.gmra.mxu0 %v7767
      %v7923 = vpop.f32.mrf.mxu0
      %v7924 = vadd.f32 %v7619, %v7923
      %v7925 = vpop.f32.mrf.mxu0
      %v7926 = vpop.f32.mrf.mxu0
      %v7927 = vadd.f32 %v7622, %v7926
      %v7928 = vpop.f32.mrf.mxu0
      %7929 = vmatprep.mubr.bf16.mxu0 0
      %7930 = vmatmul.mubr.bf16.gmra.mxu0 %v7768
      %v7931 = vpop.f32.mrf.mxu0
      %v7932 = vadd.f32 %v7627, %v7931
      %v7933 = vpop.f32.mrf.mxu0
      %v7934 = vpop.f32.mrf.mxu0
      %v7935 = vadd.f32 %v7630, %v7934
      %v7936 = vpop.f32.mrf.mxu0
      %7937 = vmatprep.mubr.bf16.mxu0 0
      %7938 = vmatmul.mubr.bf16.gmra.mxu0 %v7769
      %v7939 = vpop.f32.mrf.mxu0
      %v7940 = vadd.f32 %v7635, %v7939
      %v7941 = vpop.f32.mrf.mxu0
      %v7942 = vpop.f32.mrf.mxu0
      %v7943 = vadd.f32 %v7638, %v7942
      %v7944 = vpop.f32.mrf.mxu0
      %7945 = vmatprep.mubr.bf16.mxu0 0
      %7946 = vmatmul.mubr.bf16.gmra.mxu0 %v7770
      %v7947 = vpop.f32.mrf.mxu0
      %v7948 = vadd.f32 %v7643, %v7947
      %v7949 = vpop.f32.mrf.mxu0
      %v7950 = vpop.f32.mrf.mxu0
      %v7951 = vadd.f32 %v7646, %v7950
      %v7952 = vpop.f32.mrf.mxu0
      %7953 = vmatprep.mubr.bf16.mxu0 0
      %7954 = vmatmul.mubr.bf16.gmra.mxu0 %v7771
      %v7955 = vpop.f32.mrf.mxu0
      %v7956 = vadd.f32 %v7651, %v7955
      %v7957 = vpop.f32.mrf.mxu0
      %v7958 = vpop.f32.mrf.mxu0
      %v7959 = vadd.f32 %v7654, %v7958
      %v7960 = vpop.f32.mrf.mxu0
      %7961 = vmatprep.mubr.bf16.mxu0 0
      %7962 = vmatmul.mubr.bf16.gmra.mxu0 %v7772
      %v7963 = vpop.f32.mrf.mxu0
      %v7964 = vadd.f32 %v7659, %v7963
      %v7965 = vpop.f32.mrf.mxu0
      %v7966 = vpop.f32.mrf.mxu0
      %v7967 = vadd.f32 %v7662, %v7966
      %v7968 = vpop.f32.mrf.mxu0
      %7969 = vmatprep.mubr.bf16.mxu0 0
      %7970 = vmatmul.mubr.bf16.gmra.mxu0 %v7773
      %v7971 = vpop.f32.mrf.mxu0
      %v7972 = vadd.f32 %v7667, %v7971
      %v7973 = vpop.f32.mrf.mxu0
      %v7974 = vpop.f32.mrf.mxu0
      %v7975 = vadd.f32 %v7670, %v7974
      %v7976 = vpop.f32.mrf.mxu0
      %7977 = vmatprep.mubr.bf16.mxu0 0
      %7978 = vmatmul.mubr.bf16.gmra.mxu0 %v7774
      %v7979 = vpop.f32.mrf.mxu0
      %v7980 = vadd.f32 %v7675, %v7979
      %v7981 = vpop.f32.mrf.mxu0
      %v7982 = vpop.f32.mrf.mxu0
      %v7983 = vadd.f32 %v7678, %v7982
      %v7984 = vpop.f32.mrf.mxu0
      %7985 = vmatprep.mubr.bf16.mxu0 0
      %7986 = vmatmul.mubr.bf16.gmra.mxu0 %v7775
      %v7987 = vpop.f32.mrf.mxu0
      %v7988 = vadd.f32 %v7683, %v7987
      %v7989 = vpop.f32.mrf.mxu0
      %v7990 = vpop.f32.mrf.mxu0
      %v7991 = vadd.f32 %v7686, %v7990
      %v7992 = vpop.f32.mrf.mxu0
      %7993 = vmatprep.mubr.bf16.mxu0 0
      %7994 = vmatmul.mubr.bf16.gmra.mxu0 %v7776
      %v7995 = vpop.f32.mrf.mxu0
      %v7996 = vadd.f32 %v7691, %v7995
      %v7997 = vpop.f32.mrf.mxu0
      %v7998 = vpop.f32.mrf.mxu0
      %v7999 = vadd.f32 %v7694, %v7998
      %v8000 = vpop.f32.mrf.mxu0
      %8001 = vdwg.mxu0
      %v8002 = vld [vmem:[#allocation2] sm:$0xe]
      %v8003 = vld [vmem:[#allocation2 + $0xc] sm:$0xe]
      %v8004 = vld [vmem:[#allocation2 + $0x18] sm:$0xe]
      %v8005 = vld [vmem:[#allocation2 + $0x24] sm:$0xe]
      %v8006 = vld [vmem:[#allocation2 + $0x30] sm:$0xe]
      %v8007 = vld [vmem:[#allocation2 + $0x3c] sm:$0xe]
      %v8008 = vld [vmem:[#allocation2 + $0x48] sm:$0xe]
      %v8009 = vld [vmem:[#allocation2 + $0x54] sm:$0xe]
      %v8010 = vld [vmem:[#allocation2 + $0x60] sm:$0xe]
      %v8011 = vld [vmem:[#allocation2 + $0x6c] sm:$0xe]
      %v8012 = vld [vmem:[#allocation2 + $0x78] sm:$0xe]
      %v8013 = vld [vmem:[#allocation2 + $0x84] sm:$0xe]
      %v8014 = vld [vmem:[#allocation2 + $0x90] sm:$0xe]
      %v8015 = vld [vmem:[#allocation2 + $0x9c] sm:$0xe]
      %v8016 = vld [vmem:[#allocation2 + $0xa8] sm:$0xe]
      %v8017 = vld [vmem:[#allocation2 + $0xb4] sm:$0xe]
      %v8050 = vrot.slane %v8002, 5
      %v8051 = vrot.slane %v8050, 4
      %v8052 = vrot.slane %v6960, 5
      %v8053 = vsel %vm2306, %v8051, %v8052
      %v8054 = vrot.slane %v8052, 4
      %v8055 = vrot.slane %v7007, 5
      %v8056 = vsel %vm2306, %v8054, %v8055
      %v8057 = vrot.slane %v8003, 5
      %v8058 = vrot.slane %v8057, 4
      %v8059 = vrot.slane %v6962, 5
      %v8060 = vsel %vm2306, %v8058, %v8059
      %v8061 = vrot.slane %v8059, 4
      %v8062 = vrot.slane %v7008, 5
      %v8063 = vsel %vm2306, %v8061, %v8062
      %v8064 = vrot.slane %v8004, 5
      %v8065 = vrot.slane %v8064, 4
      %v8066 = vrot.slane %v6964, 5
      %v8067 = vsel %vm2306, %v8065, %v8066
      %v8068 = vrot.slane %v8066, 4
      %v8069 = vrot.slane %v7009, 5
      %v8070 = vsel %vm2306, %v8068, %v8069
      %v8071 = vrot.slane %v8005, 5
      %v8072 = vrot.slane %v8071, 4
      %v8073 = vrot.slane %v6966, 5
      %v8074 = vsel %vm2306, %v8072, %v8073
      %v8075 = vrot.slane %v8073, 4
      %v8076 = vrot.slane %v7010, 5
      %v8077 = vsel %vm2306, %v8075, %v8076
      %v8078 = vrot.slane %v8006, 5
      %v8079 = vrot.slane %v8078, 4
      %v8080 = vrot.slane %v6968, 5
      %v8081 = vsel %vm2306, %v8079, %v8080
      %v8082 = vrot.slane %v8080, 4
      %v8083 = vrot.slane %v7011, 5
      %v8084 = vsel %vm2306, %v8082, %v8083
      %v8085 = vrot.slane %v8007, 5
      %v8086 = vrot.slane %v8085, 4
      %v8087 = vrot.slane %v6970, 5
      %v8088 = vsel %vm2306, %v8086, %v8087
      %v8089 = vrot.slane %v8087, 4
      %v8090 = vrot.slane %v7012, 5
      %v8091 = vsel %vm2306, %v8089, %v8090
      %v8092 = vrot.slane %v8008, 5
      %v8093 = vrot.slane %v8092, 4
      %v8094 = vrot.slane %v6972, 5
      %v8095 = vsel %vm2306, %v8093, %v8094
      %v8096 = vrot.slane %v8094, 4
      %v8097 = vrot.slane %v7013, 5
      %v8098 = vsel %vm2306, %v8096, %v8097
      %v8099 = vrot.slane %v8009, 5
      %v8100 = vrot.slane %v8099, 4
      %v8101 = vrot.slane %v6974, 5
      %v8102 = vsel %vm2306, %v8100, %v8101
      %v8103 = vrot.slane %v8101, 4
      %v8104 = vrot.slane %v7014, 5
      %v8105 = vsel %vm2306, %v8103, %v8104
      %v8106 = vrot.slane %v8010, 5
      %v8107 = vrot.slane %v8106, 4
      %v8108 = vrot.slane %v6976, 5
      %v8109 = vsel %vm2306, %v8107, %v8108
      %v8110 = vrot.slane %v8108, 4
      %v8111 = vrot.slane %v7015, 5
      %v8112 = vsel %vm2306, %v8110, %v8111
      %v8113 = vrot.slane %v8011, 5
      %v8114 = vrot.slane %v8113, 4
      %v8115 = vrot.slane %v6978, 5
      %v8116 = vsel %vm2306, %v8114, %v8115
      %v8117 = vrot.slane %v8115, 4
      %v8118 = vrot.slane %v7016, 5
      %v8119 = vsel %vm2306, %v8117, %v8118
      %v8120 = vrot.slane %v8012, 5
      %v8121 = vrot.slane %v8120, 4
      %v8122 = vrot.slane %v6980, 5
      %v8123 = vsel %vm2306, %v8121, %v8122
      %v8124 = vrot.slane %v8122, 4
      %v8125 = vrot.slane %v7017, 5
      %v8126 = vsel %vm2306, %v8124, %v8125
      %v8127 = vrot.slane %v8013, 5
      %v8128 = vrot.slane %v8127, 4
      %v8129 = vrot.slane %v6982, 5
      %v8130 = vsel %vm2306, %v8128, %v8129
      %v8131 = vrot.slane %v8129, 4
      %v8132 = vrot.slane %v7018, 5
      %v8133 = vsel %vm2306, %v8131, %v8132
      %v8134 = vrot.slane %v8014, 5
      %v8135 = vrot.slane %v8134, 4
      %v8136 = vrot.slane %v6984, 5
      %v8137 = vsel %vm2306, %v8135, %v8136
      %v8138 = vrot.slane %v8136, 4
      %v8139 = vrot.slane %v7019, 5
      %v8140 = vsel %vm2306, %v8138, %v8139
      %v8141 = vrot.slane %v8015, 5
      %v8142 = vrot.slane %v8141, 4
      %v8143 = vrot.slane %v6986, 5
      %v8144 = vsel %vm2306, %v8142, %v8143
      %v8145 = vrot.slane %v8143, 4
      %v8146 = vrot.slane %v7020, 5
      %v8147 = vsel %vm2306, %v8145, %v8146
      %v8148 = vrot.slane %v8016, 5
      %v8149 = vrot.slane %v8148, 4
      %v8150 = vrot.slane %v6988, 5
      %v8151 = vsel %vm2306, %v8149, %v8150
      %v8152 = vrot.slane %v8150, 4
      %v8153 = vrot.slane %v7021, 5
      %v8154 = vsel %vm2306, %v8152, %v8153
      %v8155 = vrot.slane %v8017, 5
      %v8156 = vrot.slane %v8155, 4
      %v8157 = vrot.slane %v6990, 5
      %v8158 = vsel %vm2306, %v8156, %v8157
      %v8159 = vrot.slane %v8157, 4
      %v8160 = vrot.slane %v7022, 5
      %v8161 = vsel %vm2306, %v8159, %v8160
      %s8162 = scalar_lea.vmem %s4, 128
      %v8163 = vld [vmem:[%s8162] sm:$0xf]
      %v8164 = vld [vmem:[%s8162 + $0x4] sm:$0xf]
      %v8165 = vld [vmem:[%s8162 + $0x8] sm:$0xf]
      %v8166 = vld [vmem:[%s8162 + $0xc] sm:$0xf]
      %v8167 = vld [vmem:[%s8162 + $0x10] sm:$0xf]
      %v8168 = vld [vmem:[%s8162 + $0x14] sm:$0xf]
      %v8169 = vld [vmem:[%s8162 + $0x18] sm:$0xf]
      %v8170 = vld [vmem:[%s8162 + $0x1c] sm:$0xf]
      %v8171 = vld [vmem:[%s8162 + $0x20] sm:$0xf]
      %v8172 = vld [vmem:[%s8162 + $0x24] sm:$0xf]
      %v8173 = vld [vmem:[%s8162 + $0x28] sm:$0xf]
      %v8174 = vld [vmem:[%s8162 + $0x2c] sm:$0xf]
      %v8175 = vld [vmem:[%s8162 + $0x30] sm:$0xf]
      %v8176 = vld [vmem:[%s8162 + $0x34] sm:$0xf]
      %v8177 = vld [vmem:[%s8162 + $0x38] sm:$0xf]
      %v8178 = vld [vmem:[%s8162 + $0x3c] sm:$0xf]
      %v8179 = vunpack.c.l.b16 %v8053
      %v8180 = vunpack.c.l.b16 %v8056
      %v8181 = vunpack.c.l.b16 %v8060
      %v8182 = vunpack.c.l.b16 %v8063
      %v8183 = vunpack.c.l.b16 %v8067
      %v8184 = vunpack.c.l.b16 %v8070
      %v8185 = vunpack.c.l.b16 %v8074
      %v8186 = vunpack.c.l.b16 %v8077
      %v8187 = vunpack.c.l.b16 %v8081
      %v8188 = vunpack.c.l.b16 %v8084
      %v8189 = vunpack.c.l.b16 %v8088
      %v8190 = vunpack.c.l.b16 %v8091
      %v8191 = vunpack.c.l.b16 %v8095
      %v8192 = vunpack.c.l.b16 %v8098
      %v8193 = vunpack.c.l.b16 %v8102
      %v8194 = vunpack.c.l.b16 %v8105
      %v8195 = vunpack.c.l.b16 %v8109
      %v8196 = vunpack.c.l.b16 %v8112
      %v8197 = vunpack.c.l.b16 %v8116
      %v8198 = vunpack.c.l.b16 %v8119
      %v8199 = vunpack.c.l.b16 %v8123
      %v8200 = vunpack.c.l.b16 %v8126
      %v8201 = vunpack.c.l.b16 %v8130
      %v8202 = vunpack.c.l.b16 %v8133
      %v8203 = vunpack.c.l.b16 %v8137
      %v8204 = vunpack.c.l.b16 %v8140
      %v8205 = vunpack.c.l.b16 %v8144
      %v8206 = vunpack.c.l.b16 %v8147
      %v8207 = vunpack.c.l.b16 %v8151
      %v8208 = vunpack.c.l.b16 %v8154
      %v8209 = vunpack.c.l.b16 %v8158
      %v8210 = vunpack.c.l.b16 %v8161
      %v8211 = vpack.c.b16 %v8180, %v8179
      %v8212 = vpack.c.b16 %v8182, %v8181
      %v8213 = vpack.c.b16 %v8184, %v8183
      %v8214 = vpack.c.b16 %v8186, %v8185
      %v8215 = vpack.c.b16 %v8188, %v8187
      %v8216 = vpack.c.b16 %v8190, %v8189
      %v8217 = vpack.c.b16 %v8192, %v8191
      %v8218 = vpack.c.b16 %v8194, %v8193
      %v8219 = vpack.c.b16 %v8196, %v8195
      %v8220 = vpack.c.b16 %v8198, %v8197
      %v8221 = vpack.c.b16 %v8200, %v8199
      %v8222 = vpack.c.b16 %v8202, %v8201
      %v8223 = vpack.c.b16 %v8204, %v8203
      %v8224 = vpack.c.b16 %v8206, %v8205
      %v8225 = vpack.c.b16 %v8208, %v8207
      %v8226 = vpack.c.b16 %v8210, %v8209
      %v8259 = vunpack.c.l.b16 %v8163
      %v8260 = vunpack.c.l.b16 %v8164
      %v8261 = vunpack.c.l.b16 %v8165
      %v8262 = vunpack.c.l.b16 %v8166
      %v8263 = vunpack.c.l.b16 %v8167
      %v8264 = vunpack.c.l.b16 %v8168
      %v8265 = vunpack.c.l.b16 %v8169
      %v8266 = vunpack.c.l.b16 %v8170
      %v8267 = vunpack.c.l.b16 %v8171
      %v8268 = vunpack.c.l.b16 %v8172
      %v8269 = vunpack.c.l.b16 %v8173
      %v8270 = vunpack.c.l.b16 %v8174
      %v8271 = vunpack.c.l.b16 %v8175
      %v8272 = vunpack.c.l.b16 %v8176
      %v8273 = vunpack.c.l.b16 %v8177
      %v8274 = vunpack.c.l.b16 %v8178
      %v8275 = vpack.c.b16 %v8260, %v8259
      %v8276 = vpack.c.b16 %v8262, %v8261
      %v8277 = vpack.c.b16 %v8264, %v8263
      %v8278 = vpack.c.b16 %v8266, %v8265
      %v8279 = vpack.c.b16 %v8268, %v8267
      %v8280 = vpack.c.b16 %v8270, %v8269
      %v8281 = vpack.c.b16 %v8272, %v8271
      %v8282 = vpack.c.b16 %v8274, %v8273
      %8291 = vmatprep.subr.bf16.mxu0 0
      %8292 = vmatpush1.bf16.msra.mxu0 %v8282
      %8293 = vmatprep.subr.bf16.mxu0 0
      %8294 = vmatpush1.bf16.msra.mxu0 %v8281
      %8295 = vmatprep.subr.bf16.mxu0 0
      %8296 = vmatpush1.bf16.msra.mxu0 %v8280
      %8297 = vmatprep.subr.bf16.mxu0 0
      %8298 = vmatpush1.bf16.msra.mxu0 %v8279
      %8299 = vmatprep.subr.bf16.mxu0 0
      %8300 = vmatpush1.bf16.msra.mxu0 %v8278
      %8301 = vmatprep.subr.bf16.mxu0 0
      %8302 = vmatpush1.bf16.msra.mxu0 %v8277
      %8303 = vmatprep.subr.bf16.mxu0 0
      %8304 = vmatpush1.bf16.msra.mxu0 %v8276
      %8305 = vmatprep.subr.bf16.mxu0 0
      %8306 = vmatpush1.bf16.msra.mxu0 %v8275
      %8307 = vmatprep.subr.bf16.mxu0 0
      %8308 = vmatpush2.bf16.msra.mxu0 0
      %8309 = vmatprep.subr.bf16.mxu0 0
      %8310 = vmatpush2.bf16.msra.mxu0 0
      %8311 = vmatprep.subr.bf16.mxu0 0
      %8312 = vmatpush2.bf16.msra.mxu0 0
      %8313 = vmatprep.subr.bf16.mxu0 0
      %8314 = vmatpush2.bf16.msra.mxu0 0
      %8315 = vmatprep.subr.bf16.mxu0 0
      %8316 = vmatpush2.bf16.msra.mxu0 0
      %8317 = vmatprep.subr.bf16.mxu0 0
      %8318 = vmatpush2.bf16.msra.mxu0 0
      %8319 = vmatprep.subr.bf16.mxu0 0
      %8320 = vmatpush2.bf16.msra.mxu0 0
      %8321 = vmatprep.subr.bf16.mxu0 0
      %8322 = vmatpush2.bf16.msra.mxu0 0
      %8323 = vmatprep.mubr.bf16.mxu0 0
      %8324 = vmatmul.mubr.bf16.gmra.mxu0 %v8211
      %v8325 = vpop.f32.mrf.mxu0
      %v8326 = vadd.f32 0.0, %v8325
      %v8327 = vpop.f32.mrf.mxu0
      %v8328 = vpop.f32.mrf.mxu0
      %v8329 = vadd.f32 0.0, %v8328
      %v8330 = vpop.f32.mrf.mxu0
      %8331 = vmatprep.mubr.bf16.mxu0 0
      %8332 = vmatmul.mubr.bf16.gmra.mxu0 %v8212
      %v8333 = vpop.f32.mrf.mxu0
      %v8334 = vadd.f32 0.0, %v8333
      %v8335 = vpop.f32.mrf.mxu0
      %v8336 = vpop.f32.mrf.mxu0
      %v8337 = vadd.f32 0.0, %v8336
      %v8338 = vpop.f32.mrf.mxu0
      %8339 = vmatprep.mubr.bf16.mxu0 0
      %8340 = vmatmul.mubr.bf16.gmra.mxu0 %v8213
      %v8341 = vpop.f32.mrf.mxu0
      %v8342 = vadd.f32 0.0, %v8341
      %v8343 = vpop.f32.mrf.mxu0
      %v8344 = vpop.f32.mrf.mxu0
      %v8345 = vadd.f32 0.0, %v8344
      %v8346 = vpop.f32.mrf.mxu0
      %8347 = vmatprep.mubr.bf16.mxu0 0
      %8348 = vmatmul.mubr.bf16.gmra.mxu0 %v8214
      %v8349 = vpop.f32.mrf.mxu0
      %v8350 = vadd.f32 0.0, %v8349
      %v8351 = vpop.f32.mrf.mxu0
      %v8352 = vpop.f32.mrf.mxu0
      %v8353 = vadd.f32 0.0, %v8352
      %v8354 = vpop.f32.mrf.mxu0
      %8355 = vmatprep.mubr.bf16.mxu0 0
      %8356 = vmatmul.mubr.bf16.gmra.mxu0 %v8215
      %v8357 = vpop.f32.mrf.mxu0
      %v8358 = vadd.f32 0.0, %v8357
      %v8359 = vpop.f32.mrf.mxu0
      %v8360 = vpop.f32.mrf.mxu0
      %v8361 = vadd.f32 0.0, %v8360
      %v8362 = vpop.f32.mrf.mxu0
      %8363 = vmatprep.mubr.bf16.mxu0 0
      %8364 = vmatmul.mubr.bf16.gmra.mxu0 %v8216
      %v8365 = vpop.f32.mrf.mxu0
      %v8366 = vadd.f32 0.0, %v8365
      %v8367 = vpop.f32.mrf.mxu0
      %v8368 = vpop.f32.mrf.mxu0
      %v8369 = vadd.f32 0.0, %v8368
      %v8370 = vpop.f32.mrf.mxu0
      %8371 = vmatprep.mubr.bf16.mxu0 0
      %8372 = vmatmul.mubr.bf16.gmra.mxu0 %v8217
      %v8373 = vpop.f32.mrf.mxu0
      %v8374 = vadd.f32 0.0, %v8373
      %v8375 = vpop.f32.mrf.mxu0
      %v8376 = vpop.f32.mrf.mxu0
      %v8377 = vadd.f32 0.0, %v8376
      %v8378 = vpop.f32.mrf.mxu0
      %8379 = vmatprep.mubr.bf16.mxu0 0
      %8380 = vmatmul.mubr.bf16.gmra.mxu0 %v8218
      %v8381 = vpop.f32.mrf.mxu0
      %v8382 = vadd.f32 0.0, %v8381
      %v8383 = vpop.f32.mrf.mxu0
      %v8384 = vpop.f32.mrf.mxu0
      %v8385 = vadd.f32 0.0, %v8384
      %v8386 = vpop.f32.mrf.mxu0
      %8387 = vmatprep.mubr.bf16.mxu0 0
      %8388 = vmatmul.mubr.bf16.gmra.mxu0 %v8219
      %v8389 = vpop.f32.mrf.mxu0
      %v8390 = vadd.f32 0.0, %v8389
      %v8391 = vpop.f32.mrf.mxu0
      %v8392 = vpop.f32.mrf.mxu0
      %v8393 = vadd.f32 0.0, %v8392
      %v8394 = vpop.f32.mrf.mxu0
      %8395 = vmatprep.mubr.bf16.mxu0 0
      %8396 = vmatmul.mubr.bf16.gmra.mxu0 %v8220
      %v8397 = vpop.f32.mrf.mxu0
      %v8398 = vadd.f32 0.0, %v8397
      %v8399 = vpop.f32.mrf.mxu0
      %v8400 = vpop.f32.mrf.mxu0
      %v8401 = vadd.f32 0.0, %v8400
      %v8402 = vpop.f32.mrf.mxu0
      %8403 = vmatprep.mubr.bf16.mxu0 0
      %8404 = vmatmul.mubr.bf16.gmra.mxu0 %v8221
      %v8405 = vpop.f32.mrf.mxu0
      %v8406 = vadd.f32 0.0, %v8405
      %v8407 = vpop.f32.mrf.mxu0
      %v8408 = vpop.f32.mrf.mxu0
      %v8409 = vadd.f32 0.0, %v8408
      %v8410 = vpop.f32.mrf.mxu0
      %8411 = vmatprep.mubr.bf16.mxu0 0
      %8412 = vmatmul.mubr.bf16.gmra.mxu0 %v8222
      %v8413 = vpop.f32.mrf.mxu0
      %v8414 = vadd.f32 0.0, %v8413
      %v8415 = vpop.f32.mrf.mxu0
      %v8416 = vpop.f32.mrf.mxu0
      %v8417 = vadd.f32 0.0, %v8416
      %v8418 = vpop.f32.mrf.mxu0
      %8419 = vmatprep.mubr.bf16.mxu0 0
      %8420 = vmatmul.mubr.bf16.gmra.mxu0 %v8223
      %v8421 = vpop.f32.mrf.mxu0
      %v8422 = vadd.f32 0.0, %v8421
      %v8423 = vpop.f32.mrf.mxu0
      %v8424 = vpop.f32.mrf.mxu0
      %v8425 = vadd.f32 0.0, %v8424
      %v8426 = vpop.f32.mrf.mxu0
      %8427 = vmatprep.mubr.bf16.mxu0 0
      %8428 = vmatmul.mubr.bf16.gmra.mxu0 %v8224
      %v8429 = vpop.f32.mrf.mxu0
      %v8430 = vadd.f32 0.0, %v8429
      %v8431 = vpop.f32.mrf.mxu0
      %v8432 = vpop.f32.mrf.mxu0
      %v8433 = vadd.f32 0.0, %v8432
      %v8434 = vpop.f32.mrf.mxu0
      %8435 = vmatprep.mubr.bf16.mxu0 0
      %8436 = vmatmul.mubr.bf16.gmra.mxu0 %v8225
      %v8437 = vpop.f32.mrf.mxu0
      %v8438 = vadd.f32 0.0, %v8437
      %v8439 = vpop.f32.mrf.mxu0
      %v8440 = vpop.f32.mrf.mxu0
      %v8441 = vadd.f32 0.0, %v8440
      %v8442 = vpop.f32.mrf.mxu0
      %8443 = vmatprep.mubr.bf16.mxu0 0
      %8444 = vmatmul.mubr.bf16.gmra.mxu0 %v8226
      %v8445 = vpop.f32.mrf.mxu0
      %v8446 = vadd.f32 0.0, %v8445
      %v8447 = vpop.f32.mrf.mxu0
      %v8448 = vpop.f32.mrf.mxu0
      %v8449 = vadd.f32 0.0, %v8448
      %v8450 = vpop.f32.mrf.mxu0
      %8451 = vdwg.mxu0
      %v8452 = vadd.f32 %v7876, %v8326
      %v8453 = vadd.f32 %v7879, %v8329
      %v8454 = vadd.f32 %v7884, %v8334
      %v8455 = vadd.f32 %v7887, %v8337
      %v8456 = vadd.f32 %v7892, %v8342
      %v8457 = vadd.f32 %v7895, %v8345
      %v8458 = vadd.f32 %v7900, %v8350
      %v8459 = vadd.f32 %v7903, %v8353
      %v8460 = vadd.f32 %v7908, %v8358
      %v8461 = vadd.f32 %v7911, %v8361
      %v8462 = vadd.f32 %v7916, %v8366
      %v8463 = vadd.f32 %v7919, %v8369
      %v8464 = vadd.f32 %v7924, %v8374
      %v8465 = vadd.f32 %v7927, %v8377
      %v8466 = vadd.f32 %v7932, %v8382
      %v8467 = vadd.f32 %v7935, %v8385
      %v8468 = vadd.f32 %v7940, %v8390
      %v8469 = vadd.f32 %v7943, %v8393
      %v8470 = vadd.f32 %v7948, %v8398
      %v8471 = vadd.f32 %v7951, %v8401
      %v8472 = vadd.f32 %v7956, %v8406
      %v8473 = vadd.f32 %v7959, %v8409
      %v8474 = vadd.f32 %v7964, %v8414
      %v8475 = vadd.f32 %v7967, %v8417
      %v8476 = vadd.f32 %v7972, %v8422
      %v8477 = vadd.f32 %v7975, %v8425
      %v8478 = vadd.f32 %v7980, %v8430
      %v8479 = vadd.f32 %v7983, %v8433
      %v8480 = vadd.f32 %v7988, %v8438
      %v8481 = vadd.f32 %v7991, %v8441
      %v8482 = vadd.f32 %v7996, %v8446
      %v8483 = vadd.f32 %v7999, %v8449
      %v8484 = vld [vmem:[%s785] sm:$0xf]
      %v8485 = vld [vmem:[%s785 + $0x4] sm:$0xf]
      %v8486 = vld [vmem:[%s785 + $0xc] sm:$0xf]
      %v8487 = vld [vmem:[%s785 + $0x10] sm:$0xf]
      %v8488 = vld [vmem:[%s785 + $0x18] sm:$0xf]
      %v8489 = vld [vmem:[%s785 + $0x1c] sm:$0xf]
      %v8490 = vld [vmem:[%s785 + $0x24] sm:$0xf]
      %v8491 = vld [vmem:[%s785 + $0x28] sm:$0xf]
      %v8492 = vld [vmem:[%s785 + $0x30] sm:$0xf]
      %v8493 = vld [vmem:[%s785 + $0x34] sm:$0xf]
      %v8494 = vld [vmem:[%s785 + $0x3c] sm:$0xf]
      %v8495 = vld [vmem:[%s785 + $0x40] sm:$0xf]
      %v8496 = vld [vmem:[%s785 + $0x48] sm:$0xf]
      %v8497 = vld [vmem:[%s785 + $0x4c] sm:$0xf]
      %v8498 = vld [vmem:[%s785 + $0x54] sm:$0xf]
      %v8499 = vld [vmem:[%s785 + $0x58] sm:$0xf]
      %v8500 = vld [vmem:[%s785 + $0x60] sm:$0xf]
      %v8501 = vld [vmem:[%s785 + $0x64] sm:$0xf]
      %v8502 = vld [vmem:[%s785 + $0x6c] sm:$0xf]
      %v8503 = vld [vmem:[%s785 + $0x70] sm:$0xf]
      %v8504 = vld [vmem:[%s785 + $0x78] sm:$0xf]
      %v8505 = vld [vmem:[%s785 + $0x7c] sm:$0xf]
      %v8506 = vld [vmem:[%s785 + $0x84] sm:$0xf]
      %v8507 = vld [vmem:[%s785 + $0x88] sm:$0xf]
      %v8508 = vld [vmem:[%s785 + $0x90] sm:$0xf]
      %v8509 = vld [vmem:[%s785 + $0x94] sm:$0xf]
      %v8510 = vld [vmem:[%s785 + $0x9c] sm:$0xf]
      %v8511 = vld [vmem:[%s785 + $0xa0] sm:$0xf]
      %v8512 = vld [vmem:[%s785 + $0xa8] sm:$0xf]
      %v8513 = vld [vmem:[%s785 + $0xac] sm:$0xf]
      %v8514 = vld [vmem:[%s785 + $0xb4] sm:$0xf]
      %v8515 = vld [vmem:[%s785 + $0xb8] sm:$0xf]
      %s8516 = scalar_lea.vmem %s4, 192
      %v8517 = vld [vmem:[%s8516] sm:$0xf]
      %v8518 = vld [vmem:[%s8516 + $0x4] sm:$0xf]
      %v8519 = vld [vmem:[%s8516 + $0x8] sm:$0xf]
      %v8520 = vld [vmem:[%s8516 + $0xc] sm:$0xf]
      %v8521 = vld [vmem:[%s8516 + $0x10] sm:$0xf]
      %v8522 = vld [vmem:[%s8516 + $0x14] sm:$0xf]
      %v8523 = vld [vmem:[%s8516 + $0x18] sm:$0xf]
      %v8524 = vld [vmem:[%s8516 + $0x1c] sm:$0xf]
      %v8525 = vld [vmem:[%s8516 + $0x20] sm:$0xf]
      %v8526 = vld [vmem:[%s8516 + $0x24] sm:$0xf]
      %v8527 = vld [vmem:[%s8516 + $0x28] sm:$0xf]
      %v8528 = vld [vmem:[%s8516 + $0x2c] sm:$0xf]
      %v8529 = vld [vmem:[%s8516 + $0x30] sm:$0xf]
      %v8530 = vld [vmem:[%s8516 + $0x34] sm:$0xf]
      %v8531 = vld [vmem:[%s8516 + $0x38] sm:$0xf]
      %v8532 = vld [vmem:[%s8516 + $0x3c] sm:$0xf]
      %v8565 = vunpack.c.l.b16 %v8484
      %v8566 = vunpack.c.l.b16 %v8485
      %v8567 = vunpack.c.l.b16 %v8486
      %v8568 = vunpack.c.l.b16 %v8487
      %v8569 = vunpack.c.l.b16 %v8488
      %v8570 = vunpack.c.l.b16 %v8489
      %v8571 = vunpack.c.l.b16 %v8490
      %v8572 = vunpack.c.l.b16 %v8491
      %v8573 = vunpack.c.l.b16 %v8492
      %v8574 = vunpack.c.l.b16 %v8493
      %v8575 = vunpack.c.l.b16 %v8494
      %v8576 = vunpack.c.l.b16 %v8495
      %v8577 = vunpack.c.l.b16 %v8496
      %v8578 = vunpack.c.l.b16 %v8497
      %v8579 = vunpack.c.l.b16 %v8498
      %v8580 = vunpack.c.l.b16 %v8499
      %v8581 = vunpack.c.l.b16 %v8500
      %v8582 = vunpack.c.l.b16 %v8501
      %v8583 = vunpack.c.l.b16 %v8502
      %v8584 = vunpack.c.l.b16 %v8503
      %v8585 = vunpack.c.l.b16 %v8504
      %v8586 = vunpack.c.l.b16 %v8505
      %v8587 = vunpack.c.l.b16 %v8506
      %v8588 = vunpack.c.l.b16 %v8507
      %v8589 = vunpack.c.l.b16 %v8508
      %v8590 = vunpack.c.l.b16 %v8509
      %v8591 = vunpack.c.l.b16 %v8510
      %v8592 = vunpack.c.l.b16 %v8511
      %v8593 = vunpack.c.l.b16 %v8512
      %v8594 = vunpack.c.l.b16 %v8513
      %v8595 = vunpack.c.l.b16 %v8514
      %v8596 = vunpack.c.l.b16 %v8515
      %v8597 = vpack.c.b16 %v8566, %v8565
      %v8598 = vpack.c.b16 %v8568, %v8567
      %v8599 = vpack.c.b16 %v8570, %v8569
      %v8600 = vpack.c.b16 %v8572, %v8571
      %v8601 = vpack.c.b16 %v8574, %v8573
      %v8602 = vpack.c.b16 %v8576, %v8575
      %v8603 = vpack.c.b16 %v8578, %v8577
      %v8604 = vpack.c.b16 %v8580, %v8579
      %v8605 = vpack.c.b16 %v8582, %v8581
      %v8606 = vpack.c.b16 %v8584, %v8583
      %v8607 = vpack.c.b16 %v8586, %v8585
      %v8608 = vpack.c.b16 %v8588, %v8587
      %v8609 = vpack.c.b16 %v8590, %v8589
      %v8610 = vpack.c.b16 %v8592, %v8591
      %v8611 = vpack.c.b16 %v8594, %v8593
      %v8612 = vpack.c.b16 %v8596, %v8595
      %v8645 = vunpack.c.l.b16 %v8517
      %v8646 = vunpack.c.l.b16 %v8518
      %v8647 = vunpack.c.l.b16 %v8519
      %v8648 = vunpack.c.l.b16 %v8520
      %v8649 = vunpack.c.l.b16 %v8521
      %v8650 = vunpack.c.l.b16 %v8522
      %v8651 = vunpack.c.l.b16 %v8523
      %v8652 = vunpack.c.l.b16 %v8524
      %v8653 = vunpack.c.l.b16 %v8525
      %v8654 = vunpack.c.l.b16 %v8526
      %v8655 = vunpack.c.l.b16 %v8527
      %v8656 = vunpack.c.l.b16 %v8528
      %v8657 = vunpack.c.l.b16 %v8529
      %v8658 = vunpack.c.l.b16 %v8530
      %v8659 = vunpack.c.l.b16 %v8531
      %v8660 = vunpack.c.l.b16 %v8532
      %v8661 = vpack.c.b16 %v8646, %v8645
      %v8662 = vpack.c.b16 %v8648, %v8647
      %v8663 = vpack.c.b16 %v8650, %v8649
      %v8664 = vpack.c.b16 %v8652, %v8651
      %v8665 = vpack.c.b16 %v8654, %v8653
      %v8666 = vpack.c.b16 %v8656, %v8655
      %v8667 = vpack.c.b16 %v8658, %v8657
      %v8668 = vpack.c.b16 %v8660, %v8659
      %8677 = vmatprep.subr.bf16.mxu0 0
      %8678 = vmatpush1.bf16.msra.mxu0 %v8668
      %8679 = vmatprep.subr.bf16.mxu0 0
      %8680 = vmatpush1.bf16.msra.mxu0 %v8667
      %8681 = vmatprep.subr.bf16.mxu0 0
      %8682 = vmatpush1.bf16.msra.mxu0 %v8666
      %8683 = vmatprep.subr.bf16.mxu0 0
      %8684 = vmatpush1.bf16.msra.mxu0 %v8665
      %8685 = vmatprep.subr.bf16.mxu0 0
      %8686 = vmatpush1.bf16.msra.mxu0 %v8664
      %8687 = vmatprep.subr.bf16.mxu0 0
      %8688 = vmatpush1.bf16.msra.mxu0 %v8663
      %8689 = vmatprep.subr.bf16.mxu0 0
      %8690 = vmatpush1.bf16.msra.mxu0 %v8662
      %8691 = vmatprep.subr.bf16.mxu0 0
      %8692 = vmatpush1.bf16.msra.mxu0 %v8661
      %8693 = vmatprep.subr.bf16.mxu0 0
      %8694 = vmatpush2.bf16.msra.mxu0 0
      %8695 = vmatprep.subr.bf16.mxu0 0
      %8696 = vmatpush2.bf16.msra.mxu0 0
      %8697 = vmatprep.subr.bf16.mxu0 0
      %8698 = vmatpush2.bf16.msra.mxu0 0
      %8699 = vmatprep.subr.bf16.mxu0 0
      %8700 = vmatpush2.bf16.msra.mxu0 0
      %8701 = vmatprep.subr.bf16.mxu0 0
      %8702 = vmatpush2.bf16.msra.mxu0 0
      %8703 = vmatprep.subr.bf16.mxu0 0
      %8704 = vmatpush2.bf16.msra.mxu0 0
      %8705 = vmatprep.subr.bf16.mxu0 0
      %8706 = vmatpush2.bf16.msra.mxu0 0
      %8707 = vmatprep.subr.bf16.mxu0 0
      %8708 = vmatpush2.bf16.msra.mxu0 0
      %8709 = vmatprep.mubr.bf16.mxu0 0
      %8710 = vmatmul.mubr.bf16.gmra.mxu0 %v8597
      %v8711 = vpop.f32.mrf.mxu0
      %v8712 = vadd.f32 0.0, %v8711
      %v8713 = vpop.f32.mrf.mxu0
      %v8714 = vpop.f32.mrf.mxu0
      %v8715 = vadd.f32 0.0, %v8714
      %v8716 = vpop.f32.mrf.mxu0
      %8717 = vmatprep.mubr.bf16.mxu0 0
      %8718 = vmatmul.mubr.bf16.gmra.mxu0 %v8598
      %v8719 = vpop.f32.mrf.mxu0
      %v8720 = vadd.f32 0.0, %v8719
      %v8721 = vpop.f32.mrf.mxu0
      %v8722 = vpop.f32.mrf.mxu0
      %v8723 = vadd.f32 0.0, %v8722
      %v8724 = vpop.f32.mrf.mxu0
      %8725 = vmatprep.mubr.bf16.mxu0 0
      %8726 = vmatmul.mubr.bf16.gmra.mxu0 %v8599
      %v8727 = vpop.f32.mrf.mxu0
      %v8728 = vadd.f32 0.0, %v8727
      %v8729 = vpop.f32.mrf.mxu0
      %v8730 = vpop.f32.mrf.mxu0
      %v8731 = vadd.f32 0.0, %v8730
      %v8732 = vpop.f32.mrf.mxu0
      %8733 = vmatprep.mubr.bf16.mxu0 0
      %8734 = vmatmul.mubr.bf16.gmra.mxu0 %v8600
      %v8735 = vpop.f32.mrf.mxu0
      %v8736 = vadd.f32 0.0, %v8735
      %v8737 = vpop.f32.mrf.mxu0
      %v8738 = vpop.f32.mrf.mxu0
      %v8739 = vadd.f32 0.0, %v8738
      %v8740 = vpop.f32.mrf.mxu0
      %8741 = vmatprep.mubr.bf16.mxu0 0
      %8742 = vmatmul.mubr.bf16.gmra.mxu0 %v8601
      %v8743 = vpop.f32.mrf.mxu0
      %v8744 = vadd.f32 0.0, %v8743
      %v8745 = vpop.f32.mrf.mxu0
      %v8746 = vpop.f32.mrf.mxu0
      %v8747 = vadd.f32 0.0, %v8746
      %v8748 = vpop.f32.mrf.mxu0
      %8749 = vmatprep.mubr.bf16.mxu0 0
      %8750 = vmatmul.mubr.bf16.gmra.mxu0 %v8602
      %v8751 = vpop.f32.mrf.mxu0
      %v8752 = vadd.f32 0.0, %v8751
      %v8753 = vpop.f32.mrf.mxu0
      %v8754 = vpop.f32.mrf.mxu0
      %v8755 = vadd.f32 0.0, %v8754
      %v8756 = vpop.f32.mrf.mxu0
      %8757 = vmatprep.mubr.bf16.mxu0 0
      %8758 = vmatmul.mubr.bf16.gmra.mxu0 %v8603
      %v8759 = vpop.f32.mrf.mxu0
      %v8760 = vadd.f32 0.0, %v8759
      %v8761 = vpop.f32.mrf.mxu0
      %v8762 = vpop.f32.mrf.mxu0
      %v8763 = vadd.f32 0.0, %v8762
      %v8764 = vpop.f32.mrf.mxu0
      %8765 = vmatprep.mubr.bf16.mxu0 0
      %8766 = vmatmul.mubr.bf16.gmra.mxu0 %v8604
      %v8767 = vpop.f32.mrf.mxu0
      %v8768 = vadd.f32 0.0, %v8767
      %v8769 = vpop.f32.mrf.mxu0
      %v8770 = vpop.f32.mrf.mxu0
      %v8771 = vadd.f32 0.0, %v8770
      %v8772 = vpop.f32.mrf.mxu0
      %8773 = vmatprep.mubr.bf16.mxu0 0
      %8774 = vmatmul.mubr.bf16.gmra.mxu0 %v8605
      %v8775 = vpop.f32.mrf.mxu0
      %v8776 = vadd.f32 0.0, %v8775
      %v8777 = vpop.f32.mrf.mxu0
      %v8778 = vpop.f32.mrf.mxu0
      %v8779 = vadd.f32 0.0, %v8778
      %v8780 = vpop.f32.mrf.mxu0
      %8781 = vmatprep.mubr.bf16.mxu0 0
      %8782 = vmatmul.mubr.bf16.gmra.mxu0 %v8606
      %v8783 = vpop.f32.mrf.mxu0
      %v8784 = vadd.f32 0.0, %v8783
      %v8785 = vpop.f32.mrf.mxu0
      %v8786 = vpop.f32.mrf.mxu0
      %v8787 = vadd.f32 0.0, %v8786
      %v8788 = vpop.f32.mrf.mxu0
      %8789 = vmatprep.mubr.bf16.mxu0 0
      %8790 = vmatmul.mubr.bf16.gmra.mxu0 %v8607
      %v8791 = vpop.f32.mrf.mxu0
      %v8792 = vadd.f32 0.0, %v8791
      %v8793 = vpop.f32.mrf.mxu0
      %v8794 = vpop.f32.mrf.mxu0
      %v8795 = vadd.f32 0.0, %v8794
      %v8796 = vpop.f32.mrf.mxu0
      %8797 = vmatprep.mubr.bf16.mxu0 0
      %8798 = vmatmul.mubr.bf16.gmra.mxu0 %v8608
      %v8799 = vpop.f32.mrf.mxu0
      %v8800 = vadd.f32 0.0, %v8799
      %v8801 = vpop.f32.mrf.mxu0
      %v8802 = vpop.f32.mrf.mxu0
      %v8803 = vadd.f32 0.0, %v8802
      %v8804 = vpop.f32.mrf.mxu0
      %8805 = vmatprep.mubr.bf16.mxu0 0
      %8806 = vmatmul.mubr.bf16.gmra.mxu0 %v8609
      %v8807 = vpop.f32.mrf.mxu0
      %v8808 = vadd.f32 0.0, %v8807
      %v8809 = vpop.f32.mrf.mxu0
      %v8810 = vpop.f32.mrf.mxu0
      %v8811 = vadd.f32 0.0, %v8810
      %v8812 = vpop.f32.mrf.mxu0
      %8813 = vmatprep.mubr.bf16.mxu0 0
      %8814 = vmatmul.mubr.bf16.gmra.mxu0 %v8610
      %v8815 = vpop.f32.mrf.mxu0
      %v8816 = vadd.f32 0.0, %v8815
      %v8817 = vpop.f32.mrf.mxu0
      %v8818 = vpop.f32.mrf.mxu0
      %v8819 = vadd.f32 0.0, %v8818
      %v8820 = vpop.f32.mrf.mxu0
      %8821 = vmatprep.mubr.bf16.mxu0 0
      %8822 = vmatmul.mubr.bf16.gmra.mxu0 %v8611
      %v8823 = vpop.f32.mrf.mxu0
      %v8824 = vadd.f32 0.0, %v8823
      %v8825 = vpop.f32.mrf.mxu0
      %v8826 = vpop.f32.mrf.mxu0
      %v8827 = vadd.f32 0.0, %v8826
      %v8828 = vpop.f32.mrf.mxu0
      %8829 = vmatprep.mubr.bf16.mxu0 0
      %8830 = vmatmul.mubr.bf16.gmra.mxu0 %v8612
      %v8831 = vpop.f32.mrf.mxu0
      %v8832 = vadd.f32 0.0, %v8831
      %v8833 = vpop.f32.mrf.mxu0
      %v8834 = vpop.f32.mrf.mxu0
      %v8835 = vadd.f32 0.0, %v8834
      %v8836 = vpop.f32.mrf.mxu0
      %8837 = vdwg.mxu0
      %v8838 = vadd.f32 %v8452, %v8712
      %v8839 = vadd.f32 %v8453, %v8715
      %v8840 = vadd.f32 %v8454, %v8720
      %v8841 = vadd.f32 %v8455, %v8723
      %v8842 = vadd.f32 %v8456, %v8728
      %v8843 = vadd.f32 %v8457, %v8731
      %v8844 = vadd.f32 %v8458, %v8736
      %v8845 = vadd.f32 %v8459, %v8739
      %v8846 = vadd.f32 %v8460, %v8744
      %v8847 = vadd.f32 %v8461, %v8747
      %v8848 = vadd.f32 %v8462, %v8752
      %v8849 = vadd.f32 %v8463, %v8755
      %v8850 = vadd.f32 %v8464, %v8760
      %v8851 = vadd.f32 %v8465, %v8763
      %v8852 = vadd.f32 %v8466, %v8768
      %v8853 = vadd.f32 %v8467, %v8771
      %v8854 = vadd.f32 %v8468, %v8776
      %v8855 = vadd.f32 %v8469, %v8779
      %v8856 = vadd.f32 %v8470, %v8784
      %v8857 = vadd.f32 %v8471, %v8787
      %v8858 = vadd.f32 %v8472, %v8792
      %v8859 = vadd.f32 %v8473, %v8795
      %v8860 = vadd.f32 %v8474, %v8800
      %v8861 = vadd.f32 %v8475, %v8803
      %v8862 = vadd.f32 %v8476, %v8808
      %v8863 = vadd.f32 %v8477, %v8811
      %v8864 = vadd.f32 %v8478, %v8816
      %v8865 = vadd.f32 %v8479, %v8819
      %v8866 = vadd.f32 %v8480, %v8824
      %v8867 = vadd.f32 %v8481, %v8827
      %v8868 = vadd.f32 %v8482, %v8832
      %v8869 = vadd.f32 %v8483, %v8835
      %v8870 = vld [vmem:[%s785] sm:$0xf]
      %v8871 = vld [vmem:[%s785 + $0x4] sm:$0xf]
      %v8872 = vld [vmem:[%s785 + $0x8] sm:$0x1]
      %v8873 = vld [vmem:[%s785 + $0xc] sm:$0xf]
      %v8874 = vld [vmem:[%s785 + $0x10] sm:$0xf]
      %v8875 = vld [vmem:[%s785 + $0x14] sm:$0x1]
      %v8876 = vld [vmem:[%s785 + $0x18] sm:$0xf]
      %v8877 = vld [vmem:[%s785 + $0x1c] sm:$0xf]
      %v8878 = vld [vmem:[%s785 + $0x20] sm:$0x1]
      %v8879 = vld [vmem:[%s785 + $0x24] sm:$0xf]
      %v8880 = vld [vmem:[%s785 + $0x28] sm:$0xf]
      %v8881 = vld [vmem:[%s785 + $0x2c] sm:$0x1]
      %v8882 = vld [vmem:[%s785 + $0x30] sm:$0xf]
      %v8883 = vld [vmem:[%s785 + $0x34] sm:$0xf]
      %v8884 = vld [vmem:[%s785 + $0x38] sm:$0x1]
      %v8885 = vld [vmem:[%s785 + $0x3c] sm:$0xf]
      %v8886 = vld [vmem:[%s785 + $0x40] sm:$0xf]
      %v8887 = vld [vmem:[%s785 + $0x44] sm:$0x1]
      %v8888 = vld [vmem:[%s785 + $0x48] sm:$0xf]
      %v8889 = vld [vmem:[%s785 + $0x4c] sm:$0xf]
      %v8890 = vld [vmem:[%s785 + $0x50] sm:$0x1]
      %v8891 = vld [vmem:[%s785 + $0x54] sm:$0xf]
      %v8892 = vld [vmem:[%s785 + $0x58] sm:$0xf]
      %v8893 = vld [vmem:[%s785 + $0x5c] sm:$0x1]
      %v8894 = vld [vmem:[%s785 + $0x60] sm:$0xf]
      %v8895 = vld [vmem:[%s785 + $0x64] sm:$0xf]
      %v8896 = vld [vmem:[%s785 + $0x68] sm:$0x1]
      %v8897 = vld [vmem:[%s785 + $0x6c] sm:$0xf]
      %v8898 = vld [vmem:[%s785 + $0x70] sm:$0xf]
      %v8899 = vld [vmem:[%s785 + $0x74] sm:$0x1]
      %v8900 = vld [vmem:[%s785 + $0x78] sm:$0xf]
      %v8901 = vld [vmem:[%s785 + $0x7c] sm:$0xf]
      %v8902 = vld [vmem:[%s785 + $0x80] sm:$0x1]
      %v8903 = vld [vmem:[%s785 + $0x84] sm:$0xf]
      %v8904 = vld [vmem:[%s785 + $0x88] sm:$0xf]
      %v8905 = vld [vmem:[%s785 + $0x8c] sm:$0x1]
      %v8906 = vld [vmem:[%s785 + $0x90] sm:$0xf]
      %v8907 = vld [vmem:[%s785 + $0x94] sm:$0xf]
      %v8908 = vld [vmem:[%s785 + $0x98] sm:$0x1]
      %v8909 = vld [vmem:[%s785 + $0x9c] sm:$0xf]
      %v8910 = vld [vmem:[%s785 + $0xa0] sm:$0xf]
      %v8911 = vld [vmem:[%s785 + $0xa4] sm:$0x1]
      %v8912 = vld [vmem:[%s785 + $0xa8] sm:$0xf]
      %v8913 = vld [vmem:[%s785 + $0xac] sm:$0xf]
      %v8914 = vld [vmem:[%s785 + $0xb0] sm:$0x1]
      %v8915 = vld [vmem:[%s785 + $0xb4] sm:$0xf]
      %v8916 = vld [vmem:[%s785 + $0xb8] sm:$0xf]
      %v8917 = vld [vmem:[%s785 + $0xbc] sm:$0x1]
      %v8919 = vshrl.u32 %v8870, 16
      %v8921 = vrot.slane %v8919, 4
      %v8922 = vshll.u32 %v8870, 16
      %v8924 = vrot.slane %v8922, 5
      %v8925 = vor.u32 %v8921, %v8924
      %v8926 = vrot.slane %v8925, 4
      %v8928 = vshll.u32 %v8871, 16
      %v8930 = vrot.slane %v8928, 5
      %v8931 = vsel %vm1276, %v8926, %v8930
      %v8932 = vshrl.u32 %v8871, 16
      %v8934 = vrot.slane %v8932, 4
      %v8935 = vor.u32 %v8934, %v8930
      %v8936 = vrot.slane %v8935, 4
      %v8938 = vshll.u32 %v8872, 16
      %v8940 = vrot.slane %v8938, 5
      %v8941 = vsel %vm1276, %v8936, %v8940
      %v8943 = vshrl.u32 %v8873, 16
      %v8945 = vrot.slane %v8943, 4
      %v8946 = vshll.u32 %v8873, 16
      %v8948 = vrot.slane %v8946, 5
      %v8949 = vor.u32 %v8945, %v8948
      %v8950 = vrot.slane %v8949, 4
      %v8952 = vshll.u32 %v8874, 16
      %v8954 = vrot.slane %v8952, 5
      %v8955 = vsel %vm1276, %v8950, %v8954
      %v8956 = vshrl.u32 %v8874, 16
      %v8958 = vrot.slane %v8956, 4
      %v8959 = vor.u32 %v8958, %v8954
      %v8960 = vrot.slane %v8959, 4
      %v8962 = vshll.u32 %v8875, 16
      %v8964 = vrot.slane %v8962, 5
      %v8965 = vsel %vm1276, %v8960, %v8964
      %v8967 = vshrl.u32 %v8876, 16
      %v8969 = vrot.slane %v8967, 4
      %v8970 = vshll.u32 %v8876, 16
      %v8972 = vrot.slane %v8970, 5
      %v8973 = vor.u32 %v8969, %v8972
      %v8974 = vrot.slane %v8973, 4
      %v8976 = vshll.u32 %v8877, 16
      %v8978 = vrot.slane %v8976, 5
      %v8979 = vsel %vm1276, %v8974, %v8978
      %v8980 = vshrl.u32 %v8877, 16
      %v8982 = vrot.slane %v8980, 4
      %v8983 = vor.u32 %v8982, %v8978
      %v8984 = vrot.slane %v8983, 4
      %v8986 = vshll.u32 %v8878, 16
      %v8988 = vrot.slane %v8986, 5
      %v8989 = vsel %vm1276, %v8984, %v8988
      %v8991 = vshrl.u32 %v8879, 16
      %v8993 = vrot.slane %v8991, 4
      %v8994 = vshll.u32 %v8879, 16
      %v8996 = vrot.slane %v8994, 5
      %v8997 = vor.u32 %v8993, %v8996
      %v8998 = vrot.slane %v8997, 4
      %v9000 = vshll.u32 %v8880, 16
      %v9002 = vrot.slane %v9000, 5
      %v9003 = vsel %vm1276, %v8998, %v9002
      %v9004 = vshrl.u32 %v8880, 16
      %v9006 = vrot.slane %v9004, 4
      %v9007 = vor.u32 %v9006, %v9002
      %v9008 = vrot.slane %v9007, 4
      %v9010 = vshll.u32 %v8881, 16
      %v9012 = vrot.slane %v9010, 5
      %v9013 = vsel %vm1276, %v9008, %v9012
      %v9015 = vshrl.u32 %v8882, 16
      %v9017 = vrot.slane %v9015, 4
      %v9018 = vshll.u32 %v8882, 16
      %v9020 = vrot.slane %v9018, 5
      %v9021 = vor.u32 %v9017, %v9020
      %v9022 = vrot.slane %v9021, 4
      %v9024 = vshll.u32 %v8883, 16
      %v9026 = vrot.slane %v9024, 5
      %v9027 = vsel %vm1276, %v9022, %v9026
      %v9028 = vshrl.u32 %v8883, 16
      %v9030 = vrot.slane %v9028, 4
      %v9031 = vor.u32 %v9030, %v9026
      %v9032 = vrot.slane %v9031, 4
      %v9034 = vshll.u32 %v8884, 16
      %v9036 = vrot.slane %v9034, 5
      %v9037 = vsel %vm1276, %v9032, %v9036
      %v9039 = vshrl.u32 %v8885, 16
      %v9041 = vrot.slane %v9039, 4
      %v9042 = vshll.u32 %v8885, 16
      %v9044 = vrot.slane %v9042, 5
      %v9045 = vor.u32 %v9041, %v9044
      %v9046 = vrot.slane %v9045, 4
      %v9048 = vshll.u32 %v8886, 16
      %v9050 = vrot.slane %v9048, 5
      %v9051 = vsel %vm1276, %v9046, %v9050
      %v9052 = vshrl.u32 %v8886, 16
      %v9054 = vrot.slane %v9052, 4
      %v9055 = vor.u32 %v9054, %v9050
      %v9056 = vrot.slane %v9055, 4
      %v9058 = vshll.u32 %v8887, 16
      %v9060 = vrot.slane %v9058, 5
      %v9061 = vsel %vm1276, %v9056, %v9060
      %v9063 = vshrl.u32 %v8888, 16
      %v9065 = vrot.slane %v9063, 4
      %v9066 = vshll.u32 %v8888, 16
      %v9068 = vrot.slane %v9066, 5
      %v9069 = vor.u32 %v9065, %v9068
      %v9070 = vrot.slane %v9069, 4
      %v9072 = vshll.u32 %v8889, 16
      %v9074 = vrot.slane %v9072, 5
      %v9075 = vsel %vm1276, %v9070, %v9074
      %v9076 = vshrl.u32 %v8889, 16
      %v9078 = vrot.slane %v9076, 4
      %v9079 = vor.u32 %v9078, %v9074
      %v9080 = vrot.slane %v9079, 4
      %v9082 = vshll.u32 %v8890, 16
      %v9084 = vrot.slane %v9082, 5
      %v9085 = vsel %vm1276, %v9080, %v9084
      %v9087 = vshrl.u32 %v8891, 16
      %v9089 = vrot.slane %v9087, 4
      %v9090 = vshll.u32 %v8891, 16
      %v9092 = vrot.slane %v9090, 5
      %v9093 = vor.u32 %v9089, %v9092
      %v9094 = vrot.slane %v9093, 4
      %v9096 = vshll.u32 %v8892, 16
      %v9098 = vrot.slane %v9096, 5
      %v9099 = vsel %vm1276, %v9094, %v9098
      %v9100 = vshrl.u32 %v8892, 16
      %v9102 = vrot.slane %v9100, 4
      %v9103 = vor.u32 %v9102, %v9098
      %v9104 = vrot.slane %v9103, 4
      %v9106 = vshll.u32 %v8893, 16
      %v9108 = vrot.slane %v9106, 5
      %v9109 = vsel %vm1276, %v9104, %v9108
      %v9111 = vshrl.u32 %v8894, 16
      %v9113 = vrot.slane %v9111, 4
      %v9114 = vshll.u32 %v8894, 16
      %v9116 = vrot.slane %v9114, 5
      %v9117 = vor.u32 %v9113, %v9116
      %v9118 = vrot.slane %v9117, 4
      %v9120 = vshll.u32 %v8895, 16
      %v9122 = vrot.slane %v9120, 5
      %v9123 = vsel %vm1276, %v9118, %v9122
      %v9124 = vshrl.u32 %v8895, 16
      %v9126 = vrot.slane %v9124, 4
      %v9127 = vor.u32 %v9126, %v9122
      %v9128 = vrot.slane %v9127, 4
      %v9130 = vshll.u32 %v8896, 16
      %v9132 = vrot.slane %v9130, 5
      %v9133 = vsel %vm1276, %v9128, %v9132
      %v9135 = vshrl.u32 %v8897, 16
      %v9137 = vrot.slane %v9135, 4
      %v9138 = vshll.u32 %v8897, 16
      %v9140 = vrot.slane %v9138, 5
      %v9141 = vor.u32 %v9137, %v9140
      %v9142 = vrot.slane %v9141, 4
      %v9144 = vshll.u32 %v8898, 16
      %v9146 = vrot.slane %v9144, 5
      %v9147 = vsel %vm1276, %v9142, %v9146
      %v9148 = vshrl.u32 %v8898, 16
      %v9150 = vrot.slane %v9148, 4
      %v9151 = vor.u32 %v9150, %v9146
      %v9152 = vrot.slane %v9151, 4
      %v9154 = vshll.u32 %v8899, 16
      %v9156 = vrot.slane %v9154, 5
      %v9157 = vsel %vm1276, %v9152, %v9156
      %v9159 = vshrl.u32 %v8900, 16
      %v9161 = vrot.slane %v9159, 4
      %v9162 = vshll.u32 %v8900, 16
      %v9164 = vrot.slane %v9162, 5
      %v9165 = vor.u32 %v9161, %v9164
      %v9166 = vrot.slane %v9165, 4
      %v9168 = vshll.u32 %v8901, 16
      %v9170 = vrot.slane %v9168, 5
      %v9171 = vsel %vm1276, %v9166, %v9170
      %v9172 = vshrl.u32 %v8901, 16
      %v9174 = vrot.slane %v9172, 4
      %v9175 = vor.u32 %v9174, %v9170
      %v9176 = vrot.slane %v9175, 4
      %v9178 = vshll.u32 %v8902, 16
      %v9180 = vrot.slane %v9178, 5
      %v9181 = vsel %vm1276, %v9176, %v9180
      %v9183 = vshrl.u32 %v8903, 16
      %v9185 = vrot.slane %v9183, 4
      %v9186 = vshll.u32 %v8903, 16
      %v9188 = vrot.slane %v9186, 5
      %v9189 = vor.u32 %v9185, %v9188
      %v9190 = vrot.slane %v9189, 4
      %v9192 = vshll.u32 %v8904, 16
      %v9194 = vrot.slane %v9192, 5
      %v9195 = vsel %vm1276, %v9190, %v9194
      %v9196 = vshrl.u32 %v8904, 16
      %v9198 = vrot.slane %v9196, 4
      %v9199 = vor.u32 %v9198, %v9194
      %v9200 = vrot.slane %v9199, 4
      %v9202 = vshll.u32 %v8905, 16
      %v9204 = vrot.slane %v9202, 5
      %v9205 = vsel %vm1276, %v9200, %v9204
      %v9207 = vshrl.u32 %v8906, 16
      %v9209 = vrot.slane %v9207, 4
      %v9210 = vshll.u32 %v8906, 16
      %v9212 = vrot.slane %v9210, 5
      %v9213 = vor.u32 %v9209, %v9212
      %v9214 = vrot.slane %v9213, 4
      %v9216 = vshll.u32 %v8907, 16
      %v9218 = vrot.slane %v9216, 5
      %v9219 = vsel %vm1276, %v9214, %v9218
      %v9220 = vshrl.u32 %v8907, 16
      %v9222 = vrot.slane %v9220, 4
      %v9223 = vor.u32 %v9222, %v9218
      %v9224 = vrot.slane %v9223, 4
      %v9226 = vshll.u32 %v8908, 16
      %v9228 = vrot.slane %v9226, 5
      %v9229 = vsel %vm1276, %v9224, %v9228
      %v9231 = vshrl.u32 %v8909, 16
      %v9233 = vrot.slane %v9231, 4
      %v9234 = vshll.u32 %v8909, 16
      %v9236 = vrot.slane %v9234, 5
      %v9237 = vor.u32 %v9233, %v9236
      %v9238 = vrot.slane %v9237, 4
      %v9240 = vshll.u32 %v8910, 16
      %v9242 = vrot.slane %v9240, 5
      %v9243 = vsel %vm1276, %v9238, %v9242
      %v9244 = vshrl.u32 %v8910, 16
      %v9246 = vrot.slane %v9244, 4
      %v9247 = vor.u32 %v9246, %v9242
      %v9248 = vrot.slane %v9247, 4
      %v9250 = vshll.u32 %v8911, 16
      %v9252 = vrot.slane %v9250, 5
      %v9253 = vsel %vm1276, %v9248, %v9252
      %v9255 = vshrl.u32 %v8912, 16
      %v9257 = vrot.slane %v9255, 4
      %v9258 = vshll.u32 %v8912, 16
      %v9260 = vrot.slane %v9258, 5
      %v9261 = vor.u32 %v9257, %v9260
      %v9262 = vrot.slane %v9261, 4
      %v9264 = vshll.u32 %v8913, 16
      %v9266 = vrot.slane %v9264, 5
      %v9267 = vsel %vm1276, %v9262, %v9266
      %v9268 = vshrl.u32 %v8913, 16
      %v9270 = vrot.slane %v9268, 4
      %v9271 = vor.u32 %v9270, %v9266
      %v9272 = vrot.slane %v9271, 4
      %v9274 = vshll.u32 %v8914, 16
      %v9276 = vrot.slane %v9274, 5
      %v9277 = vsel %vm1276, %v9272, %v9276
      %v9279 = vshrl.u32 %v8915, 16
      %v9281 = vrot.slane %v9279, 4
      %v9282 = vshll.u32 %v8915, 16
      %v9284 = vrot.slane %v9282, 5
      %v9285 = vor.u32 %v9281, %v9284
      %v9286 = vrot.slane %v9285, 4
      %v9288 = vshll.u32 %v8916, 16
      %v9290 = vrot.slane %v9288, 5
      %v9291 = vsel %vm1276, %v9286, %v9290
      %v9292 = vshrl.u32 %v8916, 16
      %v9294 = vrot.slane %v9292, 4
      %v9295 = vor.u32 %v9294, %v9290
      %v9296 = vrot.slane %v9295, 4
      %v9298 = vshll.u32 %v8917, 16
      %v9300 = vrot.slane %v9298, 5
      %v9301 = vsel %vm1276, %v9296, %v9300
      %s9302 = scalar_lea.vmem %s4, 256
      %v9303 = vld [vmem:[%s9302] sm:$0xf]
      %v9304 = vld [vmem:[%s9302 + $0x4] sm:$0xf]
      %v9305 = vld [vmem:[%s9302 + $0x8] sm:$0xf]
      %v9306 = vld [vmem:[%s9302 + $0xc] sm:$0xf]
      %v9307 = vld [vmem:[%s9302 + $0x10] sm:$0xf]
      %v9308 = vld [vmem:[%s9302 + $0x14] sm:$0xf]
      %v9309 = vld [vmem:[%s9302 + $0x18] sm:$0xf]
      %v9310 = vld [vmem:[%s9302 + $0x1c] sm:$0xf]
      %v9311 = vld [vmem:[%s9302 + $0x20] sm:$0xf]
      %v9312 = vld [vmem:[%s9302 + $0x24] sm:$0xf]
      %v9313 = vld [vmem:[%s9302 + $0x28] sm:$0xf]
      %v9314 = vld [vmem:[%s9302 + $0x2c] sm:$0xf]
      %v9315 = vld [vmem:[%s9302 + $0x30] sm:$0xf]
      %v9316 = vld [vmem:[%s9302 + $0x34] sm:$0xf]
      %v9317 = vld [vmem:[%s9302 + $0x38] sm:$0xf]
      %v9318 = vld [vmem:[%s9302 + $0x3c] sm:$0xf]
      %v9319 = vunpack.c.l.b16 %v8931
      %v9320 = vunpack.c.l.b16 %v8941
      %v9321 = vunpack.c.l.b16 %v8955
      %v9322 = vunpack.c.l.b16 %v8965
      %v9323 = vunpack.c.l.b16 %v8979
      %v9324 = vunpack.c.l.b16 %v8989
      %v9325 = vunpack.c.l.b16 %v9003
      %v9326 = vunpack.c.l.b16 %v9013
      %v9327 = vunpack.c.l.b16 %v9027
      %v9328 = vunpack.c.l.b16 %v9037
      %v9329 = vunpack.c.l.b16 %v9051
      %v9330 = vunpack.c.l.b16 %v9061
      %v9331 = vunpack.c.l.b16 %v9075
      %v9332 = vunpack.c.l.b16 %v9085
      %v9333 = vunpack.c.l.b16 %v9099
      %v9334 = vunpack.c.l.b16 %v9109
      %v9335 = vunpack.c.l.b16 %v9123
      %v9336 = vunpack.c.l.b16 %v9133
      %v9337 = vunpack.c.l.b16 %v9147
      %v9338 = vunpack.c.l.b16 %v9157
      %v9339 = vunpack.c.l.b16 %v9171
      %v9340 = vunpack.c.l.b16 %v9181
      %v9341 = vunpack.c.l.b16 %v9195
      %v9342 = vunpack.c.l.b16 %v9205
      %v9343 = vunpack.c.l.b16 %v9219
      %v9344 = vunpack.c.l.b16 %v9229
      %v9345 = vunpack.c.l.b16 %v9243
      %v9346 = vunpack.c.l.b16 %v9253
      %v9347 = vunpack.c.l.b16 %v9267
      %v9348 = vunpack.c.l.b16 %v9277
      %v9349 = vunpack.c.l.b16 %v9291
      %v9350 = vunpack.c.l.b16 %v9301
      %v9351 = vpack.c.b16 %v9320, %v9319
      %v9352 = vpack.c.b16 %v9322, %v9321
      %v9353 = vpack.c.b16 %v9324, %v9323
      %v9354 = vpack.c.b16 %v9326, %v9325
      %v9355 = vpack.c.b16 %v9328, %v9327
      %v9356 = vpack.c.b16 %v9330, %v9329
      %v9357 = vpack.c.b16 %v9332, %v9331
      %v9358 = vpack.c.b16 %v9334, %v9333
      %v9359 = vpack.c.b16 %v9336, %v9335
      %v9360 = vpack.c.b16 %v9338, %v9337
      %v9361 = vpack.c.b16 %v9340, %v9339
      %v9362 = vpack.c.b16 %v9342, %v9341
      %v9363 = vpack.c.b16 %v9344, %v9343
      %v9364 = vpack.c.b16 %v9346, %v9345
      %v9365 = vpack.c.b16 %v9348, %v9347
      %v9366 = vpack.c.b16 %v9350, %v9349
      %v9399 = vunpack.c.l.b16 %v9303
      %v9400 = vunpack.c.l.b16 %v9304
      %v9401 = vunpack.c.l.b16 %v9305
      %v9402 = vunpack.c.l.b16 %v9306
      %v9403 = vunpack.c.l.b16 %v9307
      %v9404 = vunpack.c.l.b16 %v9308
      %v9405 = vunpack.c.l.b16 %v9309
      %v9406 = vunpack.c.l.b16 %v9310
      %v9407 = vunpack.c.l.b16 %v9311
      %v9408 = vunpack.c.l.b16 %v9312
      %v9409 = vunpack.c.l.b16 %v9313
      %v9410 = vunpack.c.l.b16 %v9314
      %v9411 = vunpack.c.l.b16 %v9315
      %v9412 = vunpack.c.l.b16 %v9316
      %v9413 = vunpack.c.l.b16 %v9317
      %v9414 = vunpack.c.l.b16 %v9318
      %v9415 = vpack.c.b16 %v9400, %v9399
      %v9416 = vpack.c.b16 %v9402, %v9401
      %v9417 = vpack.c.b16 %v9404, %v9403
      %v9418 = vpack.c.b16 %v9406, %v9405
      %v9419 = vpack.c.b16 %v9408, %v9407
      %v9420 = vpack.c.b16 %v9410, %v9409
      %v9421 = vpack.c.b16 %v9412, %v9411
      %v9422 = vpack.c.b16 %v9414, %v9413
      %9431 = vmatprep.subr.bf16.mxu0 0
      %9432 = vmatpush1.bf16.msra.mxu0 %v9422
      %9433 = vmatprep.subr.bf16.mxu0 0
      %9434 = vmatpush1.bf16.msra.mxu0 %v9421
      %9435 = vmatprep.subr.bf16.mxu0 0
      %9436 = vmatpush1.bf16.msra.mxu0 %v9420
      %9437 = vmatprep.subr.bf16.mxu0 0
      %9438 = vmatpush1.bf16.msra.mxu0 %v9419
      %9439 = vmatprep.subr.bf16.mxu0 0
      %9440 = vmatpush1.bf16.msra.mxu0 %v9418
      %9441 = vmatprep.subr.bf16.mxu0 0
      %9442 = vmatpush1.bf16.msra.mxu0 %v9417
      %9443 = vmatprep.subr.bf16.mxu0 0
      %9444 = vmatpush1.bf16.msra.mxu0 %v9416
      %9445 = vmatprep.subr.bf16.mxu0 0
      %9446 = vmatpush1.bf16.msra.mxu0 %v9415
      %9447 = vmatprep.subr.bf16.mxu0 0
      %9448 = vmatpush2.bf16.msra.mxu0 0
      %9449 = vmatprep.subr.bf16.mxu0 0
      %9450 = vmatpush2.bf16.msra.mxu0 0
      %9451 = vmatprep.subr.bf16.mxu0 0
      %9452 = vmatpush2.bf16.msra.mxu0 0
      %9453 = vmatprep.subr.bf16.mxu0 0
      %9454 = vmatpush2.bf16.msra.mxu0 0
      %9455 = vmatprep.subr.bf16.mxu0 0
      %9456 = vmatpush2.bf16.msra.mxu0 0
      %9457 = vmatprep.subr.bf16.mxu0 0
      %9458 = vmatpush2.bf16.msra.mxu0 0
      %9459 = vmatprep.subr.bf16.mxu0 0
      %9460 = vmatpush2.bf16.msra.mxu0 0
      %9461 = vmatprep.subr.bf16.mxu0 0
      %9462 = vmatpush2.bf16.msra.mxu0 0
      %9463 = vmatprep.mubr.bf16.mxu0 0
      %9464 = vmatmul.mubr.bf16.gmra.mxu0 %v9351
      %v9465 = vpop.f32.mrf.mxu0
      %v9466 = vadd.f32 0.0, %v9465
      %v9467 = vpop.f32.mrf.mxu0
      %v9468 = vpop.f32.mrf.mxu0
      %v9469 = vadd.f32 0.0, %v9468
      %v9470 = vpop.f32.mrf.mxu0
      %9471 = vmatprep.mubr.bf16.mxu0 0
      %9472 = vmatmul.mubr.bf16.gmra.mxu0 %v9352
      %v9473 = vpop.f32.mrf.mxu0
      %v9474 = vadd.f32 0.0, %v9473
      %v9475 = vpop.f32.mrf.mxu0
      %v9476 = vpop.f32.mrf.mxu0
      %v9477 = vadd.f32 0.0, %v9476
      %v9478 = vpop.f32.mrf.mxu0
      %9479 = vmatprep.mubr.bf16.mxu0 0
      %9480 = vmatmul.mubr.bf16.gmra.mxu0 %v9353
      %v9481 = vpop.f32.mrf.mxu0
      %v9482 = vadd.f32 0.0, %v9481
      %v9483 = vpop.f32.mrf.mxu0
      %v9484 = vpop.f32.mrf.mxu0
      %v9485 = vadd.f32 0.0, %v9484
      %v9486 = vpop.f32.mrf.mxu0
      %9487 = vmatprep.mubr.bf16.mxu0 0
      %9488 = vmatmul.mubr.bf16.gmra.mxu0 %v9354
      %v9489 = vpop.f32.mrf.mxu0
      %v9490 = vadd.f32 0.0, %v9489
      %v9491 = vpop.f32.mrf.mxu0
      %v9492 = vpop.f32.mrf.mxu0
      %v9493 = vadd.f32 0.0, %v9492
      %v9494 = vpop.f32.mrf.mxu0
      %9495 = vmatprep.mubr.bf16.mxu0 0
      %9496 = vmatmul.mubr.bf16.gmra.mxu0 %v9355
      %v9497 = vpop.f32.mrf.mxu0
      %v9498 = vadd.f32 0.0, %v9497
      %v9499 = vpop.f32.mrf.mxu0
      %v9500 = vpop.f32.mrf.mxu0
      %v9501 = vadd.f32 0.0, %v9500
      %v9502 = vpop.f32.mrf.mxu0
      %9503 = vmatprep.mubr.bf16.mxu0 0
      %9504 = vmatmul.mubr.bf16.gmra.mxu0 %v9356
      %v9505 = vpop.f32.mrf.mxu0
      %v9506 = vadd.f32 0.0, %v9505
      %v9507 = vpop.f32.mrf.mxu0
      %v9508 = vpop.f32.mrf.mxu0
      %v9509 = vadd.f32 0.0, %v9508
      %v9510 = vpop.f32.mrf.mxu0
      %9511 = vmatprep.mubr.bf16.mxu0 0
      %9512 = vmatmul.mubr.bf16.gmra.mxu0 %v9357
      %v9513 = vpop.f32.mrf.mxu0
      %v9514 = vadd.f32 0.0, %v9513
      %v9515 = vpop.f32.mrf.mxu0
      %v9516 = vpop.f32.mrf.mxu0
      %v9517 = vadd.f32 0.0, %v9516
      %v9518 = vpop.f32.mrf.mxu0
      %9519 = vmatprep.mubr.bf16.mxu0 0
      %9520 = vmatmul.mubr.bf16.gmra.mxu0 %v9358
      %v9521 = vpop.f32.mrf.mxu0
      %v9522 = vadd.f32 0.0, %v9521
      %v9523 = vpop.f32.mrf.mxu0
      %v9524 = vpop.f32.mrf.mxu0
      %v9525 = vadd.f32 0.0, %v9524
      %v9526 = vpop.f32.mrf.mxu0
      %9527 = vmatprep.mubr.bf16.mxu0 0
      %9528 = vmatmul.mubr.bf16.gmra.mxu0 %v9359
      %v9529 = vpop.f32.mrf.mxu0
      %v9530 = vadd.f32 0.0, %v9529
      %v9531 = vpop.f32.mrf.mxu0
      %v9532 = vpop.f32.mrf.mxu0
      %v9533 = vadd.f32 0.0, %v9532
      %v9534 = vpop.f32.mrf.mxu0
      %9535 = vmatprep.mubr.bf16.mxu0 0
      %9536 = vmatmul.mubr.bf16.gmra.mxu0 %v9360
      %v9537 = vpop.f32.mrf.mxu0
      %v9538 = vadd.f32 0.0, %v9537
      %v9539 = vpop.f32.mrf.mxu0
      %v9540 = vpop.f32.mrf.mxu0
      %v9541 = vadd.f32 0.0, %v9540
      %v9542 = vpop.f32.mrf.mxu0
      %9543 = vmatprep.mubr.bf16.mxu0 0
      %9544 = vmatmul.mubr.bf16.gmra.mxu0 %v9361
      %v9545 = vpop.f32.mrf.mxu0
      %v9546 = vadd.f32 0.0, %v9545
      %v9547 = vpop.f32.mrf.mxu0
      %v9548 = vpop.f32.mrf.mxu0
      %v9549 = vadd.f32 0.0, %v9548
      %v9550 = vpop.f32.mrf.mxu0
      %9551 = vmatprep.mubr.bf16.mxu0 0
      %9552 = vmatmul.mubr.bf16.gmra.mxu0 %v9362
      %v9553 = vpop.f32.mrf.mxu0
      %v9554 = vadd.f32 0.0, %v9553
      %v9555 = vpop.f32.mrf.mxu0
      %v9556 = vpop.f32.mrf.mxu0
      %v9557 = vadd.f32 0.0, %v9556
      %v9558 = vpop.f32.mrf.mxu0
      %9559 = vmatprep.mubr.bf16.mxu0 0
      %9560 = vmatmul.mubr.bf16.gmra.mxu0 %v9363
      %v9561 = vpop.f32.mrf.mxu0
      %v9562 = vadd.f32 0.0, %v9561
      %v9563 = vpop.f32.mrf.mxu0
      %v9564 = vpop.f32.mrf.mxu0
      %v9565 = vadd.f32 0.0, %v9564
      %v9566 = vpop.f32.mrf.mxu0
      %9567 = vmatprep.mubr.bf16.mxu0 0
      %9568 = vmatmul.mubr.bf16.gmra.mxu0 %v9364
      %v9569 = vpop.f32.mrf.mxu0
      %v9570 = vadd.f32 0.0, %v9569
      %v9571 = vpop.f32.mrf.mxu0
      %v9572 = vpop.f32.mrf.mxu0
      %v9573 = vadd.f32 0.0, %v9572
      %v9574 = vpop.f32.mrf.mxu0
      %9575 = vmatprep.mubr.bf16.mxu0 0
      %9576 = vmatmul.mubr.bf16.gmra.mxu0 %v9365
      %v9577 = vpop.f32.mrf.mxu0
      %v9578 = vadd.f32 0.0, %v9577
      %v9579 = vpop.f32.mrf.mxu0
      %v9580 = vpop.f32.mrf.mxu0
      %v9581 = vadd.f32 0.0, %v9580
      %v9582 = vpop.f32.mrf.mxu0
      %9583 = vmatprep.mubr.bf16.mxu0 0
      %9584 = vmatmul.mubr.bf16.gmra.mxu0 %v9366
      %v9585 = vpop.f32.mrf.mxu0
      %v9586 = vadd.f32 0.0, %v9585
      %v9587 = vpop.f32.mrf.mxu0
      %v9588 = vpop.f32.mrf.mxu0
      %v9589 = vadd.f32 0.0, %v9588
      %v9590 = vpop.f32.mrf.mxu0
      %9591 = vdwg.mxu0
      %v9592 = vadd.f32 %v8838, %v9466
      %v9593 = vadd.f32 %v8839, %v9469
      %v9594 = vadd.f32 %v8840, %v9474
      %v9595 = vadd.f32 %v8841, %v9477
      %v9596 = vadd.f32 %v8842, %v9482
      %v9597 = vadd.f32 %v8843, %v9485
      %v9598 = vadd.f32 %v8844, %v9490
      %v9599 = vadd.f32 %v8845, %v9493
      %v9600 = vadd.f32 %v8846, %v9498
      %v9601 = vadd.f32 %v8847, %v9501
      %v9602 = vadd.f32 %v8848, %v9506
      %v9603 = vadd.f32 %v8849, %v9509
      %v9604 = vadd.f32 %v8850, %v9514
      %v9605 = vadd.f32 %v8851, %v9517
      %v9606 = vadd.f32 %v8852, %v9522
      %v9607 = vadd.f32 %v8853, %v9525
      %v9608 = vadd.f32 %v8854, %v9530
      %v9609 = vadd.f32 %v8855, %v9533
      %v9610 = vadd.f32 %v8856, %v9538
      %v9611 = vadd.f32 %v8857, %v9541
      %v9612 = vadd.f32 %v8858, %v9546
      %v9613 = vadd.f32 %v8859, %v9549
      %v9614 = vadd.f32 %v8860, %v9554
      %v9615 = vadd.f32 %v8861, %v9557
      %v9616 = vadd.f32 %v8862, %v9562
      %v9617 = vadd.f32 %v8863, %v9565
      %v9618 = vadd.f32 %v8864, %v9570
      %v9619 = vadd.f32 %v8865, %v9573
      %v9620 = vadd.f32 %v8866, %v9578
      %v9621 = vadd.f32 %v8867, %v9581
      %v9622 = vadd.f32 %v8868, %v9586
      %v9623 = vadd.f32 %v8869, %v9589
      %v9624 = vld [vmem:[%s785] sm:$0xe]
      %v9625 = vld [vmem:[%s785 + $0xc] sm:$0xe]
      %v9626 = vld [vmem:[%s785 + $0x18] sm:$0xe]
      %v9627 = vld [vmem:[%s785 + $0x24] sm:$0xe]
      %v9628 = vld [vmem:[%s785 + $0x30] sm:$0xe]
      %v9629 = vld [vmem:[%s785 + $0x3c] sm:$0xe]
      %v9630 = vld [vmem:[%s785 + $0x48] sm:$0xe]
      %v9631 = vld [vmem:[%s785 + $0x54] sm:$0xe]
      %v9632 = vld [vmem:[%s785 + $0x60] sm:$0xe]
      %v9633 = vld [vmem:[%s785 + $0x6c] sm:$0xe]
      %v9634 = vld [vmem:[%s785 + $0x78] sm:$0xe]
      %v9635 = vld [vmem:[%s785 + $0x84] sm:$0xe]
      %v9636 = vld [vmem:[%s785 + $0x90] sm:$0xe]
      %v9637 = vld [vmem:[%s785 + $0x9c] sm:$0xe]
      %v9638 = vld [vmem:[%s785 + $0xa8] sm:$0xe]
      %v9639 = vld [vmem:[%s785 + $0xb4] sm:$0xe]
      %v9688 = vrot.slane %v9624, 5
      %v9689 = vrot.slane %v9688, 4
      %v9690 = vrot.slane %v8871, 5
      %v9691 = vsel %vm2306, %v9689, %v9690
      %v9692 = vrot.slane %v9690, 4
      %v9693 = vrot.slane %v8872, 5
      %v9694 = vsel %vm2306, %v9692, %v9693
      %v9695 = vrot.slane %v9625, 5
      %v9696 = vrot.slane %v9695, 4
      %v9697 = vrot.slane %v8874, 5
      %v9698 = vsel %vm2306, %v9696, %v9697
      %v9699 = vrot.slane %v9697, 4
      %v9700 = vrot.slane %v8875, 5
      %v9701 = vsel %vm2306, %v9699, %v9700
      %v9702 = vrot.slane %v9626, 5
      %v9703 = vrot.slane %v9702, 4
      %v9704 = vrot.slane %v8877, 5
      %v9705 = vsel %vm2306, %v9703, %v9704
      %v9706 = vrot.slane %v9704, 4
      %v9707 = vrot.slane %v8878, 5
      %v9708 = vsel %vm2306, %v9706, %v9707
      %v9709 = vrot.slane %v9627, 5
      %v9710 = vrot.slane %v9709, 4
      %v9711 = vrot.slane %v8880, 5
      %v9712 = vsel %vm2306, %v9710, %v9711
      %v9713 = vrot.slane %v9711, 4
      %v9714 = vrot.slane %v8881, 5
      %v9715 = vsel %vm2306, %v9713, %v9714
      %v9716 = vrot.slane %v9628, 5
      %v9717 = vrot.slane %v9716, 4
      %v9718 = vrot.slane %v8883, 5
      %v9719 = vsel %vm2306, %v9717, %v9718
      %v9720 = vrot.slane %v9718, 4
      %v9721 = vrot.slane %v8884, 5
      %v9722 = vsel %vm2306, %v9720, %v9721
      %v9723 = vrot.slane %v9629, 5
      %v9724 = vrot.slane %v9723, 4
      %v9725 = vrot.slane %v8886, 5
      %v9726 = vsel %vm2306, %v9724, %v9725
      %v9727 = vrot.slane %v9725, 4
      %v9728 = vrot.slane %v8887, 5
      %v9729 = vsel %vm2306, %v9727, %v9728
      %v9730 = vrot.slane %v9630, 5
      %v9731 = vrot.slane %v9730, 4
      %v9732 = vrot.slane %v8889, 5
      %v9733 = vsel %vm2306, %v9731, %v9732
      %v9734 = vrot.slane %v9732, 4
      %v9735 = vrot.slane %v8890, 5
      %v9736 = vsel %vm2306, %v9734, %v9735
      %v9737 = vrot.slane %v9631, 5
      %v9738 = vrot.slane %v9737, 4
      %v9739 = vrot.slane %v8892, 5
      %v9740 = vsel %vm2306, %v9738, %v9739
      %v9741 = vrot.slane %v9739, 4
      %v9742 = vrot.slane %v8893, 5
      %v9743 = vsel %vm2306, %v9741, %v9742
      %v9744 = vrot.slane %v9632, 5
      %v9745 = vrot.slane %v9744, 4
      %v9746 = vrot.slane %v8895, 5
      %v9747 = vsel %vm2306, %v9745, %v9746
      %v9748 = vrot.slane %v9746, 4
      %v9749 = vrot.slane %v8896, 5
      %v9750 = vsel %vm2306, %v9748, %v9749
      %v9751 = vrot.slane %v9633, 5
      %v9752 = vrot.slane %v9751, 4
      %v9753 = vrot.slane %v8898, 5
      %v9754 = vsel %vm2306, %v9752, %v9753
      %v9755 = vrot.slane %v9753, 4
      %v9756 = vrot.slane %v8899, 5
      %v9757 = vsel %vm2306, %v9755, %v9756
      %v9758 = vrot.slane %v9634, 5
      %v9759 = vrot.slane %v9758, 4
      %v9760 = vrot.slane %v8901, 5
      %v9761 = vsel %vm2306, %v9759, %v9760
      %v9762 = vrot.slane %v9760, 4
      %v9763 = vrot.slane %v8902, 5
      %v9764 = vsel %vm2306, %v9762, %v9763
      %v9765 = vrot.slane %v9635, 5
      %v9766 = vrot.slane %v9765, 4
      %v9767 = vrot.slane %v8904, 5
      %v9768 = vsel %vm2306, %v9766, %v9767
      %v9769 = vrot.slane %v9767, 4
      %v9770 = vrot.slane %v8905, 5
      %v9771 = vsel %vm2306, %v9769, %v9770
      %v9772 = vrot.slane %v9636, 5
      %v9773 = vrot.slane %v9772, 4
      %v9774 = vrot.slane %v8907, 5
      %v9775 = vsel %vm2306, %v9773, %v9774
      %v9776 = vrot.slane %v9774, 4
      %v9777 = vrot.slane %v8908, 5
      %v9778 = vsel %vm2306, %v9776, %v9777
      %v9779 = vrot.slane %v9637, 5
      %v9780 = vrot.slane %v9779, 4
      %v9781 = vrot.slane %v8910, 5
      %v9782 = vsel %vm2306, %v9780, %v9781
      %v9783 = vrot.slane %v9781, 4
      %v9784 = vrot.slane %v8911, 5
      %v9785 = vsel %vm2306, %v9783, %v9784
      %v9786 = vrot.slane %v9638, 5
      %v9787 = vrot.slane %v9786, 4
      %v9788 = vrot.slane %v8913, 5
      %v9789 = vsel %vm2306, %v9787, %v9788
      %v9790 = vrot.slane %v9788, 4
      %v9791 = vrot.slane %v8914, 5
      %v9792 = vsel %vm2306, %v9790, %v9791
      %v9793 = vrot.slane %v9639, 5
      %v9794 = vrot.slane %v9793, 4
      %v9795 = vrot.slane %v8916, 5
      %v9796 = vsel %vm2306, %v9794, %v9795
      %v9797 = vrot.slane %v9795, 4
      %v9798 = vrot.slane %v8917, 5
      %v9799 = vsel %vm2306, %v9797, %v9798
      %s9800 = scalar_lea.vmem %s4, 320
      %v9801 = vld [vmem:[%s9800] sm:$0xf]
      %v9802 = vld [vmem:[%s9800 + $0x4] sm:$0xf]
      %v9803 = vld [vmem:[%s9800 + $0x8] sm:$0xf]
      %v9804 = vld [vmem:[%s9800 + $0xc] sm:$0xf]
      %v9805 = vld [vmem:[%s9800 + $0x10] sm:$0xf]
      %v9806 = vld [vmem:[%s9800 + $0x14] sm:$0xf]
      %v9807 = vld [vmem:[%s9800 + $0x18] sm:$0xf]
      %v9808 = vld [vmem:[%s9800 + $0x1c] sm:$0xf]
      %v9809 = vld [vmem:[%s9800 + $0x20] sm:$0xf]
      %v9810 = vld [vmem:[%s9800 + $0x24] sm:$0xf]
      %v9811 = vld [vmem:[%s9800 + $0x28] sm:$0xf]
      %v9812 = vld [vmem:[%s9800 + $0x2c] sm:$0xf]
      %v9813 = vld [vmem:[%s9800 + $0x30] sm:$0xf]
      %v9814 = vld [vmem:[%s9800 + $0x34] sm:$0xf]
      %v9815 = vld [vmem:[%s9800 + $0x38] sm:$0xf]
      %v9816 = vld [vmem:[%s9800 + $0x3c] sm:$0xf]
      %v9817 = vunpack.c.l.b16 %v9691
      %v9818 = vunpack.c.l.b16 %v9694
      %v9819 = vunpack.c.l.b16 %v9698
      %v9820 = vunpack.c.l.b16 %v9701
      %v9821 = vunpack.c.l.b16 %v9705
      %v9822 = vunpack.c.l.b16 %v9708
      %v9823 = vunpack.c.l.b16 %v9712
      %v9824 = vunpack.c.l.b16 %v9715
      %v9825 = vunpack.c.l.b16 %v9719
      %v9826 = vunpack.c.l.b16 %v9722
      %v9827 = vunpack.c.l.b16 %v9726
      %v9828 = vunpack.c.l.b16 %v9729
      %v9829 = vunpack.c.l.b16 %v9733
      %v9830 = vunpack.c.l.b16 %v9736
      %v9831 = vunpack.c.l.b16 %v9740
      %v9832 = vunpack.c.l.b16 %v9743
      %v9833 = vunpack.c.l.b16 %v9747
      %v9834 = vunpack.c.l.b16 %v9750
      %v9835 = vunpack.c.l.b16 %v9754
      %v9836 = vunpack.c.l.b16 %v9757
      %v9837 = vunpack.c.l.b16 %v9761
      %v9838 = vunpack.c.l.b16 %v9764
      %v9839 = vunpack.c.l.b16 %v9768
      %v9840 = vunpack.c.l.b16 %v9771
      %v9841 = vunpack.c.l.b16 %v9775
      %v9842 = vunpack.c.l.b16 %v9778
      %v9843 = vunpack.c.l.b16 %v9782
      %v9844 = vunpack.c.l.b16 %v9785
      %v9845 = vunpack.c.l.b16 %v9789
      %v9846 = vunpack.c.l.b16 %v9792
      %v9847 = vunpack.c.l.b16 %v9796
      %v9848 = vunpack.c.l.b16 %v9799
      %v9849 = vpack.c.b16 %v9818, %v9817
      %v9850 = vpack.c.b16 %v9820, %v9819
      %v9851 = vpack.c.b16 %v9822, %v9821
      %v9852 = vpack.c.b16 %v9824, %v9823
      %v9853 = vpack.c.b16 %v9826, %v9825
      %v9854 = vpack.c.b16 %v9828, %v9827
      %v9855 = vpack.c.b16 %v9830, %v9829
      %v9856 = vpack.c.b16 %v9832, %v9831
      %v9857 = vpack.c.b16 %v9834, %v9833
      %v9858 = vpack.c.b16 %v9836, %v9835
      %v9859 = vpack.c.b16 %v9838, %v9837
      %v9860 = vpack.c.b16 %v9840, %v9839
      %v9861 = vpack.c.b16 %v9842, %v9841
      %v9862 = vpack.c.b16 %v9844, %v9843
      %v9863 = vpack.c.b16 %v9846, %v9845
      %v9864 = vpack.c.b16 %v9848, %v9847
      %v9897 = vunpack.c.l.b16 %v9801
      %v9898 = vunpack.c.l.b16 %v9802
      %v9899 = vunpack.c.l.b16 %v9803
      %v9900 = vunpack.c.l.b16 %v9804
      %v9901 = vunpack.c.l.b16 %v9805
      %v9902 = vunpack.c.l.b16 %v9806
      %v9903 = vunpack.c.l.b16 %v9807
      %v9904 = vunpack.c.l.b16 %v9808
      %v9905 = vunpack.c.l.b16 %v9809
      %v9906 = vunpack.c.l.b16 %v9810
      %v9907 = vunpack.c.l.b16 %v9811
      %v9908 = vunpack.c.l.b16 %v9812
      %v9909 = vunpack.c.l.b16 %v9813
      %v9910 = vunpack.c.l.b16 %v9814
      %v9911 = vunpack.c.l.b16 %v9815
      %v9912 = vunpack.c.l.b16 %v9816
      %v9913 = vpack.c.b16 %v9898, %v9897
      %v9914 = vpack.c.b16 %v9900, %v9899
      %v9915 = vpack.c.b16 %v9902, %v9901
      %v9916 = vpack.c.b16 %v9904, %v9903
      %v9917 = vpack.c.b16 %v9906, %v9905
      %v9918 = vpack.c.b16 %v9908, %v9907
      %v9919 = vpack.c.b16 %v9910, %v9909
      %v9920 = vpack.c.b16 %v9912, %v9911
      %9929 = vmatprep.subr.bf16.mxu0 0
      %9930 = vmatpush1.bf16.msra.mxu0 %v9920
      %9931 = vmatprep.subr.bf16.mxu0 0
      %9932 = vmatpush1.bf16.msra.mxu0 %v9919
      %9933 = vmatprep.subr.bf16.mxu0 0
      %9934 = vmatpush1.bf16.msra.mxu0 %v9918
      %9935 = vmatprep.subr.bf16.mxu0 0
      %9936 = vmatpush1.bf16.msra.mxu0 %v9917
      %9937 = vmatprep.subr.bf16.mxu0 0
      %9938 = vmatpush1.bf16.msra.mxu0 %v9916
      %9939 = vmatprep.subr.bf16.mxu0 0
      %9940 = vmatpush1.bf16.msra.mxu0 %v9915
      %9941 = vmatprep.subr.bf16.mxu0 0
      %9942 = vmatpush1.bf16.msra.mxu0 %v9914
      %9943 = vmatprep.subr.bf16.mxu0 0
      %9944 = vmatpush1.bf16.msra.mxu0 %v9913
      %9945 = vmatprep.subr.bf16.mxu0 0
      %9946 = vmatpush2.bf16.msra.mxu0 0
      %9947 = vmatprep.subr.bf16.mxu0 0
      %9948 = vmatpush2.bf16.msra.mxu0 0
      %9949 = vmatprep.subr.bf16.mxu0 0
      %9950 = vmatpush2.bf16.msra.mxu0 0
      %9951 = vmatprep.subr.bf16.mxu0 0
      %9952 = vmatpush2.bf16.msra.mxu0 0
      %9953 = vmatprep.subr.bf16.mxu0 0
      %9954 = vmatpush2.bf16.msra.mxu0 0
      %9955 = vmatprep.subr.bf16.mxu0 0
      %9956 = vmatpush2.bf16.msra.mxu0 0
      %9957 = vmatprep.subr.bf16.mxu0 0
      %9958 = vmatpush2.bf16.msra.mxu0 0
      %9959 = vmatprep.subr.bf16.mxu0 0
      %9960 = vmatpush2.bf16.msra.mxu0 0
      %9961 = vmatprep.mubr.bf16.mxu0 0
      %9962 = vmatmul.mubr.bf16.gmra.mxu0 %v9849
      %v9963 = vpop.f32.mrf.mxu0
      %v9964 = vadd.f32 0.0, %v9963
      %v9965 = vpop.f32.mrf.mxu0
      %v9966 = vpop.f32.mrf.mxu0
      %v9967 = vadd.f32 0.0, %v9966
      %v9968 = vpop.f32.mrf.mxu0
      %9969 = vmatprep.mubr.bf16.mxu0 0
      %9970 = vmatmul.mubr.bf16.gmra.mxu0 %v9850
      %v9971 = vpop.f32.mrf.mxu0
      %v9972 = vadd.f32 0.0, %v9971
      %v9973 = vpop.f32.mrf.mxu0
      %v9974 = vpop.f32.mrf.mxu0
      %v9975 = vadd.f32 0.0, %v9974
      %v9976 = vpop.f32.mrf.mxu0
      %9977 = vmatprep.mubr.bf16.mxu0 0
      %9978 = vmatmul.mubr.bf16.gmra.mxu0 %v9851
      %v9979 = vpop.f32.mrf.mxu0
      %v9980 = vadd.f32 0.0, %v9979
      %v9981 = vpop.f32.mrf.mxu0
      %v9982 = vpop.f32.mrf.mxu0
      %v9983 = vadd.f32 0.0, %v9982
      %v9984 = vpop.f32.mrf.mxu0
      %9985 = vmatprep.mubr.bf16.mxu0 0
      %9986 = vmatmul.mubr.bf16.gmra.mxu0 %v9852
      %v9987 = vpop.f32.mrf.mxu0
      %v9988 = vadd.f32 0.0, %v9987
      %v9989 = vpop.f32.mrf.mxu0
      %v9990 = vpop.f32.mrf.mxu0
      %v9991 = vadd.f32 0.0, %v9990
      %v9992 = vpop.f32.mrf.mxu0
      %9993 = vmatprep.mubr.bf16.mxu0 0
      %9994 = vmatmul.mubr.bf16.gmra.mxu0 %v9853
      %v9995 = vpop.f32.mrf.mxu0
      %v9996 = vadd.f32 0.0, %v9995
      %v9997 = vpop.f32.mrf.mxu0
      %v9998 = vpop.f32.mrf.mxu0
      %v9999 = vadd.f32 0.0, %v9998
      %v10000 = vpop.f32.mrf.mxu0
      %10001 = vmatprep.mubr.bf16.mxu0 0
      %10002 = vmatmul.mubr.bf16.gmra.mxu0 %v9854
      %v10003 = vpop.f32.mrf.mxu0
      %v10004 = vadd.f32 0.0, %v10003
      %v10005 = vpop.f32.mrf.mxu0
      %v10006 = vpop.f32.mrf.mxu0
      %v10007 = vadd.f32 0.0, %v10006
      %v10008 = vpop.f32.mrf.mxu0
      %10009 = vmatprep.mubr.bf16.mxu0 0
      %10010 = vmatmul.mubr.bf16.gmra.mxu0 %v9855
      %v10011 = vpop.f32.mrf.mxu0
      %v10012 = vadd.f32 0.0, %v10011
      %v10013 = vpop.f32.mrf.mxu0
      %v10014 = vpop.f32.mrf.mxu0
      %v10015 = vadd.f32 0.0, %v10014
      %v10016 = vpop.f32.mrf.mxu0
      %10017 = vmatprep.mubr.bf16.mxu0 0
      %10018 = vmatmul.mubr.bf16.gmra.mxu0 %v9856
      %v10019 = vpop.f32.mrf.mxu0
      %v10020 = vadd.f32 0.0, %v10019
      %v10021 = vpop.f32.mrf.mxu0
      %v10022 = vpop.f32.mrf.mxu0
      %v10023 = vadd.f32 0.0, %v10022
      %v10024 = vpop.f32.mrf.mxu0
      %10025 = vmatprep.mubr.bf16.mxu0 0
      %10026 = vmatmul.mubr.bf16.gmra.mxu0 %v9857
      %v10027 = vpop.f32.mrf.mxu0
      %v10028 = vadd.f32 0.0, %v10027
      %v10029 = vpop.f32.mrf.mxu0
      %v10030 = vpop.f32.mrf.mxu0
      %v10031 = vadd.f32 0.0, %v10030
      %v10032 = vpop.f32.mrf.mxu0
      %10033 = vmatprep.mubr.bf16.mxu0 0
      %10034 = vmatmul.mubr.bf16.gmra.mxu0 %v9858
      %v10035 = vpop.f32.mrf.mxu0
      %v10036 = vadd.f32 0.0, %v10035
      %v10037 = vpop.f32.mrf.mxu0
      %v10038 = vpop.f32.mrf.mxu0
      %v10039 = vadd.f32 0.0, %v10038
      %v10040 = vpop.f32.mrf.mxu0
      %10041 = vmatprep.mubr.bf16.mxu0 0
      %10042 = vmatmul.mubr.bf16.gmra.mxu0 %v9859
      %v10043 = vpop.f32.mrf.mxu0
      %v10044 = vadd.f32 0.0, %v10043
      %v10045 = vpop.f32.mrf.mxu0
      %v10046 = vpop.f32.mrf.mxu0
      %v10047 = vadd.f32 0.0, %v10046
      %v10048 = vpop.f32.mrf.mxu0
      %10049 = vmatprep.mubr.bf16.mxu0 0
      %10050 = vmatmul.mubr.bf16.gmra.mxu0 %v9860
      %v10051 = vpop.f32.mrf.mxu0
      %v10052 = vadd.f32 0.0, %v10051
      %v10053 = vpop.f32.mrf.mxu0
      %v10054 = vpop.f32.mrf.mxu0
      %v10055 = vadd.f32 0.0, %v10054
      %v10056 = vpop.f32.mrf.mxu0
      %10057 = vmatprep.mubr.bf16.mxu0 0
      %10058 = vmatmul.mubr.bf16.gmra.mxu0 %v9861
      %v10059 = vpop.f32.mrf.mxu0
      %v10060 = vadd.f32 0.0, %v10059
      %v10061 = vpop.f32.mrf.mxu0
      %v10062 = vpop.f32.mrf.mxu0
      %v10063 = vadd.f32 0.0, %v10062
      %v10064 = vpop.f32.mrf.mxu0
      %10065 = vmatprep.mubr.bf16.mxu0 0
      %10066 = vmatmul.mubr.bf16.gmra.mxu0 %v9862
      %v10067 = vpop.f32.mrf.mxu0
      %v10068 = vadd.f32 0.0, %v10067
      %v10069 = vpop.f32.mrf.mxu0
      %v10070 = vpop.f32.mrf.mxu0
      %v10071 = vadd.f32 0.0, %v10070
      %v10072 = vpop.f32.mrf.mxu0
      %10073 = vmatprep.mubr.bf16.mxu0 0
      %10074 = vmatmul.mubr.bf16.gmra.mxu0 %v9863
      %v10075 = vpop.f32.mrf.mxu0
      %v10076 = vadd.f32 0.0, %v10075
      %v10077 = vpop.f32.mrf.mxu0
      %v10078 = vpop.f32.mrf.mxu0
      %v10079 = vadd.f32 0.0, %v10078
      %v10080 = vpop.f32.mrf.mxu0
      %10081 = vmatprep.mubr.bf16.mxu0 0
      %10082 = vmatmul.mubr.bf16.gmra.mxu0 %v9864
      %v10083 = vpop.f32.mrf.mxu0
      %v10084 = vadd.f32 0.0, %v10083
      %v10085 = vpop.f32.mrf.mxu0
      %v10086 = vpop.f32.mrf.mxu0
      %v10087 = vadd.f32 0.0, %v10086
      %v10088 = vpop.f32.mrf.mxu0
      %10089 = vdwg.mxu0
      %v10090 = vadd.f32 %v9592, %v9964
      %v10091 = vadd.f32 %v9593, %v9967
      %v10092 = vadd.f32 %v9594, %v9972
      %v10093 = vadd.f32 %v9595, %v9975
      %v10094 = vadd.f32 %v9596, %v9980
      %v10095 = vadd.f32 %v9597, %v9983
      %v10096 = vadd.f32 %v9598, %v9988
      %v10097 = vadd.f32 %v9599, %v9991
      %v10098 = vadd.f32 %v9600, %v9996
      %v10099 = vadd.f32 %v9601, %v9999
      %v10100 = vadd.f32 %v9602, %v10004
      %v10101 = vadd.f32 %v9603, %v10007
      %v10102 = vadd.f32 %v9604, %v10012
      %v10103 = vadd.f32 %v9605, %v10015
      %v10104 = vadd.f32 %v9606, %v10020
      %v10105 = vadd.f32 %v9607, %v10023
      %v10106 = vadd.f32 %v9608, %v10028
      %v10107 = vadd.f32 %v9609, %v10031
      %v10108 = vadd.f32 %v9610, %v10036
      %v10109 = vadd.f32 %v9611, %v10039
      %v10110 = vadd.f32 %v9612, %v10044
      %v10111 = vadd.f32 %v9613, %v10047
      %v10112 = vadd.f32 %v9614, %v10052
      %v10113 = vadd.f32 %v9615, %v10055
      %v10114 = vadd.f32 %v9616, %v10060
      %v10115 = vadd.f32 %v9617, %v10063
      %v10116 = vadd.f32 %v9618, %v10068
      %v10117 = vadd.f32 %v9619, %v10071
      %v10118 = vadd.f32 %v9620, %v10076
      %v10119 = vadd.f32 %v9621, %v10079
      %v10120 = vadd.f32 %v9622, %v10084
      %v10121 = vadd.f32 %v9623, %v10087
      %v10122 = vld [vmem:[%s4379] sm:$0xf]
      %v10123 = vld [vmem:[%s4379 + $0x4] sm:$0xf]
      %v10124 = vld [vmem:[%s4379 + $0xc] sm:$0xf]
      %v10125 = vld [vmem:[%s4379 + $0x10] sm:$0xf]
      %v10126 = vld [vmem:[%s4379 + $0x18] sm:$0xf]
      %v10127 = vld [vmem:[%s4379 + $0x1c] sm:$0xf]
      %v10128 = vld [vmem:[%s4379 + $0x24] sm:$0xf]
      %v10129 = vld [vmem:[%s4379 + $0x28] sm:$0xf]
      %v10130 = vld [vmem:[%s4379 + $0x30] sm:$0xf]
      %v10131 = vld [vmem:[%s4379 + $0x34] sm:$0xf]
      %v10132 = vld [vmem:[%s4379 + $0x3c] sm:$0xf]
      %v10133 = vld [vmem:[%s4379 + $0x40] sm:$0xf]
      %v10134 = vld [vmem:[%s4379 + $0x48] sm:$0xf]
      %v10135 = vld [vmem:[%s4379 + $0x4c] sm:$0xf]
      %v10136 = vld [vmem:[%s4379 + $0x54] sm:$0xf]
      %v10137 = vld [vmem:[%s4379 + $0x58] sm:$0xf]
      %v10138 = vld [vmem:[%s4379 + $0x60] sm:$0xf]
      %v10139 = vld [vmem:[%s4379 + $0x64] sm:$0xf]
      %v10140 = vld [vmem:[%s4379 + $0x6c] sm:$0xf]
      %v10141 = vld [vmem:[%s4379 + $0x70] sm:$0xf]
      %v10142 = vld [vmem:[%s4379 + $0x78] sm:$0xf]
      %v10143 = vld [vmem:[%s4379 + $0x7c] sm:$0xf]
      %v10144 = vld [vmem:[%s4379 + $0x84] sm:$0xf]
      %v10145 = vld [vmem:[%s4379 + $0x88] sm:$0xf]
      %v10146 = vld [vmem:[%s4379 + $0x90] sm:$0xf]
      %v10147 = vld [vmem:[%s4379 + $0x94] sm:$0xf]
      %v10148 = vld [vmem:[%s4379 + $0x9c] sm:$0xf]
      %v10149 = vld [vmem:[%s4379 + $0xa0] sm:$0xf]
      %v10150 = vld [vmem:[%s4379 + $0xa8] sm:$0xf]
      %v10151 = vld [vmem:[%s4379 + $0xac] sm:$0xf]
      %v10152 = vld [vmem:[%s4379 + $0xb4] sm:$0xf]
      %v10153 = vld [vmem:[%s4379 + $0xb8] sm:$0xf]
      %s10154 = scalar_lea.vmem %s4, 384
      %v10155 = vld [vmem:[%s10154] sm:$0xf]
      %v10156 = vld [vmem:[%s10154 + $0x4] sm:$0xf]
      %v10157 = vld [vmem:[%s10154 + $0x8] sm:$0xf]
      %v10158 = vld [vmem:[%s10154 + $0xc] sm:$0xf]
      %v10159 = vld [vmem:[%s10154 + $0x10] sm:$0xf]
      %v10160 = vld [vmem:[%s10154 + $0x14] sm:$0xf]
      %v10161 = vld [vmem:[%s10154 + $0x18] sm:$0xf]
      %v10162 = vld [vmem:[%s10154 + $0x1c] sm:$0xf]
      %v10163 = vld [vmem:[%s10154 + $0x20] sm:$0xf]
      %v10164 = vld [vmem:[%s10154 + $0x24] sm:$0xf]
      %v10165 = vld [vmem:[%s10154 + $0x28] sm:$0xf]
      %v10166 = vld [vmem:[%s10154 + $0x2c] sm:$0xf]
      %v10167 = vld [vmem:[%s10154 + $0x30] sm:$0xf]
      %v10168 = vld [vmem:[%s10154 + $0x34] sm:$0xf]
      %v10169 = vld [vmem:[%s10154 + $0x38] sm:$0xf]
      %v10170 = vld [vmem:[%s10154 + $0x3c] sm:$0xf]
      %v10203 = vunpack.c.l.b16 %v10122
      %v10204 = vunpack.c.l.b16 %v10123
      %v10205 = vunpack.c.l.b16 %v10124
      %v10206 = vunpack.c.l.b16 %v10125
      %v10207 = vunpack.c.l.b16 %v10126
      %v10208 = vunpack.c.l.b16 %v10127
      %v10209 = vunpack.c.l.b16 %v10128
      %v10210 = vunpack.c.l.b16 %v10129
      %v10211 = vunpack.c.l.b16 %v10130
      %v10212 = vunpack.c.l.b16 %v10131
      %v10213 = vunpack.c.l.b16 %v10132
      %v10214 = vunpack.c.l.b16 %v10133
      %v10215 = vunpack.c.l.b16 %v10134
      %v10216 = vunpack.c.l.b16 %v10135
      %v10217 = vunpack.c.l.b16 %v10136
      %v10218 = vunpack.c.l.b16 %v10137
      %v10219 = vunpack.c.l.b16 %v10138
      %v10220 = vunpack.c.l.b16 %v10139
      %v10221 = vunpack.c.l.b16 %v10140
      %v10222 = vunpack.c.l.b16 %v10141
      %v10223 = vunpack.c.l.b16 %v10142
      %v10224 = vunpack.c.l.b16 %v10143
      %v10225 = vunpack.c.l.b16 %v10144
      %v10226 = vunpack.c.l.b16 %v10145
      %v10227 = vunpack.c.l.b16 %v10146
      %v10228 = vunpack.c.l.b16 %v10147
      %v10229 = vunpack.c.l.b16 %v10148
      %v10230 = vunpack.c.l.b16 %v10149
      %v10231 = vunpack.c.l.b16 %v10150
      %v10232 = vunpack.c.l.b16 %v10151
      %v10233 = vunpack.c.l.b16 %v10152
      %v10234 = vunpack.c.l.b16 %v10153
      %v10235 = vpack.c.b16 %v10204, %v10203
      %v10236 = vpack.c.b16 %v10206, %v10205
      %v10237 = vpack.c.b16 %v10208, %v10207
      %v10238 = vpack.c.b16 %v10210, %v10209
      %v10239 = vpack.c.b16 %v10212, %v10211
      %v10240 = vpack.c.b16 %v10214, %v10213
      %v10241 = vpack.c.b16 %v10216, %v10215
      %v10242 = vpack.c.b16 %v10218, %v10217
      %v10243 = vpack.c.b16 %v10220, %v10219
      %v10244 = vpack.c.b16 %v10222, %v10221
      %v10245 = vpack.c.b16 %v10224, %v10223
      %v10246 = vpack.c.b16 %v10226, %v10225
      %v10247 = vpack.c.b16 %v10228, %v10227
      %v10248 = vpack.c.b16 %v10230, %v10229
      %v10249 = vpack.c.b16 %v10232, %v10231
      %v10250 = vpack.c.b16 %v10234, %v10233
      %v10283 = vunpack.c.l.b16 %v10155
      %v10284 = vunpack.c.l.b16 %v10156
      %v10285 = vunpack.c.l.b16 %v10157
      %v10286 = vunpack.c.l.b16 %v10158
      %v10287 = vunpack.c.l.b16 %v10159
      %v10288 = vunpack.c.l.b16 %v10160
      %v10289 = vunpack.c.l.b16 %v10161
      %v10290 = vunpack.c.l.b16 %v10162
      %v10291 = vunpack.c.l.b16 %v10163
      %v10292 = vunpack.c.l.b16 %v10164
      %v10293 = vunpack.c.l.b16 %v10165
      %v10294 = vunpack.c.l.b16 %v10166
      %v10295 = vunpack.c.l.b16 %v10167
      %v10296 = vunpack.c.l.b16 %v10168
      %v10297 = vunpack.c.l.b16 %v10169
      %v10298 = vunpack.c.l.b16 %v10170
      %v10299 = vpack.c.b16 %v10284, %v10283
      %v10300 = vpack.c.b16 %v10286, %v10285
      %v10301 = vpack.c.b16 %v10288, %v10287
      %v10302 = vpack.c.b16 %v10290, %v10289
      %v10303 = vpack.c.b16 %v10292, %v10291
      %v10304 = vpack.c.b16 %v10294, %v10293
      %v10305 = vpack.c.b16 %v10296, %v10295
      %v10306 = vpack.c.b16 %v10298, %v10297
      %10315 = vmatprep.subr.bf16.mxu0 0
      %10316 = vmatpush1.bf16.msra.mxu0 %v10306
      %10317 = vmatprep.subr.bf16.mxu0 0
      %10318 = vmatpush1.bf16.msra.mxu0 %v10305
      %10319 = vmatprep.subr.bf16.mxu0 0
      %10320 = vmatpush1.bf16.msra.mxu0 %v10304
      %10321 = vmatprep.subr.bf16.mxu0 0
      %10322 = vmatpush1.bf16.msra.mxu0 %v10303
      %10323 = vmatprep.subr.bf16.mxu0 0
      %10324 = vmatpush1.bf16.msra.mxu0 %v10302
      %10325 = vmatprep.subr.bf16.mxu0 0
      %10326 = vmatpush1.bf16.msra.mxu0 %v10301
      %10327 = vmatprep.subr.bf16.mxu0 0
      %10328 = vmatpush1.bf16.msra.mxu0 %v10300
      %10329 = vmatprep.subr.bf16.mxu0 0
      %10330 = vmatpush1.bf16.msra.mxu0 %v10299
      %10331 = vmatprep.subr.bf16.mxu0 0
      %10332 = vmatpush2.bf16.msra.mxu0 0
      %10333 = vmatprep.subr.bf16.mxu0 0
      %10334 = vmatpush2.bf16.msra.mxu0 0
      %10335 = vmatprep.subr.bf16.mxu0 0
      %10336 = vmatpush2.bf16.msra.mxu0 0
      %10337 = vmatprep.subr.bf16.mxu0 0
      %10338 = vmatpush2.bf16.msra.mxu0 0
      %10339 = vmatprep.subr.bf16.mxu0 0
      %10340 = vmatpush2.bf16.msra.mxu0 0
      %10341 = vmatprep.subr.bf16.mxu0 0
      %10342 = vmatpush2.bf16.msra.mxu0 0
      %10343 = vmatprep.subr.bf16.mxu0 0
      %10344 = vmatpush2.bf16.msra.mxu0 0
      %10345 = vmatprep.subr.bf16.mxu0 0
      %10346 = vmatpush2.bf16.msra.mxu0 0
      %10347 = vmatprep.mubr.bf16.mxu0 0
      %10348 = vmatmul.mubr.bf16.gmra.mxu0 %v10235
      %v10349 = vpop.f32.mrf.mxu0
      %v10350 = vadd.f32 0.0, %v10349
      %v10351 = vpop.f32.mrf.mxu0
      %v10352 = vpop.f32.mrf.mxu0
      %v10353 = vadd.f32 0.0, %v10352
      %v10354 = vpop.f32.mrf.mxu0
      %10355 = vmatprep.mubr.bf16.mxu0 0
      %10356 = vmatmul.mubr.bf16.gmra.mxu0 %v10236
      %v10357 = vpop.f32.mrf.mxu0
      %v10358 = vadd.f32 0.0, %v10357
      %v10359 = vpop.f32.mrf.mxu0
      %v10360 = vpop.f32.mrf.mxu0
      %v10361 = vadd.f32 0.0, %v10360
      %v10362 = vpop.f32.mrf.mxu0
      %10363 = vmatprep.mubr.bf16.mxu0 0
      %10364 = vmatmul.mubr.bf16.gmra.mxu0 %v10237
      %v10365 = vpop.f32.mrf.mxu0
      %v10366 = vadd.f32 0.0, %v10365
      %v10367 = vpop.f32.mrf.mxu0
      %v10368 = vpop.f32.mrf.mxu0
      %v10369 = vadd.f32 0.0, %v10368
      %v10370 = vpop.f32.mrf.mxu0
      %10371 = vmatprep.mubr.bf16.mxu0 0
      %10372 = vmatmul.mubr.bf16.gmra.mxu0 %v10238
      %v10373 = vpop.f32.mrf.mxu0
      %v10374 = vadd.f32 0.0, %v10373
      %v10375 = vpop.f32.mrf.mxu0
      %v10376 = vpop.f32.mrf.mxu0
      %v10377 = vadd.f32 0.0, %v10376
      %v10378 = vpop.f32.mrf.mxu0
      %10379 = vmatprep.mubr.bf16.mxu0 0
      %10380 = vmatmul.mubr.bf16.gmra.mxu0 %v10239
      %v10381 = vpop.f32.mrf.mxu0
      %v10382 = vadd.f32 0.0, %v10381
      %v10383 = vpop.f32.mrf.mxu0
      %v10384 = vpop.f32.mrf.mxu0
      %v10385 = vadd.f32 0.0, %v10384
      %v10386 = vpop.f32.mrf.mxu0
      %10387 = vmatprep.mubr.bf16.mxu0 0
      %10388 = vmatmul.mubr.bf16.gmra.mxu0 %v10240
      %v10389 = vpop.f32.mrf.mxu0
      %v10390 = vadd.f32 0.0, %v10389
      %v10391 = vpop.f32.mrf.mxu0
      %v10392 = vpop.f32.mrf.mxu0
      %v10393 = vadd.f32 0.0, %v10392
      %v10394 = vpop.f32.mrf.mxu0
      %10395 = vmatprep.mubr.bf16.mxu0 0
      %10396 = vmatmul.mubr.bf16.gmra.mxu0 %v10241
      %v10397 = vpop.f32.mrf.mxu0
      %v10398 = vadd.f32 0.0, %v10397
      %v10399 = vpop.f32.mrf.mxu0
      %v10400 = vpop.f32.mrf.mxu0
      %v10401 = vadd.f32 0.0, %v10400
      %v10402 = vpop.f32.mrf.mxu0
      %10403 = vmatprep.mubr.bf16.mxu0 0
      %10404 = vmatmul.mubr.bf16.gmra.mxu0 %v10242
      %v10405 = vpop.f32.mrf.mxu0
      %v10406 = vadd.f32 0.0, %v10405
      %v10407 = vpop.f32.mrf.mxu0
      %v10408 = vpop.f32.mrf.mxu0
      %v10409 = vadd.f32 0.0, %v10408
      %v10410 = vpop.f32.mrf.mxu0
      %10411 = vmatprep.mubr.bf16.mxu0 0
      %10412 = vmatmul.mubr.bf16.gmra.mxu0 %v10243
      %v10413 = vpop.f32.mrf.mxu0
      %v10414 = vadd.f32 0.0, %v10413
      %v10415 = vpop.f32.mrf.mxu0
      %v10416 = vpop.f32.mrf.mxu0
      %v10417 = vadd.f32 0.0, %v10416
      %v10418 = vpop.f32.mrf.mxu0
      %10419 = vmatprep.mubr.bf16.mxu0 0
      %10420 = vmatmul.mubr.bf16.gmra.mxu0 %v10244
      %v10421 = vpop.f32.mrf.mxu0
      %v10422 = vadd.f32 0.0, %v10421
      %v10423 = vpop.f32.mrf.mxu0
      %v10424 = vpop.f32.mrf.mxu0
      %v10425 = vadd.f32 0.0, %v10424
      %v10426 = vpop.f32.mrf.mxu0
      %10427 = vmatprep.mubr.bf16.mxu0 0
      %10428 = vmatmul.mubr.bf16.gmra.mxu0 %v10245
      %v10429 = vpop.f32.mrf.mxu0
      %v10430 = vadd.f32 0.0, %v10429
      %v10431 = vpop.f32.mrf.mxu0
      %v10432 = vpop.f32.mrf.mxu0
      %v10433 = vadd.f32 0.0, %v10432
      %v10434 = vpop.f32.mrf.mxu0
      %10435 = vmatprep.mubr.bf16.mxu0 0
      %10436 = vmatmul.mubr.bf16.gmra.mxu0 %v10246
      %v10437 = vpop.f32.mrf.mxu0
      %v10438 = vadd.f32 0.0, %v10437
      %v10439 = vpop.f32.mrf.mxu0
      %v10440 = vpop.f32.mrf.mxu0
      %v10441 = vadd.f32 0.0, %v10440
      %v10442 = vpop.f32.mrf.mxu0
      %10443 = vmatprep.mubr.bf16.mxu0 0
      %10444 = vmatmul.mubr.bf16.gmra.mxu0 %v10247
      %v10445 = vpop.f32.mrf.mxu0
      %v10446 = vadd.f32 0.0, %v10445
      %v10447 = vpop.f32.mrf.mxu0
      %v10448 = vpop.f32.mrf.mxu0
      %v10449 = vadd.f32 0.0, %v10448
      %v10450 = vpop.f32.mrf.mxu0
      %10451 = vmatprep.mubr.bf16.mxu0 0
      %10452 = vmatmul.mubr.bf16.gmra.mxu0 %v10248
      %v10453 = vpop.f32.mrf.mxu0
      %v10454 = vadd.f32 0.0, %v10453
      %v10455 = vpop.f32.mrf.mxu0
      %v10456 = vpop.f32.mrf.mxu0
      %v10457 = vadd.f32 0.0, %v10456
      %v10458 = vpop.f32.mrf.mxu0
      %10459 = vmatprep.mubr.bf16.mxu0 0
      %10460 = vmatmul.mubr.bf16.gmra.mxu0 %v10249
      %v10461 = vpop.f32.mrf.mxu0
      %v10462 = vadd.f32 0.0, %v10461
      %v10463 = vpop.f32.mrf.mxu0
      %v10464 = vpop.f32.mrf.mxu0
      %v10465 = vadd.f32 0.0, %v10464
      %v10466 = vpop.f32.mrf.mxu0
      %10467 = vmatprep.mubr.bf16.mxu0 0
      %10468 = vmatmul.mubr.bf16.gmra.mxu0 %v10250
      %v10469 = vpop.f32.mrf.mxu0
      %v10470 = vadd.f32 0.0, %v10469
      %v10471 = vpop.f32.mrf.mxu0
      %v10472 = vpop.f32.mrf.mxu0
      %v10473 = vadd.f32 0.0, %v10472
      %v10474 = vpop.f32.mrf.mxu0
      %10475 = vdwg.mxu0
      %v10476 = vadd.f32 %v10090, %v10350
      %v10477 = vadd.f32 %v10091, %v10353
      %v10478 = vadd.f32 %v10092, %v10358
      %v10479 = vadd.f32 %v10093, %v10361
      %v10480 = vadd.f32 %v10094, %v10366
      %v10481 = vadd.f32 %v10095, %v10369
      %v10482 = vadd.f32 %v10096, %v10374
      %v10483 = vadd.f32 %v10097, %v10377
      %v10484 = vadd.f32 %v10098, %v10382
      %v10485 = vadd.f32 %v10099, %v10385
      %v10486 = vadd.f32 %v10100, %v10390
      %v10487 = vadd.f32 %v10101, %v10393
      %v10488 = vadd.f32 %v10102, %v10398
      %v10489 = vadd.f32 %v10103, %v10401
      %v10490 = vadd.f32 %v10104, %v10406
      %v10491 = vadd.f32 %v10105, %v10409
      %v10492 = vadd.f32 %v10106, %v10414
      %v10493 = vadd.f32 %v10107, %v10417
      %v10494 = vadd.f32 %v10108, %v10422
      %v10495 = vadd.f32 %v10109, %v10425
      %v10496 = vadd.f32 %v10110, %v10430
      %v10497 = vadd.f32 %v10111, %v10433
      %v10498 = vadd.f32 %v10112, %v10438
      %v10499 = vadd.f32 %v10113, %v10441
      %v10500 = vadd.f32 %v10114, %v10446
      %v10501 = vadd.f32 %v10115, %v10449
      %v10502 = vadd.f32 %v10116, %v10454
      %v10503 = vadd.f32 %v10117, %v10457
      %v10504 = vadd.f32 %v10118, %v10462
      %v10505 = vadd.f32 %v10119, %v10465
      %v10506 = vadd.f32 %v10120, %v10470
      %v10507 = vadd.f32 %v10121, %v10473
      %v10508 = vld [vmem:[%s4379] sm:$0xf]
      %v10509 = vld [vmem:[%s4379 + $0x4] sm:$0xf]
      %v10510 = vld [vmem:[%s4379 + $0x8] sm:$0x1]
      %v10511 = vld [vmem:[%s4379 + $0xc] sm:$0xf]
      %v10512 = vld [vmem:[%s4379 + $0x10] sm:$0xf]
      %v10513 = vld [vmem:[%s4379 + $0x14] sm:$0x1]
      %v10514 = vld [vmem:[%s4379 + $0x18] sm:$0xf]
      %v10515 = vld [vmem:[%s4379 + $0x1c] sm:$0xf]
      %v10516 = vld [vmem:[%s4379 + $0x20] sm:$0x1]
      %v10517 = vld [vmem:[%s4379 + $0x24] sm:$0xf]
      %v10518 = vld [vmem:[%s4379 + $0x28] sm:$0xf]
      %v10519 = vld [vmem:[%s4379 + $0x2c] sm:$0x1]
      %v10520 = vld [vmem:[%s4379 + $0x30] sm:$0xf]
      %v10521 = vld [vmem:[%s4379 + $0x34] sm:$0xf]
      %v10522 = vld [vmem:[%s4379 + $0x38] sm:$0x1]
      %v10523 = vld [vmem:[%s4379 + $0x3c] sm:$0xf]
      %v10524 = vld [vmem:[%s4379 + $0x40] sm:$0xf]
      %v10525 = vld [vmem:[%s4379 + $0x44] sm:$0x1]
      %v10526 = vld [vmem:[%s4379 + $0x48] sm:$0xf]
      %v10527 = vld [vmem:[%s4379 + $0x4c] sm:$0xf]
      %v10528 = vld [vmem:[%s4379 + $0x50] sm:$0x1]
      %v10529 = vld [vmem:[%s4379 + $0x54] sm:$0xf]
      %v10530 = vld [vmem:[%s4379 + $0x58] sm:$0xf]
      %v10531 = vld [vmem:[%s4379 + $0x5c] sm:$0x1]
      %v10532 = vld [vmem:[%s4379 + $0x60] sm:$0xf]
      %v10533 = vld [vmem:[%s4379 + $0x64] sm:$0xf]
      %v10534 = vld [vmem:[%s4379 + $0x68] sm:$0x1]
      %v10535 = vld [vmem:[%s4379 + $0x6c] sm:$0xf]
      %v10536 = vld [vmem:[%s4379 + $0x70] sm:$0xf]
      %v10537 = vld [vmem:[%s4379 + $0x74] sm:$0x1]
      %v10538 = vld [vmem:[%s4379 + $0x78] sm:$0xf]
      %v10539 = vld [vmem:[%s4379 + $0x7c] sm:$0xf]
      %v10540 = vld [vmem:[%s4379 + $0x80] sm:$0x1]
      %v10541 = vld [vmem:[%s4379 + $0x84] sm:$0xf]
      %v10542 = vld [vmem:[%s4379 + $0x88] sm:$0xf]
      %v10543 = vld [vmem:[%s4379 + $0x8c] sm:$0x1]
      %v10544 = vld [vmem:[%s4379 + $0x90] sm:$0xf]
      %v10545 = vld [vmem:[%s4379 + $0x94] sm:$0xf]
      %v10546 = vld [vmem:[%s4379 + $0x98] sm:$0x1]
      %v10547 = vld [vmem:[%s4379 + $0x9c] sm:$0xf]
      %v10548 = vld [vmem:[%s4379 + $0xa0] sm:$0xf]
      %v10549 = vld [vmem:[%s4379 + $0xa4] sm:$0x1]
      %v10550 = vld [vmem:[%s4379 + $0xa8] sm:$0xf]
      %v10551 = vld [vmem:[%s4379 + $0xac] sm:$0xf]
      %v10552 = vld [vmem:[%s4379 + $0xb0] sm:$0x1]
      %v10553 = vld [vmem:[%s4379 + $0xb4] sm:$0xf]
      %v10554 = vld [vmem:[%s4379 + $0xb8] sm:$0xf]
      %v10555 = vld [vmem:[%s4379 + $0xbc] sm:$0x1]
      %v10557 = vshrl.u32 %v10508, 16
      %v10559 = vrot.slane %v10557, 4
      %v10560 = vshll.u32 %v10508, 16
      %v10562 = vrot.slane %v10560, 5
      %v10563 = vor.u32 %v10559, %v10562
      %v10564 = vrot.slane %v10563, 4
      %v10566 = vshll.u32 %v10509, 16
      %v10568 = vrot.slane %v10566, 5
      %v10569 = vsel %vm1276, %v10564, %v10568
      %v10570 = vshrl.u32 %v10509, 16
      %v10572 = vrot.slane %v10570, 4
      %v10573 = vor.u32 %v10572, %v10568
      %v10574 = vrot.slane %v10573, 4
      %v10576 = vshll.u32 %v10510, 16
      %v10578 = vrot.slane %v10576, 5
      %v10579 = vsel %vm1276, %v10574, %v10578
      %v10581 = vshrl.u32 %v10511, 16
      %v10583 = vrot.slane %v10581, 4
      %v10584 = vshll.u32 %v10511, 16
      %v10586 = vrot.slane %v10584, 5
      %v10587 = vor.u32 %v10583, %v10586
      %v10588 = vrot.slane %v10587, 4
      %v10590 = vshll.u32 %v10512, 16
      %v10592 = vrot.slane %v10590, 5
      %v10593 = vsel %vm1276, %v10588, %v10592
      %v10594 = vshrl.u32 %v10512, 16
      %v10596 = vrot.slane %v10594, 4
      %v10597 = vor.u32 %v10596, %v10592
      %v10598 = vrot.slane %v10597, 4
      %v10600 = vshll.u32 %v10513, 16
      %v10602 = vrot.slane %v10600, 5
      %v10603 = vsel %vm1276, %v10598, %v10602
      %v10605 = vshrl.u32 %v10514, 16
      %v10607 = vrot.slane %v10605, 4
      %v10608 = vshll.u32 %v10514, 16
      %v10610 = vrot.slane %v10608, 5
      %v10611 = vor.u32 %v10607, %v10610
      %v10612 = vrot.slane %v10611, 4
      %v10614 = vshll.u32 %v10515, 16
      %v10616 = vrot.slane %v10614, 5
      %v10617 = vsel %vm1276, %v10612, %v10616
      %v10618 = vshrl.u32 %v10515, 16
      %v10620 = vrot.slane %v10618, 4
      %v10621 = vor.u32 %v10620, %v10616
      %v10622 = vrot.slane %v10621, 4
      %v10624 = vshll.u32 %v10516, 16
      %v10626 = vrot.slane %v10624, 5
      %v10627 = vsel %vm1276, %v10622, %v10626
      %v10629 = vshrl.u32 %v10517, 16
      %v10631 = vrot.slane %v10629, 4
      %v10632 = vshll.u32 %v10517, 16
      %v10634 = vrot.slane %v10632, 5
      %v10635 = vor.u32 %v10631, %v10634
      %v10636 = vrot.slane %v10635, 4
      %v10638 = vshll.u32 %v10518, 16
      %v10640 = vrot.slane %v10638, 5
      %v10641 = vsel %vm1276, %v10636, %v10640
      %v10642 = vshrl.u32 %v10518, 16
      %v10644 = vrot.slane %v10642, 4
      %v10645 = vor.u32 %v10644, %v10640
      %v10646 = vrot.slane %v10645, 4
      %v10648 = vshll.u32 %v10519, 16
      %v10650 = vrot.slane %v10648, 5
      %v10651 = vsel %vm1276, %v10646, %v10650
      %v10653 = vshrl.u32 %v10520, 16
      %v10655 = vrot.slane %v10653, 4
      %v10656 = vshll.u32 %v10520, 16
      %v10658 = vrot.slane %v10656, 5
      %v10659 = vor.u32 %v10655, %v10658
      %v10660 = vrot.slane %v10659, 4
      %v10662 = vshll.u32 %v10521, 16
      %v10664 = vrot.slane %v10662, 5
      %v10665 = vsel %vm1276, %v10660, %v10664
      %v10666 = vshrl.u32 %v10521, 16
      %v10668 = vrot.slane %v10666, 4
      %v10669 = vor.u32 %v10668, %v10664
      %v10670 = vrot.slane %v10669, 4
      %v10672 = vshll.u32 %v10522, 16
      %v10674 = vrot.slane %v10672, 5
      %v10675 = vsel %vm1276, %v10670, %v10674
      %v10677 = vshrl.u32 %v10523, 16
      %v10679 = vrot.slane %v10677, 4
      %v10680 = vshll.u32 %v10523, 16
      %v10682 = vrot.slane %v10680, 5
      %v10683 = vor.u32 %v10679, %v10682
      %v10684 = vrot.slane %v10683, 4
      %v10686 = vshll.u32 %v10524, 16
      %v10688 = vrot.slane %v10686, 5
      %v10689 = vsel %vm1276, %v10684, %v10688
      %v10690 = vshrl.u32 %v10524, 16
      %v10692 = vrot.slane %v10690, 4
      %v10693 = vor.u32 %v10692, %v10688
      %v10694 = vrot.slane %v10693, 4
      %v10696 = vshll.u32 %v10525, 16
      %v10698 = vrot.slane %v10696, 5
      %v10699 = vsel %vm1276, %v10694, %v10698
      %v10701 = vshrl.u32 %v10526, 16
      %v10703 = vrot.slane %v10701, 4
      %v10704 = vshll.u32 %v10526, 16
      %v10706 = vrot.slane %v10704, 5
      %v10707 = vor.u32 %v10703, %v10706
      %v10708 = vrot.slane %v10707, 4
      %v10710 = vshll.u32 %v10527, 16
      %v10712 = vrot.slane %v10710, 5
      %v10713 = vsel %vm1276, %v10708, %v10712
      %v10714 = vshrl.u32 %v10527, 16
      %v10716 = vrot.slane %v10714, 4
      %v10717 = vor.u32 %v10716, %v10712
      %v10718 = vrot.slane %v10717, 4
      %v10720 = vshll.u32 %v10528, 16
      %v10722 = vrot.slane %v10720, 5
      %v10723 = vsel %vm1276, %v10718, %v10722
      %v10725 = vshrl.u32 %v10529, 16
      %v10727 = vrot.slane %v10725, 4
      %v10728 = vshll.u32 %v10529, 16
      %v10730 = vrot.slane %v10728, 5
      %v10731 = vor.u32 %v10727, %v10730
      %v10732 = vrot.slane %v10731, 4
      %v10734 = vshll.u32 %v10530, 16
      %v10736 = vrot.slane %v10734, 5
      %v10737 = vsel %vm1276, %v10732, %v10736
      %v10738 = vshrl.u32 %v10530, 16
      %v10740 = vrot.slane %v10738, 4
      %v10741 = vor.u32 %v10740, %v10736
      %v10742 = vrot.slane %v10741, 4
      %v10744 = vshll.u32 %v10531, 16
      %v10746 = vrot.slane %v10744, 5
      %v10747 = vsel %vm1276, %v10742, %v10746
      %v10749 = vshrl.u32 %v10532, 16
      %v10751 = vrot.slane %v10749, 4
      %v10752 = vshll.u32 %v10532, 16
      %v10754 = vrot.slane %v10752, 5
      %v10755 = vor.u32 %v10751, %v10754
      %v10756 = vrot.slane %v10755, 4
      %v10758 = vshll.u32 %v10533, 16
      %v10760 = vrot.slane %v10758, 5
      %v10761 = vsel %vm1276, %v10756, %v10760
      %v10762 = vshrl.u32 %v10533, 16
      %v10764 = vrot.slane %v10762, 4
      %v10765 = vor.u32 %v10764, %v10760
      %v10766 = vrot.slane %v10765, 4
      %v10768 = vshll.u32 %v10534, 16
      %v10770 = vrot.slane %v10768, 5
      %v10771 = vsel %vm1276, %v10766, %v10770
      %v10773 = vshrl.u32 %v10535, 16
      %v10775 = vrot.slane %v10773, 4
      %v10776 = vshll.u32 %v10535, 16
      %v10778 = vrot.slane %v10776, 5
      %v10779 = vor.u32 %v10775, %v10778
      %v10780 = vrot.slane %v10779, 4
      %v10782 = vshll.u32 %v10536, 16
      %v10784 = vrot.slane %v10782, 5
      %v10785 = vsel %vm1276, %v10780, %v10784
      %v10786 = vshrl.u32 %v10536, 16
      %v10788 = vrot.slane %v10786, 4
      %v10789 = vor.u32 %v10788, %v10784
      %v10790 = vrot.slane %v10789, 4
      %v10792 = vshll.u32 %v10537, 16
      %v10794 = vrot.slane %v10792, 5
      %v10795 = vsel %vm1276, %v10790, %v10794
      %v10797 = vshrl.u32 %v10538, 16
      %v10799 = vrot.slane %v10797, 4
      %v10800 = vshll.u32 %v10538, 16
      %v10802 = vrot.slane %v10800, 5
      %v10803 = vor.u32 %v10799, %v10802
      %v10804 = vrot.slane %v10803, 4
      %v10806 = vshll.u32 %v10539, 16
      %v10808 = vrot.slane %v10806, 5
      %v10809 = vsel %vm1276, %v10804, %v10808
      %v10810 = vshrl.u32 %v10539, 16
      %v10812 = vrot.slane %v10810, 4
      %v10813 = vor.u32 %v10812, %v10808
      %v10814 = vrot.slane %v10813, 4
      %v10816 = vshll.u32 %v10540, 16
      %v10818 = vrot.slane %v10816, 5
      %v10819 = vsel %vm1276, %v10814, %v10818
      %v10821 = vshrl.u32 %v10541, 16
      %v10823 = vrot.slane %v10821, 4
      %v10824 = vshll.u32 %v10541, 16
      %v10826 = vrot.slane %v10824, 5
      %v10827 = vor.u32 %v10823, %v10826
      %v10828 = vrot.slane %v10827, 4
      %v10830 = vshll.u32 %v10542, 16
      %v10832 = vrot.slane %v10830, 5
      %v10833 = vsel %vm1276, %v10828, %v10832
      %v10834 = vshrl.u32 %v10542, 16
      %v10836 = vrot.slane %v10834, 4
      %v10837 = vor.u32 %v10836, %v10832
      %v10838 = vrot.slane %v10837, 4
      %v10840 = vshll.u32 %v10543, 16
      %v10842 = vrot.slane %v10840, 5
      %v10843 = vsel %vm1276, %v10838, %v10842
      %v10845 = vshrl.u32 %v10544, 16
      %v10847 = vrot.slane %v10845, 4
      %v10848 = vshll.u32 %v10544, 16
      %v10850 = vrot.slane %v10848, 5
      %v10851 = vor.u32 %v10847, %v10850
      %v10852 = vrot.slane %v10851, 4
      %v10854 = vshll.u32 %v10545, 16
      %v10856 = vrot.slane %v10854, 5
      %v10857 = vsel %vm1276, %v10852, %v10856
      %v10858 = vshrl.u32 %v10545, 16
      %v10860 = vrot.slane %v10858, 4
      %v10861 = vor.u32 %v10860, %v10856
      %v10862 = vrot.slane %v10861, 4
      %v10864 = vshll.u32 %v10546, 16
      %v10866 = vrot.slane %v10864, 5
      %v10867 = vsel %vm1276, %v10862, %v10866
      %v10869 = vshrl.u32 %v10547, 16
      %v10871 = vrot.slane %v10869, 4
      %v10872 = vshll.u32 %v10547, 16
      %v10874 = vrot.slane %v10872, 5
      %v10875 = vor.u32 %v10871, %v10874
      %v10876 = vrot.slane %v10875, 4
      %v10878 = vshll.u32 %v10548, 16
      %v10880 = vrot.slane %v10878, 5
      %v10881 = vsel %vm1276, %v10876, %v10880
      %v10882 = vshrl.u32 %v10548, 16
      %v10884 = vrot.slane %v10882, 4
      %v10885 = vor.u32 %v10884, %v10880
      %v10886 = vrot.slane %v10885, 4
      %v10888 = vshll.u32 %v10549, 16
      %v10890 = vrot.slane %v10888, 5
      %v10891 = vsel %vm1276, %v10886, %v10890
      %v10893 = vshrl.u32 %v10550, 16
      %v10895 = vrot.slane %v10893, 4
      %v10896 = vshll.u32 %v10550, 16
      %v10898 = vrot.slane %v10896, 5
      %v10899 = vor.u32 %v10895, %v10898
      %v10900 = vrot.slane %v10899, 4
      %v10902 = vshll.u32 %v10551, 16
      %v10904 = vrot.slane %v10902, 5
      %v10905 = vsel %vm1276, %v10900, %v10904
      %v10906 = vshrl.u32 %v10551, 16
      %v10908 = vrot.slane %v10906, 4
      %v10909 = vor.u32 %v10908, %v10904
      %v10910 = vrot.slane %v10909, 4
      %v10912 = vshll.u32 %v10552, 16
      %v10914 = vrot.slane %v10912, 5
      %v10915 = vsel %vm1276, %v10910, %v10914
      %v10917 = vshrl.u32 %v10553, 16
      %v10919 = vrot.slane %v10917, 4
      %v10920 = vshll.u32 %v10553, 16
      %v10922 = vrot.slane %v10920, 5
      %v10923 = vor.u32 %v10919, %v10922
      %v10924 = vrot.slane %v10923, 4
      %v10926 = vshll.u32 %v10554, 16
      %v10928 = vrot.slane %v10926, 5
      %v10929 = vsel %vm1276, %v10924, %v10928
      %v10930 = vshrl.u32 %v10554, 16
      %v10932 = vrot.slane %v10930, 4
      %v10933 = vor.u32 %v10932, %v10928
      %v10934 = vrot.slane %v10933, 4
      %v10936 = vshll.u32 %v10555, 16
      %v10938 = vrot.slane %v10936, 5
      %v10939 = vsel %vm1276, %v10934, %v10938
      %s10940 = scalar_lea.vmem %s4, 448
      %v10941 = vld [vmem:[%s10940] sm:$0xf]
      %v10942 = vld [vmem:[%s10940 + $0x4] sm:$0xf]
      %v10943 = vld [vmem:[%s10940 + $0x8] sm:$0xf]
      %v10944 = vld [vmem:[%s10940 + $0xc] sm:$0xf]
      %v10945 = vld [vmem:[%s10940 + $0x10] sm:$0xf]
      %v10946 = vld [vmem:[%s10940 + $0x14] sm:$0xf]
      %v10947 = vld [vmem:[%s10940 + $0x18] sm:$0xf]
      %v10948 = vld [vmem:[%s10940 + $0x1c] sm:$0xf]
      %v10949 = vld [vmem:[%s10940 + $0x20] sm:$0xf]
      %v10950 = vld [vmem:[%s10940 + $0x24] sm:$0xf]
      %v10951 = vld [vmem:[%s10940 + $0x28] sm:$0xf]
      %v10952 = vld [vmem:[%s10940 + $0x2c] sm:$0xf]
      %v10953 = vld [vmem:[%s10940 + $0x30] sm:$0xf]
      %v10954 = vld [vmem:[%s10940 + $0x34] sm:$0xf]
      %v10955 = vld [vmem:[%s10940 + $0x38] sm:$0xf]
      %v10956 = vld [vmem:[%s10940 + $0x3c] sm:$0xf]
      %v10957 = vunpack.c.l.b16 %v10569
      %v10958 = vunpack.c.l.b16 %v10579
      %v10959 = vunpack.c.l.b16 %v10593
      %v10960 = vunpack.c.l.b16 %v10603
      %v10961 = vunpack.c.l.b16 %v10617
      %v10962 = vunpack.c.l.b16 %v10627
      %v10963 = vunpack.c.l.b16 %v10641
      %v10964 = vunpack.c.l.b16 %v10651
      %v10965 = vunpack.c.l.b16 %v10665
      %v10966 = vunpack.c.l.b16 %v10675
      %v10967 = vunpack.c.l.b16 %v10689
      %v10968 = vunpack.c.l.b16 %v10699
      %v10969 = vunpack.c.l.b16 %v10713
      %v10970 = vunpack.c.l.b16 %v10723
      %v10971 = vunpack.c.l.b16 %v10737
      %v10972 = vunpack.c.l.b16 %v10747
      %v10973 = vunpack.c.l.b16 %v10761
      %v10974 = vunpack.c.l.b16 %v10771
      %v10975 = vunpack.c.l.b16 %v10785
      %v10976 = vunpack.c.l.b16 %v10795
      %v10977 = vunpack.c.l.b16 %v10809
      %v10978 = vunpack.c.l.b16 %v10819
      %v10979 = vunpack.c.l.b16 %v10833
      %v10980 = vunpack.c.l.b16 %v10843
      %v10981 = vunpack.c.l.b16 %v10857
      %v10982 = vunpack.c.l.b16 %v10867
      %v10983 = vunpack.c.l.b16 %v10881
      %v10984 = vunpack.c.l.b16 %v10891
      %v10985 = vunpack.c.l.b16 %v10905
      %v10986 = vunpack.c.l.b16 %v10915
      %v10987 = vunpack.c.l.b16 %v10929
      %v10988 = vunpack.c.l.b16 %v10939
      %v10989 = vpack.c.b16 %v10958, %v10957
      %v10990 = vpack.c.b16 %v10960, %v10959
      %v10991 = vpack.c.b16 %v10962, %v10961
      %v10992 = vpack.c.b16 %v10964, %v10963
      %v10993 = vpack.c.b16 %v10966, %v10965
      %v10994 = vpack.c.b16 %v10968, %v10967
      %v10995 = vpack.c.b16 %v10970, %v10969
      %v10996 = vpack.c.b16 %v10972, %v10971
      %v10997 = vpack.c.b16 %v10974, %v10973
      %v10998 = vpack.c.b16 %v10976, %v10975
      %v10999 = vpack.c.b16 %v10978, %v10977
      %v11000 = vpack.c.b16 %v10980, %v10979
      %v11001 = vpack.c.b16 %v10982, %v10981
      %v11002 = vpack.c.b16 %v10984, %v10983
      %v11003 = vpack.c.b16 %v10986, %v10985
      %v11004 = vpack.c.b16 %v10988, %v10987
      %v11037 = vunpack.c.l.b16 %v10941
      %v11038 = vunpack.c.l.b16 %v10942
      %v11039 = vunpack.c.l.b16 %v10943
      %v11040 = vunpack.c.l.b16 %v10944
      %v11041 = vunpack.c.l.b16 %v10945
      %v11042 = vunpack.c.l.b16 %v10946
      %v11043 = vunpack.c.l.b16 %v10947
      %v11044 = vunpack.c.l.b16 %v10948
      %v11045 = vunpack.c.l.b16 %v10949
      %v11046 = vunpack.c.l.b16 %v10950
      %v11047 = vunpack.c.l.b16 %v10951
      %v11048 = vunpack.c.l.b16 %v10952
      %v11049 = vunpack.c.l.b16 %v10953
      %v11050 = vunpack.c.l.b16 %v10954
      %v11051 = vunpack.c.l.b16 %v10955
      %v11052 = vunpack.c.l.b16 %v10956
      %v11053 = vpack.c.b16 %v11038, %v11037
      %v11054 = vpack.c.b16 %v11040, %v11039
      %v11055 = vpack.c.b16 %v11042, %v11041
      %v11056 = vpack.c.b16 %v11044, %v11043
      %v11057 = vpack.c.b16 %v11046, %v11045
      %v11058 = vpack.c.b16 %v11048, %v11047
      %v11059 = vpack.c.b16 %v11050, %v11049
      %v11060 = vpack.c.b16 %v11052, %v11051
      %11069 = vmatprep.subr.bf16.mxu0 0
      %11070 = vmatpush1.bf16.msra.mxu0 %v11060
      %11071 = vmatprep.subr.bf16.mxu0 0
      %11072 = vmatpush1.bf16.msra.mxu0 %v11059
      %11073 = vmatprep.subr.bf16.mxu0 0
      %11074 = vmatpush1.bf16.msra.mxu0 %v11058
      %11075 = vmatprep.subr.bf16.mxu0 0
      %11076 = vmatpush1.bf16.msra.mxu0 %v11057
      %11077 = vmatprep.subr.bf16.mxu0 0
      %11078 = vmatpush1.bf16.msra.mxu0 %v11056
      %11079 = vmatprep.subr.bf16.mxu0 0
      %11080 = vmatpush1.bf16.msra.mxu0 %v11055
      %11081 = vmatprep.subr.bf16.mxu0 0
      %11082 = vmatpush1.bf16.msra.mxu0 %v11054
      %11083 = vmatprep.subr.bf16.mxu0 0
      %11084 = vmatpush1.bf16.msra.mxu0 %v11053
      %11085 = vmatprep.subr.bf16.mxu0 0
      %11086 = vmatpush2.bf16.msra.mxu0 0
      %11087 = vmatprep.subr.bf16.mxu0 0
      %11088 = vmatpush2.bf16.msra.mxu0 0
      %11089 = vmatprep.subr.bf16.mxu0 0
      %11090 = vmatpush2.bf16.msra.mxu0 0
      %11091 = vmatprep.subr.bf16.mxu0 0
      %11092 = vmatpush2.bf16.msra.mxu0 0
      %11093 = vmatprep.subr.bf16.mxu0 0
      %11094 = vmatpush2.bf16.msra.mxu0 0
      %11095 = vmatprep.subr.bf16.mxu0 0
      %11096 = vmatpush2.bf16.msra.mxu0 0
      %11097 = vmatprep.subr.bf16.mxu0 0
      %11098 = vmatpush2.bf16.msra.mxu0 0
      %11099 = vmatprep.subr.bf16.mxu0 0
      %11100 = vmatpush2.bf16.msra.mxu0 0
      %11101 = vmatprep.mubr.bf16.mxu0 0
      %11102 = vmatmul.mubr.bf16.gmra.mxu0 %v10989
      %v11103 = vpop.f32.mrf.mxu0
      %v11104 = vadd.f32 0.0, %v11103
      %v11105 = vpop.f32.mrf.mxu0
      %v11106 = vpop.f32.mrf.mxu0
      %v11107 = vadd.f32 0.0, %v11106
      %v11108 = vpop.f32.mrf.mxu0
      %11109 = vmatprep.mubr.bf16.mxu0 0
      %11110 = vmatmul.mubr.bf16.gmra.mxu0 %v10990
      %v11111 = vpop.f32.mrf.mxu0
      %v11112 = vadd.f32 0.0, %v11111
      %v11113 = vpop.f32.mrf.mxu0
      %v11114 = vpop.f32.mrf.mxu0
      %v11115 = vadd.f32 0.0, %v11114
      %v11116 = vpop.f32.mrf.mxu0
      %11117 = vmatprep.mubr.bf16.mxu0 0
      %11118 = vmatmul.mubr.bf16.gmra.mxu0 %v10991
      %v11119 = vpop.f32.mrf.mxu0
      %v11120 = vadd.f32 0.0, %v11119
      %v11121 = vpop.f32.mrf.mxu0
      %v11122 = vpop.f32.mrf.mxu0
      %v11123 = vadd.f32 0.0, %v11122
      %v11124 = vpop.f32.mrf.mxu0
      %11125 = vmatprep.mubr.bf16.mxu0 0
      %11126 = vmatmul.mubr.bf16.gmra.mxu0 %v10992
      %v11127 = vpop.f32.mrf.mxu0
      %v11128 = vadd.f32 0.0, %v11127
      %v11129 = vpop.f32.mrf.mxu0
      %v11130 = vpop.f32.mrf.mxu0
      %v11131 = vadd.f32 0.0, %v11130
      %v11132 = vpop.f32.mrf.mxu0
      %11133 = vmatprep.mubr.bf16.mxu0 0
      %11134 = vmatmul.mubr.bf16.gmra.mxu0 %v10993
      %v11135 = vpop.f32.mrf.mxu0
      %v11136 = vadd.f32 0.0, %v11135
      %v11137 = vpop.f32.mrf.mxu0
      %v11138 = vpop.f32.mrf.mxu0
      %v11139 = vadd.f32 0.0, %v11138
      %v11140 = vpop.f32.mrf.mxu0
      %11141 = vmatprep.mubr.bf16.mxu0 0
      %11142 = vmatmul.mubr.bf16.gmra.mxu0 %v10994
      %v11143 = vpop.f32.mrf.mxu0
      %v11144 = vadd.f32 0.0, %v11143
      %v11145 = vpop.f32.mrf.mxu0
      %v11146 = vpop.f32.mrf.mxu0
      %v11147 = vadd.f32 0.0, %v11146
      %v11148 = vpop.f32.mrf.mxu0
      %11149 = vmatprep.mubr.bf16.mxu0 0
      %11150 = vmatmul.mubr.bf16.gmra.mxu0 %v10995
      %v11151 = vpop.f32.mrf.mxu0
      %v11152 = vadd.f32 0.0, %v11151
      %v11153 = vpop.f32.mrf.mxu0
      %v11154 = vpop.f32.mrf.mxu0
      %v11155 = vadd.f32 0.0, %v11154
      %v11156 = vpop.f32.mrf.mxu0
      %11157 = vmatprep.mubr.bf16.mxu0 0
      %11158 = vmatmul.mubr.bf16.gmra.mxu0 %v10996
      %v11159 = vpop.f32.mrf.mxu0
      %v11160 = vadd.f32 0.0, %v11159
      %v11161 = vpop.f32.mrf.mxu0
      %v11162 = vpop.f32.mrf.mxu0
      %v11163 = vadd.f32 0.0, %v11162
      %v11164 = vpop.f32.mrf.mxu0
      %11165 = vmatprep.mubr.bf16.mxu0 0
      %11166 = vmatmul.mubr.bf16.gmra.mxu0 %v10997
      %v11167 = vpop.f32.mrf.mxu0
      %v11168 = vadd.f32 0.0, %v11167
      %v11169 = vpop.f32.mrf.mxu0
      %v11170 = vpop.f32.mrf.mxu0
      %v11171 = vadd.f32 0.0, %v11170
      %v11172 = vpop.f32.mrf.mxu0
      %11173 = vmatprep.mubr.bf16.mxu0 0
      %11174 = vmatmul.mubr.bf16.gmra.mxu0 %v10998
      %v11175 = vpop.f32.mrf.mxu0
      %v11176 = vadd.f32 0.0, %v11175
      %v11177 = vpop.f32.mrf.mxu0
      %v11178 = vpop.f32.mrf.mxu0
      %v11179 = vadd.f32 0.0, %v11178
      %v11180 = vpop.f32.mrf.mxu0
      %11181 = vmatprep.mubr.bf16.mxu0 0
      %11182 = vmatmul.mubr.bf16.gmra.mxu0 %v10999
      %v11183 = vpop.f32.mrf.mxu0
      %v11184 = vadd.f32 0.0, %v11183
      %v11185 = vpop.f32.mrf.mxu0
      %v11186 = vpop.f32.mrf.mxu0
      %v11187 = vadd.f32 0.0, %v11186
      %v11188 = vpop.f32.mrf.mxu0
      %11189 = vmatprep.mubr.bf16.mxu0 0
      %11190 = vmatmul.mubr.bf16.gmra.mxu0 %v11000
      %v11191 = vpop.f32.mrf.mxu0
      %v11192 = vadd.f32 0.0, %v11191
      %v11193 = vpop.f32.mrf.mxu0
      %v11194 = vpop.f32.mrf.mxu0
      %v11195 = vadd.f32 0.0, %v11194
      %v11196 = vpop.f32.mrf.mxu0
      %11197 = vmatprep.mubr.bf16.mxu0 0
      %11198 = vmatmul.mubr.bf16.gmra.mxu0 %v11001
      %v11199 = vpop.f32.mrf.mxu0
      %v11200 = vadd.f32 0.0, %v11199
      %v11201 = vpop.f32.mrf.mxu0
      %v11202 = vpop.f32.mrf.mxu0
      %v11203 = vadd.f32 0.0, %v11202
      %v11204 = vpop.f32.mrf.mxu0
      %11205 = vmatprep.mubr.bf16.mxu0 0
      %11206 = vmatmul.mubr.bf16.gmra.mxu0 %v11002
      %v11207 = vpop.f32.mrf.mxu0
      %v11208 = vadd.f32 0.0, %v11207
      %v11209 = vpop.f32.mrf.mxu0
      %v11210 = vpop.f32.mrf.mxu0
      %v11211 = vadd.f32 0.0, %v11210
      %v11212 = vpop.f32.mrf.mxu0
      %11213 = vmatprep.mubr.bf16.mxu0 0
      %11214 = vmatmul.mubr.bf16.gmra.mxu0 %v11003
      %v11215 = vpop.f32.mrf.mxu0
      %v11216 = vadd.f32 0.0, %v11215
      %v11217 = vpop.f32.mrf.mxu0
      %v11218 = vpop.f32.mrf.mxu0
      %v11219 = vadd.f32 0.0, %v11218
      %v11220 = vpop.f32.mrf.mxu0
      %11221 = vmatprep.mubr.bf16.mxu0 0
      %11222 = vmatmul.mubr.bf16.gmra.mxu0 %v11004
      %v11223 = vpop.f32.mrf.mxu0
      %v11224 = vadd.f32 0.0, %v11223
      %v11225 = vpop.f32.mrf.mxu0
      %v11226 = vpop.f32.mrf.mxu0
      %v11227 = vadd.f32 0.0, %v11226
      %v11228 = vpop.f32.mrf.mxu0
      %11229 = vdwg.mxu0
      %v11230 = vadd.f32 %v10476, %v11104
      %v11231 = vadd.f32 %v10477, %v11107
      %v11232 = vadd.f32 %v10478, %v11112
      %v11233 = vadd.f32 %v10479, %v11115
      %v11234 = vadd.f32 %v10480, %v11120
      %v11235 = vadd.f32 %v10481, %v11123
      %v11236 = vadd.f32 %v10482, %v11128
      %v11237 = vadd.f32 %v10483, %v11131
      %v11238 = vadd.f32 %v10484, %v11136
      %v11239 = vadd.f32 %v10485, %v11139
      %v11240 = vadd.f32 %v10486, %v11144
      %v11241 = vadd.f32 %v10487, %v11147
      %v11242 = vadd.f32 %v10488, %v11152
      %v11243 = vadd.f32 %v10489, %v11155
      %v11244 = vadd.f32 %v10490, %v11160
      %v11245 = vadd.f32 %v10491, %v11163
      %v11246 = vadd.f32 %v10492, %v11168
      %v11247 = vadd.f32 %v10493, %v11171
      %v11248 = vadd.f32 %v10494, %v11176
      %v11249 = vadd.f32 %v10495, %v11179
      %v11250 = vadd.f32 %v10496, %v11184
      %v11251 = vadd.f32 %v10497, %v11187
      %v11252 = vadd.f32 %v10498, %v11192
      %v11253 = vadd.f32 %v10499, %v11195
      %v11254 = vadd.f32 %v10500, %v11200
      %v11255 = vadd.f32 %v10501, %v11203
      %v11256 = vadd.f32 %v10502, %v11208
      %v11257 = vadd.f32 %v10503, %v11211
      %v11258 = vadd.f32 %v10504, %v11216
      %v11259 = vadd.f32 %v10505, %v11219
      %v11260 = vadd.f32 %v10506, %v11224
      %v11261 = vadd.f32 %v10507, %v11227
      %v11262 = vld [vmem:[%s4379] sm:$0xe]
      %v11263 = vld [vmem:[%s4379 + $0xc] sm:$0xe]
      %v11264 = vld [vmem:[%s4379 + $0x18] sm:$0xe]
      %v11265 = vld [vmem:[%s4379 + $0x24] sm:$0xe]
      %v11266 = vld [vmem:[%s4379 + $0x30] sm:$0xe]
      %v11267 = vld [vmem:[%s4379 + $0x3c] sm:$0xe]
      %v11268 = vld [vmem:[%s4379 + $0x48] sm:$0xe]
      %v11269 = vld [vmem:[%s4379 + $0x54] sm:$0xe]
      %v11270 = vld [vmem:[%s4379 + $0x60] sm:$0xe]
      %v11271 = vld [vmem:[%s4379 + $0x6c] sm:$0xe]
      %v11272 = vld [vmem:[%s4379 + $0x78] sm:$0xe]
      %v11273 = vld [vmem:[%s4379 + $0x84] sm:$0xe]
      %v11274 = vld [vmem:[%s4379 + $0x90] sm:$0xe]
      %v11275 = vld [vmem:[%s4379 + $0x9c] sm:$0xe]
      %v11276 = vld [vmem:[%s4379 + $0xa8] sm:$0xe]
      %v11277 = vld [vmem:[%s4379 + $0xb4] sm:$0xe]
      %v11326 = vrot.slane %v11262, 5
      %v11327 = vrot.slane %v11326, 4
      %v11328 = vrot.slane %v10509, 5
      %v11329 = vsel %vm2306, %v11327, %v11328
      %v11330 = vrot.slane %v11328, 4
      %v11331 = vrot.slane %v10510, 5
      %v11332 = vsel %vm2306, %v11330, %v11331
      %v11333 = vrot.slane %v11263, 5
      %v11334 = vrot.slane %v11333, 4
      %v11335 = vrot.slane %v10512, 5
      %v11336 = vsel %vm2306, %v11334, %v11335
      %v11337 = vrot.slane %v11335, 4
      %v11338 = vrot.slane %v10513, 5
      %v11339 = vsel %vm2306, %v11337, %v11338
      %v11340 = vrot.slane %v11264, 5
      %v11341 = vrot.slane %v11340, 4
      %v11342 = vrot.slane %v10515, 5
      %v11343 = vsel %vm2306, %v11341, %v11342
      %v11344 = vrot.slane %v11342, 4
      %v11345 = vrot.slane %v10516, 5
      %v11346 = vsel %vm2306, %v11344, %v11345
      %v11347 = vrot.slane %v11265, 5
      %v11348 = vrot.slane %v11347, 4
      %v11349 = vrot.slane %v10518, 5
      %v11350 = vsel %vm2306, %v11348, %v11349
      %v11351 = vrot.slane %v11349, 4
      %v11352 = vrot.slane %v10519, 5
      %v11353 = vsel %vm2306, %v11351, %v11352
      %v11354 = vrot.slane %v11266, 5
      %v11355 = vrot.slane %v11354, 4
      %v11356 = vrot.slane %v10521, 5
      %v11357 = vsel %vm2306, %v11355, %v11356
      %v11358 = vrot.slane %v11356, 4
      %v11359 = vrot.slane %v10522, 5
      %v11360 = vsel %vm2306, %v11358, %v11359
      %v11361 = vrot.slane %v11267, 5
      %v11362 = vrot.slane %v11361, 4
      %v11363 = vrot.slane %v10524, 5
      %v11364 = vsel %vm2306, %v11362, %v11363
      %v11365 = vrot.slane %v11363, 4
      %v11366 = vrot.slane %v10525, 5
      %v11367 = vsel %vm2306, %v11365, %v11366
      %v11368 = vrot.slane %v11268, 5
      %v11369 = vrot.slane %v11368, 4
      %v11370 = vrot.slane %v10527, 5
      %v11371 = vsel %vm2306, %v11369, %v11370
      %v11372 = vrot.slane %v11370, 4
      %v11373 = vrot.slane %v10528, 5
      %v11374 = vsel %vm2306, %v11372, %v11373
      %v11375 = vrot.slane %v11269, 5
      %v11376 = vrot.slane %v11375, 4
      %v11377 = vrot.slane %v10530, 5
      %v11378 = vsel %vm2306, %v11376, %v11377
      %v11379 = vrot.slane %v11377, 4
      %v11380 = vrot.slane %v10531, 5
      %v11381 = vsel %vm2306, %v11379, %v11380
      %v11382 = vrot.slane %v11270, 5
      %v11383 = vrot.slane %v11382, 4
      %v11384 = vrot.slane %v10533, 5
      %v11385 = vsel %vm2306, %v11383, %v11384
      %v11386 = vrot.slane %v11384, 4
      %v11387 = vrot.slane %v10534, 5
      %v11388 = vsel %vm2306, %v11386, %v11387
      %v11389 = vrot.slane %v11271, 5
      %v11390 = vrot.slane %v11389, 4
      %v11391 = vrot.slane %v10536, 5
      %v11392 = vsel %vm2306, %v11390, %v11391
      %v11393 = vrot.slane %v11391, 4
      %v11394 = vrot.slane %v10537, 5
      %v11395 = vsel %vm2306, %v11393, %v11394
      %v11396 = vrot.slane %v11272, 5
      %v11397 = vrot.slane %v11396, 4
      %v11398 = vrot.slane %v10539, 5
      %v11399 = vsel %vm2306, %v11397, %v11398
      %v11400 = vrot.slane %v11398, 4
      %v11401 = vrot.slane %v10540, 5
      %v11402 = vsel %vm2306, %v11400, %v11401
      %v11403 = vrot.slane %v11273, 5
      %v11404 = vrot.slane %v11403, 4
      %v11405 = vrot.slane %v10542, 5
      %v11406 = vsel %vm2306, %v11404, %v11405
      %v11407 = vrot.slane %v11405, 4
      %v11408 = vrot.slane %v10543, 5
      %v11409 = vsel %vm2306, %v11407, %v11408
      %v11410 = vrot.slane %v11274, 5
      %v11411 = vrot.slane %v11410, 4
      %v11412 = vrot.slane %v10545, 5
      %v11413 = vsel %vm2306, %v11411, %v11412
      %v11414 = vrot.slane %v11412, 4
      %v11415 = vrot.slane %v10546, 5
      %v11416 = vsel %vm2306, %v11414, %v11415
      %v11417 = vrot.slane %v11275, 5
      %v11418 = vrot.slane %v11417, 4
      %v11419 = vrot.slane %v10548, 5
      %v11420 = vsel %vm2306, %v11418, %v11419
      %v11421 = vrot.slane %v11419, 4
      %v11422 = vrot.slane %v10549, 5
      %v11423 = vsel %vm2306, %v11421, %v11422
      %v11424 = vrot.slane %v11276, 5
      %v11425 = vrot.slane %v11424, 4
      %v11426 = vrot.slane %v10551, 5
      %v11427 = vsel %vm2306, %v11425, %v11426
      %v11428 = vrot.slane %v11426, 4
      %v11429 = vrot.slane %v10552, 5
      %v11430 = vsel %vm2306, %v11428, %v11429
      %v11431 = vrot.slane %v11277, 5
      %v11432 = vrot.slane %v11431, 4
      %v11433 = vrot.slane %v10554, 5
      %v11434 = vsel %vm2306, %v11432, %v11433
      %v11435 = vrot.slane %v11433, 4
      %v11436 = vrot.slane %v10555, 5
      %v11437 = vsel %vm2306, %v11435, %v11436
      %s11438 = scalar_lea.vmem %s4, 512
      %v11439 = vld [vmem:[%s11438] sm:$0xf]
      %v11440 = vld [vmem:[%s11438 + $0x4] sm:$0xf]
      %v11441 = vld [vmem:[%s11438 + $0x8] sm:$0xf]
      %v11442 = vld [vmem:[%s11438 + $0xc] sm:$0xf]
      %v11443 = vld [vmem:[%s11438 + $0x10] sm:$0xf]
      %v11444 = vld [vmem:[%s11438 + $0x14] sm:$0xf]
      %v11445 = vld [vmem:[%s11438 + $0x18] sm:$0xf]
      %v11446 = vld [vmem:[%s11438 + $0x1c] sm:$0xf]
      %v11447 = vld [vmem:[%s11438 + $0x20] sm:$0xf]
      %v11448 = vld [vmem:[%s11438 + $0x24] sm:$0xf]
      %v11449 = vld [vmem:[%s11438 + $0x28] sm:$0xf]
      %v11450 = vld [vmem:[%s11438 + $0x2c] sm:$0xf]
      %v11451 = vld [vmem:[%s11438 + $0x30] sm:$0xf]
      %v11452 = vld [vmem:[%s11438 + $0x34] sm:$0xf]
      %v11453 = vld [vmem:[%s11438 + $0x38] sm:$0xf]
      %v11454 = vld [vmem:[%s11438 + $0x3c] sm:$0xf]
      %v11455 = vunpack.c.l.b16 %v11329
      %v11456 = vunpack.c.l.b16 %v11332
      %v11457 = vunpack.c.l.b16 %v11336
      %v11458 = vunpack.c.l.b16 %v11339
      %v11459 = vunpack.c.l.b16 %v11343
      %v11460 = vunpack.c.l.b16 %v11346
      %v11461 = vunpack.c.l.b16 %v11350
      %v11462 = vunpack.c.l.b16 %v11353
      %v11463 = vunpack.c.l.b16 %v11357
      %v11464 = vunpack.c.l.b16 %v11360
      %v11465 = vunpack.c.l.b16 %v11364
      %v11466 = vunpack.c.l.b16 %v11367
      %v11467 = vunpack.c.l.b16 %v11371
      %v11468 = vunpack.c.l.b16 %v11374
      %v11469 = vunpack.c.l.b16 %v11378
      %v11470 = vunpack.c.l.b16 %v11381
      %v11471 = vunpack.c.l.b16 %v11385
      %v11472 = vunpack.c.l.b16 %v11388
      %v11473 = vunpack.c.l.b16 %v11392
      %v11474 = vunpack.c.l.b16 %v11395
      %v11475 = vunpack.c.l.b16 %v11399
      %v11476 = vunpack.c.l.b16 %v11402
      %v11477 = vunpack.c.l.b16 %v11406
      %v11478 = vunpack.c.l.b16 %v11409
      %v11479 = vunpack.c.l.b16 %v11413
      %v11480 = vunpack.c.l.b16 %v11416
      %v11481 = vunpack.c.l.b16 %v11420
      %v11482 = vunpack.c.l.b16 %v11423
      %v11483 = vunpack.c.l.b16 %v11427
      %v11484 = vunpack.c.l.b16 %v11430
      %v11485 = vunpack.c.l.b16 %v11434
      %v11486 = vunpack.c.l.b16 %v11437
      %v11487 = vpack.c.b16 %v11456, %v11455
      %v11488 = vpack.c.b16 %v11458, %v11457
      %v11489 = vpack.c.b16 %v11460, %v11459
      %v11490 = vpack.c.b16 %v11462, %v11461
      %v11491 = vpack.c.b16 %v11464, %v11463
      %v11492 = vpack.c.b16 %v11466, %v11465
      %v11493 = vpack.c.b16 %v11468, %v11467
      %v11494 = vpack.c.b16 %v11470, %v11469
      %v11495 = vpack.c.b16 %v11472, %v11471
      %v11496 = vpack.c.b16 %v11474, %v11473
      %v11497 = vpack.c.b16 %v11476, %v11475
      %v11498 = vpack.c.b16 %v11478, %v11477
      %v11499 = vpack.c.b16 %v11480, %v11479
      %v11500 = vpack.c.b16 %v11482, %v11481
      %v11501 = vpack.c.b16 %v11484, %v11483
      %v11502 = vpack.c.b16 %v11486, %v11485
      %v11535 = vunpack.c.l.b16 %v11439
      %v11536 = vunpack.c.l.b16 %v11440
      %v11537 = vunpack.c.l.b16 %v11441
      %v11538 = vunpack.c.l.b16 %v11442
      %v11539 = vunpack.c.l.b16 %v11443
      %v11540 = vunpack.c.l.b16 %v11444
      %v11541 = vunpack.c.l.b16 %v11445
      %v11542 = vunpack.c.l.b16 %v11446
      %v11543 = vunpack.c.l.b16 %v11447
      %v11544 = vunpack.c.l.b16 %v11448
      %v11545 = vunpack.c.l.b16 %v11449
      %v11546 = vunpack.c.l.b16 %v11450
      %v11547 = vunpack.c.l.b16 %v11451
      %v11548 = vunpack.c.l.b16 %v11452
      %v11549 = vunpack.c.l.b16 %v11453
      %v11550 = vunpack.c.l.b16 %v11454
      %v11551 = vpack.c.b16 %v11536, %v11535
      %v11552 = vpack.c.b16 %v11538, %v11537
      %v11553 = vpack.c.b16 %v11540, %v11539
      %v11554 = vpack.c.b16 %v11542, %v11541
      %v11555 = vpack.c.b16 %v11544, %v11543
      %v11556 = vpack.c.b16 %v11546, %v11545
      %v11557 = vpack.c.b16 %v11548, %v11547
      %v11558 = vpack.c.b16 %v11550, %v11549
      %11567 = vmatprep.subr.bf16.mxu0 0
      %11568 = vmatpush1.bf16.msra.mxu0 %v11558
      %11569 = vmatprep.subr.bf16.mxu0 0
      %11570 = vmatpush1.bf16.msra.mxu0 %v11557
      %11571 = vmatprep.subr.bf16.mxu0 0
      %11572 = vmatpush1.bf16.msra.mxu0 %v11556
      %11573 = vmatprep.subr.bf16.mxu0 0
      %11574 = vmatpush1.bf16.msra.mxu0 %v11555
      %11575 = vmatprep.subr.bf16.mxu0 0
      %11576 = vmatpush1.bf16.msra.mxu0 %v11554
      %11577 = vmatprep.subr.bf16.mxu0 0
      %11578 = vmatpush1.bf16.msra.mxu0 %v11553
      %11579 = vmatprep.subr.bf16.mxu0 0
      %11580 = vmatpush1.bf16.msra.mxu0 %v11552
      %11581 = vmatprep.subr.bf16.mxu0 0
      %11582 = vmatpush1.bf16.msra.mxu0 %v11551
      %11583 = vmatprep.subr.bf16.mxu0 0
      %11584 = vmatpush2.bf16.msra.mxu0 0
      %11585 = vmatprep.subr.bf16.mxu0 0
      %11586 = vmatpush2.bf16.msra.mxu0 0
      %11587 = vmatprep.subr.bf16.mxu0 0
      %11588 = vmatpush2.bf16.msra.mxu0 0
      %11589 = vmatprep.subr.bf16.mxu0 0
      %11590 = vmatpush2.bf16.msra.mxu0 0
      %11591 = vmatprep.subr.bf16.mxu0 0
      %11592 = vmatpush2.bf16.msra.mxu0 0
      %11593 = vmatprep.subr.bf16.mxu0 0
      %11594 = vmatpush2.bf16.msra.mxu0 0
      %11595 = vmatprep.subr.bf16.mxu0 0
      %11596 = vmatpush2.bf16.msra.mxu0 0
      %11597 = vmatprep.subr.bf16.mxu0 0
      %11598 = vmatpush2.bf16.msra.mxu0 0
      %11599 = vmatprep.mubr.bf16.mxu0 0
      %11600 = vmatmul.mubr.bf16.gmra.mxu0 %v11487
      %v11601 = vpop.f32.mrf.mxu0
      %v11602 = vadd.f32 0.0, %v11601
      %v11603 = vpop.f32.mrf.mxu0
      %v11604 = vpop.f32.mrf.mxu0
      %v11605 = vadd.f32 0.0, %v11604
      %v11606 = vpop.f32.mrf.mxu0
      %11607 = vmatprep.mubr.bf16.mxu0 0
      %11608 = vmatmul.mubr.bf16.gmra.mxu0 %v11488
      %v11609 = vpop.f32.mrf.mxu0
      %v11610 = vadd.f32 0.0, %v11609
      %v11611 = vpop.f32.mrf.mxu0
      %v11612 = vpop.f32.mrf.mxu0
      %v11613 = vadd.f32 0.0, %v11612
      %v11614 = vpop.f32.mrf.mxu0
      %11615 = vmatprep.mubr.bf16.mxu0 0
      %11616 = vmatmul.mubr.bf16.gmra.mxu0 %v11489
      %v11617 = vpop.f32.mrf.mxu0
      %v11618 = vadd.f32 0.0, %v11617
      %v11619 = vpop.f32.mrf.mxu0
      %v11620 = vpop.f32.mrf.mxu0
      %v11621 = vadd.f32 0.0, %v11620
      %v11622 = vpop.f32.mrf.mxu0
      %11623 = vmatprep.mubr.bf16.mxu0 0
      %11624 = vmatmul.mubr.bf16.gmra.mxu0 %v11490
      %v11625 = vpop.f32.mrf.mxu0
      %v11626 = vadd.f32 0.0, %v11625
      %v11627 = vpop.f32.mrf.mxu0
      %v11628 = vpop.f32.mrf.mxu0
      %v11629 = vadd.f32 0.0, %v11628
      %v11630 = vpop.f32.mrf.mxu0
      %11631 = vmatprep.mubr.bf16.mxu0 0
      %11632 = vmatmul.mubr.bf16.gmra.mxu0 %v11491
      %v11633 = vpop.f32.mrf.mxu0
      %v11634 = vadd.f32 0.0, %v11633
      %v11635 = vpop.f32.mrf.mxu0
      %v11636 = vpop.f32.mrf.mxu0
      %v11637 = vadd.f32 0.0, %v11636
      %v11638 = vpop.f32.mrf.mxu0
      %11639 = vmatprep.mubr.bf16.mxu0 0
      %11640 = vmatmul.mubr.bf16.gmra.mxu0 %v11492
      %v11641 = vpop.f32.mrf.mxu0
      %v11642 = vadd.f32 0.0, %v11641
      %v11643 = vpop.f32.mrf.mxu0
      %v11644 = vpop.f32.mrf.mxu0
      %v11645 = vadd.f32 0.0, %v11644
      %v11646 = vpop.f32.mrf.mxu0
      %11647 = vmatprep.mubr.bf16.mxu0 0
      %11648 = vmatmul.mubr.bf16.gmra.mxu0 %v11493
      %v11649 = vpop.f32.mrf.mxu0
      %v11650 = vadd.f32 0.0, %v11649
      %v11651 = vpop.f32.mrf.mxu0
      %v11652 = vpop.f32.mrf.mxu0
      %v11653 = vadd.f32 0.0, %v11652
      %v11654 = vpop.f32.mrf.mxu0
      %11655 = vmatprep.mubr.bf16.mxu0 0
      %11656 = vmatmul.mubr.bf16.gmra.mxu0 %v11494
      %v11657 = vpop.f32.mrf.mxu0
      %v11658 = vadd.f32 0.0, %v11657
      %v11659 = vpop.f32.mrf.mxu0
      %v11660 = vpop.f32.mrf.mxu0
      %v11661 = vadd.f32 0.0, %v11660
      %v11662 = vpop.f32.mrf.mxu0
      %11663 = vmatprep.mubr.bf16.mxu0 0
      %11664 = vmatmul.mubr.bf16.gmra.mxu0 %v11495
      %v11665 = vpop.f32.mrf.mxu0
      %v11666 = vadd.f32 0.0, %v11665
      %v11667 = vpop.f32.mrf.mxu0
      %v11668 = vpop.f32.mrf.mxu0
      %v11669 = vadd.f32 0.0, %v11668
      %v11670 = vpop.f32.mrf.mxu0
      %11671 = vmatprep.mubr.bf16.mxu0 0
      %11672 = vmatmul.mubr.bf16.gmra.mxu0 %v11496
      %v11673 = vpop.f32.mrf.mxu0
      %v11674 = vadd.f32 0.0, %v11673
      %v11675 = vpop.f32.mrf.mxu0
      %v11676 = vpop.f32.mrf.mxu0
      %v11677 = vadd.f32 0.0, %v11676
      %v11678 = vpop.f32.mrf.mxu0
      %11679 = vmatprep.mubr.bf16.mxu0 0
      %11680 = vmatmul.mubr.bf16.gmra.mxu0 %v11497
      %v11681 = vpop.f32.mrf.mxu0
      %v11682 = vadd.f32 0.0, %v11681
      %v11683 = vpop.f32.mrf.mxu0
      %v11684 = vpop.f32.mrf.mxu0
      %v11685 = vadd.f32 0.0, %v11684
      %v11686 = vpop.f32.mrf.mxu0
      %11687 = vmatprep.mubr.bf16.mxu0 0
      %11688 = vmatmul.mubr.bf16.gmra.mxu0 %v11498
      %v11689 = vpop.f32.mrf.mxu0
      %v11690 = vadd.f32 0.0, %v11689
      %v11691 = vpop.f32.mrf.mxu0
      %v11692 = vpop.f32.mrf.mxu0
      %v11693 = vadd.f32 0.0, %v11692
      %v11694 = vpop.f32.mrf.mxu0
      %11695 = vmatprep.mubr.bf16.mxu0 0
      %11696 = vmatmul.mubr.bf16.gmra.mxu0 %v11499
      %v11697 = vpop.f32.mrf.mxu0
      %v11698 = vadd.f32 0.0, %v11697
      %v11699 = vpop.f32.mrf.mxu0
      %v11700 = vpop.f32.mrf.mxu0
      %v11701 = vadd.f32 0.0, %v11700
      %v11702 = vpop.f32.mrf.mxu0
      %11703 = vmatprep.mubr.bf16.mxu0 0
      %11704 = vmatmul.mubr.bf16.gmra.mxu0 %v11500
      %v11705 = vpop.f32.mrf.mxu0
      %v11706 = vadd.f32 0.0, %v11705
      %v11707 = vpop.f32.mrf.mxu0
      %v11708 = vpop.f32.mrf.mxu0
      %v11709 = vadd.f32 0.0, %v11708
      %v11710 = vpop.f32.mrf.mxu0
      %11711 = vmatprep.mubr.bf16.mxu0 0
      %11712 = vmatmul.mubr.bf16.gmra.mxu0 %v11501
      %v11713 = vpop.f32.mrf.mxu0
      %v11714 = vadd.f32 0.0, %v11713
      %v11715 = vpop.f32.mrf.mxu0
      %v11716 = vpop.f32.mrf.mxu0
      %v11717 = vadd.f32 0.0, %v11716
      %v11718 = vpop.f32.mrf.mxu0
      %11719 = vmatprep.mubr.bf16.mxu0 0
      %11720 = vmatmul.mubr.bf16.gmra.mxu0 %v11502
      %v11721 = vpop.f32.mrf.mxu0
      %v11722 = vadd.f32 0.0, %v11721
      %v11723 = vpop.f32.mrf.mxu0
      %v11724 = vpop.f32.mrf.mxu0
      %v11725 = vadd.f32 0.0, %v11724
      %v11726 = vpop.f32.mrf.mxu0
      %11727 = vdwg.mxu0
      %v11728 = vadd.f32 %v11230, %v11602
      %v11729 = vadd.f32 %v11231, %v11605
      %v11730 = vadd.f32 %v11232, %v11610
      %v11731 = vadd.f32 %v11233, %v11613
      %v11732 = vadd.f32 %v11234, %v11618
      %v11733 = vadd.f32 %v11235, %v11621
      %v11734 = vadd.f32 %v11236, %v11626
      %v11735 = vadd.f32 %v11237, %v11629
      %v11736 = vadd.f32 %v11238, %v11634
      %v11737 = vadd.f32 %v11239, %v11637
      %v11738 = vadd.f32 %v11240, %v11642
      %v11739 = vadd.f32 %v11241, %v11645
      %v11740 = vadd.f32 %v11242, %v11650
      %v11741 = vadd.f32 %v11243, %v11653
      %v11742 = vadd.f32 %v11244, %v11658
      %v11743 = vadd.f32 %v11245, %v11661
      %v11744 = vadd.f32 %v11246, %v11666
      %v11745 = vadd.f32 %v11247, %v11669
      %v11746 = vadd.f32 %v11248, %v11674
      %v11747 = vadd.f32 %v11249, %v11677
      %v11748 = vadd.f32 %v11250, %v11682
      %v11749 = vadd.f32 %v11251, %v11685
      %v11750 = vadd.f32 %v11252, %v11690
      %v11751 = vadd.f32 %v11253, %v11693
      %v11752 = vadd.f32 %v11254, %v11698
      %v11753 = vadd.f32 %v11255, %v11701
      %v11754 = vadd.f32 %v11256, %v11706
      %v11755 = vadd.f32 %v11257, %v11709
      %v11756 = vadd.f32 %v11258, %v11714
      %v11757 = vadd.f32 %v11259, %v11717
      %v11758 = vadd.f32 %v11260, %v11722
      %v11759 = vadd.f32 %v11261, %v11725
      %v11760 = vld [vmem:[%s5] sm:$0x1]
      %v11762 = vlaneseq
      %v11763 = vshrl.u32 %v11762, 7
      %v11764 = vsub.s32 0, %v11763
      %v11765 = vrot.slane %v11760, %v11764
      %v11767 = vmul.f32 %v11728, %v11765
      %v11768 = vmul.f32 %v11729, %v11765
      %v11769 = vmul.f32 %v11730, %v11765
      %v11770 = vmul.f32 %v11731, %v11765
      %v11771 = vmul.f32 %v11732, %v11765
      %v11772 = vmul.f32 %v11733, %v11765
      %v11773 = vmul.f32 %v11734, %v11765
      %v11774 = vmul.f32 %v11735, %v11765
      %v11775 = vmul.f32 %v11736, %v11765
      %v11776 = vmul.f32 %v11737, %v11765
      %v11777 = vmul.f32 %v11738, %v11765
      %v11778 = vmul.f32 %v11739, %v11765
      %v11779 = vmul.f32 %v11740, %v11765
      %v11780 = vmul.f32 %v11741, %v11765
      %v11781 = vmul.f32 %v11742, %v11765
      %v11782 = vmul.f32 %v11743, %v11765
      %v11783 = vmul.f32 %v11744, %v11765
      %v11784 = vmul.f32 %v11745, %v11765
      %v11785 = vmul.f32 %v11746, %v11765
      %v11786 = vmul.f32 %v11747, %v11765
      %v11787 = vmul.f32 %v11748, %v11765
      %v11788 = vmul.f32 %v11749, %v11765
      %v11789 = vmul.f32 %v11750, %v11765
      %v11790 = vmul.f32 %v11751, %v11765
      %v11791 = vmul.f32 %v11752, %v11765
      %v11792 = vmul.f32 %v11753, %v11765
      %v11793 = vmul.f32 %v11754, %v11765
      %v11794 = vmul.f32 %v11755, %v11765
      %v11795 = vmul.f32 %v11756, %v11765
      %v11796 = vmul.f32 %v11757, %v11765
      %v11797 = vmul.f32 %v11758, %v11765
      %v11798 = vmul.f32 %v11759, %v11765
      %v11799 = vld [vmem:[%s6] sm:$0x1]
      %v11801 = vlaneseq
      %v11802 = vshrl.u32 %v11801, 7
      %v11803 = vsub.s32 0, %v11802
      %v11804 = vrot.slane %v11799, %v11803
      %v11806 = vadd.f32 %v11767, %v11804
      %v11807 = vadd.f32 %v11768, %v11804
      %v11808 = vadd.f32 %v11769, %v11804
      %v11809 = vadd.f32 %v11770, %v11804
      %v11810 = vadd.f32 %v11771, %v11804
      %v11811 = vadd.f32 %v11772, %v11804
      %v11812 = vadd.f32 %v11773, %v11804
      %v11813 = vadd.f32 %v11774, %v11804
      %v11814 = vadd.f32 %v11775, %v11804
      %v11815 = vadd.f32 %v11776, %v11804
      %v11816 = vadd.f32 %v11777, %v11804
      %v11817 = vadd.f32 %v11778, %v11804
      %v11818 = vadd.f32 %v11779, %v11804
      %v11819 = vadd.f32 %v11780, %v11804
      %v11820 = vadd.f32 %v11781, %v11804
      %v11821 = vadd.f32 %v11782, %v11804
      %v11822 = vadd.f32 %v11783, %v11804
      %v11823 = vadd.f32 %v11784, %v11804
      %v11824 = vadd.f32 %v11785, %v11804
      %v11825 = vadd.f32 %v11786, %v11804
      %v11826 = vadd.f32 %v11787, %v11804
      %v11827 = vadd.f32 %v11788, %v11804
      %v11828 = vadd.f32 %v11789, %v11804
      %v11829 = vadd.f32 %v11790, %v11804
      %v11830 = vadd.f32 %v11791, %v11804
      %v11831 = vadd.f32 %v11792, %v11804
      %v11832 = vadd.f32 %v11793, %v11804
      %v11833 = vadd.f32 %v11794, %v11804
      %v11834 = vadd.f32 %v11795, %v11804
      %v11835 = vadd.f32 %v11796, %v11804
      %v11836 = vadd.f32 %v11797, %v11804
      %v11837 = vadd.f32 %v11798, %v11804
      %v11838 = vld [vmem:[%s273] sm:$0xff]
      %v11839 = vld [vmem:[%s273 + $0x8] sm:$0xff]
      %v11840 = vld [vmem:[%s273 + $0x10] sm:$0xff]
      %v11841 = vld [vmem:[%s273 + $0x18] sm:$0xff]
      %v11842 = vld [vmem:[%s273 + $0x20] sm:$0xff]
      %v11843 = vld [vmem:[%s273 + $0x28] sm:$0xff]
      %v11844 = vld [vmem:[%s273 + $0x30] sm:$0xff]
      %v11845 = vld [vmem:[%s273 + $0x38] sm:$0xff]
      %v11846 = vld [vmem:[%s273 + $0x40] sm:$0xff]
      %v11847 = vld [vmem:[%s273 + $0x48] sm:$0xff]
      %v11848 = vld [vmem:[%s273 + $0x50] sm:$0xff]
      %v11849 = vld [vmem:[%s273 + $0x58] sm:$0xff]
      %v11850 = vld [vmem:[%s273 + $0x60] sm:$0xff]
      %v11851 = vld [vmem:[%s273 + $0x68] sm:$0xff]
      %v11852 = vld [vmem:[%s273 + $0x70] sm:$0xff]
      %v11853 = vld [vmem:[%s273 + $0x78] sm:$0xff]
      %v11854 = vld [vmem:[%s273 + $0x80] sm:$0xff]
      %v11855 = vld [vmem:[%s273 + $0x88] sm:$0xff]
      %v11856 = vld [vmem:[%s273 + $0x90] sm:$0xff]
      %v11857 = vld [vmem:[%s273 + $0x98] sm:$0xff]
      %v11858 = vld [vmem:[%s273 + $0xa0] sm:$0xff]
      %v11859 = vld [vmem:[%s273 + $0xa8] sm:$0xff]
      %v11860 = vld [vmem:[%s273 + $0xb0] sm:$0xff]
      %v11861 = vld [vmem:[%s273 + $0xb8] sm:$0xff]
      %v11862 = vld [vmem:[%s273 + $0xc0] sm:$0xff]
      %v11863 = vld [vmem:[%s273 + $0xc8] sm:$0xff]
      %v11864 = vld [vmem:[%s273 + $0xd0] sm:$0xff]
      %v11865 = vld [vmem:[%s273 + $0xd8] sm:$0xff]
      %v11866 = vld [vmem:[%s273 + $0xe0] sm:$0xff]
      %v11867 = vld [vmem:[%s273 + $0xe8] sm:$0xff]
      %v11868 = vld [vmem:[%s273 + $0xf0] sm:$0xff]
      %v11869 = vld [vmem:[%s273 + $0xf8] sm:$0xff]
      %v11870 = vadd.f32 %v11838, %v11806
      %v11871 = vadd.f32 %v11839, %v11807
      %v11872 = vadd.f32 %v11840, %v11808
      %v11873 = vadd.f32 %v11841, %v11809
      %v11874 = vadd.f32 %v11842, %v11810
      %v11875 = vadd.f32 %v11843, %v11811
      %v11876 = vadd.f32 %v11844, %v11812
      %v11877 = vadd.f32 %v11845, %v11813
      %v11878 = vadd.f32 %v11846, %v11814
      %v11879 = vadd.f32 %v11847, %v11815
      %v11880 = vadd.f32 %v11848, %v11816
      %v11881 = vadd.f32 %v11849, %v11817
      %v11882 = vadd.f32 %v11850, %v11818
      %v11883 = vadd.f32 %v11851, %v11819
      %v11884 = vadd.f32 %v11852, %v11820
      %v11885 = vadd.f32 %v11853, %v11821
      %v11886 = vadd.f32 %v11854, %v11822
      %v11887 = vadd.f32 %v11855, %v11823
      %v11888 = vadd.f32 %v11856, %v11824
      %v11889 = vadd.f32 %v11857, %v11825
      %v11890 = vadd.f32 %v11858, %v11826
      %v11891 = vadd.f32 %v11859, %v11827
      %v11892 = vadd.f32 %v11860, %v11828
      %v11893 = vadd.f32 %v11861, %v11829
      %v11894 = vadd.f32 %v11862, %v11830
      %v11895 = vadd.f32 %v11863, %v11831
      %v11896 = vadd.f32 %v11864, %v11832
      %v11897 = vadd.f32 %v11865, %v11833
      %v11898 = vadd.f32 %v11866, %v11834
      %v11899 = vadd.f32 %v11867, %v11835
      %v11900 = vadd.f32 %v11868, %v11836
      %v11901 = vadd.f32 %v11869, %v11837
      %vm11902 = vcmask 31744
      %11903 = vst.msk [vmem:[%s278] sm:$0xff] %vm11902, %v11870
      %11904 = vst.msk [vmem:[%s278 + $0x8] sm:$0xff] %vm11902, %v11871
      %11905 = vst.msk [vmem:[%s278 + $0x10] sm:$0xff] %vm11902, %v11872
      %11906 = vst.msk [vmem:[%s278 + $0x18] sm:$0xff] %vm11902, %v11873
      %11907 = vst.msk [vmem:[%s278 + $0x20] sm:$0xff] %vm11902, %v11874
      %11908 = vst.msk [vmem:[%s278 + $0x28] sm:$0xff] %vm11902, %v11875
      %11909 = vst.msk [vmem:[%s278 + $0x30] sm:$0xff] %vm11902, %v11876
      %11910 = vst.msk [vmem:[%s278 + $0x38] sm:$0xff] %vm11902, %v11877
      %11911 = vst.msk [vmem:[%s278 + $0x40] sm:$0xff] %vm11902, %v11878
      %11912 = vst.msk [vmem:[%s278 + $0x48] sm:$0xff] %vm11902, %v11879
      %11913 = vst.msk [vmem:[%s278 + $0x50] sm:$0xff] %vm11902, %v11880
      %11914 = vst.msk [vmem:[%s278 + $0x58] sm:$0xff] %vm11902, %v11881
      %11915 = vst.msk [vmem:[%s278 + $0x60] sm:$0xff] %vm11902, %v11882
      %11916 = vst.msk [vmem:[%s278 + $0x68] sm:$0xff] %vm11902, %v11883
      %11917 = vst.msk [vmem:[%s278 + $0x70] sm:$0xff] %vm11902, %v11884
      %11918 = vst.msk [vmem:[%s278 + $0x78] sm:$0xff] %vm11902, %v11885
      %11919 = vst.msk [vmem:[%s278 + $0x80] sm:$0xff] %vm11902, %v11886
      %11920 = vst.msk [vmem:[%s278 + $0x88] sm:$0xff] %vm11902, %v11887
      %11921 = vst.msk [vmem:[%s278 + $0x90] sm:$0xff] %vm11902, %v11888
      %11922 = vst.msk [vmem:[%s278 + $0x98] sm:$0xff] %vm11902, %v11889
      %11923 = vst.msk [vmem:[%s278 + $0xa0] sm:$0xff] %vm11902, %v11890
      %11924 = vst.msk [vmem:[%s278 + $0xa8] sm:$0xff] %vm11902, %v11891
      %11925 = vst.msk [vmem:[%s278 + $0xb0] sm:$0xff] %vm11902, %v11892
      %11926 = vst.msk [vmem:[%s278 + $0xb8] sm:$0xff] %vm11902, %v11893
      %11927 = vst.msk [vmem:[%s278 + $0xc0] sm:$0xff] %vm11902, %v11894
      %11928 = vst.msk [vmem:[%s278 + $0xc8] sm:$0xff] %vm11902, %v11895
      %11929 = vst.msk [vmem:[%s278 + $0xd0] sm:$0xff] %vm11902, %v11896
      %11930 = vst.msk [vmem:[%s278 + $0xd8] sm:$0xff] %vm11902, %v11897
      %11931 = vst.msk [vmem:[%s278 + $0xe0] sm:$0xff] %vm11902, %v11898
      %11932 = vst.msk [vmem:[%s278 + $0xe8] sm:$0xff] %vm11902, %v11899
      %11933 = vst.msk [vmem:[%s278 + $0xf0] sm:$0xff] %vm11902, %v11900
      %11934 = vst.msk [vmem:[%s278 + $0xf8] sm:$0xff] %vm11902, %v11901
      %p11935 = scmp.lt.s32.totalorder %s18, 1
      %s11936 = scalar_select %p11935, %s18, 1
      %s11937 = smul.addr %s11936, 32
      %s11938 = smul.addr %s11937, 8
      %s11939 = scalar_lea.vmem %s7, %s11938
      // Predicated region
      $region49: #{residual_block_forward.1} parent=47 // pred_check
        %p11940 = pneg %p188
      $region50: #{residual_block_forward.1} parent=47 // pred_check_branch
        %11942 = sbr.rel (%p11940) target = $region52
      $region51: #{residual_block_forward.1} parent=47 // pred_region
        _
      $region52: #{residual_block_forward.1} parent=47 // pred_fallthru
        _
    $region48: #{residual_block_forward.1} parent=5 // pred_fallthru
      _
    %p11943 = scmp.le.s32.totalorder 2, %s13
    // Predicated region
    $region53: #{residual_block_forward.1} parent=5 // pred_check
      %p11944 = pneg %p11943
    $region54: #{residual_block_forward.1} parent=5 // pred_check_branch
      %11946 = sbr.rel (%p11944) target = $region56
    $region55: #{residual_block_forward.1} parent=5 // pred_region
      %s11947 = ssub.s32 %s13, 2
      // Predicated region
      $region57: #{residual_block_forward.1} parent=55 // pred_check
        %p11948 = pneg %p194
      $region58: #{residual_block_forward.1} parent=55 // pred_check_branch
        %11950 = sbr.rel (%p11948) target = $region60
      $region59: #{residual_block_forward.1} parent=55 // pred_region
        %p11951 = scmp.lt.s32.totalorder %s19, 1
        %s11952 = scalar_select %p11951, %s19, 1
        %s11953 = smul.addr %s11952, 32
        %s11954 = smul.addr %s11953, 8
        %s11955 = scalar_lea.vmem %s7, %s11954
      $region60: #{residual_block_forward.1} parent=55 // pred_fallthru
        _
    $region56: #{residual_block_forward.1} parent=5 // pred_fallthru
      _
  $region6: #{residual_block_forward.1} parent=0 // loop_footer
    %s17 = sadd.s32 1, %s13
  $region7: #{residual_block_forward.1} parent=0 // loop_footer_branch
    %12 = sbr.rel target = $region3
  $region8: #{residual_block_forward.1} parent=0 // loop_exit
    _

</llo_original>
